<compile_context>
chip_gen: v7x
topology: tpu7x:2x2x1
jax: 0.10.0
libtpu: 0.0.40
codegen_flags: <defaults>
</compile_context>

<pallas_src>
import numpy as np
import jax
import jax.numpy as jnp
from jax import lax
from jax.experimental import pallas as pl
from jax.experimental.pallas import tpu as pltpu  # noqa: F401  (TPU backend)

# ------------------------- model configuration (small) -------------------------
DIM = 64
N_HEADS = 4
HEAD_DIM = DIM // N_HEADS            # 16
N_LAYERS = 2
VOCAB = 256
MULTIPLE_OF = 32
NORM_EPS = 1e-5

# Mamba2 hyperparameters hard-coded in Attention.__init__:
N_GROUPS = 1
EXPAND = 1
STATE = 256
CONV_K = 4
INTER = EXPAND * DIM                 # 64 (== N_HEADS * HEAD_DIM)
assert INTER == N_HEADS * HEAD_DIM

_h = int(2 * (4 * DIM) / 3)
FFN_HIDDEN = MULTIPLE_OF * ((_h + MULTIPLE_OF - 1) // MULTIPLE_OF)   # 192
FFN_PAD = 256                        # padded to 2 x 128 lanes (exact zero-pad)

BATCH = 2
SEQ = 8
BS = BATCH * SEQ                     # 16 folded rows


# ------------------------------ in-kernel helpers ------------------------------
def _silu(x):
    return x * jax.nn.sigmoid(x)


def _softplus(x):
    # stable softplus built only from exp/log/abs/max (all Mosaic-supported)
    return jnp.maximum(x, 0.0) + jnp.log(1.0 + jnp.exp(-jnp.abs(x)))


def _rms(x, w):
    var = jnp.mean(x * x, axis=-1, keepdims=True)
    return x * lax.rsqrt(var + NORM_EPS) * w


def _conv_silu(u, w, b, sh):
    # Causal depthwise conv along time (per folded batch block) + SiLU.
    # u: (BS, C) f32, w: (K, C) f32, b: (1, C) f32,
    # sh: (K, BS, BS) host-precomputed block-diagonal shift matrices, so
    #   (sh[k] @ u)[t] == u[t - (K-1-k)] within the same sequence, else 0.
    acc = jnp.zeros_like(u)
    for k in range(CONV_K):                      # static unroll, K == 4
        shifted = jnp.dot(sh[k], u, preferred_element_type=jnp.float32)
        acc = acc + shifted * w[k:k + 1, :]
    return _silu(acc + b)


# --------------------------- fully fused forward kernel -------------------------
def _fwd_kernel(h_ref,
                tri_ref, hsel_ref, sh_ref,
                attn_nw_ref, inner_nw_ref,
                wz_ref, wx_ref, wBC_ref, wdt_ref,
                cwx_ref, cbx_ref, cwBC_ref, cbBC_ref,
                alog_ref, dtb_ref, drep_ref, mnw_ref,
                wout_ref, wo_ref,
                ffn_nw_ref, w13_ref, w2_ref,
                fnw_ref, wv_ref,
                o_ref):
    h = h_ref[...]                               # (BS, D) f32 residual stream
    tri = tri_ref[...]                           # (BS, BS) block-diag causal mask
    hsel = hsel_ref[...]                         # (H, INTER) head->lane one-hot
    sh = sh_ref[...]                             # (K, BS, BS) conv shift mats

    for l in range(N_LAYERS):                    # static unroll over layers
        x = h

        # -------------- attention branch: norms + Mamba2 mixer --------------
        xn = _rms(x, attn_nw_ref[l])             # TransformerBlock.attention_norm
        xm = _rms(xn, inner_nw_ref[l])           # Attention.norm
        xmb = xm.astype(jnp.bfloat16)

        gate = jnp.dot(xmb, wz_ref[l], preferred_element_type=jnp.float32)   # (BS, 64)
        x_in = jnp.dot(xmb, wx_ref[l], preferred_element_type=jnp.float32)   # (BS, 64)
        BC_in = jnp.dot(xmb, wBC_ref[l], preferred_element_type=jnp.float32)  # (BS, 512)
        dt_raw = jnp.dot(xmb, wdt_ref[l], preferred_element_type=jnp.float32)  # (BS, H)

        # causal depthwise conv + SiLU over the [x] and fused [B|C] groups
        xc = _conv_silu(x_in, cwx_ref[l], cbx_ref[l], sh)                     # (BS, 64)
        BCc = _conv_silu(BC_in, cwBC_ref[l], cbBC_ref[l], sh)                 # (BS, 512)
        Bc = BCc[:, :STATE]                       # lane-aligned slice at 256
        Cc = BCc[:, STATE:]

        dt = _softplus(dt_raw + dtb_ref[l])       # (BS, H)
        A = -jnp.exp(alog_ref[l])                 # (1, H)
        dAlog = dt * A                            # (BS, H) per-step log decay

        # Single-chunk SSD form of the selective-SSM recurrence (zero init):
        #   y[t] = sum_{s<=t} exp(cum[t]-cum[s]) * (C_t.B_s) * dt_s * x_s
        cum = jnp.dot(tri, dAlog, preferred_element_type=jnp.float32)         # (BS, H)
        # exp on the small per-head array, THEN expand heads to lanes
        epos = jnp.dot(jnp.exp(cum), hsel, preferred_element_type=jnp.float32)   # (BS, 64)
        eneg = jnp.dot(jnp.exp(-cum), hsel, preferred_element_type=jnp.float32)  # (BS, 64)
        dt_r = jnp.dot(dt, hsel, preferred_element_type=jnp.float32)             # (BS, 64)

        G = lax.dot_general(Cc, Bc, (((1,), (1,)), ((), ())),
                            preferred_element_type=jnp.float32)               # (BS, BS)
        Gm = G * tri                                                           # causal+block-diag
        y = epos * jnp.dot(Gm, eneg * (xc * dt_r),
                           preferred_element_type=jnp.float32)                 # (BS, 64)
        y = y + xc * drep_ref[l]                  # D skip connection

        # gated RMSNorm (gate applied before norm) -> out_proj -> wo
        yg = y * _silu(gate)
        yn = _rms(yg, mnw_ref[l])
        m_out = jnp.dot(yn.astype(jnp.bfloat16), wout_ref[l],
                        preferred_element_type=jnp.float32)                   # (BS, D)
        attn_out = jnp.dot(m_out.astype(jnp.bfloat16), wo_ref[l],
                           preferred_element_type=jnp.float32)                # (BS, D)
        hh = x + attn_out

        # ------------------------------ FFN branch ------------------------------
        hn = _rms(hh, ffn_nw_ref[l]).astype(jnp.bfloat16)
        ac = jnp.dot(hn, w13_ref[l], preferred_element_type=jnp.float32)      # (BS, 512)
        a = ac[:, :FFN_PAD]                       # lane-aligned slice at 256
        c = ac[:, FFN_PAD:]
        g = _silu(a) * c
        ffn = jnp.dot(g.astype(jnp.bfloat16), w2_ref[l],
                      preferred_element_type=jnp.float32)                     # (BS, D)
        h = hh + ffn

    # ----------------------- final norm + output head -----------------------
    hn = _rms(h, fnw_ref[...]).astype(jnp.bfloat16)
    o_ref[...] = jnp.dot(hn, wv_ref[...], preferred_element_type=jnp.float32)  # (BS, VOCAB)


def _full_spec(a):
    zeros = (0,) * a.ndim
    return pl.BlockSpec(a.shape, lambda i, z=zeros: z)


# -------------------------------- forward pass ----------------------------------
def transformer_forward(tokens, params):
    B, S = tokens.shape
    h0 = params["emb"][tokens].reshape(B * S, DIM)     # embedding gather (JAX glue)
    args = (
        h0,
        params["tri"], params["hsel"], params["shift"],
        params["attn_nw"], params["inner_nw"],
        params["w_z"], params["w_x"], params["w_BC"], params["w_dt"],
        params["cw_x"], params["cb_x"], params["cw_BC"], params["cb_BC"],
        params["A_log"], params["dt_bias"], params["D_rep"], params["mamba_nw"],
        params["out_proj"], params["wo"],
        params["ffn_nw"], params["w13"], params["w2"],
        params["final_nw"], params["out_w"],
    )
    logits = pl.pallas_call(
        _fwd_kernel,
        grid=(1,),
        out_shape=jax.ShapeDtypeStruct((B * S, VOCAB), jnp.float32),
        in_specs=[_full_spec(a) for a in args],
        out_specs=pl.BlockSpec((B * S, VOCAB), lambda i: (0, 0)),
    )(*args)
    return logits.reshape(B, S, VOCAB)


# -------------------------- host-precomputed constants ---------------------------
def _make_constants():
    # block-diagonal lower-triangular (incl. diagonal) mask over folded (B*S) rows
    tri = np.zeros((BS, BS), np.float32)
    for b in range(BATCH):
        for t in range(SEQ):
            tri[b * SEQ + t, b * SEQ: b * SEQ + t + 1] = 1.0
    # head -> (head*head_dim) one-hot expansion
    hsel = np.zeros((N_HEADS, INTER), np.float32)
    for hh in range(N_HEADS):
        hsel[hh, hh * HEAD_DIM:(hh + 1) * HEAD_DIM] = 1.0
    # causal depthwise-conv shift matrices (batch-block diagonal, no leakage)
    sh = np.zeros((CONV_K, BS, BS), np.float32)
    for k in range(CONV_K):
        s = CONV_K - 1 - k
        for b in range(BATCH):
            for t in range(SEQ):
                if t - s >= 0:
                    sh[k, b * SEQ + t, b * SEQ + t - s] = 1.0
    return jnp.asarray(tri), jnp.asarray(hsel), jnp.asarray(sh)


# ------------------------------ parameter init ----------------------------------
def init_params(key):
    keys = iter(jax.random.split(key, 128))

    def rand(shape, std=0.02):
        return jax.random.normal(next(keys), shape, jnp.float32) * std

    def w_bf16(shape, std=0.02):
        return rand(shape, std).astype(jnp.bfloat16)

    params = {"emb": jax.random.normal(next(keys), (VOCAB, DIM), jnp.float32)}

    stacked = {}

    def add(name, arr):
        stacked.setdefault(name, []).append(arr)

    for _ in range(N_LAYERS):
        add("attn_nw", jnp.ones((1, DIM), jnp.float32))
        add("inner_nw", jnp.ones((1, DIM), jnp.float32))
        # in_proj split into lane-aligned column groups [gate | x | B|C | dt]
        add("w_z", w_bf16((DIM, INTER)))
        add("w_x", w_bf16((DIM, INTER)))
        add("w_BC", w_bf16((DIM, 2 * STATE)))
        add("w_dt", w_bf16((DIM, N_HEADS)))
        # depthwise causal conv weights ([x] group and fused [B|C] group)
        add("cw_x", rand((CONV_K, INTER)))
        add("cb_x", jnp.zeros((1, INTER), jnp.float32))
        add("cw_BC", rand((CONV_K, 2 * STATE)))
        add("cb_BC", jnp.zeros((1, 2 * STATE), jnp.float32))
        add("A_log", jnp.log(jnp.arange(1, N_HEADS + 1,
                                        dtype=jnp.float32)).reshape(1, N_HEADS))
        add("dt_bias", jnp.log(jnp.expm1(jnp.linspace(
            1e-3, 1e-1, N_HEADS, dtype=jnp.float32))).reshape(1, N_HEADS))
        add("D_rep", jnp.ones((1, INTER), jnp.float32))   # per-head D pre-expanded
        add("mamba_nw", jnp.ones((1, INTER), jnp.float32))
        add("out_proj", w_bf16((INTER, DIM)))
        add("wo", w_bf16((DIM, DIM)))
        add("ffn_nw", jnp.ones((1, DIM), jnp.float32))
        # SwiGLU FFN: fuse w1|w3 and zero-pad hidden 192 -> 256 (exact)
        w1 = rand((DIM, FFN_HIDDEN))
        w3 = rand((DIM, FFN_HIDDEN))
        w2 = rand((FFN_HIDDEN, DIM))
        w1p = jnp.pad(w1, ((0, 0), (0, FFN_PAD - FFN_HIDDEN)))
        w3p = jnp.pad(w3, ((0, 0), (0, FFN_PAD - FFN_HIDDEN)))
        add("w13", jnp.concatenate([w1p, w3p], axis=1).astype(jnp.bfloat16))
        add("w2", jnp.pad(w2, ((0, FFN_PAD - FFN_HIDDEN), (0, 0))).astype(jnp.bfloat16))

    for name, lst in stacked.items():
        params[name] = jnp.stack(lst, axis=0)      # leading layer axis

    params["final_nw"] = jnp.ones((1, DIM), jnp.float32)
    params["out_w"] = w_bf16((DIM, VOCAB), std=DIM ** -0.5)

    tri, hsel, sh = _make_constants()
    params["tri"] = tri
    params["hsel"] = hsel
    params["shift"] = sh
    return params


# ----------------------------------- main ----------------------------------------
if __name__ == "__main__":
    key = jax.random.PRNGKey(0)
    pkey, tkey = jax.random.split(key)
    params = init_params(pkey)
    tokens = jax.random.randint(tkey, (BATCH, SEQ), 0, VOCAB)   # (batch=2, seq=8)

    logits = jax.jit(transformer_forward)(tokens, params)
    jax.block_until_ready(logits)
    assert logits.shape == (BATCH, SEQ, VOCAB)
    assert bool(jnp.all(jnp.isfinite(logits)))
    print("KERNEL_OK")
</pallas_src>

<mosaic_0001>
module attributes {stable_mosaic.version = 11 : i64} {
  func.func @_fwd_kernel(%arg0: i32, %arg1: memref<16x64xf32, #tpu.memory_space<vmem>>, %arg2: memref<16x16xf32, #tpu.memory_space<vmem>>, %arg3: memref<4x64xf32, #tpu.memory_space<vmem>>, %arg4: memref<4x16x16xf32, #tpu.memory_space<vmem>>, %arg5: memref<2x1x64xf32, #tpu.memory_space<vmem>>, %arg6: memref<2x1x64xf32, #tpu.memory_space<vmem>>, %arg7: memref<2x64x64xbf16, #tpu.memory_space<vmem>>, %arg8: memref<2x64x64xbf16, #tpu.memory_space<vmem>>, %arg9: memref<2x64x512xbf16, #tpu.memory_space<vmem>>, %arg10: memref<2x64x4xbf16, #tpu.memory_space<vmem>>, %arg11: memref<2x4x64xf32, #tpu.memory_space<vmem>>, %arg12: memref<2x1x64xf32, #tpu.memory_space<vmem>>, %arg13: memref<2x4x512xf32, #tpu.memory_space<vmem>>, %arg14: memref<2x1x512xf32, #tpu.memory_space<vmem>>, %arg15: memref<2x1x4xf32, #tpu.memory_space<vmem>>, %arg16: memref<2x1x4xf32, #tpu.memory_space<vmem>>, %arg17: memref<2x1x64xf32, #tpu.memory_space<vmem>>, %arg18: memref<2x1x64xf32, #tpu.memory_space<vmem>>, %arg19: memref<2x64x64xbf16, #tpu.memory_space<vmem>>, %arg20: memref<2x64x64xbf16, #tpu.memory_space<vmem>>, %arg21: memref<2x1x64xf32, #tpu.memory_space<vmem>>, %arg22: memref<2x64x512xbf16, #tpu.memory_space<vmem>>, %arg23: memref<2x256x64xbf16, #tpu.memory_space<vmem>>, %arg24: memref<1x64xf32, #tpu.memory_space<vmem>>, %arg25: memref<64x256xbf16, #tpu.memory_space<vmem>>, %arg26: memref<16x256xf32, #tpu.memory_space<vmem>>) attributes {dimension_semantics = [#tpu.dimension_semantics<arbitrary>], iteration_bounds = array<i64: 1>, scalar_prefetch = 0 : i64, scratch_operands = 0 : i64, tpu.core_type = #tpu.core_type<tc>, window_params = [{pipeline_mode = #tpu.pipeline_mode<synchronous>, transform_indices = @transform_0, window_bounds = array<i64: 16, 64>}, {pipeline_mode = #tpu.pipeline_mode<synchronous>, transform_indices = @transform_1, window_bounds = array<i64: 16, 16>}, {pipeline_mode = #tpu.pipeline_mode<synchronous>, transform_indices = @transform_2, window_bounds = array<i64: 4, 64>}, {pipeline_mode = #tpu.pipeline_mode<synchronous>, transform_indices = @transform_3, window_bounds = array<i64: 4, 16, 16>}, {pipeline_mode = #tpu.pipeline_mode<synchronous>, transform_indices = @transform_4, window_bounds = array<i64: 2, 1, 64>}, {pipeline_mode = #tpu.pipeline_mode<synchronous>, transform_indices = @transform_5, window_bounds = array<i64: 2, 1, 64>}, {pipeline_mode = #tpu.pipeline_mode<synchronous>, transform_indices = @transform_6, window_bounds = array<i64: 2, 64, 64>}, {pipeline_mode = #tpu.pipeline_mode<synchronous>, transform_indices = @transform_7, window_bounds = array<i64: 2, 64, 64>}, {pipeline_mode = #tpu.pipeline_mode<synchronous>, transform_indices = @transform_8, window_bounds = array<i64: 2, 64, 512>}, {pipeline_mode = #tpu.pipeline_mode<synchronous>, transform_indices = @transform_9, window_bounds = array<i64: 2, 64, 4>}, {pipeline_mode = #tpu.pipeline_mode<synchronous>, transform_indices = @transform_10, window_bounds = array<i64: 2, 4, 64>}, {pipeline_mode = #tpu.pipeline_mode<synchronous>, transform_indices = @transform_11, window_bounds = array<i64: 2, 1, 64>}, {pipeline_mode = #tpu.pipeline_mode<synchronous>, transform_indices = @transform_12, window_bounds = array<i64: 2, 4, 512>}, {pipeline_mode = #tpu.pipeline_mode<synchronous>, transform_indices = @transform_13, window_bounds = array<i64: 2, 1, 512>}, {pipeline_mode = #tpu.pipeline_mode<synchronous>, transform_indices = @transform_14, window_bounds = array<i64: 2, 1, 4>}, {pipeline_mode = #tpu.pipeline_mode<synchronous>, transform_indices = @transform_15, window_bounds = array<i64: 2, 1, 4>}, {pipeline_mode = #tpu.pipeline_mode<synchronous>, transform_indices = @transform_16, window_bounds = array<i64: 2, 1, 64>}, {pipeline_mode = #tpu.pipeline_mode<synchronous>, transform_indices = @transform_17, window_bounds = array<i64: 2, 1, 64>}, {pipeline_mode = #tpu.pipeline_mode<synchronous>, transform_indices = @transform_18, window_bounds = array<i64: 2, 64, 64>}, {pipeline_mode = #tpu.pipeline_mode<synchronous>, transform_indices = @transform_19, window_bounds = array<i64: 2, 64, 64>}, {pipeline_mode = #tpu.pipeline_mode<synchronous>, transform_indices = @transform_20, window_bounds = array<i64: 2, 1, 64>}, {pipeline_mode = #tpu.pipeline_mode<synchronous>, transform_indices = @transform_21, window_bounds = array<i64: 2, 64, 512>}, {pipeline_mode = #tpu.pipeline_mode<synchronous>, transform_indices = @transform_22, window_bounds = array<i64: 2, 256, 64>}, {pipeline_mode = #tpu.pipeline_mode<synchronous>, transform_indices = @transform_23, window_bounds = array<i64: 1, 64>}, {pipeline_mode = #tpu.pipeline_mode<synchronous>, transform_indices = @transform_24, window_bounds = array<i64: 64, 256>}, {pipeline_mode = #tpu.pipeline_mode<synchronous>, transform_indices = @transform_25, window_bounds = array<i64: 16, 256>}]} {
    %c0 = arith.constant 0 : index
    %c0_0 = arith.constant 0 : index
    %0 = vector.load %arg1[%c0, %c0_0] : memref<16x64xf32, #tpu.memory_space<vmem>>, vector<16x64xf32>
    %c0_1 = arith.constant 0 : index
    %c0_2 = arith.constant 0 : index
    %1 = vector.load %arg2[%c0_1, %c0_2] : memref<16x16xf32, #tpu.memory_space<vmem>>, vector<16x16xf32>
    %c0_3 = arith.constant 0 : index
    %c0_4 = arith.constant 0 : index
    %2 = vector.load %arg3[%c0_3, %c0_4] : memref<4x64xf32, #tpu.memory_space<vmem>>, vector<4x64xf32>
    %c0_5 = arith.constant 0 : index
    %c0_6 = arith.constant 0 : index
    %c0_7 = arith.constant 0 : index
    %3 = vector.load %arg4[%c0_5, %c0_6, %c0_7] : memref<4x16x16xf32, #tpu.memory_space<vmem>>, vector<4x16x16xf32>
    %c0_8 = arith.constant 0 : index
    %c0_9 = arith.constant 0 : index
    %c0_10 = arith.constant 0 : index
    %4 = vector.load %arg5[%c0_8, %c0_9, %c0_10] : memref<2x1x64xf32, #tpu.memory_space<vmem>>, vector<1x1x64xf32>
    %5 = vector.shape_cast %4 : vector<1x1x64xf32> to vector<1x64xf32>
    %6 = arith.mulf %0, %0 : vector<16x64xf32>
    %cst = arith.constant dense<0.000000e+00> : vector<16xf32>
    %7 = vector.multi_reduction <add>, %6, %cst [1] : vector<16x64xf32> to vector<16xf32>
    %8 = vector.shape_cast %7 : vector<16xf32> to vector<16x1xf32>
    %cst_11 = arith.constant 6.400000e+01 : f32
    %9 = vector.broadcast %cst_11 : f32 to vector<16x1xf32>
    %10 = arith.divf %8, %9 : vector<16x1xf32>
    %cst_12 = arith.constant 9.99999974E-6 : f32
    %11 = vector.broadcast %cst_12 : f32 to vector<16x1xf32>
    %12 = arith.addf %10, %11 : vector<16x1xf32>
    %13 = math.rsqrt %12 : vector<16x1xf32>
    %14 = vector.broadcast %13 : vector<16x1xf32> to vector<16x64xf32>
    %15 = arith.mulf %0, %14 : vector<16x64xf32>
    %16 = vector.broadcast %5 : vector<1x64xf32> to vector<16x64xf32>
    %17 = arith.mulf %15, %16 : vector<16x64xf32>
    %c0_13 = arith.constant 0 : index
    %c0_14 = arith.constant 0 : index
    %c0_15 = arith.constant 0 : index
    %18 = vector.load %arg6[%c0_13, %c0_14, %c0_15] : memref<2x1x64xf32, #tpu.memory_space<vmem>>, vector<1x1x64xf32>
    %19 = vector.shape_cast %18 : vector<1x1x64xf32> to vector<1x64xf32>
    %20 = arith.mulf %17, %17 : vector<16x64xf32>
    %cst_16 = arith.constant dense<0.000000e+00> : vector<16xf32>
    %21 = vector.multi_reduction <add>, %20, %cst_16 [1] : vector<16x64xf32> to vector<16xf32>
    %22 = vector.shape_cast %21 : vector<16xf32> to vector<16x1xf32>
    %cst_17 = arith.constant 6.400000e+01 : f32
    %23 = vector.broadcast %cst_17 : f32 to vector<16x1xf32>
    %24 = arith.divf %22, %23 : vector<16x1xf32>
    %cst_18 = arith.constant 9.99999974E-6 : f32
    %25 = vector.broadcast %cst_18 : f32 to vector<16x1xf32>
    %26 = arith.addf %24, %25 : vector<16x1xf32>
    %27 = math.rsqrt %26 : vector<16x1xf32>
    %28 = vector.broadcast %27 : vector<16x1xf32> to vector<16x64xf32>
    %29 = arith.mulf %17, %28 : vector<16x64xf32>
    %30 = vector.broadcast %19 : vector<1x64xf32> to vector<16x64xf32>
    %31 = arith.mulf %29, %30 : vector<16x64xf32>
    %32 = arith.truncf %31 : vector<16x64xf32> to vector<16x64xbf16>
    %c0_19 = arith.constant 0 : index
    %c0_20 = arith.constant 0 : index
    %c0_21 = arith.constant 0 : index
    %33 = vector.load %arg7[%c0_19, %c0_20, %c0_21] : memref<2x64x64xbf16, #tpu.memory_space<vmem>>, vector<1x64x64xbf16>
    %34 = vector.shape_cast %33 : vector<1x64x64xbf16> to vector<64x64xbf16>
    %cst_22 = arith.constant dense<0.000000e+00> : vector<16x64xf32>
    %35 = tpu.matmul %32, %34, %cst_22 {dimension_numbers = #tpu.dot_dimension_numbers<[1], [0], [0], [1], [0, 0, 1, 1], [], []>} : vector<16x64xbf16>, vector<64x64xbf16>, vector<16x64xf32> -> vector<16x64xf32>
    %c0_23 = arith.constant 0 : index
    %c0_24 = arith.constant 0 : index
    %c0_25 = arith.constant 0 : index
    %36 = vector.load %arg8[%c0_23, %c0_24, %c0_25] : memref<2x64x64xbf16, #tpu.memory_space<vmem>>, vector<1x64x64xbf16>
    %37 = vector.shape_cast %36 : vector<1x64x64xbf16> to vector<64x64xbf16>
    %cst_26 = arith.constant dense<0.000000e+00> : vector<16x64xf32>
    %38 = tpu.matmul %32, %37, %cst_26 {dimension_numbers = #tpu.dot_dimension_numbers<[1], [0], [0], [1], [0, 0, 1, 1], [], []>} : vector<16x64xbf16>, vector<64x64xbf16>, vector<16x64xf32> -> vector<16x64xf32>
    %c0_27 = arith.constant 0 : index
    %c0_28 = arith.constant 0 : index
    %c0_29 = arith.constant 0 : index
    %39 = vector.load %arg9[%c0_27, %c0_28, %c0_29] : memref<2x64x512xbf16, #tpu.memory_space<vmem>>, vector<1x64x512xbf16>
    %40 = vector.shape_cast %39 : vector<1x64x512xbf16> to vector<64x512xbf16>
    %cst_30 = arith.constant dense<0.000000e+00> : vector<16x512xf32>
    %41 = tpu.matmul %32, %40, %cst_30 {dimension_numbers = #tpu.dot_dimension_numbers<[1], [0], [0], [1], [0, 0, 1, 1], [], []>} : vector<16x64xbf16>, vector<64x512xbf16>, vector<16x512xf32> -> vector<16x512xf32>
    %c0_31 = arith.constant 0 : index
    %c0_32 = arith.constant 0 : index
    %c0_33 = arith.constant 0 : index
    %42 = vector.load %arg10[%c0_31, %c0_32, %c0_33] : memref<2x64x4xbf16, #tpu.memory_space<vmem>>, vector<1x64x4xbf16>
    %43 = vector.shape_cast %42 : vector<1x64x4xbf16> to vector<64x4xbf16>
    %cst_34 = arith.constant dense<0.000000e+00> : vector<16x4xf32>
    %44 = tpu.matmul %32, %43, %cst_34 {dimension_numbers = #tpu.dot_dimension_numbers<[1], [0], [0], [1], [0, 0, 1, 1], [], []>} : vector<16x64xbf16>, vector<64x4xbf16>, vector<16x4xf32> -> vector<16x4xf32>
    %c0_35 = arith.constant 0 : index
    %c0_36 = arith.constant 0 : index
    %c0_37 = arith.constant 0 : index
    %45 = vector.load %arg11[%c0_35, %c0_36, %c0_37] : memref<2x4x64xf32, #tpu.memory_space<vmem>>, vector<1x4x64xf32>
    %46 = vector.shape_cast %45 : vector<1x4x64xf32> to vector<4x64xf32>
    %c0_38 = arith.constant 0 : index
    %c0_39 = arith.constant 0 : index
    %c0_40 = arith.constant 0 : index
    %47 = vector.load %arg12[%c0_38, %c0_39, %c0_40] : memref<2x1x64xf32, #tpu.memory_space<vmem>>, vector<1x1x64xf32>
    %48 = vector.shape_cast %47 : vector<1x1x64xf32> to vector<1x64xf32>
    %cst_41 = arith.constant 0.000000e+00 : f32
    %49 = vector.broadcast %cst_41 : f32 to vector<16x64xf32>
    %50 = vector.extract_strided_slice %3 {offsets = [0, 0, 0], sizes = [1, 16, 16], strides = [1, 1, 1]} : vector<4x16x16xf32> to vector<1x16x16xf32>
    %51 = vector.shape_cast %50 : vector<1x16x16xf32> to vector<16x16xf32>
    %cst_42 = arith.constant dense<0.000000e+00> : vector<16x64xf32>
    %52 = tpu.matmul %51, %38, %cst_42 {dimension_numbers = #tpu.dot_dimension_numbers<[1], [0], [0], [1], [0, 0, 1, 1], [], []>} : vector<16x16xf32>, vector<16x64xf32>, vector<16x64xf32> -> vector<16x64xf32>
    %53 = vector.extract_strided_slice %46 {offsets = [0, 0], sizes = [1, 64], strides = [1, 1]} : vector<4x64xf32> to vector<1x64xf32>
    %54 = vector.broadcast %53 : vector<1x64xf32> to vector<16x64xf32>
    %55 = arith.mulf %52, %54 : vector<16x64xf32>
    %56 = arith.addf %49, %55 : vector<16x64xf32>
    %57 = vector.extract_strided_slice %3 {offsets = [1, 0, 0], sizes = [1, 16, 16], strides = [1, 1, 1]} : vector<4x16x16xf32> to vector<1x16x16xf32>
    %58 = vector.shape_cast %57 : vector<1x16x16xf32> to vector<16x16xf32>
    %cst_43 = arith.constant dense<0.000000e+00> : vector<16x64xf32>
    %59 = tpu.matmul %58, %38, %cst_43 {dimension_numbers = #tpu.dot_dimension_numbers<[1], [0], [0], [1], [0, 0, 1, 1], [], []>} : vector<16x16xf32>, vector<16x64xf32>, vector<16x64xf32> -> vector<16x64xf32>
    %60 = vector.extract_strided_slice %46 {offsets = [1, 0], sizes = [1, 64], strides = [1, 1]} : vector<4x64xf32> to vector<1x64xf32>
    %61 = vector.broadcast %60 : vector<1x64xf32> to vector<16x64xf32>
    %62 = arith.mulf %59, %61 : vector<16x64xf32>
    %63 = arith.addf %56, %62 : vector<16x64xf32>
    %64 = vector.extract_strided_slice %3 {offsets = [2, 0, 0], sizes = [1, 16, 16], strides = [1, 1, 1]} : vector<4x16x16xf32> to vector<1x16x16xf32>
    %65 = vector.shape_cast %64 : vector<1x16x16xf32> to vector<16x16xf32>
    %cst_44 = arith.constant dense<0.000000e+00> : vector<16x64xf32>
    %66 = tpu.matmul %65, %38, %cst_44 {dimension_numbers = #tpu.dot_dimension_numbers<[1], [0], [0], [1], [0, 0, 1, 1], [], []>} : vector<16x16xf32>, vector<16x64xf32>, vector<16x64xf32> -> vector<16x64xf32>
    %67 = vector.extract_strided_slice %46 {offsets = [2, 0], sizes = [1, 64], strides = [1, 1]} : vector<4x64xf32> to vector<1x64xf32>
    %68 = vector.broadcast %67 : vector<1x64xf32> to vector<16x64xf32>
    %69 = arith.mulf %66, %68 : vector<16x64xf32>
    %70 = arith.addf %63, %69 : vector<16x64xf32>
    %71 = vector.extract_strided_slice %3 {offsets = [3, 0, 0], sizes = [1, 16, 16], strides = [1, 1, 1]} : vector<4x16x16xf32> to vector<1x16x16xf32>
    %72 = vector.shape_cast %71 : vector<1x16x16xf32> to vector<16x16xf32>
    %cst_45 = arith.constant dense<0.000000e+00> : vector<16x64xf32>
    %73 = tpu.matmul %72, %38, %cst_45 {dimension_numbers = #tpu.dot_dimension_numbers<[1], [0], [0], [1], [0, 0, 1, 1], [], []>} : vector<16x16xf32>, vector<16x64xf32>, vector<16x64xf32> -> vector<16x64xf32>
    %74 = vector.extract_strided_slice %46 {offsets = [3, 0], sizes = [1, 64], strides = [1, 1]} : vector<4x64xf32> to vector<1x64xf32>
    %75 = vector.broadcast %74 : vector<1x64xf32> to vector<16x64xf32>
    %76 = arith.mulf %73, %75 : vector<16x64xf32>
    %77 = arith.addf %70, %76 : vector<16x64xf32>
    %78 = vector.broadcast %48 : vector<1x64xf32> to vector<16x64xf32>
    %79 = arith.addf %77, %78 : vector<16x64xf32>
    %80 = arith.negf %79 : vector<16x64xf32>
    %81 = math.exp %80 : vector<16x64xf32>
    %cst_46 = arith.constant 1.000000e+00 : f32
    %82 = vector.broadcast %cst_46 : f32 to vector<16x64xf32>
    %83 = arith.addf %82, %81 : vector<16x64xf32>
    %84 = arith.divf %82, %83 : vector<16x64xf32>
    %85 = arith.mulf %79, %84 : vector<16x64xf32>
    %c0_47 = arith.constant 0 : index
    %c0_48 = arith.constant 0 : index
    %c0_49 = arith.constant 0 : index
    %86 = vector.load %arg13[%c0_47, %c0_48, %c0_49] : memref<2x4x512xf32, #tpu.memory_space<vmem>>, vector<1x4x512xf32>
    %87 = vector.shape_cast %86 : vector<1x4x512xf32> to vector<4x512xf32>
    %c0_50 = arith.constant 0 : index
    %c0_51 = arith.constant 0 : index
    %c0_52 = arith.constant 0 : index
    %88 = vector.load %arg14[%c0_50, %c0_51, %c0_52] : memref<2x1x512xf32, #tpu.memory_space<vmem>>, vector<1x1x512xf32>
    %89 = vector.shape_cast %88 : vector<1x1x512xf32> to vector<1x512xf32>
    %cst_53 = arith.constant 0.000000e+00 : f32
    %90 = vector.broadcast %cst_53 : f32 to vector<16x512xf32>
    %91 = vector.extract_strided_slice %3 {offsets = [0, 0, 0], sizes = [1, 16, 16], strides = [1, 1, 1]} : vector<4x16x16xf32> to vector<1x16x16xf32>
    %92 = vector.shape_cast %91 : vector<1x16x16xf32> to vector<16x16xf32>
    %cst_54 = arith.constant dense<0.000000e+00> : vector<16x512xf32>
    %93 = tpu.matmul %92, %41, %cst_54 {dimension_numbers = #tpu.dot_dimension_numbers<[1], [0], [0], [1], [0, 0, 1, 1], [], []>} : vector<16x16xf32>, vector<16x512xf32>, vector<16x512xf32> -> vector<16x512xf32>
    %94 = vector.extract_strided_slice %87 {offsets = [0, 0], sizes = [1, 512], strides = [1, 1]} : vector<4x512xf32> to vector<1x512xf32>
    %95 = vector.broadcast %94 : vector<1x512xf32> to vector<16x512xf32>
    %96 = arith.mulf %93, %95 : vector<16x512xf32>
    %97 = arith.addf %90, %96 : vector<16x512xf32>
    %98 = vector.extract_strided_slice %3 {offsets = [1, 0, 0], sizes = [1, 16, 16], strides = [1, 1, 1]} : vector<4x16x16xf32> to vector<1x16x16xf32>
    %99 = vector.shape_cast %98 : vector<1x16x16xf32> to vector<16x16xf32>
    %cst_55 = arith.constant dense<0.000000e+00> : vector<16x512xf32>
    %100 = tpu.matmul %99, %41, %cst_55 {dimension_numbers = #tpu.dot_dimension_numbers<[1], [0], [0], [1], [0, 0, 1, 1], [], []>} : vector<16x16xf32>, vector<16x512xf32>, vector<16x512xf32> -> vector<16x512xf32>
    %101 = vector.extract_strided_slice %87 {offsets = [1, 0], sizes = [1, 512], strides = [1, 1]} : vector<4x512xf32> to vector<1x512xf32>
    %102 = vector.broadcast %101 : vector<1x512xf32> to vector<16x512xf32>
    %103 = arith.mulf %100, %102 : vector<16x512xf32>
    %104 = arith.addf %97, %103 : vector<16x512xf32>
    %105 = vector.extract_strided_slice %3 {offsets = [2, 0, 0], sizes = [1, 16, 16], strides = [1, 1, 1]} : vector<4x16x16xf32> to vector<1x16x16xf32>
    %106 = vector.shape_cast %105 : vector<1x16x16xf32> to vector<16x16xf32>
    %cst_56 = arith.constant dense<0.000000e+00> : vector<16x512xf32>
    %107 = tpu.matmul %106, %41, %cst_56 {dimension_numbers = #tpu.dot_dimension_numbers<[1], [0], [0], [1], [0, 0, 1, 1], [], []>} : vector<16x16xf32>, vector<16x512xf32>, vector<16x512xf32> -> vector<16x512xf32>
    %108 = vector.extract_strided_slice %87 {offsets = [2, 0], sizes = [1, 512], strides = [1, 1]} : vector<4x512xf32> to vector<1x512xf32>
    %109 = vector.broadcast %108 : vector<1x512xf32> to vector<16x512xf32>
    %110 = arith.mulf %107, %109 : vector<16x512xf32>
    %111 = arith.addf %104, %110 : vector<16x512xf32>
    %112 = vector.extract_strided_slice %3 {offsets = [3, 0, 0], sizes = [1, 16, 16], strides = [1, 1, 1]} : vector<4x16x16xf32> to vector<1x16x16xf32>
    %113 = vector.shape_cast %112 : vector<1x16x16xf32> to vector<16x16xf32>
    %cst_57 = arith.constant dense<0.000000e+00> : vector<16x512xf32>
    %114 = tpu.matmul %113, %41, %cst_57 {dimension_numbers = #tpu.dot_dimension_numbers<[1], [0], [0], [1], [0, 0, 1, 1], [], []>} : vector<16x16xf32>, vector<16x512xf32>, vector<16x512xf32> -> vector<16x512xf32>
    %115 = vector.extract_strided_slice %87 {offsets = [3, 0], sizes = [1, 512], strides = [1, 1]} : vector<4x512xf32> to vector<1x512xf32>
    %116 = vector.broadcast %115 : vector<1x512xf32> to vector<16x512xf32>
    %117 = arith.mulf %114, %116 : vector<16x512xf32>
    %118 = arith.addf %111, %117 : vector<16x512xf32>
    %119 = vector.broadcast %89 : vector<1x512xf32> to vector<16x512xf32>
    %120 = arith.addf %118, %119 : vector<16x512xf32>
    %121 = arith.negf %120 : vector<16x512xf32>
    %122 = math.exp %121 : vector<16x512xf32>
    %cst_58 = arith.constant 1.000000e+00 : f32
    %123 = vector.broadcast %cst_58 : f32 to vector<16x512xf32>
    %124 = arith.addf %123, %122 : vector<16x512xf32>
    %125 = arith.divf %123, %124 : vector<16x512xf32>
    %126 = arith.mulf %120, %125 : vector<16x512xf32>
    %127 = vector.extract_strided_slice %126 {offsets = [0, 0], sizes = [16, 256], strides = [1, 1]} : vector<16x512xf32> to vector<16x256xf32>
    %128 = vector.extract_strided_slice %126 {offsets = [0, 256], sizes = [16, 256], strides = [1, 1]} : vector<16x512xf32> to vector<16x256xf32>
    %c0_59 = arith.constant 0 : index
    %c0_60 = arith.constant 0 : index
    %c0_61 = arith.constant 0 : index
    %129 = vector.load %arg16[%c0_59, %c0_60, %c0_61] : memref<2x1x4xf32, #tpu.memory_space<vmem>>, vector<1x1x4xf32>
    %130 = vector.shape_cast %129 : vector<1x1x4xf32> to vector<1x4xf32>
    %131 = vector.broadcast %130 : vector<1x4xf32> to vector<16x4xf32>
    %132 = arith.addf %44, %131 : vector<16x4xf32>
    %cst_62 = arith.constant 0.000000e+00 : f32
    %133 = vector.broadcast %cst_62 : f32 to vector<16x4xf32>
    %134 = arith.maximumf %132, %133 : vector<16x4xf32>
    %135 = math.absf %132 : vector<16x4xf32>
    %cst_63 = arith.constant 0.000000e+00 : f32
    %136 = vector.broadcast %cst_63 : f32 to vector<16x4xf32>
    %137 = arith.subf %136, %135 : vector<16x4xf32>
    %138 = math.exp %137 : vector<16x4xf32>
    %cst_64 = arith.constant 1.000000e+00 : f32
    %139 = vector.broadcast %cst_64 : f32 to vector<16x4xf32>
    %140 = arith.addf %139, %138 : vector<16x4xf32>
    %141 = math.log %140 : vector<16x4xf32>
    %142 = arith.addf %134, %141 : vector<16x4xf32>
    %c0_65 = arith.constant 0 : index
    %c0_66 = arith.constant 0 : index
    %c0_67 = arith.constant 0 : index
    %143 = vector.load %arg15[%c0_65, %c0_66, %c0_67] : memref<2x1x4xf32, #tpu.memory_space<vmem>>, vector<1x1x4xf32>
    %144 = vector.shape_cast %143 : vector<1x1x4xf32> to vector<1x4xf32>
    %145 = math.exp %144 : vector<1x4xf32>
    %cst_68 = arith.constant 0.000000e+00 : f32
    %146 = vector.broadcast %cst_68 : f32 to vector<1x4xf32>
    %147 = arith.subf %146, %145 : vector<1x4xf32>
    %148 = vector.broadcast %147 : vector<1x4xf32> to vector<16x4xf32>
    %149 = arith.mulf %142, %148 : vector<16x4xf32>
    %cst_69 = arith.constant dense<0.000000e+00> : vector<16x4xf32>
    %150 = tpu.matmul %1, %149, %cst_69 {dimension_numbers = #tpu.dot_dimension_numbers<[1], [0], [0], [1], [0, 0, 1, 1], [], []>} : vector<16x16xf32>, vector<16x4xf32>, vector<16x4xf32> -> vector<16x4xf32>
    %151 = math.exp %150 : vector<16x4xf32>
    %cst_70 = arith.constant dense<0.000000e+00> : vector<16x64xf32>
    %152 = tpu.matmul %151, %2, %cst_70 {dimension_numbers = #tpu.dot_dimension_numbers<[1], [0], [0], [1], [0, 0, 1, 1], [], []>} : vector<16x4xf32>, vector<4x64xf32>, vector<16x64xf32> -> vector<16x64xf32>
    %cst_71 = arith.constant 0.000000e+00 : f32
    %153 = vector.broadcast %cst_71 : f32 to vector<16x4xf32>
    %154 = arith.subf %153, %150 : vector<16x4xf32>
    %155 = math.exp %154 : vector<16x4xf32>
    %cst_72 = arith.constant dense<0.000000e+00> : vector<16x64xf32>
    %156 = tpu.matmul %155, %2, %cst_72 {dimension_numbers = #tpu.dot_dimension_numbers<[1], [0], [0], [1], [0, 0, 1, 1], [], []>} : vector<16x4xf32>, vector<4x64xf32>, vector<16x64xf32> -> vector<16x64xf32>
    %cst_73 = arith.constant dense<0.000000e+00> : vector<16x64xf32>
    %157 = tpu.matmul %142, %2, %cst_73 {dimension_numbers = #tpu.dot_dimension_numbers<[1], [0], [0], [1], [0, 0, 1, 1], [], []>} : vector<16x4xf32>, vector<4x64xf32>, vector<16x64xf32> -> vector<16x64xf32>
    %cst_74 = arith.constant dense<0.000000e+00> : vector<16x16xf32>
    %158 = tpu.matmul %128, %127, %cst_74 {dimension_numbers = #tpu.dot_dimension_numbers<[1], [1], [0], [0], [0, 0, 1, 0], [], []>} : vector<16x256xf32>, vector<16x256xf32>, vector<16x16xf32> -> vector<16x16xf32>
    %159 = arith.mulf %158, %1 : vector<16x16xf32>
    %160 = arith.mulf %85, %157 : vector<16x64xf32>
    %161 = arith.mulf %156, %160 : vector<16x64xf32>
    %cst_75 = arith.constant dense<0.000000e+00> : vector<16x64xf32>
    %162 = tpu.matmul %159, %161, %cst_75 {dimension_numbers = #tpu.dot_dimension_numbers<[1], [0], [0], [1], [0, 0, 1, 1], [], []>} : vector<16x16xf32>, vector<16x64xf32>, vector<16x64xf32> -> vector<16x64xf32>
    %163 = arith.mulf %152, %162 : vector<16x64xf32>
    %c0_76 = arith.constant 0 : index
    %c0_77 = arith.constant 0 : index
    %c0_78 = arith.constant 0 : index
    %164 = vector.load %arg17[%c0_76, %c0_77, %c0_78] : memref<2x1x64xf32, #tpu.memory_space<vmem>>, vector<1x1x64xf32>
    %165 = vector.shape_cast %164 : vector<1x1x64xf32> to vector<1x64xf32>
    %166 = vector.broadcast %165 : vector<1x64xf32> to vector<16x64xf32>
    %167 = arith.mulf %85, %166 : vector<16x64xf32>
    %168 = arith.addf %163, %167 : vector<16x64xf32>
    %169 = arith.negf %35 : vector<16x64xf32>
    %170 = math.exp %169 : vector<16x64xf32>
    %cst_79 = arith.constant 1.000000e+00 : f32
    %171 = vector.broadcast %cst_79 : f32 to vector<16x64xf32>
    %172 = arith.addf %171, %170 : vector<16x64xf32>
    %173 = arith.divf %171, %172 : vector<16x64xf32>
    %174 = arith.mulf %35, %173 : vector<16x64xf32>
    %175 = arith.mulf %168, %174 : vector<16x64xf32>
    %c0_80 = arith.constant 0 : index
    %c0_81 = arith.constant 0 : index
    %c0_82 = arith.constant 0 : index
    %176 = vector.load %arg18[%c0_80, %c0_81, %c0_82] : memref<2x1x64xf32, #tpu.memory_space<vmem>>, vector<1x1x64xf32>
    %177 = vector.shape_cast %176 : vector<1x1x64xf32> to vector<1x64xf32>
    %178 = arith.mulf %175, %175 : vector<16x64xf32>
    %cst_83 = arith.constant dense<0.000000e+00> : vector<16xf32>
    %179 = vector.multi_reduction <add>, %178, %cst_83 [1] : vector<16x64xf32> to vector<16xf32>
    %180 = vector.shape_cast %179 : vector<16xf32> to vector<16x1xf32>
    %cst_84 = arith.constant 6.400000e+01 : f32
    %181 = vector.broadcast %cst_84 : f32 to vector<16x1xf32>
    %182 = arith.divf %180, %181 : vector<16x1xf32>
    %cst_85 = arith.constant 9.99999974E-6 : f32
    %183 = vector.broadcast %cst_85 : f32 to vector<16x1xf32>
    %184 = arith.addf %182, %183 : vector<16x1xf32>
    %185 = math.rsqrt %184 : vector<16x1xf32>
    %186 = vector.broadcast %185 : vector<16x1xf32> to vector<16x64xf32>
    %187 = arith.mulf %175, %186 : vector<16x64xf32>
    %188 = vector.broadcast %177 : vector<1x64xf32> to vector<16x64xf32>
    %189 = arith.mulf %187, %188 : vector<16x64xf32>
    %190 = arith.truncf %189 : vector<16x64xf32> to vector<16x64xbf16>
    %c0_86 = arith.constant 0 : index
    %c0_87 = arith.constant 0 : index
    %c0_88 = arith.constant 0 : index
    %191 = vector.load %arg19[%c0_86, %c0_87, %c0_88] : memref<2x64x64xbf16, #tpu.memory_space<vmem>>, vector<1x64x64xbf16>
    %192 = vector.shape_cast %191 : vector<1x64x64xbf16> to vector<64x64xbf16>
    %cst_89 = arith.constant dense<0.000000e+00> : vector<16x64xf32>
    %193 = tpu.matmul %190, %192, %cst_89 {dimension_numbers = #tpu.dot_dimension_numbers<[1], [0], [0], [1], [0, 0, 1, 1], [], []>} : vector<16x64xbf16>, vector<64x64xbf16>, vector<16x64xf32> -> vector<16x64xf32>
    %194 = arith.truncf %193 : vector<16x64xf32> to vector<16x64xbf16>
    %c0_90 = arith.constant 0 : index
    %c0_91 = arith.constant 0 : index
    %c0_92 = arith.constant 0 : index
    %195 = vector.load %arg20[%c0_90, %c0_91, %c0_92] : memref<2x64x64xbf16, #tpu.memory_space<vmem>>, vector<1x64x64xbf16>
    %196 = vector.shape_cast %195 : vector<1x64x64xbf16> to vector<64x64xbf16>
    %cst_93 = arith.constant dense<0.000000e+00> : vector<16x64xf32>
    %197 = tpu.matmul %194, %196, %cst_93 {dimension_numbers = #tpu.dot_dimension_numbers<[1], [0], [0], [1], [0, 0, 1, 1], [], []>} : vector<16x64xbf16>, vector<64x64xbf16>, vector<16x64xf32> -> vector<16x64xf32>
    %198 = arith.addf %0, %197 : vector<16x64xf32>
    %c0_94 = arith.constant 0 : index
    %c0_95 = arith.constant 0 : index
    %c0_96 = arith.constant 0 : index
    %199 = vector.load %arg21[%c0_94, %c0_95, %c0_96] : memref<2x1x64xf32, #tpu.memory_space<vmem>>, vector<1x1x64xf32>
    %200 = vector.shape_cast %199 : vector<1x1x64xf32> to vector<1x64xf32>
    %201 = arith.mulf %198, %198 : vector<16x64xf32>
    %cst_97 = arith.constant dense<0.000000e+00> : vector<16xf32>
    %202 = vector.multi_reduction <add>, %201, %cst_97 [1] : vector<16x64xf32> to vector<16xf32>
    %203 = vector.shape_cast %202 : vector<16xf32> to vector<16x1xf32>
    %cst_98 = arith.constant 6.400000e+01 : f32
    %204 = vector.broadcast %cst_98 : f32 to vector<16x1xf32>
    %205 = arith.divf %203, %204 : vector<16x1xf32>
    %cst_99 = arith.constant 9.99999974E-6 : f32
    %206 = vector.broadcast %cst_99 : f32 to vector<16x1xf32>
    %207 = arith.addf %205, %206 : vector<16x1xf32>
    %208 = math.rsqrt %207 : vector<16x1xf32>
    %209 = vector.broadcast %208 : vector<16x1xf32> to vector<16x64xf32>
    %210 = arith.mulf %198, %209 : vector<16x64xf32>
    %211 = vector.broadcast %200 : vector<1x64xf32> to vector<16x64xf32>
    %212 = arith.mulf %210, %211 : vector<16x64xf32>
    %213 = arith.truncf %212 : vector<16x64xf32> to vector<16x64xbf16>
    %c0_100 = arith.constant 0 : index
    %c0_101 = arith.constant 0 : index
    %c0_102 = arith.constant 0 : index
    %214 = vector.load %arg22[%c0_100, %c0_101, %c0_102] : memref<2x64x512xbf16, #tpu.memory_space<vmem>>, vector<1x64x512xbf16>
    %215 = vector.shape_cast %214 : vector<1x64x512xbf16> to vector<64x512xbf16>
    %cst_103 = arith.constant dense<0.000000e+00> : vector<16x512xf32>
    %216 = tpu.matmul %213, %215, %cst_103 {dimension_numbers = #tpu.dot_dimension_numbers<[1], [0], [0], [1], [0, 0, 1, 1], [], []>} : vector<16x64xbf16>, vector<64x512xbf16>, vector<16x512xf32> -> vector<16x512xf32>
    %217 = vector.extract_strided_slice %216 {offsets = [0, 0], sizes = [16, 256], strides = [1, 1]} : vector<16x512xf32> to vector<16x256xf32>
    %218 = vector.extract_strided_slice %216 {offsets = [0, 256], sizes = [16, 256], strides = [1, 1]} : vector<16x512xf32> to vector<16x256xf32>
    %219 = arith.negf %217 : vector<16x256xf32>
    %220 = math.exp %219 : vector<16x256xf32>
    %cst_104 = arith.constant 1.000000e+00 : f32
    %221 = vector.broadcast %cst_104 : f32 to vector<16x256xf32>
    %222 = arith.addf %221, %220 : vector<16x256xf32>
    %223 = arith.divf %221, %222 : vector<16x256xf32>
    %224 = arith.mulf %217, %223 : vector<16x256xf32>
    %225 = arith.mulf %224, %218 : vector<16x256xf32>
    %226 = arith.truncf %225 : vector<16x256xf32> to vector<16x256xbf16>
    %c0_105 = arith.constant 0 : index
    %c0_106 = arith.constant 0 : index
    %c0_107 = arith.constant 0 : index
    %227 = vector.load %arg23[%c0_105, %c0_106, %c0_107] : memref<2x256x64xbf16, #tpu.memory_space<vmem>>, vector<1x256x64xbf16>
    %228 = vector.shape_cast %227 : vector<1x256x64xbf16> to vector<256x64xbf16>
    %cst_108 = arith.constant dense<0.000000e+00> : vector<16x64xf32>
    %229 = tpu.matmul %226, %228, %cst_108 {dimension_numbers = #tpu.dot_dimension_numbers<[1], [0], [0], [1], [0, 0, 1, 1], [], []>} : vector<16x256xbf16>, vector<256x64xbf16>, vector<16x64xf32> -> vector<16x64xf32>
    %230 = arith.addf %198, %229 : vector<16x64xf32>
    %c1 = arith.constant 1 : index
    %c0_109 = arith.constant 0 : index
    %c0_110 = arith.constant 0 : index
    %231 = vector.load %arg5[%c1, %c0_109, %c0_110] : memref<2x1x64xf32, #tpu.memory_space<vmem>>, vector<1x1x64xf32>
    %232 = vector.shape_cast %231 : vector<1x1x64xf32> to vector<1x64xf32>
    %233 = arith.mulf %230, %230 : vector<16x64xf32>
    %cst_111 = arith.constant dense<0.000000e+00> : vector<16xf32>
    %234 = vector.multi_reduction <add>, %233, %cst_111 [1] : vector<16x64xf32> to vector<16xf32>
    %235 = vector.shape_cast %234 : vector<16xf32> to vector<16x1xf32>
    %cst_112 = arith.constant 6.400000e+01 : f32
    %236 = vector.broadcast %cst_112 : f32 to vector<16x1xf32>
    %237 = arith.divf %235, %236 : vector<16x1xf32>
    %cst_113 = arith.constant 9.99999974E-6 : f32
    %238 = vector.broadcast %cst_113 : f32 to vector<16x1xf32>
    %239 = arith.addf %237, %238 : vector<16x1xf32>
    %240 = math.rsqrt %239 : vector<16x1xf32>
    %241 = vector.broadcast %240 : vector<16x1xf32> to vector<16x64xf32>
    %242 = arith.mulf %230, %241 : vector<16x64xf32>
    %243 = vector.broadcast %232 : vector<1x64xf32> to vector<16x64xf32>
    %244 = arith.mulf %242, %243 : vector<16x64xf32>
    %c1_114 = arith.constant 1 : index
    %c0_115 = arith.constant 0 : index
    %c0_116 = arith.constant 0 : index
    %245 = vector.load %arg6[%c1_114, %c0_115, %c0_116] : memref<2x1x64xf32, #tpu.memory_space<vmem>>, vector<1x1x64xf32>
    %246 = vector.shape_cast %245 : vector<1x1x64xf32> to vector<1x64xf32>
    %247 = arith.mulf %244, %244 : vector<16x64xf32>
    %cst_117 = arith.constant dense<0.000000e+00> : vector<16xf32>
    %248 = vector.multi_reduction <add>, %247, %cst_117 [1] : vector<16x64xf32> to vector<16xf32>
    %249 = vector.shape_cast %248 : vector<16xf32> to vector<16x1xf32>
    %cst_118 = arith.constant 6.400000e+01 : f32
    %250 = vector.broadcast %cst_118 : f32 to vector<16x1xf32>
    %251 = arith.divf %249, %250 : vector<16x1xf32>
    %cst_119 = arith.constant 9.99999974E-6 : f32
    %252 = vector.broadcast %cst_119 : f32 to vector<16x1xf32>
    %253 = arith.addf %251, %252 : vector<16x1xf32>
    %254 = math.rsqrt %253 : vector<16x1xf32>
    %255 = vector.broadcast %254 : vector<16x1xf32> to vector<16x64xf32>
    %256 = arith.mulf %244, %255 : vector<16x64xf32>
    %257 = vector.broadcast %246 : vector<1x64xf32> to vector<16x64xf32>
    %258 = arith.mulf %256, %257 : vector<16x64xf32>
    %259 = arith.truncf %258 : vector<16x64xf32> to vector<16x64xbf16>
    %c1_120 = arith.constant 1 : index
    %c0_121 = arith.constant 0 : index
    %c0_122 = arith.constant 0 : index
    %260 = vector.load %arg7[%c1_120, %c0_121, %c0_122] : memref<2x64x64xbf16, #tpu.memory_space<vmem>>, vector<1x64x64xbf16>
    %261 = vector.shape_cast %260 : vector<1x64x64xbf16> to vector<64x64xbf16>
    %cst_123 = arith.constant dense<0.000000e+00> : vector<16x64xf32>
    %262 = tpu.matmul %259, %261, %cst_123 {dimension_numbers = #tpu.dot_dimension_numbers<[1], [0], [0], [1], [0, 0, 1, 1], [], []>} : vector<16x64xbf16>, vector<64x64xbf16>, vector<16x64xf32> -> vector<16x64xf32>
    %c1_124 = arith.constant 1 : index
    %c0_125 = arith.constant 0 : index
    %c0_126 = arith.constant 0 : index
    %263 = vector.load %arg8[%c1_124, %c0_125, %c0_126] : memref<2x64x64xbf16, #tpu.memory_space<vmem>>, vector<1x64x64xbf16>
    %264 = vector.shape_cast %263 : vector<1x64x64xbf16> to vector<64x64xbf16>
    %cst_127 = arith.constant dense<0.000000e+00> : vector<16x64xf32>
    %265 = tpu.matmul %259, %264, %cst_127 {dimension_numbers = #tpu.dot_dimension_numbers<[1], [0], [0], [1], [0, 0, 1, 1], [], []>} : vector<16x64xbf16>, vector<64x64xbf16>, vector<16x64xf32> -> vector<16x64xf32>
    %c1_128 = arith.constant 1 : index
    %c0_129 = arith.constant 0 : index
    %c0_130 = arith.constant 0 : index
    %266 = vector.load %arg9[%c1_128, %c0_129, %c0_130] : memref<2x64x512xbf16, #tpu.memory_space<vmem>>, vector<1x64x512xbf16>
    %267 = vector.shape_cast %266 : vector<1x64x512xbf16> to vector<64x512xbf16>
    %cst_131 = arith.constant dense<0.000000e+00> : vector<16x512xf32>
    %268 = tpu.matmul %259, %267, %cst_131 {dimension_numbers = #tpu.dot_dimension_numbers<[1], [0], [0], [1], [0, 0, 1, 1], [], []>} : vector<16x64xbf16>, vector<64x512xbf16>, vector<16x512xf32> -> vector<16x512xf32>
    %c1_132 = arith.constant 1 : index
    %c0_133 = arith.constant 0 : index
    %c0_134 = arith.constant 0 : index
    %269 = vector.load %arg10[%c1_132, %c0_133, %c0_134] : memref<2x64x4xbf16, #tpu.memory_space<vmem>>, vector<1x64x4xbf16>
    %270 = vector.shape_cast %269 : vector<1x64x4xbf16> to vector<64x4xbf16>
    %cst_135 = arith.constant dense<0.000000e+00> : vector<16x4xf32>
    %271 = tpu.matmul %259, %270, %cst_135 {dimension_numbers = #tpu.dot_dimension_numbers<[1], [0], [0], [1], [0, 0, 1, 1], [], []>} : vector<16x64xbf16>, vector<64x4xbf16>, vector<16x4xf32> -> vector<16x4xf32>
    %c1_136 = arith.constant 1 : index
    %c0_137 = arith.constant 0 : index
    %c0_138 = arith.constant 0 : index
    %272 = vector.load %arg11[%c1_136, %c0_137, %c0_138] : memref<2x4x64xf32, #tpu.memory_space<vmem>>, vector<1x4x64xf32>
    %273 = vector.shape_cast %272 : vector<1x4x64xf32> to vector<4x64xf32>
    %c1_139 = arith.constant 1 : index
    %c0_140 = arith.constant 0 : index
    %c0_141 = arith.constant 0 : index
    %274 = vector.load %arg12[%c1_139, %c0_140, %c0_141] : memref<2x1x64xf32, #tpu.memory_space<vmem>>, vector<1x1x64xf32>
    %275 = vector.shape_cast %274 : vector<1x1x64xf32> to vector<1x64xf32>
    %cst_142 = arith.constant 0.000000e+00 : f32
    %276 = vector.broadcast %cst_142 : f32 to vector<16x64xf32>
    %277 = vector.extract_strided_slice %3 {offsets = [0, 0, 0], sizes = [1, 16, 16], strides = [1, 1, 1]} : vector<4x16x16xf32> to vector<1x16x16xf32>
    %278 = vector.shape_cast %277 : vector<1x16x16xf32> to vector<16x16xf32>
    %cst_143 = arith.constant dense<0.000000e+00> : vector<16x64xf32>
    %279 = tpu.matmul %278, %265, %cst_143 {dimension_numbers = #tpu.dot_dimension_numbers<[1], [0], [0], [1], [0, 0, 1, 1], [], []>} : vector<16x16xf32>, vector<16x64xf32>, vector<16x64xf32> -> vector<16x64xf32>
    %280 = vector.extract_strided_slice %273 {offsets = [0, 0], sizes = [1, 64], strides = [1, 1]} : vector<4x64xf32> to vector<1x64xf32>
    %281 = vector.broadcast %280 : vector<1x64xf32> to vector<16x64xf32>
    %282 = arith.mulf %279, %281 : vector<16x64xf32>
    %283 = arith.addf %276, %282 : vector<16x64xf32>
    %284 = vector.extract_strided_slice %3 {offsets = [1, 0, 0], sizes = [1, 16, 16], strides = [1, 1, 1]} : vector<4x16x16xf32> to vector<1x16x16xf32>
    %285 = vector.shape_cast %284 : vector<1x16x16xf32> to vector<16x16xf32>
    %cst_144 = arith.constant dense<0.000000e+00> : vector<16x64xf32>
    %286 = tpu.matmul %285, %265, %cst_144 {dimension_numbers = #tpu.dot_dimension_numbers<[1], [0], [0], [1], [0, 0, 1, 1], [], []>} : vector<16x16xf32>, vector<16x64xf32>, vector<16x64xf32> -> vector<16x64xf32>
    %287 = vector.extract_strided_slice %273 {offsets = [1, 0], sizes = [1, 64], strides = [1, 1]} : vector<4x64xf32> to vector<1x64xf32>
    %288 = vector.broadcast %287 : vector<1x64xf32> to vector<16x64xf32>
    %289 = arith.mulf %286, %288 : vector<16x64xf32>
    %290 = arith.addf %283, %289 : vector<16x64xf32>
    %291 = vector.extract_strided_slice %3 {offsets = [2, 0, 0], sizes = [1, 16, 16], strides = [1, 1, 1]} : vector<4x16x16xf32> to vector<1x16x16xf32>
    %292 = vector.shape_cast %291 : vector<1x16x16xf32> to vector<16x16xf32>
    %cst_145 = arith.constant dense<0.000000e+00> : vector<16x64xf32>
    %293 = tpu.matmul %292, %265, %cst_145 {dimension_numbers = #tpu.dot_dimension_numbers<[1], [0], [0], [1], [0, 0, 1, 1], [], []>} : vector<16x16xf32>, vector<16x64xf32>, vector<16x64xf32> -> vector<16x64xf32>
    %294 = vector.extract_strided_slice %273 {offsets = [2, 0], sizes = [1, 64], strides = [1, 1]} : vector<4x64xf32> to vector<1x64xf32>
    %295 = vector.broadcast %294 : vector<1x64xf32> to vector<16x64xf32>
    %296 = arith.mulf %293, %295 : vector<16x64xf32>
    %297 = arith.addf %290, %296 : vector<16x64xf32>
    %298 = vector.extract_strided_slice %3 {offsets = [3, 0, 0], sizes = [1, 16, 16], strides = [1, 1, 1]} : vector<4x16x16xf32> to vector<1x16x16xf32>
    %299 = vector.shape_cast %298 : vector<1x16x16xf32> to vector<16x16xf32>
    %cst_146 = arith.constant dense<0.000000e+00> : vector<16x64xf32>
    %300 = tpu.matmul %299, %265, %cst_146 {dimension_numbers = #tpu.dot_dimension_numbers<[1], [0], [0], [1], [0, 0, 1, 1], [], []>} : vector<16x16xf32>, vector<16x64xf32>, vector<16x64xf32> -> vector<16x64xf32>
    %301 = vector.extract_strided_slice %273 {offsets = [3, 0], sizes = [1, 64], strides = [1, 1]} : vector<4x64xf32> to vector<1x64xf32>
    %302 = vector.broadcast %301 : vector<1x64xf32> to vector<16x64xf32>
    %303 = arith.mulf %300, %302 : vector<16x64xf32>
    %304 = arith.addf %297, %303 : vector<16x64xf32>
    %305 = vector.broadcast %275 : vector<1x64xf32> to vector<16x64xf32>
    %306 = arith.addf %304, %305 : vector<16x64xf32>
    %307 = arith.negf %306 : vector<16x64xf32>
    %308 = math.exp %307 : vector<16x64xf32>
    %cst_147 = arith.constant 1.000000e+00 : f32
    %309 = vector.broadcast %cst_147 : f32 to vector<16x64xf32>
    %310 = arith.addf %309, %308 : vector<16x64xf32>
    %311 = arith.divf %309, %310 : vector<16x64xf32>
    %312 = arith.mulf %306, %311 : vector<16x64xf32>
    %c1_148 = arith.constant 1 : index
    %c0_149 = arith.constant 0 : index
    %c0_150 = arith.constant 0 : index
    %313 = vector.load %arg13[%c1_148, %c0_149, %c0_150] : memref<2x4x512xf32, #tpu.memory_space<vmem>>, vector<1x4x512xf32>
    %314 = vector.shape_cast %313 : vector<1x4x512xf32> to vector<4x512xf32>
    %c1_151 = arith.constant 1 : index
    %c0_152 = arith.constant 0 : index
    %c0_153 = arith.constant 0 : index
    %315 = vector.load %arg14[%c1_151, %c0_152, %c0_153] : memref<2x1x512xf32, #tpu.memory_space<vmem>>, vector<1x1x512xf32>
    %316 = vector.shape_cast %315 : vector<1x1x512xf32> to vector<1x512xf32>
    %cst_154 = arith.constant 0.000000e+00 : f32
    %317 = vector.broadcast %cst_154 : f32 to vector<16x512xf32>
    %318 = vector.extract_strided_slice %3 {offsets = [0, 0, 0], sizes = [1, 16, 16], strides = [1, 1, 1]} : vector<4x16x16xf32> to vector<1x16x16xf32>
    %319 = vector.shape_cast %318 : vector<1x16x16xf32> to vector<16x16xf32>
    %cst_155 = arith.constant dense<0.000000e+00> : vector<16x512xf32>
    %320 = tpu.matmul %319, %268, %cst_155 {dimension_numbers = #tpu.dot_dimension_numbers<[1], [0], [0], [1], [0, 0, 1, 1], [], []>} : vector<16x16xf32>, vector<16x512xf32>, vector<16x512xf32> -> vector<16x512xf32>
    %321 = vector.extract_strided_slice %314 {offsets = [0, 0], sizes = [1, 512], strides = [1, 1]} : vector<4x512xf32> to vector<1x512xf32>
    %322 = vector.broadcast %321 : vector<1x512xf32> to vector<16x512xf32>
    %323 = arith.mulf %320, %322 : vector<16x512xf32>
    %324 = arith.addf %317, %323 : vector<16x512xf32>
    %325 = vector.extract_strided_slice %3 {offsets = [1, 0, 0], sizes = [1, 16, 16], strides = [1, 1, 1]} : vector<4x16x16xf32> to vector<1x16x16xf32>
    %326 = vector.shape_cast %325 : vector<1x16x16xf32> to vector<16x16xf32>
    %cst_156 = arith.constant dense<0.000000e+00> : vector<16x512xf32>
    %327 = tpu.matmul %326, %268, %cst_156 {dimension_numbers = #tpu.dot_dimension_numbers<[1], [0], [0], [1], [0, 0, 1, 1], [], []>} : vector<16x16xf32>, vector<16x512xf32>, vector<16x512xf32> -> vector<16x512xf32>
    %328 = vector.extract_strided_slice %314 {offsets = [1, 0], sizes = [1, 512], strides = [1, 1]} : vector<4x512xf32> to vector<1x512xf32>
    %329 = vector.broadcast %328 : vector<1x512xf32> to vector<16x512xf32>
    %330 = arith.mulf %327, %329 : vector<16x512xf32>
    %331 = arith.addf %324, %330 : vector<16x512xf32>
    %332 = vector.extract_strided_slice %3 {offsets = [2, 0, 0], sizes = [1, 16, 16], strides = [1, 1, 1]} : vector<4x16x16xf32> to vector<1x16x16xf32>
    %333 = vector.shape_cast %332 : vector<1x16x16xf32> to vector<16x16xf32>
    %cst_157 = arith.constant dense<0.000000e+00> : vector<16x512xf32>
    %334 = tpu.matmul %333, %268, %cst_157 {dimension_numbers = #tpu.dot_dimension_numbers<[1], [0], [0], [1], [0, 0, 1, 1], [], []>} : vector<16x16xf32>, vector<16x512xf32>, vector<16x512xf32> -> vector<16x512xf32>
    %335 = vector.extract_strided_slice %314 {offsets = [2, 0], sizes = [1, 512], strides = [1, 1]} : vector<4x512xf32> to vector<1x512xf32>
    %336 = vector.broadcast %335 : vector<1x512xf32> to vector<16x512xf32>
    %337 = arith.mulf %334, %336 : vector<16x512xf32>
    %338 = arith.addf %331, %337 : vector<16x512xf32>
    %339 = vector.extract_strided_slice %3 {offsets = [3, 0, 0], sizes = [1, 16, 16], strides = [1, 1, 1]} : vector<4x16x16xf32> to vector<1x16x16xf32>
    %340 = vector.shape_cast %339 : vector<1x16x16xf32> to vector<16x16xf32>
    %cst_158 = arith.constant dense<0.000000e+00> : vector<16x512xf32>
    %341 = tpu.matmul %340, %268, %cst_158 {dimension_numbers = #tpu.dot_dimension_numbers<[1], [0], [0], [1], [0, 0, 1, 1], [], []>} : vector<16x16xf32>, vector<16x512xf32>, vector<16x512xf32> -> vector<16x512xf32>
    %342 = vector.extract_strided_slice %314 {offsets = [3, 0], sizes = [1, 512], strides = [1, 1]} : vector<4x512xf32> to vector<1x512xf32>
    %343 = vector.broadcast %342 : vector<1x512xf32> to vector<16x512xf32>
    %344 = arith.mulf %341, %343 : vector<16x512xf32>
    %345 = arith.addf %338, %344 : vector<16x512xf32>
    %346 = vector.broadcast %316 : vector<1x512xf32> to vector<16x512xf32>
    %347 = arith.addf %345, %346 : vector<16x512xf32>
    %348 = arith.negf %347 : vector<16x512xf32>
    %349 = math.exp %348 : vector<16x512xf32>
    %cst_159 = arith.constant 1.000000e+00 : f32
    %350 = vector.broadcast %cst_159 : f32 to vector<16x512xf32>
    %351 = arith.addf %350, %349 : vector<16x512xf32>
    %352 = arith.divf %350, %351 : vector<16x512xf32>
    %353 = arith.mulf %347, %352 : vector<16x512xf32>
    %354 = vector.extract_strided_slice %353 {offsets = [0, 0], sizes = [16, 256], strides = [1, 1]} : vector<16x512xf32> to vector<16x256xf32>
    %355 = vector.extract_strided_slice %353 {offsets = [0, 256], sizes = [16, 256], strides = [1, 1]} : vector<16x512xf32> to vector<16x256xf32>
    %c1_160 = arith.constant 1 : index
    %c0_161 = arith.constant 0 : index
    %c0_162 = arith.constant 0 : index
    %356 = vector.load %arg16[%c1_160, %c0_161, %c0_162] : memref<2x1x4xf32, #tpu.memory_space<vmem>>, vector<1x1x4xf32>
    %357 = vector.shape_cast %356 : vector<1x1x4xf32> to vector<1x4xf32>
    %358 = vector.broadcast %357 : vector<1x4xf32> to vector<16x4xf32>
    %359 = arith.addf %271, %358 : vector<16x4xf32>
    %cst_163 = arith.constant 0.000000e+00 : f32
    %360 = vector.broadcast %cst_163 : f32 to vector<16x4xf32>
    %361 = arith.maximumf %359, %360 : vector<16x4xf32>
    %362 = math.absf %359 : vector<16x4xf32>
    %cst_164 = arith.constant 0.000000e+00 : f32
    %363 = vector.broadcast %cst_164 : f32 to vector<16x4xf32>
    %364 = arith.subf %363, %362 : vector<16x4xf32>
    %365 = math.exp %364 : vector<16x4xf32>
    %cst_165 = arith.constant 1.000000e+00 : f32
    %366 = vector.broadcast %cst_165 : f32 to vector<16x4xf32>
    %367 = arith.addf %366, %365 : vector<16x4xf32>
    %368 = math.log %367 : vector<16x4xf32>
    %369 = arith.addf %361, %368 : vector<16x4xf32>
    %c1_166 = arith.constant 1 : index
    %c0_167 = arith.constant 0 : index
    %c0_168 = arith.constant 0 : index
    %370 = vector.load %arg15[%c1_166, %c0_167, %c0_168] : memref<2x1x4xf32, #tpu.memory_space<vmem>>, vector<1x1x4xf32>
    %371 = vector.shape_cast %370 : vector<1x1x4xf32> to vector<1x4xf32>
    %372 = math.exp %371 : vector<1x4xf32>
    %cst_169 = arith.constant 0.000000e+00 : f32
    %373 = vector.broadcast %cst_169 : f32 to vector<1x4xf32>
    %374 = arith.subf %373, %372 : vector<1x4xf32>
    %375 = vector.broadcast %374 : vector<1x4xf32> to vector<16x4xf32>
    %376 = arith.mulf %369, %375 : vector<16x4xf32>
    %cst_170 = arith.constant dense<0.000000e+00> : vector<16x4xf32>
    %377 = tpu.matmul %1, %376, %cst_170 {dimension_numbers = #tpu.dot_dimension_numbers<[1], [0], [0], [1], [0, 0, 1, 1], [], []>} : vector<16x16xf32>, vector<16x4xf32>, vector<16x4xf32> -> vector<16x4xf32>
    %378 = math.exp %377 : vector<16x4xf32>
    %cst_171 = arith.constant dense<0.000000e+00> : vector<16x64xf32>
    %379 = tpu.matmul %378, %2, %cst_171 {dimension_numbers = #tpu.dot_dimension_numbers<[1], [0], [0], [1], [0, 0, 1, 1], [], []>} : vector<16x4xf32>, vector<4x64xf32>, vector<16x64xf32> -> vector<16x64xf32>
    %cst_172 = arith.constant 0.000000e+00 : f32
    %380 = vector.broadcast %cst_172 : f32 to vector<16x4xf32>
    %381 = arith.subf %380, %377 : vector<16x4xf32>
    %382 = math.exp %381 : vector<16x4xf32>
    %cst_173 = arith.constant dense<0.000000e+00> : vector<16x64xf32>
    %383 = tpu.matmul %382, %2, %cst_173 {dimension_numbers = #tpu.dot_dimension_numbers<[1], [0], [0], [1], [0, 0, 1, 1], [], []>} : vector<16x4xf32>, vector<4x64xf32>, vector<16x64xf32> -> vector<16x64xf32>
    %cst_174 = arith.constant dense<0.000000e+00> : vector<16x64xf32>
    %384 = tpu.matmul %369, %2, %cst_174 {dimension_numbers = #tpu.dot_dimension_numbers<[1], [0], [0], [1], [0, 0, 1, 1], [], []>} : vector<16x4xf32>, vector<4x64xf32>, vector<16x64xf32> -> vector<16x64xf32>
    %cst_175 = arith.constant dense<0.000000e+00> : vector<16x16xf32>
    %385 = tpu.matmul %355, %354, %cst_175 {dimension_numbers = #tpu.dot_dimension_numbers<[1], [1], [0], [0], [0, 0, 1, 0], [], []>} : vector<16x256xf32>, vector<16x256xf32>, vector<16x16xf32> -> vector<16x16xf32>
    %386 = arith.mulf %385, %1 : vector<16x16xf32>
    %387 = arith.mulf %312, %384 : vector<16x64xf32>
    %388 = arith.mulf %383, %387 : vector<16x64xf32>
    %cst_176 = arith.constant dense<0.000000e+00> : vector<16x64xf32>
    %389 = tpu.matmul %386, %388, %cst_176 {dimension_numbers = #tpu.dot_dimension_numbers<[1], [0], [0], [1], [0, 0, 1, 1], [], []>} : vector<16x16xf32>, vector<16x64xf32>, vector<16x64xf32> -> vector<16x64xf32>
    %390 = arith.mulf %379, %389 : vector<16x64xf32>
    %c1_177 = arith.constant 1 : index
    %c0_178 = arith.constant 0 : index
    %c0_179 = arith.constant 0 : index
    %391 = vector.load %arg17[%c1_177, %c0_178, %c0_179] : memref<2x1x64xf32, #tpu.memory_space<vmem>>, vector<1x1x64xf32>
    %392 = vector.shape_cast %391 : vector<1x1x64xf32> to vector<1x64xf32>
    %393 = vector.broadcast %392 : vector<1x64xf32> to vector<16x64xf32>
    %394 = arith.mulf %312, %393 : vector<16x64xf32>
    %395 = arith.addf %390, %394 : vector<16x64xf32>
    %396 = arith.negf %262 : vector<16x64xf32>
    %397 = math.exp %396 : vector<16x64xf32>
    %cst_180 = arith.constant 1.000000e+00 : f32
    %398 = vector.broadcast %cst_180 : f32 to vector<16x64xf32>
    %399 = arith.addf %398, %397 : vector<16x64xf32>
    %400 = arith.divf %398, %399 : vector<16x64xf32>
    %401 = arith.mulf %262, %400 : vector<16x64xf32>
    %402 = arith.mulf %395, %401 : vector<16x64xf32>
    %c1_181 = arith.constant 1 : index
    %c0_182 = arith.constant 0 : index
    %c0_183 = arith.constant 0 : index
    %403 = vector.load %arg18[%c1_181, %c0_182, %c0_183] : memref<2x1x64xf32, #tpu.memory_space<vmem>>, vector<1x1x64xf32>
    %404 = vector.shape_cast %403 : vector<1x1x64xf32> to vector<1x64xf32>
    %405 = arith.mulf %402, %402 : vector<16x64xf32>
    %cst_184 = arith.constant dense<0.000000e+00> : vector<16xf32>
    %406 = vector.multi_reduction <add>, %405, %cst_184 [1] : vector<16x64xf32> to vector<16xf32>
    %407 = vector.shape_cast %406 : vector<16xf32> to vector<16x1xf32>
    %cst_185 = arith.constant 6.400000e+01 : f32
    %408 = vector.broadcast %cst_185 : f32 to vector<16x1xf32>
    %409 = arith.divf %407, %408 : vector<16x1xf32>
    %cst_186 = arith.constant 9.99999974E-6 : f32
    %410 = vector.broadcast %cst_186 : f32 to vector<16x1xf32>
    %411 = arith.addf %409, %410 : vector<16x1xf32>
    %412 = math.rsqrt %411 : vector<16x1xf32>
    %413 = vector.broadcast %412 : vector<16x1xf32> to vector<16x64xf32>
    %414 = arith.mulf %402, %413 : vector<16x64xf32>
    %415 = vector.broadcast %404 : vector<1x64xf32> to vector<16x64xf32>
    %416 = arith.mulf %414, %415 : vector<16x64xf32>
    %417 = arith.truncf %416 : vector<16x64xf32> to vector<16x64xbf16>
    %c1_187 = arith.constant 1 : index
    %c0_188 = arith.constant 0 : index
    %c0_189 = arith.constant 0 : index
    %418 = vector.load %arg19[%c1_187, %c0_188, %c0_189] : memref<2x64x64xbf16, #tpu.memory_space<vmem>>, vector<1x64x64xbf16>
    %419 = vector.shape_cast %418 : vector<1x64x64xbf16> to vector<64x64xbf16>
    %cst_190 = arith.constant dense<0.000000e+00> : vector<16x64xf32>
    %420 = tpu.matmul %417, %419, %cst_190 {dimension_numbers = #tpu.dot_dimension_numbers<[1], [0], [0], [1], [0, 0, 1, 1], [], []>} : vector<16x64xbf16>, vector<64x64xbf16>, vector<16x64xf32> -> vector<16x64xf32>
    %421 = arith.truncf %420 : vector<16x64xf32> to vector<16x64xbf16>
    %c1_191 = arith.constant 1 : index
    %c0_192 = arith.constant 0 : index
    %c0_193 = arith.constant 0 : index
    %422 = vector.load %arg20[%c1_191, %c0_192, %c0_193] : memref<2x64x64xbf16, #tpu.memory_space<vmem>>, vector<1x64x64xbf16>
    %423 = vector.shape_cast %422 : vector<1x64x64xbf16> to vector<64x64xbf16>
    %cst_194 = arith.constant dense<0.000000e+00> : vector<16x64xf32>
    %424 = tpu.matmul %421, %423, %cst_194 {dimension_numbers = #tpu.dot_dimension_numbers<[1], [0], [0], [1], [0, 0, 1, 1], [], []>} : vector<16x64xbf16>, vector<64x64xbf16>, vector<16x64xf32> -> vector<16x64xf32>
    %425 = arith.addf %230, %424 : vector<16x64xf32>
    %c1_195 = arith.constant 1 : index
    %c0_196 = arith.constant 0 : index
    %c0_197 = arith.constant 0 : index
    %426 = vector.load %arg21[%c1_195, %c0_196, %c0_197] : memref<2x1x64xf32, #tpu.memory_space<vmem>>, vector<1x1x64xf32>
    %427 = vector.shape_cast %426 : vector<1x1x64xf32> to vector<1x64xf32>
    %428 = arith.mulf %425, %425 : vector<16x64xf32>
    %cst_198 = arith.constant dense<0.000000e+00> : vector<16xf32>
    %429 = vector.multi_reduction <add>, %428, %cst_198 [1] : vector<16x64xf32> to vector<16xf32>
    %430 = vector.shape_cast %429 : vector<16xf32> to vector<16x1xf32>
    %cst_199 = arith.constant 6.400000e+01 : f32
    %431 = vector.broadcast %cst_199 : f32 to vector<16x1xf32>
    %432 = arith.divf %430, %431 : vector<16x1xf32>
    %cst_200 = arith.constant 9.99999974E-6 : f32
    %433 = vector.broadcast %cst_200 : f32 to vector<16x1xf32>
    %434 = arith.addf %432, %433 : vector<16x1xf32>
    %435 = math.rsqrt %434 : vector<16x1xf32>
    %436 = vector.broadcast %435 : vector<16x1xf32> to vector<16x64xf32>
    %437 = arith.mulf %425, %436 : vector<16x64xf32>
    %438 = vector.broadcast %427 : vector<1x64xf32> to vector<16x64xf32>
    %439 = arith.mulf %437, %438 : vector<16x64xf32>
    %440 = arith.truncf %439 : vector<16x64xf32> to vector<16x64xbf16>
    %c1_201 = arith.constant 1 : index
    %c0_202 = arith.constant 0 : index
    %c0_203 = arith.constant 0 : index
    %441 = vector.load %arg22[%c1_201, %c0_202, %c0_203] : memref<2x64x512xbf16, #tpu.memory_space<vmem>>, vector<1x64x512xbf16>
    %442 = vector.shape_cast %441 : vector<1x64x512xbf16> to vector<64x512xbf16>
    %cst_204 = arith.constant dense<0.000000e+00> : vector<16x512xf32>
    %443 = tpu.matmul %440, %442, %cst_204 {dimension_numbers = #tpu.dot_dimension_numbers<[1], [0], [0], [1], [0, 0, 1, 1], [], []>} : vector<16x64xbf16>, vector<64x512xbf16>, vector<16x512xf32> -> vector<16x512xf32>
    %444 = vector.extract_strided_slice %443 {offsets = [0, 0], sizes = [16, 256], strides = [1, 1]} : vector<16x512xf32> to vector<16x256xf32>
    %445 = vector.extract_strided_slice %443 {offsets = [0, 256], sizes = [16, 256], strides = [1, 1]} : vector<16x512xf32> to vector<16x256xf32>
    %446 = arith.negf %444 : vector<16x256xf32>
    %447 = math.exp %446 : vector<16x256xf32>
    %cst_205 = arith.constant 1.000000e+00 : f32
    %448 = vector.broadcast %cst_205 : f32 to vector<16x256xf32>
    %449 = arith.addf %448, %447 : vector<16x256xf32>
    %450 = arith.divf %448, %449 : vector<16x256xf32>
    %451 = arith.mulf %444, %450 : vector<16x256xf32>
    %452 = arith.mulf %451, %445 : vector<16x256xf32>
    %453 = arith.truncf %452 : vector<16x256xf32> to vector<16x256xbf16>
    %c1_206 = arith.constant 1 : index
    %c0_207 = arith.constant 0 : index
    %c0_208 = arith.constant 0 : index
    %454 = vector.load %arg23[%c1_206, %c0_207, %c0_208] : memref<2x256x64xbf16, #tpu.memory_space<vmem>>, vector<1x256x64xbf16>
    %455 = vector.shape_cast %454 : vector<1x256x64xbf16> to vector<256x64xbf16>
    %cst_209 = arith.constant dense<0.000000e+00> : vector<16x64xf32>
    %456 = tpu.matmul %453, %455, %cst_209 {dimension_numbers = #tpu.dot_dimension_numbers<[1], [0], [0], [1], [0, 0, 1, 1], [], []>} : vector<16x256xbf16>, vector<256x64xbf16>, vector<16x64xf32> -> vector<16x64xf32>
    %457 = arith.addf %425, %456 : vector<16x64xf32>
    %c0_210 = arith.constant 0 : index
    %c0_211 = arith.constant 0 : index
    %458 = vector.load %arg24[%c0_210, %c0_211] : memref<1x64xf32, #tpu.memory_space<vmem>>, vector<1x64xf32>
    %459 = arith.mulf %457, %457 : vector<16x64xf32>
    %cst_212 = arith.constant dense<0.000000e+00> : vector<16xf32>
    %460 = vector.multi_reduction <add>, %459, %cst_212 [1] : vector<16x64xf32> to vector<16xf32>
    %461 = vector.shape_cast %460 : vector<16xf32> to vector<16x1xf32>
    %cst_213 = arith.constant 6.400000e+01 : f32
    %462 = vector.broadcast %cst_213 : f32 to vector<16x1xf32>
    %463 = arith.divf %461, %462 : vector<16x1xf32>
    %cst_214 = arith.constant 9.99999974E-6 : f32
    %464 = vector.broadcast %cst_214 : f32 to vector<16x1xf32>
    %465 = arith.addf %463, %464 : vector<16x1xf32>
    %466 = math.rsqrt %465 : vector<16x1xf32>
    %467 = vector.broadcast %466 : vector<16x1xf32> to vector<16x64xf32>
    %468 = arith.mulf %457, %467 : vector<16x64xf32>
    %469 = vector.broadcast %458 : vector<1x64xf32> to vector<16x64xf32>
    %470 = arith.mulf %468, %469 : vector<16x64xf32>
    %471 = arith.truncf %470 : vector<16x64xf32> to vector<16x64xbf16>
    %c0_215 = arith.constant 0 : index
    %c0_216 = arith.constant 0 : index
    %472 = vector.load %arg25[%c0_215, %c0_216] : memref<64x256xbf16, #tpu.memory_space<vmem>>, vector<64x256xbf16>
    %cst_217 = arith.constant dense<0.000000e+00> : vector<16x256xf32>
    %473 = tpu.matmul %471, %472, %cst_217 {dimension_numbers = #tpu.dot_dimension_numbers<[1], [0], [0], [1], [0, 0, 1, 1], [], []>} : vector<16x64xbf16>, vector<64x256xbf16>, vector<16x256xf32> -> vector<16x256xf32>
    %c0_218 = arith.constant 0 : index
    %c0_219 = arith.constant 0 : index
    %474 = vector.load %arg26[%c0_218, %c0_219] : memref<16x256xf32, #tpu.memory_space<vmem>>, vector<16x256xf32>
    tpu.vector_store %arg26[%c0_218, %c0_219], %473 {strides = array<i32>} : memref<16x256xf32, #tpu.memory_space<vmem>>, vector<16x256xf32>,
    return
  }
  func.func @transform_0(%arg0: i32) -> (i32, i32) {
    %c0_i32 = arith.constant 0 : i32
    %c0_i32_0 = arith.constant 0 : i32
    %c0_i32_1 = arith.constant 0 : i32
    return %c0_i32, %c0_i32_0 : i32, i32
  }
  func.func @transform_1(%arg0: i32) -> (i32, i32) {
    %c0_i32 = arith.constant 0 : i32
    %c0_i32_0 = arith.constant 0 : i32
    %c0_i32_1 = arith.constant 0 : i32
    return %c0_i32, %c0_i32_0 : i32, i32
  }
  func.func @transform_2(%arg0: i32) -> (i32, i32) {
    %c0_i32 = arith.constant 0 : i32
    %c0_i32_0 = arith.constant 0 : i32
    %c0_i32_1 = arith.constant 0 : i32
    return %c0_i32, %c0_i32_0 : i32, i32
  }
  func.func @transform_3(%arg0: i32) -> (i32, i32, i32) {
    %c0_i32 = arith.constant 0 : i32
    %c0_i32_0 = arith.constant 0 : i32
    %c0_i32_1 = arith.constant 0 : i32
    %c0_i32_2 = arith.constant 0 : i32
    return %c0_i32, %c0_i32_0, %c0_i32_1 : i32, i32, i32
  }
  func.func @transform_4(%arg0: i32) -> (i32, i32, i32) {
    %c0_i32 = arith.constant 0 : i32
    %c0_i32_0 = arith.constant 0 : i32
    %c0_i32_1 = arith.constant 0 : i32
    %c0_i32_2 = arith.constant 0 : i32
    return %c0_i32, %c0_i32_0, %c0_i32_1 : i32, i32, i32
  }
  func.func @transform_5(%arg0: i32) -> (i32, i32, i32) {
    %c0_i32 = arith.constant 0 : i32
    %c0_i32_0 = arith.constant 0 : i32
    %c0_i32_1 = arith.constant 0 : i32
    %c0_i32_2 = arith.constant 0 : i32
    return %c0_i32, %c0_i32_0, %c0_i32_1 : i32, i32, i32
  }
  func.func @transform_6(%arg0: i32) -> (i32, i32, i32) {
    %c0_i32 = arith.constant 0 : i32
    %c0_i32_0 = arith.constant 0 : i32
    %c0_i32_1 = arith.constant 0 : i32
    %c0_i32_2 = arith.constant 0 : i32
    return %c0_i32, %c0_i32_0, %c0_i32_1 : i32, i32, i32
  }
  func.func @transform_7(%arg0: i32) -> (i32, i32, i32) {
    %c0_i32 = arith.constant 0 : i32
    %c0_i32_0 = arith.constant 0 : i32
    %c0_i32_1 = arith.constant 0 : i32
    %c0_i32_2 = arith.constant 0 : i32
    return %c0_i32, %c0_i32_0, %c0_i32_1 : i32, i32, i32
  }
  func.func @transform_8(%arg0: i32) -> (i32, i32, i32) {
    %c0_i32 = arith.constant 0 : i32
    %c0_i32_0 = arith.constant 0 : i32
    %c0_i32_1 = arith.constant 0 : i32
    %c0_i32_2 = arith.constant 0 : i32
    return %c0_i32, %c0_i32_0, %c0_i32_1 : i32, i32, i32
  }
  func.func @transform_9(%arg0: i32) -> (i32, i32, i32) {
    %c0_i32 = arith.constant 0 : i32
    %c0_i32_0 = arith.constant 0 : i32
    %c0_i32_1 = arith.constant 0 : i32
    %c0_i32_2 = arith.constant 0 : i32
    return %c0_i32, %c0_i32_0, %c0_i32_1 : i32, i32, i32
  }
  func.func @transform_10(%arg0: i32) -> (i32, i32, i32) {
    %c0_i32 = arith.constant 0 : i32
    %c0_i32_0 = arith.constant 0 : i32
    %c0_i32_1 = arith.constant 0 : i32
    %c0_i32_2 = arith.constant 0 : i32
    return %c0_i32, %c0_i32_0, %c0_i32_1 : i32, i32, i32
  }
  func.func @transform_11(%arg0: i32) -> (i32, i32, i32) {
    %c0_i32 = arith.constant 0 : i32
    %c0_i32_0 = arith.constant 0 : i32
    %c0_i32_1 = arith.constant 0 : i32
    %c0_i32_2 = arith.constant 0 : i32
    return %c0_i32, %c0_i32_0, %c0_i32_1 : i32, i32, i32
  }
  func.func @transform_12(%arg0: i32) -> (i32, i32, i32) {
    %c0_i32 = arith.constant 0 : i32
    %c0_i32_0 = arith.constant 0 : i32
    %c0_i32_1 = arith.constant 0 : i32
    %c0_i32_2 = arith.constant 0 : i32
    return %c0_i32, %c0_i32_0, %c0_i32_1 : i32, i32, i32
  }
  func.func @transform_13(%arg0: i32) -> (i32, i32, i32) {
    %c0_i32 = arith.constant 0 : i32
    %c0_i32_0 = arith.constant 0 : i32
    %c0_i32_1 = arith.constant 0 : i32
    %c0_i32_2 = arith.constant 0 : i32
    return %c0_i32, %c0_i32_0, %c0_i32_1 : i32, i32, i32
  }
  func.func @transform_14(%arg0: i32) -> (i32, i32, i32) {
    %c0_i32 = arith.constant 0 : i32
    %c0_i32_0 = arith.constant 0 : i32
    %c0_i32_1 = arith.constant 0 : i32
    %c0_i32_2 = arith.constant 0 : i32
    return %c0_i32, %c0_i32_0, %c0_i32_1 : i32, i32, i32
  }
  func.func @transform_15(%arg0: i32) -> (i32, i32, i32) {
    %c0_i32 = arith.constant 0 : i32
    %c0_i32_0 = arith.constant 0 : i32
    %c0_i32_1 = arith.constant 0 : i32
    %c0_i32_2 = arith.constant 0 : i32
    return %c0_i32, %c0_i32_0, %c0_i32_1 : i32, i32, i32
  }
  func.func @transform_16(%arg0: i32) -> (i32, i32, i32) {
    %c0_i32 = arith.constant 0 : i32
    %c0_i32_0 = arith.constant 0 : i32
    %c0_i32_1 = arith.constant 0 : i32
    %c0_i32_2 = arith.constant 0 : i32
    return %c0_i32, %c0_i32_0, %c0_i32_1 : i32, i32, i32
  }
  func.func @transform_17(%arg0: i32) -> (i32, i32, i32) {
    %c0_i32 = arith.constant 0 : i32
    %c0_i32_0 = arith.constant 0 : i32
    %c0_i32_1 = arith.constant 0 : i32
    %c0_i32_2 = arith.constant 0 : i32
    return %c0_i32, %c0_i32_0, %c0_i32_1 : i32, i32, i32
  }
  func.func @transform_18(%arg0: i32) -> (i32, i32, i32) {
    %c0_i32 = arith.constant 0 : i32
    %c0_i32_0 = arith.constant 0 : i32
    %c0_i32_1 = arith.constant 0 : i32
    %c0_i32_2 = arith.constant 0 : i32
    return %c0_i32, %c0_i32_0, %c0_i32_1 : i32, i32, i32
  }
  func.func @transform_19(%arg0: i32) -> (i32, i32, i32) {
    %c0_i32 = arith.constant 0 : i32
    %c0_i32_0 = arith.constant 0 : i32
    %c0_i32_1 = arith.constant 0 : i32
    %c0_i32_2 = arith.constant 0 : i32
    return %c0_i32, %c0_i32_0, %c0_i32_1 : i32, i32, i32
  }
  func.func @transform_20(%arg0: i32) -> (i32, i32, i32) {
    %c0_i32 = arith.constant 0 : i32
    %c0_i32_0 = arith.constant 0 : i32
    %c0_i32_1 = arith.constant 0 : i32
    %c0_i32_2 = arith.constant 0 : i32
    return %c0_i32, %c0_i32_0, %c0_i32_1 : i32, i32, i32
  }
  func.func @transform_21(%arg0: i32) -> (i32, i32, i32) {
    %c0_i32 = arith.constant 0 : i32
    %c0_i32_0 = arith.constant 0 : i32
    %c0_i32_1 = arith.constant 0 : i32
    %c0_i32_2 = arith.constant 0 : i32
    return %c0_i32, %c0_i32_0, %c0_i32_1 : i32, i32, i32
  }
  func.func @transform_22(%arg0: i32) -> (i32, i32, i32) {
    %c0_i32 = arith.constant 0 : i32
    %c0_i32_0 = arith.constant 0 : i32
    %c0_i32_1 = arith.constant 0 : i32
    %c0_i32_2 = arith.constant 0 : i32
    return %c0_i32, %c0_i32_0, %c0_i32_1 : i32, i32, i32
  }
  func.func @transform_23(%arg0: i32) -> (i32, i32) {
    %c0_i32 = arith.constant 0 : i32
    %c0_i32_0 = arith.constant 0 : i32
    %c0_i32_1 = arith.constant 0 : i32
    return %c0_i32, %c0_i32_0 : i32, i32
  }
  func.func @transform_24(%arg0: i32) -> (i32, i32) {
    %c0_i32 = arith.constant 0 : i32
    %c0_i32_0 = arith.constant 0 : i32
    %c0_i32_1 = arith.constant 0 : i32
    return %c0_i32, %c0_i32_0 : i32, i32
  }
  func.func @transform_25(%arg0: i32) -> (i32, i32) {
    %c0_i32 = arith.constant 0 : i32
    %c0_i32_0 = arith.constant 0 : i32
    %c0_i32_1 = arith.constant 0 : i32
    return %c0_i32, %c0_i32_0 : i32, i32
  }
}

</mosaic_0001>

<llo_original>
// kernel: transformer_forward.1
$region0: #{transformer_forward.1}
  #allocation0 [shape = 'u32[]', space=smem, size = 0x4, offset = 0x4, fixed_abs, tag = 'smem constant byte address 0x4 - core index']
  #allocation1 [shape = 'u32[144,128]{1,0:T(1,128)}', space=vmem, size = 0x12000, scoped, tag = 'internal scratch']
  %s0 = inlined_call_operand.vmem [shape: f32[16,64], index: 0, kind: input, shape index: {}]
  %s1 = inlined_call_operand.vmem [shape: f32[16,16], index: 1, kind: input, shape index: {}]
  %s2 = inlined_call_operand.hbm [shape: f32[4,64], index: 2, kind: input, shape index: {}]
  %s3 = inlined_call_operand.vmem [shape: f32[4,16,16], index: 3, kind: input, shape index: {}]
  %s4 = inlined_call_operand.hbm [shape: f32[2,1,64], index: 4, kind: input, shape index: {}]
  %s5 = inlined_call_operand.hbm [shape: f32[2,1,64], index: 5, kind: input, shape index: {}]
  %s6 = inlined_call_operand.vmem [shape: bf16[2,64,64], index: 6, kind: input, shape index: {}]
  %s7 = inlined_call_operand.vmem [shape: bf16[2,64,64], index: 7, kind: input, shape index: {}]
  %s8 = inlined_call_operand.vmem [shape: bf16[2,64,512], index: 8, kind: input, shape index: {}]
  %s9 = inlined_call_operand.vmem [shape: bf16[2,64,4], index: 9, kind: input, shape index: {}]
  %s10 = inlined_call_operand.hbm [shape: f32[2,4,64], index: 10, kind: input, shape index: {}]
  %s11 = inlined_call_operand.hbm [shape: f32[2,1,64], index: 11, kind: input, shape index: {}]
  %s12 = inlined_call_operand.hbm [shape: f32[2,4,512], index: 12, kind: input, shape index: {}]
  %s13 = inlined_call_operand.hbm [shape: f32[2,1,512], index: 13, kind: input, shape index: {}]
  %s14 = inlined_call_operand.hbm [shape: f32[2,1,4], index: 14, kind: input, shape index: {}]
  %s15 = inlined_call_operand.hbm [shape: f32[2,1,4], index: 15, kind: input, shape index: {}]
  %s16 = inlined_call_operand.hbm [shape: f32[2,1,64], index: 16, kind: input, shape index: {}]
  %s17 = inlined_call_operand.vmem [shape: f32[2,1,64], index: 17, kind: input, shape index: {}]
  %s18 = inlined_call_operand.vmem [shape: bf16[2,64,64], index: 18, kind: input, shape index: {}]
  %s19 = inlined_call_operand.vmem [shape: bf16[2,64,64], index: 19, kind: input, shape index: {}]
  %s20 = inlined_call_operand.hbm [shape: f32[2,1,64], index: 20, kind: input, shape index: {}]
  %s21 = inlined_call_operand.vmem [shape: bf16[2,64,512], index: 21, kind: input, shape index: {}]
  %s22 = inlined_call_operand.vmem [shape: bf16[2,256,64], index: 22, kind: input, shape index: {}]
  %s23 = inlined_call_operand.hbm [shape: f32[1,64], index: 23, kind: input, shape index: {}]
  %s24 = inlined_call_operand.vmem [shape: bf16[64,256], index: 24, kind: input, shape index: {}]
  %s25 = inlined_call_operand.hbm [shape: f32[16,256], index: 25, kind: output, shape index: {}]
  %s26 = sld [smem:[#allocation0]]
  $region158: #{transformer_forward.1} parent=0
    _
  %s28 = ssub.s32 1, %s26
  %s29 = scalar_select 0, %s28, %s26
  $region1: #{transformer_forward.1} parent=0
    #allocation2 [shape = 'u8[2048]{0}', space=vmem, size = 0x800, scoped, tag = 'input window, operand 2, single buffered']
    #allocation3 [shape = 's32[1]{0}', space=sflag, size = 0x4, scoped, tag = 'scoped memory for transformer_forward.1']
    #allocation4 [shape = 's32[1]{0}', space=sflag, size = 0x4, scoped, tag = 'scoped memory for transformer_forward.1']
    #allocation5 [shape = 'u8[1024]{0}', space=vmem, size = 0x400, scoped, tag = 'input window, operand 4, single buffered']
    #allocation6 [shape = 's32[1]{0}', space=sflag, size = 0x4, scoped, tag = 'scoped memory for transformer_forward.1']
    #allocation7 [shape = 'u8[1024]{0}', space=vmem, size = 0x400, scoped, tag = 'input window, operand 5, single buffered']
    #allocation8 [shape = 'u8[4096]{0}', space=vmem, size = 0x1000, scoped, tag = 'input window, operand 10, single buffered']
    #allocation9 [shape = 's32[1]{0}', space=sflag, size = 0x4, scoped, tag = 'scoped memory for transformer_forward.1']
    #allocation10 [shape = 'u8[1024]{0}', space=vmem, size = 0x400, scoped, tag = 'input window, operand 11, single buffered']
    #allocation11 [shape = 'u8[16384]{0}', space=vmem, size = 0x4000, scoped, tag = 'input window, operand 12, single buffered']
    #allocation12 [shape = 's32[1]{0}', space=sflag, size = 0x4, scoped, tag = 'scoped memory for transformer_forward.1']
    #allocation13 [shape = 'u8[4096]{0}', space=vmem, size = 0x1000, scoped, tag = 'input window, operand 13, single buffered']
    #allocation14 [shape = 'u8[1024]{0}', space=vmem, size = 0x400, scoped, tag = 'input window, operand 14, single buffered']
    #allocation15 [shape = 's32[1]{0}', space=sflag, size = 0x4, scoped, tag = 'scoped memory for transformer_forward.1']
    #allocation16 [shape = 'u8[1024]{0}', space=vmem, size = 0x400, scoped, tag = 'input window, operand 15, single buffered']
    #allocation17 [shape = 'u8[1024]{0}', space=vmem, size = 0x400, scoped, tag = 'input window, operand 16, single buffered']
    #allocation18 [shape = 's32[1]{0}', space=sflag, size = 0x4, scoped, tag = 'scoped memory for transformer_forward.1']
    #allocation19 [shape = 'u8[1024]{0}', space=vmem, size = 0x400, scoped, tag = 'input window, operand 20, single buffered']
    #allocation20 [shape = 'u8[512]{0}', space=vmem, size = 0x400, scoped, tag = 'input window, operand 23, single buffered']
    #allocation21 [shape = 's32[1]{0}', space=sflag, size = 0x4, scoped, tag = 'scoped memory for transformer_forward.1']
    #allocation22 [shape = 'u8[16384]{0}', space=vmem, size = 0x4000, scoped, tag = 'output window, operand 0, single buffered']
    %30 = vsyncpa [#allocation3], 0
    %31 = vsyncpa [#allocation6], 0
    %32 = vsyncpa [#allocation9], 0
    %33 = vsyncpa [#allocation12], 0
    %34 = vsyncpa [#allocation15], 0
    %35 = vsyncpa [#allocation18], 0
    %36 = vsyncpa [#allocation21], 0
    %37 = vsyncpa [#allocation4], 0
    // Predicated region
    $region2: #{transformer_forward.1} parent=1 // pred_check
      _
    $region3: #{transformer_forward.1} parent=1 // pred_check_branch
      %39 = sbr.rel (0) target = $region5
    $region4: #{transformer_forward.1} parent=1 // pred_region
      _
    $region5: #{transformer_forward.1} parent=1 // pred_fallthru
      _
    // Predicated region
    $region6: #{transformer_forward.1} parent=1 // pred_check
      _
    $region7: #{transformer_forward.1} parent=1 // pred_check_branch
      %41 = sbr.rel (0) target = $region9
    $region8: #{transformer_forward.1} parent=1 // pred_region
      _
    $region9: #{transformer_forward.1} parent=1 // pred_fallthru
      _
    // Predicated region
    $region10: #{transformer_forward.1} parent=1 // pred_check
      _
    $region11: #{transformer_forward.1} parent=1 // pred_check_branch
      %43 = sbr.rel (0) target = $region13
    $region12: #{transformer_forward.1} parent=1 // pred_region
      %s45 = ssub.s32 64, 64
      %46 = vsyncadd [#allocation3], %s45
      %s48 = sshll.u32 [#allocation2], 4
      %s49 = int_to_ptr.vmem [resolvable:$true] %s48
      %51 = dma.hbm_to_vmem [thread:$0]  %s2, 64, %s49, [#allocation3]
    $region13: #{transformer_forward.1} parent=1 // pred_fallthru
      _
    // Predicated region
    $region14: #{transformer_forward.1} parent=1 // pred_check
      _
    $region15: #{transformer_forward.1} parent=1 // pred_check_branch
      %53 = sbr.rel (0) target = $region17
    $region16: #{transformer_forward.1} parent=1 // pred_region
      _
    $region17: #{transformer_forward.1} parent=1 // pred_fallthru
      _
    // Predicated region
    $region18: #{transformer_forward.1} parent=1 // pred_check
      _
    $region19: #{transformer_forward.1} parent=1 // pred_check_branch
      %55 = sbr.rel (0) target = $region21
    $region20: #{transformer_forward.1} parent=1 // pred_region
      %s57 = ssub.s32 32, 32
      %58 = vsyncadd [#allocation6], %s57
      %s59 = sshll.u32 [#allocation5], 4
      %s60 = int_to_ptr.vmem [resolvable:$true] %s59
      %65 = dma.hbm_to_vmem [thread:$0]  %s4, 32, %s60, [#allocation6], 16, 16, 1
    $region21: #{transformer_forward.1} parent=1 // pred_fallthru
      _
    // Predicated region
    $region22: #{transformer_forward.1} parent=1 // pred_check
      _
    $region23: #{transformer_forward.1} parent=1 // pred_check_branch
      %67 = sbr.rel (0) target = $region25
    $region24: #{transformer_forward.1} parent=1 // pred_region
      %s69 = ssub.s32 32, 32
      %70 = vsyncadd [#allocation6], %s69
      %s71 = sshll.u32 [#allocation7], 4
      %s72 = int_to_ptr.vmem [resolvable:$true] %s71
      %77 = dma.hbm_to_vmem [thread:$0]  %s5, 32, %s72, [#allocation6], 16, 16, 1
    $region25: #{transformer_forward.1} parent=1 // pred_fallthru
      _
    // Predicated region
    $region26: #{transformer_forward.1} parent=1 // pred_check
      _
    $region27: #{transformer_forward.1} parent=1 // pred_check_branch
      %79 = sbr.rel (0) target = $region29
    $region28: #{transformer_forward.1} parent=1 // pred_region
      _
    $region29: #{transformer_forward.1} parent=1 // pred_fallthru
      _
    // Predicated region
    $region30: #{transformer_forward.1} parent=1 // pred_check
      _
    $region31: #{transformer_forward.1} parent=1 // pred_check_branch
      %81 = sbr.rel (0) target = $region33
    $region32: #{transformer_forward.1} parent=1 // pred_region
      _
    $region33: #{transformer_forward.1} parent=1 // pred_fallthru
      _
    // Predicated region
    $region34: #{transformer_forward.1} parent=1 // pred_check
      _
    $region35: #{transformer_forward.1} parent=1 // pred_check_branch
      %83 = sbr.rel (0) target = $region37
    $region36: #{transformer_forward.1} parent=1 // pred_region
      _
    $region37: #{transformer_forward.1} parent=1 // pred_fallthru
      _
    // Predicated region
    $region38: #{transformer_forward.1} parent=1 // pred_check
      _
    $region39: #{transformer_forward.1} parent=1 // pred_check_branch
      %85 = sbr.rel (0) target = $region41
    $region40: #{transformer_forward.1} parent=1 // pred_region
      _
    $region41: #{transformer_forward.1} parent=1 // pred_fallthru
      _
    // Predicated region
    $region42: #{transformer_forward.1} parent=1 // pred_check
      _
    $region43: #{transformer_forward.1} parent=1 // pred_check_branch
      %87 = sbr.rel (0) target = $region45
    $region44: #{transformer_forward.1} parent=1 // pred_region
      %s89 = ssub.s32 128, 128
      %90 = vsyncadd [#allocation9], %s89
      %s91 = sshll.u32 [#allocation8], 4
      %s92 = int_to_ptr.vmem [resolvable:$true] %s91
      %97 = dma.hbm_to_vmem [thread:$0]  %s10, 128, %s92, [#allocation9], 64, 64, 4
    $region45: #{transformer_forward.1} parent=1 // pred_fallthru
      _
    // Predicated region
    $region46: #{transformer_forward.1} parent=1 // pred_check
      _
    $region47: #{transformer_forward.1} parent=1 // pred_check_branch
      %99 = sbr.rel (0) target = $region49
    $region48: #{transformer_forward.1} parent=1 // pred_region
      %s101 = ssub.s32 32, 32
      %102 = vsyncadd [#allocation9], %s101
      %s103 = sshll.u32 [#allocation10], 4
      %s104 = int_to_ptr.vmem [resolvable:$true] %s103
      %109 = dma.hbm_to_vmem [thread:$0]  %s11, 32, %s104, [#allocation9], 16, 16, 1
    $region49: #{transformer_forward.1} parent=1 // pred_fallthru
      _
    // Predicated region
    $region50: #{transformer_forward.1} parent=1 // pred_check
      _
    $region51: #{transformer_forward.1} parent=1 // pred_check_branch
      %111 = sbr.rel (0) target = $region53
    $region52: #{transformer_forward.1} parent=1 // pred_region
      %s113 = ssub.s32 512, 512
      %114 = vsyncadd [#allocation12], %s113
      %s115 = sshll.u32 [#allocation11], 4
      %s116 = int_to_ptr.vmem [resolvable:$true] %s115
      %121 = dma.hbm_to_vmem [thread:$0]  %s12, 512, %s116, [#allocation12], 256, 256, 16
    $region53: #{transformer_forward.1} parent=1 // pred_fallthru
      _
    // Predicated region
    $region54: #{transformer_forward.1} parent=1 // pred_check
      _
    $region55: #{transformer_forward.1} parent=1 // pred_check_branch
      %123 = sbr.rel (0) target = $region57
    $region56: #{transformer_forward.1} parent=1 // pred_region
      %s125 = ssub.s32 128, 128
      %126 = vsyncadd [#allocation12], %s125
      %s127 = sshll.u32 [#allocation13], 4
      %s128 = int_to_ptr.vmem [resolvable:$true] %s127
      %133 = dma.hbm_to_vmem [thread:$0]  %s13, 128, %s128, [#allocation12], 64, 64, 4
    $region57: #{transformer_forward.1} parent=1 // pred_fallthru
      _
    // Predicated region
    $region58: #{transformer_forward.1} parent=1 // pred_check
      _
    $region59: #{transformer_forward.1} parent=1 // pred_check_branch
      %135 = sbr.rel (0) target = $region61
    $region60: #{transformer_forward.1} parent=1 // pred_region
      %s137 = ssub.s32 32, 32
      %138 = vsyncadd [#allocation15], %s137
      %s139 = sshll.u32 [#allocation14], 4
      %s140 = int_to_ptr.vmem [resolvable:$true] %s139
      %145 = dma.hbm_to_vmem [thread:$0]  %s14, 32, %s140, [#allocation15], 16, 16, 1
    $region61: #{transformer_forward.1} parent=1 // pred_fallthru
      _
    // Predicated region
    $region62: #{transformer_forward.1} parent=1 // pred_check
      _
    $region63: #{transformer_forward.1} parent=1 // pred_check_branch
      %147 = sbr.rel (0) target = $region65
    $region64: #{transformer_forward.1} parent=1 // pred_region
      %s149 = ssub.s32 32, 32
      %150 = vsyncadd [#allocation15], %s149
      %s151 = sshll.u32 [#allocation16], 4
      %s152 = int_to_ptr.vmem [resolvable:$true] %s151
      %157 = dma.hbm_to_vmem [thread:$0]  %s15, 32, %s152, [#allocation15], 16, 16, 1
    $region65: #{transformer_forward.1} parent=1 // pred_fallthru
      _
    // Predicated region
    $region66: #{transformer_forward.1} parent=1 // pred_check
      _
    $region67: #{transformer_forward.1} parent=1 // pred_check_branch
      %159 = sbr.rel (0) target = $region69
    $region68: #{transformer_forward.1} parent=1 // pred_region
      %s161 = ssub.s32 32, 32
      %162 = vsyncadd [#allocation18], %s161
      %s163 = sshll.u32 [#allocation17], 4
      %s164 = int_to_ptr.vmem [resolvable:$true] %s163
      %169 = dma.hbm_to_vmem [thread:$0]  %s16, 32, %s164, [#allocation18], 16, 16, 1
    $region69: #{transformer_forward.1} parent=1 // pred_fallthru
      _
    // Predicated region
    $region70: #{transformer_forward.1} parent=1 // pred_check
      _
    $region71: #{transformer_forward.1} parent=1 // pred_check_branch
      %171 = sbr.rel (0) target = $region73
    $region72: #{transformer_forward.1} parent=1 // pred_region
      _
    $region73: #{transformer_forward.1} parent=1 // pred_fallthru
      _
    // Predicated region
    $region74: #{transformer_forward.1} parent=1 // pred_check
      _
    $region75: #{transformer_forward.1} parent=1 // pred_check_branch
      %173 = sbr.rel (0) target = $region77
    $region76: #{transformer_forward.1} parent=1 // pred_region
      _
    $region77: #{transformer_forward.1} parent=1 // pred_fallthru
      _
    // Predicated region
    $region78: #{transformer_forward.1} parent=1 // pred_check
      _
    $region79: #{transformer_forward.1} parent=1 // pred_check_branch
      %175 = sbr.rel (0) target = $region81
    $region80: #{transformer_forward.1} parent=1 // pred_region
      _
    $region81: #{transformer_forward.1} parent=1 // pred_fallthru
      _
    // Predicated region
    $region82: #{transformer_forward.1} parent=1 // pred_check
      _
    $region83: #{transformer_forward.1} parent=1 // pred_check_branch
      %177 = sbr.rel (0) target = $region85
    $region84: #{transformer_forward.1} parent=1 // pred_region
      %s179 = ssub.s32 32, 32
      %180 = vsyncadd [#allocation18], %s179
      %s181 = sshll.u32 [#allocation19], 4
      %s182 = int_to_ptr.vmem [resolvable:$true] %s181
      %187 = dma.hbm_to_vmem [thread:$0]  %s20, 32, %s182, [#allocation18], 16, 16, 1
    $region85: #{transformer_forward.1} parent=1 // pred_fallthru
      _
    // Predicated region
    $region86: #{transformer_forward.1} parent=1 // pred_check
      _
    $region87: #{transformer_forward.1} parent=1 // pred_check_branch
      %189 = sbr.rel (0) target = $region89
    $region88: #{transformer_forward.1} parent=1 // pred_region
      _
    $region89: #{transformer_forward.1} parent=1 // pred_fallthru
      _
    // Predicated region
    $region90: #{transformer_forward.1} parent=1 // pred_check
      _
    $region91: #{transformer_forward.1} parent=1 // pred_check_branch
      %191 = sbr.rel (0) target = $region93
    $region92: #{transformer_forward.1} parent=1 // pred_region
      _
    $region93: #{transformer_forward.1} parent=1 // pred_fallthru
      _
    // Predicated region
    $region94: #{transformer_forward.1} parent=1 // pred_check
      _
    $region95: #{transformer_forward.1} parent=1 // pred_check_branch
      %193 = sbr.rel (0) target = $region97
    $region96: #{transformer_forward.1} parent=1 // pred_region
      %s195 = ssub.s32 16, 16
      %196 = vsyncadd [#allocation21], %s195
      %s198 = sshll.u32 [#allocation20], 4
      %s199 = int_to_ptr.vmem [resolvable:$true] %s198
      %201 = dma.hbm_to_vmem [thread:$0]  %s23, 16, %s199, [#allocation21]
    $region97: #{transformer_forward.1} parent=1 // pred_fallthru
      _
    // Predicated region
    $region98: #{transformer_forward.1} parent=1 // pred_check
      _
    $region99: #{transformer_forward.1} parent=1 // pred_check_branch
      %203 = sbr.rel (0) target = $region101
    $region100: #{transformer_forward.1} parent=1 // pred_region
      _
    $region101: #{transformer_forward.1} parent=1 // pred_fallthru
      _
    // Predicated region
    $region102: #{transformer_forward.1} parent=1 // pred_check
      _
    $region103: #{transformer_forward.1} parent=1 // pred_check_branch
      %205 = sbr.rel (0) target = $region105
    $region104: #{transformer_forward.1} parent=1 // pred_region
      %206 = dma.done [#allocation3], 64
    $region105: #{transformer_forward.1} parent=1 // pred_fallthru
      _
    // Predicated region
    $region106: #{transformer_forward.1} parent=1 // pred_check
      _
    $region107: #{transformer_forward.1} parent=1 // pred_check_branch
      %208 = sbr.rel (0) target = $region109
    $region108: #{transformer_forward.1} parent=1 // pred_region
      %209 = dma.done [#allocation6], 32
    $region109: #{transformer_forward.1} parent=1 // pred_fallthru
      _
    // Predicated region
    $region110: #{transformer_forward.1} parent=1 // pred_check
      _
    $region111: #{transformer_forward.1} parent=1 // pred_check_branch
      %211 = sbr.rel (0) target = $region113
    $region112: #{transformer_forward.1} parent=1 // pred_region
      %212 = dma.done [#allocation6], 32
    $region113: #{transformer_forward.1} parent=1 // pred_fallthru
      _
    // Predicated region
    $region114: #{transformer_forward.1} parent=1 // pred_check
      _
    $region115: #{transformer_forward.1} parent=1 // pred_check_branch
      %214 = sbr.rel (0) target = $region117
    $region116: #{transformer_forward.1} parent=1 // pred_region
      %215 = dma.done [#allocation9], 128
    $region117: #{transformer_forward.1} parent=1 // pred_fallthru
      _
    // Predicated region
    $region118: #{transformer_forward.1} parent=1 // pred_check
      _
    $region119: #{transformer_forward.1} parent=1 // pred_check_branch
      %217 = sbr.rel (0) target = $region121
    $region120: #{transformer_forward.1} parent=1 // pred_region
      %218 = dma.done [#allocation9], 32
    $region121: #{transformer_forward.1} parent=1 // pred_fallthru
      _
    // Predicated region
    $region122: #{transformer_forward.1} parent=1 // pred_check
      _
    $region123: #{transformer_forward.1} parent=1 // pred_check_branch
      %220 = sbr.rel (0) target = $region125
    $region124: #{transformer_forward.1} parent=1 // pred_region
      %221 = dma.done [#allocation12], 512
    $region125: #{transformer_forward.1} parent=1 // pred_fallthru
      _
    // Predicated region
    $region126: #{transformer_forward.1} parent=1 // pred_check
      _
    $region127: #{transformer_forward.1} parent=1 // pred_check_branch
      %223 = sbr.rel (0) target = $region129
    $region128: #{transformer_forward.1} parent=1 // pred_region
      %224 = dma.done [#allocation12], 128
    $region129: #{transformer_forward.1} parent=1 // pred_fallthru
      _
    // Predicated region
    $region130: #{transformer_forward.1} parent=1 // pred_check
      _
    $region131: #{transformer_forward.1} parent=1 // pred_check_branch
      %226 = sbr.rel (0) target = $region133
    $region132: #{transformer_forward.1} parent=1 // pred_region
      %227 = dma.done [#allocation15], 32
    $region133: #{transformer_forward.1} parent=1 // pred_fallthru
      _
    // Predicated region
    $region134: #{transformer_forward.1} parent=1 // pred_check
      _
    $region135: #{transformer_forward.1} parent=1 // pred_check_branch
      %229 = sbr.rel (0) target = $region137
    $region136: #{transformer_forward.1} parent=1 // pred_region
      %230 = dma.done [#allocation15], 32
    $region137: #{transformer_forward.1} parent=1 // pred_fallthru
      _
    // Predicated region
    $region138: #{transformer_forward.1} parent=1 // pred_check
      _
    $region139: #{transformer_forward.1} parent=1 // pred_check_branch
      %232 = sbr.rel (0) target = $region141
    $region140: #{transformer_forward.1} parent=1 // pred_region
      %233 = dma.done [#allocation18], 32
    $region141: #{transformer_forward.1} parent=1 // pred_fallthru
      _
    // Predicated region
    $region142: #{transformer_forward.1} parent=1 // pred_check
      _
    $region143: #{transformer_forward.1} parent=1 // pred_check_branch
      %235 = sbr.rel (0) target = $region145
    $region144: #{transformer_forward.1} parent=1 // pred_region
      %236 = dma.done [#allocation18], 32
    $region145: #{transformer_forward.1} parent=1 // pred_fallthru
      _
    // Predicated region
    $region146: #{transformer_forward.1} parent=1 // pred_check
      _
    $region147: #{transformer_forward.1} parent=1 // pred_check_branch
      %238 = sbr.rel (0) target = $region149
    $region148: #{transformer_forward.1} parent=1 // pred_region
      %239 = dma.done [#allocation21], 16
    $region149: #{transformer_forward.1} parent=1 // pred_fallthru
      _
    %v241 = vld [vmem:[%s0] sm:$0xff]
    %v242 = vld [vmem:[%s0 + $0x8] sm:$0xff]
    %v243 = vld [vmem:[%s1] sm:$0xff]
    %v244 = vld [vmem:[%s1 + $0x8] sm:$0xff]
    %v245 = vld [vmem:[#allocation2] sm:$0xf]
    %v246 = vld [vmem:[%s3] sm:$0xff]
    %v247 = vld [vmem:[%s3 + $0x8] sm:$0xff]
    %v248 = vld [vmem:[%s3 + $0x10] sm:$0xff]
    %v249 = vld [vmem:[%s3 + $0x18] sm:$0xff]
    %v250 = vld [vmem:[%s3 + $0x20] sm:$0xff]
    %v251 = vld [vmem:[%s3 + $0x28] sm:$0xff]
    %v252 = vld [vmem:[%s3 + $0x30] sm:$0xff]
    %v253 = vld [vmem:[%s3 + $0x38] sm:$0xff]
    %v254 = vld [vmem:[#allocation5] sm:$0x1]
    %v255 = vmul.f32 %v241, %v241
    %v256 = vmul.f32 %v242, %v242
    %vm257 = vcmask 523264
    %v258 = vsel %vm257, %v255, 0.0
    %259 = vadd.xlane.f32.xlu0 %v258
    %v260 = vpop.xlane.xlu0 %259
    %v261 = vsel %vm257, %v256, 0.0
    %262 = vadd.xlane.f32.xlu0 %v261
    %v263 = vpop.xlane.xlu0 %262
    %v264 = vrcp.pop 64.0
    %v265 = vmul.f32 %v260, %v264
    %v266 = vmul.f32 %v263, %v264
    %v267 = vadd.f32 %v265, 1e-05
    %v268 = vadd.f32 %v266, 1e-05
    %v269 = vrsqrt.pop %v267
    %v270 = vrsqrt.pop %v268
    %v271 = vmul.f32 %v241, %v269
    %v272 = vmul.f32 %v242, %v270
    %v274 = vlaneseq
    %v275 = vshrl.u32 %v274, 7
    %v276 = vsub.s32 0, %v275
    %v277 = vrot.slane %v254, %v276
    %v279 = vmul.f32 %v271, %v277
    %v280 = vmul.f32 %v272, %v277
    %v281 = vld [vmem:[#allocation7] sm:$0x1]
    %v282 = vmul.f32 %v279, %v279
    %v283 = vmul.f32 %v280, %v280
    %v284 = vsel %vm257, %v282, 0.0
    %285 = vadd.xlane.f32.xlu0 %v284
    %v286 = vpop.xlane.xlu0 %285
    %v287 = vsel %vm257, %v283, 0.0
    %288 = vadd.xlane.f32.xlu0 %v287
    %v289 = vpop.xlane.xlu0 %288
    %v290 = vmul.f32 %v286, %v264
    %v291 = vmul.f32 %v289, %v264
    %v292 = vadd.f32 %v290, 1e-05
    %v293 = vadd.f32 %v291, 1e-05
    %v294 = vrsqrt.pop %v292
    %v295 = vrsqrt.pop %v293
    %v296 = vmul.f32 %v279, %v294
    %v297 = vmul.f32 %v280, %v295
    %v299 = vlaneseq
    %v300 = vshrl.u32 %v299, 7
    %v301 = vsub.s32 0, %v300
    %v302 = vrot.slane %v281, %v301
    %v304 = vmul.f32 %v296, %v302
    %v305 = vmul.f32 %v297, %v302
    %v306 = vpack.c.bf16 %v305, %v304
    %v307 = vld [vmem:[%s6] sm:$0xf]
    %v308 = vld [vmem:[%s6 + $0x4] sm:$0xf]
    %v309 = vld [vmem:[%s6 + $0x8] sm:$0xf]
    %v310 = vld [vmem:[%s6 + $0xc] sm:$0xf]
    %v311 = vld [vmem:[%s6 + $0x10] sm:$0xf]
    %v312 = vld [vmem:[%s6 + $0x14] sm:$0xf]
    %v313 = vld [vmem:[%s6 + $0x18] sm:$0xf]
    %v314 = vld [vmem:[%s6 + $0x1c] sm:$0xf]
    %v323 = vunpack.c.l.b16 %v307
    %v324 = vunpack.c.l.b16 %v308
    %v325 = vunpack.c.l.b16 %v309
    %v326 = vunpack.c.l.b16 %v310
    %v327 = vunpack.c.l.b16 %v311
    %v328 = vunpack.c.l.b16 %v312
    %v329 = vunpack.c.l.b16 %v313
    %v330 = vunpack.c.l.b16 %v314
    %v331 = vpack.c.b16 %v324, %v323
    %v332 = vpack.c.b16 %v326, %v325
    %v333 = vpack.c.b16 %v328, %v327
    %v334 = vpack.c.b16 %v330, %v329
    %v340 = vsel %vm257, %v306, 0
    %342 = vmatprep.subr.bf16.mxu0 0
    %343 = vmatpush1.bf16.msra.mxu0 %v331
    %344 = vmatprep.subr.bf16.mxu0 0
    %345 = vmatpush1.bf16.msra.mxu0 %v332
    %346 = vmatprep.subr.bf16.mxu0 0
    %347 = vmatpush1.bf16.msra.mxu0 %v333
    %348 = vmatprep.subr.bf16.mxu0 0
    %349 = vmatpush1.bf16.msra.mxu0 %v334
    %350 = vmatprep.subr.bf16.mxu0 0
    %351 = vmatpush1.bf16.msra.mxu0 0
    %352 = vmatprep.subr.bf16.mxu0 0
    %353 = vmatpush1.bf16.msra.mxu0 0
    %354 = vmatprep.subr.bf16.mxu0 0
    %355 = vmatpush1.bf16.msra.mxu0 0
    %356 = vmatprep.subr.bf16.mxu0 0
    %357 = vmatpush1.bf16.msra.mxu0 0
    %358 = vmatprep.subr.bf16.mxu0 0
    %359 = vmatpush1.bf16.msra.mxu0 0
    %360 = vmatprep.subr.bf16.mxu0 0
    %361 = vmatpush1.bf16.msra.mxu0 0
    %362 = vmatprep.subr.bf16.mxu0 0
    %363 = vmatpush1.bf16.msra.mxu0 0
    %364 = vmatprep.subr.bf16.mxu0 0
    %365 = vmatpush1.bf16.msra.mxu0 0
    %366 = vmatprep.subr.bf16.mxu0 0
    %367 = vmatpush1.bf16.msra.mxu0 0
    %368 = vmatprep.subr.bf16.mxu0 0
    %369 = vmatpush1.bf16.msra.mxu0 0
    %370 = vmatprep.subr.bf16.mxu0 0
    %371 = vmatpush1.bf16.msra.mxu0 0
    %372 = vmatprep.subr.bf16.mxu0 0
    %373 = vmatpush1.bf16.msra.mxu0 0
    %374 = vmatprep.mubr.bf16.mxu0 0
    %375 = vmatmul.mubr.bf16.gmra.mrb[0].mxu0 %v340
    %v376 = vpop.f32.mrb[0].mxu0
    %v377 = vadd.f32 0.0, %v376
    %v378 = vpop.f32.mrb[0].mxu0
    %v379 = vpop.f32.mrb[0].mxu0
    %v380 = vadd.f32 0.0, %v379
    %v381 = vpop.f32.mrb[0].mxu0
    %382 = vdwg.mxu0
    %v383 = vld [vmem:[%s7] sm:$0xf]
    %v384 = vld [vmem:[%s7 + $0x4] sm:$0xf]
    %v385 = vld [vmem:[%s7 + $0x8] sm:$0xf]
    %v386 = vld [vmem:[%s7 + $0xc] sm:$0xf]
    %v387 = vld [vmem:[%s7 + $0x10] sm:$0xf]
    %v388 = vld [vmem:[%s7 + $0x14] sm:$0xf]
    %v389 = vld [vmem:[%s7 + $0x18] sm:$0xf]
    %v390 = vld [vmem:[%s7 + $0x1c] sm:$0xf]
    %v399 = vunpack.c.l.b16 %v383
    %v400 = vunpack.c.l.b16 %v384
    %v401 = vunpack.c.l.b16 %v385
    %v402 = vunpack.c.l.b16 %v386
    %v403 = vunpack.c.l.b16 %v387
    %v404 = vunpack.c.l.b16 %v388
    %v405 = vunpack.c.l.b16 %v389
    %v406 = vunpack.c.l.b16 %v390
    %v407 = vpack.c.b16 %v400, %v399
    %v408 = vpack.c.b16 %v402, %v401
    %v409 = vpack.c.b16 %v404, %v403
    %v410 = vpack.c.b16 %v406, %v405
    %415 = vmatprep.subr.bf16.mxu0 0
    %416 = vmatpush1.bf16.msra.mxu0 %v407
    %417 = vmatprep.subr.bf16.mxu0 0
    %418 = vmatpush1.bf16.msra.mxu0 %v408
    %419 = vmatprep.subr.bf16.mxu0 0
    %420 = vmatpush1.bf16.msra.mxu0 %v409
    %421 = vmatprep.subr.bf16.mxu0 0
    %422 = vmatpush1.bf16.msra.mxu0 %v410
    %423 = vmatprep.subr.bf16.mxu0 0
    %424 = vmatpush1.bf16.msra.mxu0 0
    %425 = vmatprep.subr.bf16.mxu0 0
    %426 = vmatpush1.bf16.msra.mxu0 0
    %427 = vmatprep.subr.bf16.mxu0 0
    %428 = vmatpush1.bf16.msra.mxu0 0
    %429 = vmatprep.subr.bf16.mxu0 0
    %430 = vmatpush1.bf16.msra.mxu0 0
    %431 = vmatprep.subr.bf16.mxu0 0
    %432 = vmatpush1.bf16.msra.mxu0 0
    %433 = vmatprep.subr.bf16.mxu0 0
    %434 = vmatpush1.bf16.msra.mxu0 0
    %435 = vmatprep.subr.bf16.mxu0 0
    %436 = vmatpush1.bf16.msra.mxu0 0
    %437 = vmatprep.subr.bf16.mxu0 0
    %438 = vmatpush1.bf16.msra.mxu0 0
    %439 = vmatprep.subr.bf16.mxu0 0
    %440 = vmatpush1.bf16.msra.mxu0 0
    %441 = vmatprep.subr.bf16.mxu0 0
    %442 = vmatpush1.bf16.msra.mxu0 0
    %443 = vmatprep.subr.bf16.mxu0 0
    %444 = vmatpush1.bf16.msra.mxu0 0
    %445 = vmatprep.subr.bf16.mxu0 0
    %446 = vmatpush1.bf16.msra.mxu0 0
    %447 = vmatprep.mubr.bf16.mxu0 0
    %448 = vmatmul.mubr.bf16.gmra.mrb[0].mxu0 %v340
    %v449 = vpop.f32.mrb[0].mxu0
    %v450 = vadd.f32 0.0, %v449
    %v451 = vpop.f32.mrb[0].mxu0
    %v452 = vpop.f32.mrb[0].mxu0
    %v453 = vadd.f32 0.0, %v452
    %v454 = vpop.f32.mrb[0].mxu0
    %455 = vdwg.mxu0
    %v456 = vld [vmem:[%s8] sm:$0xff]
    %v457 = vld [vmem:[%s8 + $0x8] sm:$0xff]
    %v458 = vld [vmem:[%s8 + $0x10] sm:$0xff]
    %v459 = vld [vmem:[%s8 + $0x18] sm:$0xff]
    %v460 = vld [vmem:[%s8 + $0x20] sm:$0xff]
    %v461 = vld [vmem:[%s8 + $0x28] sm:$0xff]
    %v462 = vld [vmem:[%s8 + $0x30] sm:$0xff]
    %v463 = vld [vmem:[%s8 + $0x38] sm:$0xff]
    %v464 = vld [vmem:[%s8 + $0x40] sm:$0xff]
    %v465 = vld [vmem:[%s8 + $0x48] sm:$0xff]
    %v466 = vld [vmem:[%s8 + $0x50] sm:$0xff]
    %v467 = vld [vmem:[%s8 + $0x58] sm:$0xff]
    %v468 = vld [vmem:[%s8 + $0x60] sm:$0xff]
    %v469 = vld [vmem:[%s8 + $0x68] sm:$0xff]
    %v470 = vld [vmem:[%s8 + $0x70] sm:$0xff]
    %v471 = vld [vmem:[%s8 + $0x78] sm:$0xff]
    %v488 = vunpack.c.l.b16 %v456
    %v489 = vunpack.c.h.b16 %v456
    %v490 = vunpack.c.l.b16 %v457
    %v491 = vunpack.c.h.b16 %v457
    %v492 = vunpack.c.l.b16 %v458
    %v493 = vunpack.c.h.b16 %v458
    %v494 = vunpack.c.l.b16 %v459
    %v495 = vunpack.c.h.b16 %v459
    %v496 = vunpack.c.l.b16 %v460
    %v497 = vunpack.c.h.b16 %v460
    %v498 = vunpack.c.l.b16 %v461
    %v499 = vunpack.c.h.b16 %v461
    %v500 = vunpack.c.l.b16 %v462
    %v501 = vunpack.c.h.b16 %v462
    %v502 = vunpack.c.l.b16 %v463
    %v503 = vunpack.c.h.b16 %v463
    %v504 = vunpack.c.l.b16 %v464
    %v505 = vunpack.c.h.b16 %v464
    %v506 = vunpack.c.l.b16 %v465
    %v507 = vunpack.c.h.b16 %v465
    %v508 = vunpack.c.l.b16 %v466
    %v509 = vunpack.c.h.b16 %v466
    %v510 = vunpack.c.l.b16 %v467
    %v511 = vunpack.c.h.b16 %v467
    %v512 = vunpack.c.l.b16 %v468
    %v513 = vunpack.c.h.b16 %v468
    %v514 = vunpack.c.l.b16 %v469
    %v515 = vunpack.c.h.b16 %v469
    %v516 = vunpack.c.l.b16 %v470
    %v517 = vunpack.c.h.b16 %v470
    %v518 = vunpack.c.l.b16 %v471
    %v519 = vunpack.c.h.b16 %v471
    %v520 = vpack.c.b16 %v492, %v488
    %v521 = vpack.c.b16 %v493, %v489
    %v522 = vpack.c.b16 %v494, %v490
    %v523 = vpack.c.b16 %v495, %v491
    %v524 = vpack.c.b16 %v500, %v496
    %v525 = vpack.c.b16 %v501, %v497
    %v526 = vpack.c.b16 %v502, %v498
    %v527 = vpack.c.b16 %v503, %v499
    %v528 = vpack.c.b16 %v508, %v504
    %v529 = vpack.c.b16 %v509, %v505
    %v530 = vpack.c.b16 %v510, %v506
    %v531 = vpack.c.b16 %v511, %v507
    %v532 = vpack.c.b16 %v516, %v512
    %v533 = vpack.c.b16 %v517, %v513
    %v534 = vpack.c.b16 %v518, %v514
    %v535 = vpack.c.b16 %v519, %v515
    %552 = vmatprep.subr.bf16.mxu0 %v521
    %553 = vmatpush1.bf16.msra.mxu0 %v520
    %554 = vmatprep.subr.bf16.mxu0 %v525
    %555 = vmatpush1.bf16.msra.mxu0 %v524
    %556 = vmatprep.subr.bf16.mxu0 %v529
    %557 = vmatpush1.bf16.msra.mxu0 %v528
    %558 = vmatprep.subr.bf16.mxu0 %v533
    %559 = vmatpush1.bf16.msra.mxu0 %v532
    %560 = vmatprep.subr.bf16.mxu0 0
    %561 = vmatpush1.bf16.msra.mxu0 0
    %562 = vmatprep.subr.bf16.mxu0 0
    %563 = vmatpush1.bf16.msra.mxu0 0
    %564 = vmatprep.subr.bf16.mxu0 0
    %565 = vmatpush1.bf16.msra.mxu0 0
    %566 = vmatprep.subr.bf16.mxu0 0
    %567 = vmatpush1.bf16.msra.mxu0 0
    %568 = vmatprep.subr.bf16.mxu0 0
    %569 = vmatpush1.bf16.msra.mxu0 0
    %570 = vmatprep.subr.bf16.mxu0 0
    %571 = vmatpush1.bf16.msra.mxu0 0
    %572 = vmatprep.subr.bf16.mxu0 0
    %573 = vmatpush1.bf16.msra.mxu0 0
    %574 = vmatprep.subr.bf16.mxu0 0
    %575 = vmatpush1.bf16.msra.mxu0 0
    %576 = vmatprep.subr.bf16.mxu0 0
    %577 = vmatpush1.bf16.msra.mxu0 0
    %578 = vmatprep.subr.bf16.mxu0 0
    %579 = vmatpush1.bf16.msra.mxu0 0
    %580 = vmatprep.subr.bf16.mxu0 0
    %581 = vmatpush1.bf16.msra.mxu0 0
    %582 = vmatprep.subr.bf16.mxu0 0
    %583 = vmatpush1.bf16.msra.mxu0 0
    %584 = vmatprep.mubr.bf16.mxu0 0
    %585 = vmatmul.mubr.bf16.gmra.mrb[0].mxu0 %v340
    %v586 = vpop.f32.mrb[0].mxu0
    %v587 = vadd.f32 0.0, %v586
    %v588 = vpop.f32.mrb[0].mxu0
    %v589 = vadd.f32 0.0, %v588
    %v590 = vpop.f32.mrb[0].mxu0
    %v591 = vadd.f32 0.0, %v590
    %v592 = vpop.f32.mrb[0].mxu0
    %v593 = vadd.f32 0.0, %v592
    %594 = vdwg.mxu0
    %595 = vmatprep.subr.bf16.mxu0 %v523
    %596 = vmatpush1.bf16.msra.mxu0 %v522
    %597 = vmatprep.subr.bf16.mxu0 %v527
    %598 = vmatpush1.bf16.msra.mxu0 %v526
    %599 = vmatprep.subr.bf16.mxu0 %v531
    %600 = vmatpush1.bf16.msra.mxu0 %v530
    %601 = vmatprep.subr.bf16.mxu0 %v535
    %602 = vmatpush1.bf16.msra.mxu0 %v534
    %603 = vmatprep.subr.bf16.mxu0 0
    %604 = vmatpush1.bf16.msra.mxu0 0
    %605 = vmatprep.subr.bf16.mxu0 0
    %606 = vmatpush1.bf16.msra.mxu0 0
    %607 = vmatprep.subr.bf16.mxu0 0
    %608 = vmatpush1.bf16.msra.mxu0 0
    %609 = vmatprep.subr.bf16.mxu0 0
    %610 = vmatpush1.bf16.msra.mxu0 0
    %611 = vmatprep.subr.bf16.mxu0 0
    %612 = vmatpush1.bf16.msra.mxu0 0
    %613 = vmatprep.subr.bf16.mxu0 0
    %614 = vmatpush1.bf16.msra.mxu0 0
    %615 = vmatprep.subr.bf16.mxu0 0
    %616 = vmatpush1.bf16.msra.mxu0 0
    %617 = vmatprep.subr.bf16.mxu0 0
    %618 = vmatpush1.bf16.msra.mxu0 0
    %619 = vmatprep.subr.bf16.mxu0 0
    %620 = vmatpush1.bf16.msra.mxu0 0
    %621 = vmatprep.subr.bf16.mxu0 0
    %622 = vmatpush1.bf16.msra.mxu0 0
    %623 = vmatprep.subr.bf16.mxu0 0
    %624 = vmatpush1.bf16.msra.mxu0 0
    %625 = vmatprep.subr.bf16.mxu0 0
    %626 = vmatpush1.bf16.msra.mxu0 0
    %627 = vmatprep.mubr.bf16.mxu0 0
    %628 = vmatmul.mubr.bf16.gmra.mrb[0].mxu0 %v340
    %v629 = vpop.f32.mrb[0].mxu0
    %v630 = vadd.f32 0.0, %v629
    %v631 = vpop.f32.mrb[0].mxu0
    %v632 = vadd.f32 0.0, %v631
    %v633 = vpop.f32.mrb[0].mxu0
    %v634 = vadd.f32 0.0, %v633
    %v635 = vpop.f32.mrb[0].mxu0
    %v636 = vadd.f32 0.0, %v635
    %637 = vdwg.mxu0
    %v638 = vld [vmem:[%s9] sm:$0xf]
    %v639 = vld [vmem:[%s9 + $0x4] sm:$0xf]
    %v640 = vld [vmem:[%s9 + $0x8] sm:$0xf]
    %v641 = vld [vmem:[%s9 + $0xc] sm:$0xf]
    %v642 = vld [vmem:[%s9 + $0x10] sm:$0xf]
    %v643 = vld [vmem:[%s9 + $0x14] sm:$0xf]
    %v644 = vld [vmem:[%s9 + $0x18] sm:$0xf]
    %v645 = vld [vmem:[%s9 + $0x1c] sm:$0xf]
    %v646 = vld [vmem:[#allocation8] sm:$0xf]
    %v647 = vld [vmem:[#allocation10] sm:$0x1]
    %vm648 = vcmask 130048
    %v650 = vsel %vm648, %v246, 0
    %v653 = vsel %vm648, %v247, 0
    %655 = vmatprep.subr.mxu0 0.0
    %656 = vmatpush1.msra.mxu0 %v450
    %657 = vmatprep.subr.mxu0 0.0
    %658 = vmatpush1.msra.mxu0 %v453
    %659 = vmatprep.subr.mxu0 0.0
    %660 = vmatpush1.msra.mxu0 0.0
    %661 = vmatprep.subr.mxu0 0.0
    %662 = vmatpush1.msra.mxu0 0.0
    %663 = vmatprep.subr.mxu0 0.0
    %664 = vmatpush1.msra.mxu0 0.0
    %665 = vmatprep.subr.mxu0 0.0
    %666 = vmatpush1.msra.mxu0 0.0
    %667 = vmatprep.subr.mxu0 0.0
    %668 = vmatpush1.msra.mxu0 0.0
    %669 = vmatprep.subr.mxu0 0.0
    %670 = vmatpush1.msra.mxu0 0.0
    %671 = vmatprep.subr.mxu0 0.0
    %672 = vmatpush1.msra.mxu0 0.0
    %673 = vmatprep.subr.mxu0 0.0
    %674 = vmatpush1.msra.mxu0 0.0
    %675 = vmatprep.subr.mxu0 0.0
    %676 = vmatpush1.msra.mxu0 0.0
    %677 = vmatprep.subr.mxu0 0.0
    %678 = vmatpush1.msra.mxu0 0.0
    %679 = vmatprep.subr.mxu0 0.0
    %680 = vmatpush1.msra.mxu0 0.0
    %681 = vmatprep.subr.mxu0 0.0
    %682 = vmatpush1.msra.mxu0 0.0
    %683 = vmatprep.subr.mxu0 0.0
    %684 = vmatpush1.msra.mxu0 0.0
    %685 = vmatprep.subr.mxu0 0.0
    %686 = vmatpush1.msra.mxu0 0.0
    %687 = vmatprep.subr.mxu0 0.0
    %688 = vmatpush1.msra.mxu0 0.0
    %689 = vmatprep.subr.mxu0 0.0
    %690 = vmatpush1.msra.mxu0 0.0
    %691 = vmatprep.subr.mxu0 0.0
    %692 = vmatpush1.msra.mxu0 0.0
    %693 = vmatprep.subr.mxu0 0.0
    %694 = vmatpush1.msra.mxu0 0.0
    %695 = vmatprep.subr.mxu0 0.0
    %696 = vmatpush1.msra.mxu0 0.0
    %697 = vmatprep.subr.mxu0 0.0
    %698 = vmatpush1.msra.mxu0 0.0
    %699 = vmatprep.subr.mxu0 0.0
    %700 = vmatpush1.msra.mxu0 0.0
    %701 = vmatprep.subr.mxu0 0.0
    %702 = vmatpush1.msra.mxu0 0.0
    %703 = vmatprep.subr.mxu0 0.0
    %704 = vmatpush1.msra.mxu0 0.0
    %705 = vmatprep.subr.mxu0 0.0
    %706 = vmatpush1.msra.mxu0 0.0
    %707 = vmatprep.subr.mxu0 0.0
    %708 = vmatpush1.msra.mxu0 0.0
    %709 = vmatprep.subr.mxu0 0.0
    %710 = vmatpush1.msra.mxu0 0.0
    %711 = vmatprep.subr.mxu0 0.0
    %712 = vmatpush1.msra.mxu0 0.0
    %713 = vmatprep.subr.mxu0 0.0
    %714 = vmatpush1.msra.mxu0 0.0
    %715 = vmatprep.subr.mxu0 0.0
    %716 = vmatpush1.msra.mxu0 0.0
    %717 = vmatprep.subr.mxu0 0.0
    %718 = vmatpush1.msra.mxu0 0.0
    %719 = vmatprep.mubr.f32.mxu0 0.0
    %720 = vmatmul.mubr.f32.gmra.mrb[0].mxu0 %v650
    %v721 = vpop.f32.mrb[0].mxu0
    %v722 = vadd.f32 0.0, %v721
    %v723 = vpop.f32.mrb[0].mxu0
    %724 = vmatprep.mubr.f32.mxu0 0.0
    %725 = vmatmul.mubr.f32.gmra.mrb[0].mxu0 %v653
    %v726 = vpop.f32.mrb[0].mxu0
    %v727 = vadd.f32 0.0, %v726
    %v728 = vpop.f32.mrb[0].mxu0
    %729 = vdwg.mxu0
    %v730 = vlaneseq
    %v731 = vshrl.u32 %v730, 7
    %v732 = vsub.s32 0, %v731
    %v733 = vrot.slane %v646, %v732
    %v734 = vmul.f32 %v722, %v733
    %v735 = vmul.f32 %v727, %v733
    %v736 = vadd.f32 %v734, 0.0
    %v737 = vadd.f32 %v735, 0.0
    %v739 = vsel %vm648, %v248, 0
    %v742 = vsel %vm648, %v249, 0
    %744 = vmatprep.subr.mxu0 0.0
    %745 = vmatpush1.msra.mxu0 %v450
    %746 = vmatprep.subr.mxu0 0.0
    %747 = vmatpush1.msra.mxu0 %v453
    %748 = vmatprep.subr.mxu0 0.0
    %749 = vmatpush1.msra.mxu0 0.0
    %750 = vmatprep.subr.mxu0 0.0
    %751 = vmatpush1.msra.mxu0 0.0
    %752 = vmatprep.subr.mxu0 0.0
    %753 = vmatpush1.msra.mxu0 0.0
    %754 = vmatprep.subr.mxu0 0.0
    %755 = vmatpush1.msra.mxu0 0.0
    %756 = vmatprep.subr.mxu0 0.0
    %757 = vmatpush1.msra.mxu0 0.0
    %758 = vmatprep.subr.mxu0 0.0
    %759 = vmatpush1.msra.mxu0 0.0
    %760 = vmatprep.subr.mxu0 0.0
    %761 = vmatpush1.msra.mxu0 0.0
    %762 = vmatprep.subr.mxu0 0.0
    %763 = vmatpush1.msra.mxu0 0.0
    %764 = vmatprep.subr.mxu0 0.0
    %765 = vmatpush1.msra.mxu0 0.0
    %766 = vmatprep.subr.mxu0 0.0
    %767 = vmatpush1.msra.mxu0 0.0
    %768 = vmatprep.subr.mxu0 0.0
    %769 = vmatpush1.msra.mxu0 0.0
    %770 = vmatprep.subr.mxu0 0.0
    %771 = vmatpush1.msra.mxu0 0.0
    %772 = vmatprep.subr.mxu0 0.0
    %773 = vmatpush1.msra.mxu0 0.0
    %774 = vmatprep.subr.mxu0 0.0
    %775 = vmatpush1.msra.mxu0 0.0
    %776 = vmatprep.subr.mxu0 0.0
    %777 = vmatpush1.msra.mxu0 0.0
    %778 = vmatprep.subr.mxu0 0.0
    %779 = vmatpush1.msra.mxu0 0.0
    %780 = vmatprep.subr.mxu0 0.0
    %781 = vmatpush1.msra.mxu0 0.0
    %782 = vmatprep.subr.mxu0 0.0
    %783 = vmatpush1.msra.mxu0 0.0
    %784 = vmatprep.subr.mxu0 0.0
    %785 = vmatpush1.msra.mxu0 0.0
    %786 = vmatprep.subr.mxu0 0.0
    %787 = vmatpush1.msra.mxu0 0.0
    %788 = vmatprep.subr.mxu0 0.0
    %789 = vmatpush1.msra.mxu0 0.0
    %790 = vmatprep.subr.mxu0 0.0
    %791 = vmatpush1.msra.mxu0 0.0
    %792 = vmatprep.subr.mxu0 0.0
    %793 = vmatpush1.msra.mxu0 0.0
    %794 = vmatprep.subr.mxu0 0.0
    %795 = vmatpush1.msra.mxu0 0.0
    %796 = vmatprep.subr.mxu0 0.0
    %797 = vmatpush1.msra.mxu0 0.0
    %798 = vmatprep.subr.mxu0 0.0
    %799 = vmatpush1.msra.mxu0 0.0
    %800 = vmatprep.subr.mxu0 0.0
    %801 = vmatpush1.msra.mxu0 0.0
    %802 = vmatprep.subr.mxu0 0.0
    %803 = vmatpush1.msra.mxu0 0.0
    %804 = vmatprep.subr.mxu0 0.0
    %805 = vmatpush1.msra.mxu0 0.0
    %806 = vmatprep.subr.mxu0 0.0
    %807 = vmatpush1.msra.mxu0 0.0
    %808 = vmatprep.mubr.f32.mxu0 0.0
    %809 = vmatmul.mubr.f32.gmra.mrb[0].mxu0 %v739
    %v810 = vpop.f32.mrb[0].mxu0
    %v811 = vadd.f32 0.0, %v810
    %v812 = vpop.f32.mrb[0].mxu0
    %813 = vmatprep.mubr.f32.mxu0 0.0
    %814 = vmatmul.mubr.f32.gmra.mrb[0].mxu0 %v742
    %v815 = vpop.f32.mrb[0].mxu0
    %v816 = vadd.f32 0.0, %v815
    %v817 = vpop.f32.mrb[0].mxu0
    %818 = vdwg.mxu0
    %v819 = vlaneseq
    %v820 = vshrl.u32 %v819, 7
    %v821 = vsub.s32 1, %v820
    %v822 = vrot.slane %v646, %v821
    %v823 = vmul.f32 %v811, %v822
    %v824 = vmul.f32 %v816, %v822
    %v825 = vadd.f32 %v736, %v823
    %v826 = vadd.f32 %v737, %v824
    %v828 = vsel %vm648, %v250, 0
    %v831 = vsel %vm648, %v251, 0
    %833 = vmatprep.subr.mxu0 0.0
    %834 = vmatpush1.msra.mxu0 %v450
    %835 = vmatprep.subr.mxu0 0.0
    %836 = vmatpush1.msra.mxu0 %v453
    %837 = vmatprep.subr.mxu0 0.0
    %838 = vmatpush1.msra.mxu0 0.0
    %839 = vmatprep.subr.mxu0 0.0
    %840 = vmatpush1.msra.mxu0 0.0
    %841 = vmatprep.subr.mxu0 0.0
    %842 = vmatpush1.msra.mxu0 0.0
    %843 = vmatprep.subr.mxu0 0.0
    %844 = vmatpush1.msra.mxu0 0.0
    %845 = vmatprep.subr.mxu0 0.0
    %846 = vmatpush1.msra.mxu0 0.0
    %847 = vmatprep.subr.mxu0 0.0
    %848 = vmatpush1.msra.mxu0 0.0
    %849 = vmatprep.subr.mxu0 0.0
    %850 = vmatpush1.msra.mxu0 0.0
    %851 = vmatprep.subr.mxu0 0.0
    %852 = vmatpush1.msra.mxu0 0.0
    %853 = vmatprep.subr.mxu0 0.0
    %854 = vmatpush1.msra.mxu0 0.0
    %855 = vmatprep.subr.mxu0 0.0
    %856 = vmatpush1.msra.mxu0 0.0
    %857 = vmatprep.subr.mxu0 0.0
    %858 = vmatpush1.msra.mxu0 0.0
    %859 = vmatprep.subr.mxu0 0.0
    %860 = vmatpush1.msra.mxu0 0.0
    %861 = vmatprep.subr.mxu0 0.0
    %862 = vmatpush1.msra.mxu0 0.0
    %863 = vmatprep.subr.mxu0 0.0
    %864 = vmatpush1.msra.mxu0 0.0
    %865 = vmatprep.subr.mxu0 0.0
    %866 = vmatpush1.msra.mxu0 0.0
    %867 = vmatprep.subr.mxu0 0.0
    %868 = vmatpush1.msra.mxu0 0.0
    %869 = vmatprep.subr.mxu0 0.0
    %870 = vmatpush1.msra.mxu0 0.0
    %871 = vmatprep.subr.mxu0 0.0
    %872 = vmatpush1.msra.mxu0 0.0
    %873 = vmatprep.subr.mxu0 0.0
    %874 = vmatpush1.msra.mxu0 0.0
    %875 = vmatprep.subr.mxu0 0.0
    %876 = vmatpush1.msra.mxu0 0.0
    %877 = vmatprep.subr.mxu0 0.0
    %878 = vmatpush1.msra.mxu0 0.0
    %879 = vmatprep.subr.mxu0 0.0
    %880 = vmatpush1.msra.mxu0 0.0
    %881 = vmatprep.subr.mxu0 0.0
    %882 = vmatpush1.msra.mxu0 0.0
    %883 = vmatprep.subr.mxu0 0.0
    %884 = vmatpush1.msra.mxu0 0.0
    %885 = vmatprep.subr.mxu0 0.0
    %886 = vmatpush1.msra.mxu0 0.0
    %887 = vmatprep.subr.mxu0 0.0
    %888 = vmatpush1.msra.mxu0 0.0
    %889 = vmatprep.subr.mxu0 0.0
    %890 = vmatpush1.msra.mxu0 0.0
    %891 = vmatprep.subr.mxu0 0.0
    %892 = vmatpush1.msra.mxu0 0.0
    %893 = vmatprep.subr.mxu0 0.0
    %894 = vmatpush1.msra.mxu0 0.0
    %895 = vmatprep.subr.mxu0 0.0
    %896 = vmatpush1.msra.mxu0 0.0
    %897 = vmatprep.mubr.f32.mxu0 0.0
    %898 = vmatmul.mubr.f32.gmra.mrb[0].mxu0 %v828
    %v899 = vpop.f32.mrb[0].mxu0
    %v900 = vadd.f32 0.0, %v899
    %v901 = vpop.f32.mrb[0].mxu0
    %902 = vmatprep.mubr.f32.mxu0 0.0
    %903 = vmatmul.mubr.f32.gmra.mrb[0].mxu0 %v831
    %v904 = vpop.f32.mrb[0].mxu0
    %v905 = vadd.f32 0.0, %v904
    %v906 = vpop.f32.mrb[0].mxu0
    %907 = vdwg.mxu0
    %v908 = vlaneseq
    %v909 = vshrl.u32 %v908, 7
    %v910 = vsub.s32 2, %v909
    %v911 = vrot.slane %v646, %v910
    %v912 = vmul.f32 %v900, %v911
    %v913 = vmul.f32 %v905, %v911
    %v914 = vadd.f32 %v825, %v912
    %v915 = vadd.f32 %v826, %v913
    %v917 = vsel %vm648, %v252, 0
    %v920 = vsel %vm648, %v253, 0
    %922 = vmatprep.subr.mxu0 0.0
    %923 = vmatpush1.msra.mxu0 %v450
    %924 = vmatprep.subr.mxu0 0.0
    %925 = vmatpush1.msra.mxu0 %v453
    %926 = vmatprep.subr.mxu0 0.0
    %927 = vmatpush1.msra.mxu0 0.0
    %928 = vmatprep.subr.mxu0 0.0
    %929 = vmatpush1.msra.mxu0 0.0
    %930 = vmatprep.subr.mxu0 0.0
    %931 = vmatpush1.msra.mxu0 0.0
    %932 = vmatprep.subr.mxu0 0.0
    %933 = vmatpush1.msra.mxu0 0.0
    %934 = vmatprep.subr.mxu0 0.0
    %935 = vmatpush1.msra.mxu0 0.0
    %936 = vmatprep.subr.mxu0 0.0
    %937 = vmatpush1.msra.mxu0 0.0
    %938 = vmatprep.subr.mxu0 0.0
    %939 = vmatpush1.msra.mxu0 0.0
    %940 = vmatprep.subr.mxu0 0.0
    %941 = vmatpush1.msra.mxu0 0.0
    %942 = vmatprep.subr.mxu0 0.0
    %943 = vmatpush1.msra.mxu0 0.0
    %944 = vmatprep.subr.mxu0 0.0
    %945 = vmatpush1.msra.mxu0 0.0
    %946 = vmatprep.subr.mxu0 0.0
    %947 = vmatpush1.msra.mxu0 0.0
    %948 = vmatprep.subr.mxu0 0.0
    %949 = vmatpush1.msra.mxu0 0.0
    %950 = vmatprep.subr.mxu0 0.0
    %951 = vmatpush1.msra.mxu0 0.0
    %952 = vmatprep.subr.mxu0 0.0
    %953 = vmatpush1.msra.mxu0 0.0
    %954 = vmatprep.subr.mxu0 0.0
    %955 = vmatpush1.msra.mxu0 0.0
    %956 = vmatprep.subr.mxu0 0.0
    %957 = vmatpush1.msra.mxu0 0.0
    %958 = vmatprep.subr.mxu0 0.0
    %959 = vmatpush1.msra.mxu0 0.0
    %960 = vmatprep.subr.mxu0 0.0
    %961 = vmatpush1.msra.mxu0 0.0
    %962 = vmatprep.subr.mxu0 0.0
    %963 = vmatpush1.msra.mxu0 0.0
    %964 = vmatprep.subr.mxu0 0.0
    %965 = vmatpush1.msra.mxu0 0.0
    %966 = vmatprep.subr.mxu0 0.0
    %967 = vmatpush1.msra.mxu0 0.0
    %968 = vmatprep.subr.mxu0 0.0
    %969 = vmatpush1.msra.mxu0 0.0
    %970 = vmatprep.subr.mxu0 0.0
    %971 = vmatpush1.msra.mxu0 0.0
    %972 = vmatprep.subr.mxu0 0.0
    %973 = vmatpush1.msra.mxu0 0.0
    %974 = vmatprep.subr.mxu0 0.0
    %975 = vmatpush1.msra.mxu0 0.0
    %976 = vmatprep.subr.mxu0 0.0
    %977 = vmatpush1.msra.mxu0 0.0
    %978 = vmatprep.subr.mxu0 0.0
    %979 = vmatpush1.msra.mxu0 0.0
    %980 = vmatprep.subr.mxu0 0.0
    %981 = vmatpush1.msra.mxu0 0.0
    %982 = vmatprep.subr.mxu0 0.0
    %983 = vmatpush1.msra.mxu0 0.0
    %984 = vmatprep.subr.mxu0 0.0
    %985 = vmatpush1.msra.mxu0 0.0
    %986 = vmatprep.mubr.f32.mxu0 0.0
    %987 = vmatmul.mubr.f32.gmra.mrb[0].mxu0 %v917
    %v988 = vpop.f32.mrb[0].mxu0
    %v989 = vadd.f32 0.0, %v988
    %v990 = vpop.f32.mrb[0].mxu0
    %991 = vmatprep.mubr.f32.mxu0 0.0
    %992 = vmatmul.mubr.f32.gmra.mrb[0].mxu0 %v920
    %v993 = vpop.f32.mrb[0].mxu0
    %v994 = vadd.f32 0.0, %v993
    %v995 = vpop.f32.mrb[0].mxu0
    %996 = vdwg.mxu0
    %v997 = vlaneseq
    %v998 = vshrl.u32 %v997, 7
    %v999 = vsub.s32 3, %v998
    %v1000 = vrot.slane %v646, %v999
    %v1001 = vmul.f32 %v989, %v1000
    %v1002 = vmul.f32 %v994, %v1000
    %v1003 = vadd.f32 %v914, %v1001
    %v1004 = vadd.f32 %v915, %v1002
    %v1006 = vlaneseq
    %v1007 = vshrl.u32 %v1006, 7
    %v1008 = vsub.s32 0, %v1007
    %v1009 = vrot.slane %v647, %v1008
    %v1011 = vadd.f32 %v1003, %v1009
    %v1012 = vadd.f32 %v1004, %v1009
    %v1013 = vxor.u32 %v1011, 2147483648
    %v1014 = vxor.u32 %v1012, 2147483648
    %v1015 = vmul.f32 %v1013, 1.442695
    %v1016 = vpow.pop %v1015
    %v1017 = vmul.f32 %v1014, 1.442695
    %v1018 = vpow.pop %v1017
    %v1019 = vadd.f32 %v1016, 1.0
    %v1020 = vadd.f32 %v1018, 1.0
    %v1021 = vrcp.pop %v1019
    %v1022 = vmul.f32 1.0, %v1021
    %v1023 = vrcp.pop %v1020
    %v1024 = vmul.f32 1.0, %v1023
    %v1025 = vmul.f32 %v1011, %v1022
    %v1026 = vmul.f32 %v1012, %v1024
    %v1027 = vld [vmem:[#allocation11] sm:$0xff]
    %v1028 = vld [vmem:[#allocation11 + $0x8] sm:$0xff]
    %v1029 = vld [vmem:[#allocation13] sm:$0xf]
    %1030 = vmatprep.subr.mxu0 %v589
    %1031 = vmatpush1.msra.mxu0 %v587
    %1032 = vmatprep.subr.mxu0 %v593
    %1033 = vmatpush1.msra.mxu0 %v591
    %1034 = vmatprep.subr.mxu0 0.0
    %1035 = vmatpush1.msra.mxu0 0.0
    %1036 = vmatprep.subr.mxu0 0.0
    %1037 = vmatpush1.msra.mxu0 0.0
    %1038 = vmatprep.subr.mxu0 0.0
    %1039 = vmatpush1.msra.mxu0 0.0
    %1040 = vmatprep.subr.mxu0 0.0
    %1041 = vmatpush1.msra.mxu0 0.0
    %1042 = vmatprep.subr.mxu0 0.0
    %1043 = vmatpush1.msra.mxu0 0.0
    %1044 = vmatprep.subr.mxu0 0.0
    %1045 = vmatpush1.msra.mxu0 0.0
    %1046 = vmatprep.subr.mxu0 0.0
    %1047 = vmatpush1.msra.mxu0 0.0
    %1048 = vmatprep.subr.mxu0 0.0
    %1049 = vmatpush1.msra.mxu0 0.0
    %1050 = vmatprep.subr.mxu0 0.0
    %1051 = vmatpush1.msra.mxu0 0.0
    %1052 = vmatprep.subr.mxu0 0.0
    %1053 = vmatpush1.msra.mxu0 0.0
    %1054 = vmatprep.subr.mxu0 0.0
    %1055 = vmatpush1.msra.mxu0 0.0
    %1056 = vmatprep.subr.mxu0 0.0
    %1057 = vmatpush1.msra.mxu0 0.0
    %1058 = vmatprep.subr.mxu0 0.0
    %1059 = vmatpush1.msra.mxu0 0.0
    %1060 = vmatprep.subr.mxu0 0.0
    %1061 = vmatpush1.msra.mxu0 0.0
    %1062 = vmatprep.subr.mxu0 0.0
    %1063 = vmatpush1.msra.mxu0 0.0
    %1064 = vmatprep.subr.mxu0 0.0
    %1065 = vmatpush1.msra.mxu0 0.0
    %1066 = vmatprep.subr.mxu0 0.0
    %1067 = vmatpush1.msra.mxu0 0.0
    %1068 = vmatprep.subr.mxu0 0.0
    %1069 = vmatpush1.msra.mxu0 0.0
    %1070 = vmatprep.subr.mxu0 0.0
    %1071 = vmatpush1.msra.mxu0 0.0
    %1072 = vmatprep.subr.mxu0 0.0
    %1073 = vmatpush1.msra.mxu0 0.0
    %1074 = vmatprep.subr.mxu0 0.0
    %1075 = vmatpush1.msra.mxu0 0.0
    %1076 = vmatprep.subr.mxu0 0.0
    %1077 = vmatpush1.msra.mxu0 0.0
    %1078 = vmatprep.subr.mxu0 0.0
    %1079 = vmatpush1.msra.mxu0 0.0
    %1080 = vmatprep.subr.mxu0 0.0
    %1081 = vmatpush1.msra.mxu0 0.0
    %1082 = vmatprep.subr.mxu0 0.0
    %1083 = vmatpush1.msra.mxu0 0.0
    %1084 = vmatprep.subr.mxu0 0.0
    %1085 = vmatpush1.msra.mxu0 0.0
    %1086 = vmatprep.subr.mxu0 0.0
    %1087 = vmatpush1.msra.mxu0 0.0
    %1088 = vmatprep.subr.mxu0 0.0
    %1089 = vmatpush1.msra.mxu0 0.0
    %1090 = vmatprep.subr.mxu0 0.0
    %1091 = vmatpush1.msra.mxu0 0.0
    %1092 = vmatprep.subr.mxu0 0.0
    %1093 = vmatpush1.msra.mxu0 0.0
    %1094 = vmatprep.mubr.f32.mxu0 0.0
    %1095 = vmatmul.mubr.f32.gmra.mrb[0].mxu0 %v650
    %v1096 = vpop.f32.mrb[0].mxu0
    %v1097 = vadd.f32 0.0, %v1096
    %v1098 = vpop.f32.mrb[0].mxu0
    %v1099 = vadd.f32 0.0, %v1098
    %1100 = vmatprep.mubr.f32.mxu0 0.0
    %1101 = vmatmul.mubr.f32.gmra.mrb[0].mxu0 %v653
    %v1102 = vpop.f32.mrb[0].mxu0
    %v1103 = vadd.f32 0.0, %v1102
    %v1104 = vpop.f32.mrb[0].mxu0
    %v1105 = vadd.f32 0.0, %v1104
    %1106 = vdwg.mxu0
    %1107 = vmatprep.subr.mxu0 %v632
    %1108 = vmatpush1.msra.mxu0 %v630
    %1109 = vmatprep.subr.mxu0 %v636
    %1110 = vmatpush1.msra.mxu0 %v634
    %1111 = vmatprep.subr.mxu0 0.0
    %1112 = vmatpush1.msra.mxu0 0.0
    %1113 = vmatprep.subr.mxu0 0.0
    %1114 = vmatpush1.msra.mxu0 0.0
    %1115 = vmatprep.subr.mxu0 0.0
    %1116 = vmatpush1.msra.mxu0 0.0
    %1117 = vmatprep.subr.mxu0 0.0
    %1118 = vmatpush1.msra.mxu0 0.0
    %1119 = vmatprep.subr.mxu0 0.0
    %1120 = vmatpush1.msra.mxu0 0.0
    %1121 = vmatprep.subr.mxu0 0.0
    %1122 = vmatpush1.msra.mxu0 0.0
    %1123 = vmatprep.subr.mxu0 0.0
    %1124 = vmatpush1.msra.mxu0 0.0
    %1125 = vmatprep.subr.mxu0 0.0
    %1126 = vmatpush1.msra.mxu0 0.0
    %1127 = vmatprep.subr.mxu0 0.0
    %1128 = vmatpush1.msra.mxu0 0.0
    %1129 = vmatprep.subr.mxu0 0.0
    %1130 = vmatpush1.msra.mxu0 0.0
    %1131 = vmatprep.subr.mxu0 0.0
    %1132 = vmatpush1.msra.mxu0 0.0
    %1133 = vmatprep.subr.mxu0 0.0
    %1134 = vmatpush1.msra.mxu0 0.0
    %1135 = vmatprep.subr.mxu0 0.0
    %1136 = vmatpush1.msra.mxu0 0.0
    %1137 = vmatprep.subr.mxu0 0.0
    %1138 = vmatpush1.msra.mxu0 0.0
    %1139 = vmatprep.subr.mxu0 0.0
    %1140 = vmatpush1.msra.mxu0 0.0
    %1141 = vmatprep.subr.mxu0 0.0
    %1142 = vmatpush1.msra.mxu0 0.0
    %1143 = vmatprep.subr.mxu0 0.0
    %1144 = vmatpush1.msra.mxu0 0.0
    %1145 = vmatprep.subr.mxu0 0.0
    %1146 = vmatpush1.msra.mxu0 0.0
    %1147 = vmatprep.subr.mxu0 0.0
    %1148 = vmatpush1.msra.mxu0 0.0
    %1149 = vmatprep.subr.mxu0 0.0
    %1150 = vmatpush1.msra.mxu0 0.0
    %1151 = vmatprep.subr.mxu0 0.0
    %1152 = vmatpush1.msra.mxu0 0.0
    %1153 = vmatprep.subr.mxu0 0.0
    %1154 = vmatpush1.msra.mxu0 0.0
    %1155 = vmatprep.subr.mxu0 0.0
    %1156 = vmatpush1.msra.mxu0 0.0
    %1157 = vmatprep.subr.mxu0 0.0
    %1158 = vmatpush1.msra.mxu0 0.0
    %1159 = vmatprep.subr.mxu0 0.0
    %1160 = vmatpush1.msra.mxu0 0.0
    %1161 = vmatprep.subr.mxu0 0.0
    %1162 = vmatpush1.msra.mxu0 0.0
    %1163 = vmatprep.subr.mxu0 0.0
    %1164 = vmatpush1.msra.mxu0 0.0
    %1165 = vmatprep.subr.mxu0 0.0
    %1166 = vmatpush1.msra.mxu0 0.0
    %1167 = vmatprep.subr.mxu0 0.0
    %1168 = vmatpush1.msra.mxu0 0.0
    %1169 = vmatprep.subr.mxu0 0.0
    %1170 = vmatpush1.msra.mxu0 0.0
    %1171 = vmatprep.mubr.f32.mxu0 0.0
    %1172 = vmatmul.mubr.f32.gmra.mrb[0].mxu0 %v650
    %v1173 = vpop.f32.mrb[0].mxu0
    %v1174 = vadd.f32 0.0, %v1173
    %v1175 = vpop.f32.mrb[0].mxu0
    %v1176 = vadd.f32 0.0, %v1175
    %1177 = vmatprep.mubr.f32.mxu0 0.0
    %1178 = vmatmul.mubr.f32.gmra.mrb[0].mxu0 %v653
    %v1179 = vpop.f32.mrb[0].mxu0
    %v1180 = vadd.f32 0.0, %v1179
    %v1181 = vpop.f32.mrb[0].mxu0
    %v1182 = vadd.f32 0.0, %v1181
    %1183 = vdwg.mxu0
    %v1186 = vlaneseq
    %v1187 = vshrl.u32 %v1186, 7
    %v1188 = vsub.s32 0, %v1187
    %v1189 = vrot.slane %v1027, %v1188
    %v1190 = vlaneseq
    %v1191 = vshrl.u32 %v1190, 7
    %v1192 = vsub.s32 4, %v1191
    %v1193 = vrot.slane %v1027, %v1192
    %v1194 = vlaneseq
    %v1195 = vshrl.u32 %v1194, 7
    %v1196 = vsub.s32 0, %v1195
    %v1197 = vrot.slane %v1028, %v1196
    %v1198 = vlaneseq
    %v1199 = vshrl.u32 %v1198, 7
    %v1200 = vsub.s32 4, %v1199
    %v1201 = vrot.slane %v1028, %v1200
    %v1206 = vlaneseq
    %v1207 = vshrl.u32 %v1206, 7
    %v1208 = vsub.s32 0, %v1207
    %v1209 = vrot.slane %v1189, %v1208
    %v1210 = vlaneseq
    %v1211 = vshrl.u32 %v1210, 7
    %v1212 = vsub.s32 0, %v1211
    %v1213 = vrot.slane %v1193, %v1212
    %v1214 = vlaneseq
    %v1215 = vshrl.u32 %v1214, 7
    %v1216 = vsub.s32 0, %v1215
    %v1217 = vrot.slane %v1197, %v1216
    %v1218 = vlaneseq
    %v1219 = vshrl.u32 %v1218, 7
    %v1220 = vsub.s32 0, %v1219
    %v1221 = vrot.slane %v1201, %v1220
    %v1222 = vmul.f32 %v1097, %v1209
    %v1223 = vmul.f32 %v1099, %v1213
    %v1224 = vmul.f32 %v1174, %v1217
    %v1225 = vmul.f32 %v1176, %v1221
    %v1226 = vmul.f32 %v1103, %v1209
    %v1227 = vmul.f32 %v1105, %v1213
    %v1228 = vmul.f32 %v1180, %v1217
    %v1229 = vmul.f32 %v1182, %v1221
    %v1230 = vadd.f32 %v1222, 0.0
    %v1231 = vadd.f32 %v1223, 0.0
    %v1232 = vadd.f32 %v1224, 0.0
    %v1233 = vadd.f32 %v1225, 0.0
    %v1234 = vadd.f32 %v1226, 0.0
    %v1235 = vadd.f32 %v1227, 0.0
    %v1236 = vadd.f32 %v1228, 0.0
    %v1237 = vadd.f32 %v1229, 0.0
    %1238 = vmatprep.subr.mxu0 %v589
    %1239 = vmatpush1.msra.mxu0 %v587
    %1240 = vmatprep.subr.mxu0 %v593
    %1241 = vmatpush1.msra.mxu0 %v591
    %1242 = vmatprep.subr.mxu0 0.0
    %1243 = vmatpush1.msra.mxu0 0.0
    %1244 = vmatprep.subr.mxu0 0.0
    %1245 = vmatpush1.msra.mxu0 0.0
    %1246 = vmatprep.subr.mxu0 0.0
    %1247 = vmatpush1.msra.mxu0 0.0
    %1248 = vmatprep.subr.mxu0 0.0
    %1249 = vmatpush1.msra.mxu0 0.0
    %1250 = vmatprep.subr.mxu0 0.0
    %1251 = vmatpush1.msra.mxu0 0.0
    %1252 = vmatprep.subr.mxu0 0.0
    %1253 = vmatpush1.msra.mxu0 0.0
    %1254 = vmatprep.subr.mxu0 0.0
    %1255 = vmatpush1.msra.mxu0 0.0
    %1256 = vmatprep.subr.mxu0 0.0
    %1257 = vmatpush1.msra.mxu0 0.0
    %1258 = vmatprep.subr.mxu0 0.0
    %1259 = vmatpush1.msra.mxu0 0.0
    %1260 = vmatprep.subr.mxu0 0.0
    %1261 = vmatpush1.msra.mxu0 0.0
    %1262 = vmatprep.subr.mxu0 0.0
    %1263 = vmatpush1.msra.mxu0 0.0
    %1264 = vmatprep.subr.mxu0 0.0
    %1265 = vmatpush1.msra.mxu0 0.0
    %1266 = vmatprep.subr.mxu0 0.0
    %1267 = vmatpush1.msra.mxu0 0.0
    %1268 = vmatprep.subr.mxu0 0.0
    %1269 = vmatpush1.msra.mxu0 0.0
    %1270 = vmatprep.subr.mxu0 0.0
    %1271 = vmatpush1.msra.mxu0 0.0
    %1272 = vmatprep.subr.mxu0 0.0
    %1273 = vmatpush1.msra.mxu0 0.0
    %1274 = vmatprep.subr.mxu0 0.0
    %1275 = vmatpush1.msra.mxu0 0.0
    %1276 = vmatprep.subr.mxu0 0.0
    %1277 = vmatpush1.msra.mxu0 0.0
    %1278 = vmatprep.subr.mxu0 0.0
    %1279 = vmatpush1.msra.mxu0 0.0
    %1280 = vmatprep.subr.mxu0 0.0
    %1281 = vmatpush1.msra.mxu0 0.0
    %1282 = vmatprep.subr.mxu0 0.0
    %1283 = vmatpush1.msra.mxu0 0.0
    %1284 = vmatprep.subr.mxu0 0.0
    %1285 = vmatpush1.msra.mxu0 0.0
    %1286 = vmatprep.subr.mxu0 0.0
    %1287 = vmatpush1.msra.mxu0 0.0
    %1288 = vmatprep.subr.mxu0 0.0
    %1289 = vmatpush1.msra.mxu0 0.0
    %1290 = vmatprep.subr.mxu0 0.0
    %1291 = vmatpush1.msra.mxu0 0.0
    %1292 = vmatprep.subr.mxu0 0.0
    %1293 = vmatpush1.msra.mxu0 0.0
    %1294 = vmatprep.subr.mxu0 0.0
    %1295 = vmatpush1.msra.mxu0 0.0
    %1296 = vmatprep.subr.mxu0 0.0
    %1297 = vmatpush1.msra.mxu0 0.0
    %1298 = vmatprep.subr.mxu0 0.0
    %1299 = vmatpush1.msra.mxu0 0.0
    %1300 = vmatprep.subr.mxu0 0.0
    %1301 = vmatpush1.msra.mxu0 0.0
    %1302 = vmatprep.mubr.f32.mxu0 0.0
    %1303 = vmatmul.mubr.f32.gmra.mrb[0].mxu0 %v739
    %v1304 = vpop.f32.mrb[0].mxu0
    %v1305 = vadd.f32 0.0, %v1304
    %v1306 = vpop.f32.mrb[0].mxu0
    %v1307 = vadd.f32 0.0, %v1306
    %1308 = vmatprep.mubr.f32.mxu0 0.0
    %1309 = vmatmul.mubr.f32.gmra.mrb[0].mxu0 %v742
    %v1310 = vpop.f32.mrb[0].mxu0
    %v1311 = vadd.f32 0.0, %v1310
    %v1312 = vpop.f32.mrb[0].mxu0
    %v1313 = vadd.f32 0.0, %v1312
    %1314 = vdwg.mxu0
    %1315 = vmatprep.subr.mxu0 %v632
    %1316 = vmatpush1.msra.mxu0 %v630
    %1317 = vmatprep.subr.mxu0 %v636
    %1318 = vmatpush1.msra.mxu0 %v634
    %1319 = vmatprep.subr.mxu0 0.0
    %1320 = vmatpush1.msra.mxu0 0.0
    %1321 = vmatprep.subr.mxu0 0.0
    %1322 = vmatpush1.msra.mxu0 0.0
    %1323 = vmatprep.subr.mxu0 0.0
    %1324 = vmatpush1.msra.mxu0 0.0
    %1325 = vmatprep.subr.mxu0 0.0
    %1326 = vmatpush1.msra.mxu0 0.0
    %1327 = vmatprep.subr.mxu0 0.0
    %1328 = vmatpush1.msra.mxu0 0.0
    %1329 = vmatprep.subr.mxu0 0.0
    %1330 = vmatpush1.msra.mxu0 0.0
    %1331 = vmatprep.subr.mxu0 0.0
    %1332 = vmatpush1.msra.mxu0 0.0
    %1333 = vmatprep.subr.mxu0 0.0
    %1334 = vmatpush1.msra.mxu0 0.0
    %1335 = vmatprep.subr.mxu0 0.0
    %1336 = vmatpush1.msra.mxu0 0.0
    %1337 = vmatprep.subr.mxu0 0.0
    %1338 = vmatpush1.msra.mxu0 0.0
    %1339 = vmatprep.subr.mxu0 0.0
    %1340 = vmatpush1.msra.mxu0 0.0
    %1341 = vmatprep.subr.mxu0 0.0
    %1342 = vmatpush1.msra.mxu0 0.0
    %1343 = vmatprep.subr.mxu0 0.0
    %1344 = vmatpush1.msra.mxu0 0.0
    %1345 = vmatprep.subr.mxu0 0.0
    %1346 = vmatpush1.msra.mxu0 0.0
    %1347 = vmatprep.subr.mxu0 0.0
    %1348 = vmatpush1.msra.mxu0 0.0
    %1349 = vmatprep.subr.mxu0 0.0
    %1350 = vmatpush1.msra.mxu0 0.0
    %1351 = vmatprep.subr.mxu0 0.0
    %1352 = vmatpush1.msra.mxu0 0.0
    %1353 = vmatprep.subr.mxu0 0.0
    %1354 = vmatpush1.msra.mxu0 0.0
    %1355 = vmatprep.subr.mxu0 0.0
    %1356 = vmatpush1.msra.mxu0 0.0
    %1357 = vmatprep.subr.mxu0 0.0
    %1358 = vmatpush1.msra.mxu0 0.0
    %1359 = vmatprep.subr.mxu0 0.0
    %1360 = vmatpush1.msra.mxu0 0.0
    %1361 = vmatprep.subr.mxu0 0.0
    %1362 = vmatpush1.msra.mxu0 0.0
    %1363 = vmatprep.subr.mxu0 0.0
    %1364 = vmatpush1.msra.mxu0 0.0
    %1365 = vmatprep.subr.mxu0 0.0
    %1366 = vmatpush1.msra.mxu0 0.0
    %1367 = vmatprep.subr.mxu0 0.0
    %1368 = vmatpush1.msra.mxu0 0.0
    %1369 = vmatprep.subr.mxu0 0.0
    %1370 = vmatpush1.msra.mxu0 0.0
    %1371 = vmatprep.subr.mxu0 0.0
    %1372 = vmatpush1.msra.mxu0 0.0
    %1373 = vmatprep.subr.mxu0 0.0
    %1374 = vmatpush1.msra.mxu0 0.0
    %1375 = vmatprep.subr.mxu0 0.0
    %1376 = vmatpush1.msra.mxu0 0.0
    %1377 = vmatprep.subr.mxu0 0.0
    %1378 = vmatpush1.msra.mxu0 0.0
    %1379 = vmatprep.mubr.f32.mxu0 0.0
    %1380 = vmatmul.mubr.f32.gmra.mrb[0].mxu0 %v739
    %v1381 = vpop.f32.mrb[0].mxu0
    %v1382 = vadd.f32 0.0, %v1381
    %v1383 = vpop.f32.mrb[0].mxu0
    %v1384 = vadd.f32 0.0, %v1383
    %1385 = vmatprep.mubr.f32.mxu0 0.0
    %1386 = vmatmul.mubr.f32.gmra.mrb[0].mxu0 %v742
    %v1387 = vpop.f32.mrb[0].mxu0
    %v1388 = vadd.f32 0.0, %v1387
    %v1389 = vpop.f32.mrb[0].mxu0
    %v1390 = vadd.f32 0.0, %v1389
    %1391 = vdwg.mxu0
    %v1392 = vlaneseq
    %v1393 = vshrl.u32 %v1392, 7
    %v1394 = vsub.s32 1, %v1393
    %v1395 = vrot.slane %v1027, %v1394
    %v1396 = vlaneseq
    %v1397 = vshrl.u32 %v1396, 7
    %v1398 = vsub.s32 5, %v1397
    %v1399 = vrot.slane %v1027, %v1398
    %v1400 = vlaneseq
    %v1401 = vshrl.u32 %v1400, 7
    %v1402 = vsub.s32 1, %v1401
    %v1403 = vrot.slane %v1028, %v1402
    %v1404 = vlaneseq
    %v1405 = vshrl.u32 %v1404, 7
    %v1406 = vsub.s32 5, %v1405
    %v1407 = vrot.slane %v1028, %v1406
    %v1412 = vlaneseq
    %v1413 = vshrl.u32 %v1412, 7
    %v1414 = vsub.s32 1, %v1413
    %v1415 = vrot.slane %v1395, %v1414
    %v1416 = vlaneseq
    %v1417 = vshrl.u32 %v1416, 7
    %v1418 = vsub.s32 1, %v1417
    %v1419 = vrot.slane %v1399, %v1418
    %v1420 = vlaneseq
    %v1421 = vshrl.u32 %v1420, 7
    %v1422 = vsub.s32 1, %v1421
    %v1423 = vrot.slane %v1403, %v1422
    %v1424 = vlaneseq
    %v1425 = vshrl.u32 %v1424, 7
    %v1426 = vsub.s32 1, %v1425
    %v1427 = vrot.slane %v1407, %v1426
    %v1428 = vmul.f32 %v1305, %v1415
    %v1429 = vmul.f32 %v1307, %v1419
    %v1430 = vmul.f32 %v1382, %v1423
    %v1431 = vmul.f32 %v1384, %v1427
    %v1432 = vmul.f32 %v1311, %v1415
    %v1433 = vmul.f32 %v1313, %v1419
    %v1434 = vmul.f32 %v1388, %v1423
    %v1435 = vmul.f32 %v1390, %v1427
    %v1436 = vadd.f32 %v1230, %v1428
    %v1437 = vadd.f32 %v1231, %v1429
    %v1438 = vadd.f32 %v1232, %v1430
    %v1439 = vadd.f32 %v1233, %v1431
    %v1440 = vadd.f32 %v1234, %v1432
    %v1441 = vadd.f32 %v1235, %v1433
    %v1442 = vadd.f32 %v1236, %v1434
    %v1443 = vadd.f32 %v1237, %v1435
    %1444 = vmatprep.subr.mxu0 %v589
    %1445 = vmatpush1.msra.mxu0 %v587
    %1446 = vmatprep.subr.mxu0 %v593
    %1447 = vmatpush1.msra.mxu0 %v591
    %1448 = vmatprep.subr.mxu0 0.0
    %1449 = vmatpush1.msra.mxu0 0.0
    %1450 = vmatprep.subr.mxu0 0.0
    %1451 = vmatpush1.msra.mxu0 0.0
    %1452 = vmatprep.subr.mxu0 0.0
    %1453 = vmatpush1.msra.mxu0 0.0
    %1454 = vmatprep.subr.mxu0 0.0
    %1455 = vmatpush1.msra.mxu0 0.0
    %1456 = vmatprep.subr.mxu0 0.0
    %1457 = vmatpush1.msra.mxu0 0.0
    %1458 = vmatprep.subr.mxu0 0.0
    %1459 = vmatpush1.msra.mxu0 0.0
    %1460 = vmatprep.subr.mxu0 0.0
    %1461 = vmatpush1.msra.mxu0 0.0
    %1462 = vmatprep.subr.mxu0 0.0
    %1463 = vmatpush1.msra.mxu0 0.0
    %1464 = vmatprep.subr.mxu0 0.0
    %1465 = vmatpush1.msra.mxu0 0.0
    %1466 = vmatprep.subr.mxu0 0.0
    %1467 = vmatpush1.msra.mxu0 0.0
    %1468 = vmatprep.subr.mxu0 0.0
    %1469 = vmatpush1.msra.mxu0 0.0
    %1470 = vmatprep.subr.mxu0 0.0
    %1471 = vmatpush1.msra.mxu0 0.0
    %1472 = vmatprep.subr.mxu0 0.0
    %1473 = vmatpush1.msra.mxu0 0.0
    %1474 = vmatprep.subr.mxu0 0.0
    %1475 = vmatpush1.msra.mxu0 0.0
    %1476 = vmatprep.subr.mxu0 0.0
    %1477 = vmatpush1.msra.mxu0 0.0
    %1478 = vmatprep.subr.mxu0 0.0
    %1479 = vmatpush1.msra.mxu0 0.0
    %1480 = vmatprep.subr.mxu0 0.0
    %1481 = vmatpush1.msra.mxu0 0.0
    %1482 = vmatprep.subr.mxu0 0.0
    %1483 = vmatpush1.msra.mxu0 0.0
    %1484 = vmatprep.subr.mxu0 0.0
    %1485 = vmatpush1.msra.mxu0 0.0
    %1486 = vmatprep.subr.mxu0 0.0
    %1487 = vmatpush1.msra.mxu0 0.0
    %1488 = vmatprep.subr.mxu0 0.0
    %1489 = vmatpush1.msra.mxu0 0.0
    %1490 = vmatprep.subr.mxu0 0.0
    %1491 = vmatpush1.msra.mxu0 0.0
    %1492 = vmatprep.subr.mxu0 0.0
    %1493 = vmatpush1.msra.mxu0 0.0
    %1494 = vmatprep.subr.mxu0 0.0
    %1495 = vmatpush1.msra.mxu0 0.0
    %1496 = vmatprep.subr.mxu0 0.0
    %1497 = vmatpush1.msra.mxu0 0.0
    %1498 = vmatprep.subr.mxu0 0.0
    %1499 = vmatpush1.msra.mxu0 0.0
    %1500 = vmatprep.subr.mxu0 0.0
    %1501 = vmatpush1.msra.mxu0 0.0
    %1502 = vmatprep.subr.mxu0 0.0
    %1503 = vmatpush1.msra.mxu0 0.0
    %1504 = vmatprep.subr.mxu0 0.0
    %1505 = vmatpush1.msra.mxu0 0.0
    %1506 = vmatprep.subr.mxu0 0.0
    %1507 = vmatpush1.msra.mxu0 0.0
    %1508 = vmatprep.mubr.f32.mxu0 0.0
    %1509 = vmatmul.mubr.f32.gmra.mrb[0].mxu0 %v828
    %v1510 = vpop.f32.mrb[0].mxu0
    %v1511 = vadd.f32 0.0, %v1510
    %v1512 = vpop.f32.mrb[0].mxu0
    %v1513 = vadd.f32 0.0, %v1512
    %1514 = vmatprep.mubr.f32.mxu0 0.0
    %1515 = vmatmul.mubr.f32.gmra.mrb[0].mxu0 %v831
    %v1516 = vpop.f32.mrb[0].mxu0
    %v1517 = vadd.f32 0.0, %v1516
    %v1518 = vpop.f32.mrb[0].mxu0
    %v1519 = vadd.f32 0.0, %v1518
    %1520 = vdwg.mxu0
    %1521 = vmatprep.subr.mxu0 %v632
    %1522 = vmatpush1.msra.mxu0 %v630
    %1523 = vmatprep.subr.mxu0 %v636
    %1524 = vmatpush1.msra.mxu0 %v634
    %1525 = vmatprep.subr.mxu0 0.0
    %1526 = vmatpush1.msra.mxu0 0.0
    %1527 = vmatprep.subr.mxu0 0.0
    %1528 = vmatpush1.msra.mxu0 0.0
    %1529 = vmatprep.subr.mxu0 0.0
    %1530 = vmatpush1.msra.mxu0 0.0
    %1531 = vmatprep.subr.mxu0 0.0
    %1532 = vmatpush1.msra.mxu0 0.0
    %1533 = vmatprep.subr.mxu0 0.0
    %1534 = vmatpush1.msra.mxu0 0.0
    %1535 = vmatprep.subr.mxu0 0.0
    %1536 = vmatpush1.msra.mxu0 0.0
    %1537 = vmatprep.subr.mxu0 0.0
    %1538 = vmatpush1.msra.mxu0 0.0
    %1539 = vmatprep.subr.mxu0 0.0
    %1540 = vmatpush1.msra.mxu0 0.0
    %1541 = vmatprep.subr.mxu0 0.0
    %1542 = vmatpush1.msra.mxu0 0.0
    %1543 = vmatprep.subr.mxu0 0.0
    %1544 = vmatpush1.msra.mxu0 0.0
    %1545 = vmatprep.subr.mxu0 0.0
    %1546 = vmatpush1.msra.mxu0 0.0
    %1547 = vmatprep.subr.mxu0 0.0
    %1548 = vmatpush1.msra.mxu0 0.0
    %1549 = vmatprep.subr.mxu0 0.0
    %1550 = vmatpush1.msra.mxu0 0.0
    %1551 = vmatprep.subr.mxu0 0.0
    %1552 = vmatpush1.msra.mxu0 0.0
    %1553 = vmatprep.subr.mxu0 0.0
    %1554 = vmatpush1.msra.mxu0 0.0
    %1555 = vmatprep.subr.mxu0 0.0
    %1556 = vmatpush1.msra.mxu0 0.0
    %1557 = vmatprep.subr.mxu0 0.0
    %1558 = vmatpush1.msra.mxu0 0.0
    %1559 = vmatprep.subr.mxu0 0.0
    %1560 = vmatpush1.msra.mxu0 0.0
    %1561 = vmatprep.subr.mxu0 0.0
    %1562 = vmatpush1.msra.mxu0 0.0
    %1563 = vmatprep.subr.mxu0 0.0
    %1564 = vmatpush1.msra.mxu0 0.0
    %1565 = vmatprep.subr.mxu0 0.0
    %1566 = vmatpush1.msra.mxu0 0.0
    %1567 = vmatprep.subr.mxu0 0.0
    %1568 = vmatpush1.msra.mxu0 0.0
    %1569 = vmatprep.subr.mxu0 0.0
    %1570 = vmatpush1.msra.mxu0 0.0
    %1571 = vmatprep.subr.mxu0 0.0
    %1572 = vmatpush1.msra.mxu0 0.0
    %1573 = vmatprep.subr.mxu0 0.0
    %1574 = vmatpush1.msra.mxu0 0.0
    %1575 = vmatprep.subr.mxu0 0.0
    %1576 = vmatpush1.msra.mxu0 0.0
    %1577 = vmatprep.subr.mxu0 0.0
    %1578 = vmatpush1.msra.mxu0 0.0
    %1579 = vmatprep.subr.mxu0 0.0
    %1580 = vmatpush1.msra.mxu0 0.0
    %1581 = vmatprep.subr.mxu0 0.0
    %1582 = vmatpush1.msra.mxu0 0.0
    %1583 = vmatprep.subr.mxu0 0.0
    %1584 = vmatpush1.msra.mxu0 0.0
    %1585 = vmatprep.mubr.f32.mxu0 0.0
    %1586 = vmatmul.mubr.f32.gmra.mrb[0].mxu0 %v828
    %v1587 = vpop.f32.mrb[0].mxu0
    %v1588 = vadd.f32 0.0, %v1587
    %v1589 = vpop.f32.mrb[0].mxu0
    %v1590 = vadd.f32 0.0, %v1589
    %1591 = vmatprep.mubr.f32.mxu0 0.0
    %1592 = vmatmul.mubr.f32.gmra.mrb[0].mxu0 %v831
    %v1593 = vpop.f32.mrb[0].mxu0
    %v1594 = vadd.f32 0.0, %v1593
    %v1595 = vpop.f32.mrb[0].mxu0
    %v1596 = vadd.f32 0.0, %v1595
    %1597 = vdwg.mxu0
    %v1598 = vlaneseq
    %v1599 = vshrl.u32 %v1598, 7
    %v1600 = vsub.s32 2, %v1599
    %v1601 = vrot.slane %v1027, %v1600
    %v1602 = vlaneseq
    %v1603 = vshrl.u32 %v1602, 7
    %v1604 = vsub.s32 6, %v1603
    %v1605 = vrot.slane %v1027, %v1604
    %v1606 = vlaneseq
    %v1607 = vshrl.u32 %v1606, 7
    %v1608 = vsub.s32 2, %v1607
    %v1609 = vrot.slane %v1028, %v1608
    %v1610 = vlaneseq
    %v1611 = vshrl.u32 %v1610, 7
    %v1612 = vsub.s32 6, %v1611
    %v1613 = vrot.slane %v1028, %v1612
    %v1618 = vlaneseq
    %v1619 = vshrl.u32 %v1618, 7
    %v1620 = vsub.s32 2, %v1619
    %v1621 = vrot.slane %v1601, %v1620
    %v1622 = vlaneseq
    %v1623 = vshrl.u32 %v1622, 7
    %v1624 = vsub.s32 2, %v1623
    %v1625 = vrot.slane %v1605, %v1624
    %v1626 = vlaneseq
    %v1627 = vshrl.u32 %v1626, 7
    %v1628 = vsub.s32 2, %v1627
    %v1629 = vrot.slane %v1609, %v1628
    %v1630 = vlaneseq
    %v1631 = vshrl.u32 %v1630, 7
    %v1632 = vsub.s32 2, %v1631
    %v1633 = vrot.slane %v1613, %v1632
    %v1634 = vmul.f32 %v1511, %v1621
    %v1635 = vmul.f32 %v1513, %v1625
    %v1636 = vmul.f32 %v1588, %v1629
    %v1637 = vmul.f32 %v1590, %v1633
    %v1638 = vmul.f32 %v1517, %v1621
    %v1639 = vmul.f32 %v1519, %v1625
    %v1640 = vmul.f32 %v1594, %v1629
    %v1641 = vmul.f32 %v1596, %v1633
    %v1642 = vadd.f32 %v1436, %v1634
    %v1643 = vadd.f32 %v1437, %v1635
    %v1644 = vadd.f32 %v1438, %v1636
    %v1645 = vadd.f32 %v1439, %v1637
    %v1646 = vadd.f32 %v1440, %v1638
    %v1647 = vadd.f32 %v1441, %v1639
    %v1648 = vadd.f32 %v1442, %v1640
    %v1649 = vadd.f32 %v1443, %v1641
    %1650 = vmatprep.subr.mxu0 %v589
    %1651 = vmatpush1.msra.mxu0 %v587
    %1652 = vmatprep.subr.mxu0 %v593
    %1653 = vmatpush1.msra.mxu0 %v591
    %1654 = vmatprep.subr.mxu0 0.0
    %1655 = vmatpush1.msra.mxu0 0.0
    %1656 = vmatprep.subr.mxu0 0.0
    %1657 = vmatpush1.msra.mxu0 0.0
    %1658 = vmatprep.subr.mxu0 0.0
    %1659 = vmatpush1.msra.mxu0 0.0
    %1660 = vmatprep.subr.mxu0 0.0
    %1661 = vmatpush1.msra.mxu0 0.0
    %1662 = vmatprep.subr.mxu0 0.0
    %1663 = vmatpush1.msra.mxu0 0.0
    %1664 = vmatprep.subr.mxu0 0.0
    %1665 = vmatpush1.msra.mxu0 0.0
    %1666 = vmatprep.subr.mxu0 0.0
    %1667 = vmatpush1.msra.mxu0 0.0
    %1668 = vmatprep.subr.mxu0 0.0
    %1669 = vmatpush1.msra.mxu0 0.0
    %1670 = vmatprep.subr.mxu0 0.0
    %1671 = vmatpush1.msra.mxu0 0.0
    %1672 = vmatprep.subr.mxu0 0.0
    %1673 = vmatpush1.msra.mxu0 0.0
    %1674 = vmatprep.subr.mxu0 0.0
    %1675 = vmatpush1.msra.mxu0 0.0
    %1676 = vmatprep.subr.mxu0 0.0
    %1677 = vmatpush1.msra.mxu0 0.0
    %1678 = vmatprep.subr.mxu0 0.0
    %1679 = vmatpush1.msra.mxu0 0.0
    %1680 = vmatprep.subr.mxu0 0.0
    %1681 = vmatpush1.msra.mxu0 0.0
    %1682 = vmatprep.subr.mxu0 0.0
    %1683 = vmatpush1.msra.mxu0 0.0
    %1684 = vmatprep.subr.mxu0 0.0
    %1685 = vmatpush1.msra.mxu0 0.0
    %1686 = vmatprep.subr.mxu0 0.0
    %1687 = vmatpush1.msra.mxu0 0.0
    %1688 = vmatprep.subr.mxu0 0.0
    %1689 = vmatpush1.msra.mxu0 0.0
    %1690 = vmatprep.subr.mxu0 0.0
    %1691 = vmatpush1.msra.mxu0 0.0
    %1692 = vmatprep.subr.mxu0 0.0
    %1693 = vmatpush1.msra.mxu0 0.0
    %1694 = vmatprep.subr.mxu0 0.0
    %1695 = vmatpush1.msra.mxu0 0.0
    %1696 = vmatprep.subr.mxu0 0.0
    %1697 = vmatpush1.msra.mxu0 0.0
    %1698 = vmatprep.subr.mxu0 0.0
    %1699 = vmatpush1.msra.mxu0 0.0
    %1700 = vmatprep.subr.mxu0 0.0
    %1701 = vmatpush1.msra.mxu0 0.0
    %1702 = vmatprep.subr.mxu0 0.0
    %1703 = vmatpush1.msra.mxu0 0.0
    %1704 = vmatprep.subr.mxu0 0.0
    %1705 = vmatpush1.msra.mxu0 0.0
    %1706 = vmatprep.subr.mxu0 0.0
    %1707 = vmatpush1.msra.mxu0 0.0
    %1708 = vmatprep.subr.mxu0 0.0
    %1709 = vmatpush1.msra.mxu0 0.0
    %1710 = vmatprep.subr.mxu0 0.0
    %1711 = vmatpush1.msra.mxu0 0.0
    %1712 = vmatprep.subr.mxu0 0.0
    %1713 = vmatpush1.msra.mxu0 0.0
    %1714 = vmatprep.mubr.f32.mxu0 0.0
    %1715 = vmatmul.mubr.f32.gmra.mrb[0].mxu0 %v917
    %v1716 = vpop.f32.mrb[0].mxu0
    %v1717 = vadd.f32 0.0, %v1716
    %v1718 = vpop.f32.mrb[0].mxu0
    %v1719 = vadd.f32 0.0, %v1718
    %1720 = vmatprep.mubr.f32.mxu0 0.0
    %1721 = vmatmul.mubr.f32.gmra.mrb[0].mxu0 %v920
    %v1722 = vpop.f32.mrb[0].mxu0
    %v1723 = vadd.f32 0.0, %v1722
    %v1724 = vpop.f32.mrb[0].mxu0
    %v1725 = vadd.f32 0.0, %v1724
    %1726 = vdwg.mxu0
    %1727 = vmatprep.subr.mxu0 %v632
    %1728 = vmatpush1.msra.mxu0 %v630
    %1729 = vmatprep.subr.mxu0 %v636
    %1730 = vmatpush1.msra.mxu0 %v634
    %1731 = vmatprep.subr.mxu0 0.0
    %1732 = vmatpush1.msra.mxu0 0.0
    %1733 = vmatprep.subr.mxu0 0.0
    %1734 = vmatpush1.msra.mxu0 0.0
    %1735 = vmatprep.subr.mxu0 0.0
    %1736 = vmatpush1.msra.mxu0 0.0
    %1737 = vmatprep.subr.mxu0 0.0
    %1738 = vmatpush1.msra.mxu0 0.0
    %1739 = vmatprep.subr.mxu0 0.0
    %1740 = vmatpush1.msra.mxu0 0.0
    %1741 = vmatprep.subr.mxu0 0.0
    %1742 = vmatpush1.msra.mxu0 0.0
    %1743 = vmatprep.subr.mxu0 0.0
    %1744 = vmatpush1.msra.mxu0 0.0
    %1745 = vmatprep.subr.mxu0 0.0
    %1746 = vmatpush1.msra.mxu0 0.0
    %1747 = vmatprep.subr.mxu0 0.0
    %1748 = vmatpush1.msra.mxu0 0.0
    %1749 = vmatprep.subr.mxu0 0.0
    %1750 = vmatpush1.msra.mxu0 0.0
    %1751 = vmatprep.subr.mxu0 0.0
    %1752 = vmatpush1.msra.mxu0 0.0
    %1753 = vmatprep.subr.mxu0 0.0
    %1754 = vmatpush1.msra.mxu0 0.0
    %1755 = vmatprep.subr.mxu0 0.0
    %1756 = vmatpush1.msra.mxu0 0.0
    %1757 = vmatprep.subr.mxu0 0.0
    %1758 = vmatpush1.msra.mxu0 0.0
    %1759 = vmatprep.subr.mxu0 0.0
    %1760 = vmatpush1.msra.mxu0 0.0
    %1761 = vmatprep.subr.mxu0 0.0
    %1762 = vmatpush1.msra.mxu0 0.0
    %1763 = vmatprep.subr.mxu0 0.0
    %1764 = vmatpush1.msra.mxu0 0.0
    %1765 = vmatprep.subr.mxu0 0.0
    %1766 = vmatpush1.msra.mxu0 0.0
    %1767 = vmatprep.subr.mxu0 0.0
    %1768 = vmatpush1.msra.mxu0 0.0
    %1769 = vmatprep.subr.mxu0 0.0
    %1770 = vmatpush1.msra.mxu0 0.0
    %1771 = vmatprep.subr.mxu0 0.0
    %1772 = vmatpush1.msra.mxu0 0.0
    %1773 = vmatprep.subr.mxu0 0.0
    %1774 = vmatpush1.msra.mxu0 0.0
    %1775 = vmatprep.subr.mxu0 0.0
    %1776 = vmatpush1.msra.mxu0 0.0
    %1777 = vmatprep.subr.mxu0 0.0
    %1778 = vmatpush1.msra.mxu0 0.0
    %1779 = vmatprep.subr.mxu0 0.0
    %1780 = vmatpush1.msra.mxu0 0.0
    %1781 = vmatprep.subr.mxu0 0.0
    %1782 = vmatpush1.msra.mxu0 0.0
    %1783 = vmatprep.subr.mxu0 0.0
    %1784 = vmatpush1.msra.mxu0 0.0
    %1785 = vmatprep.subr.mxu0 0.0
    %1786 = vmatpush1.msra.mxu0 0.0
    %1787 = vmatprep.subr.mxu0 0.0
    %1788 = vmatpush1.msra.mxu0 0.0
    %1789 = vmatprep.subr.mxu0 0.0
    %1790 = vmatpush1.msra.mxu0 0.0
    %1791 = vmatprep.mubr.f32.mxu0 0.0
    %1792 = vmatmul.mubr.f32.gmra.mrb[0].mxu0 %v917
    %v1793 = vpop.f32.mrb[0].mxu0
    %v1794 = vadd.f32 0.0, %v1793
    %v1795 = vpop.f32.mrb[0].mxu0
    %v1796 = vadd.f32 0.0, %v1795
    %1797 = vmatprep.mubr.f32.mxu0 0.0
    %1798 = vmatmul.mubr.f32.gmra.mrb[0].mxu0 %v920
    %v1799 = vpop.f32.mrb[0].mxu0
    %v1800 = vadd.f32 0.0, %v1799
    %v1801 = vpop.f32.mrb[0].mxu0
    %v1802 = vadd.f32 0.0, %v1801
    %1803 = vdwg.mxu0
    %v1804 = vlaneseq
    %v1805 = vshrl.u32 %v1804, 7
    %v1806 = vsub.s32 3, %v1805
    %v1807 = vrot.slane %v1027, %v1806
    %v1808 = vlaneseq
    %v1809 = vshrl.u32 %v1808, 7
    %v1810 = vsub.s32 7, %v1809
    %v1811 = vrot.slane %v1027, %v1810
    %v1812 = vlaneseq
    %v1813 = vshrl.u32 %v1812, 7
    %v1814 = vsub.s32 3, %v1813
    %v1815 = vrot.slane %v1028, %v1814
    %v1816 = vlaneseq
    %v1817 = vshrl.u32 %v1816, 7
    %v1818 = vsub.s32 7, %v1817
    %v1819 = vrot.slane %v1028, %v1818
    %v1824 = vlaneseq
    %v1825 = vshrl.u32 %v1824, 7
    %v1826 = vsub.s32 3, %v1825
    %v1827 = vrot.slane %v1807, %v1826
    %v1828 = vlaneseq
    %v1829 = vshrl.u32 %v1828, 7
    %v1830 = vsub.s32 3, %v1829
    %v1831 = vrot.slane %v1811, %v1830
    %v1832 = vlaneseq
    %v1833 = vshrl.u32 %v1832, 7
    %v1834 = vsub.s32 3, %v1833
    %v1835 = vrot.slane %v1815, %v1834
    %v1836 = vlaneseq
    %v1837 = vshrl.u32 %v1836, 7
    %v1838 = vsub.s32 3, %v1837
    %v1839 = vrot.slane %v1819, %v1838
    %v1840 = vmul.f32 %v1717, %v1827
    %v1841 = vmul.f32 %v1719, %v1831
    %v1842 = vmul.f32 %v1794, %v1835
    %v1843 = vmul.f32 %v1796, %v1839
    %v1844 = vmul.f32 %v1723, %v1827
    %v1845 = vmul.f32 %v1725, %v1831
    %v1846 = vmul.f32 %v1800, %v1835
    %v1847 = vmul.f32 %v1802, %v1839
    %v1848 = vadd.f32 %v1642, %v1840
    %v1849 = vadd.f32 %v1643, %v1841
    %v1850 = vadd.f32 %v1644, %v1842
    %v1851 = vadd.f32 %v1645, %v1843
    %v1852 = vadd.f32 %v1646, %v1844
    %v1853 = vadd.f32 %v1647, %v1845
    %v1854 = vadd.f32 %v1648, %v1846
    %v1855 = vadd.f32 %v1649, %v1847
    %v1857 = vlaneseq
    %v1858 = vshrl.u32 %v1857, 7
    %v1859 = vsub.s32 0, %v1858
    %v1860 = vrot.slane %v1029, %v1859
    %v1861 = vlaneseq
    %v1862 = vshrl.u32 %v1861, 7
    %v1863 = vsub.s32 1, %v1862
    %v1864 = vrot.slane %v1029, %v1863
    %v1865 = vlaneseq
    %v1866 = vshrl.u32 %v1865, 7
    %v1867 = vsub.s32 2, %v1866
    %v1868 = vrot.slane %v1029, %v1867
    %v1869 = vlaneseq
    %v1870 = vshrl.u32 %v1869, 7
    %v1871 = vsub.s32 3, %v1870
    %v1872 = vrot.slane %v1029, %v1871
    %v1877 = vadd.f32 %v1848, %v1860
    %v1878 = vadd.f32 %v1849, %v1864
    %v1879 = vadd.f32 %v1850, %v1868
    %v1880 = vadd.f32 %v1851, %v1872
    %v1881 = vadd.f32 %v1852, %v1860
    %v1882 = vadd.f32 %v1853, %v1864
    %v1883 = vadd.f32 %v1854, %v1868
    %v1884 = vadd.f32 %v1855, %v1872
    %v1885 = vxor.u32 %v1877, 2147483648
    %v1886 = vxor.u32 %v1878, 2147483648
    %v1887 = vxor.u32 %v1879, 2147483648
    %v1888 = vxor.u32 %v1880, 2147483648
    %v1889 = vxor.u32 %v1881, 2147483648
    %v1890 = vxor.u32 %v1882, 2147483648
    %v1891 = vxor.u32 %v1883, 2147483648
    %v1892 = vxor.u32 %v1884, 2147483648
    %v1893 = vmul.f32 %v1885, 1.442695
    %v1894 = vpow.pop %v1893
    %v1895 = vmul.f32 %v1886, 1.442695
    %v1896 = vpow.pop %v1895
    %v1897 = vmul.f32 %v1887, 1.442695
    %v1898 = vpow.pop %v1897
    %v1899 = vmul.f32 %v1888, 1.442695
    %v1900 = vpow.pop %v1899
    %v1901 = vmul.f32 %v1889, 1.442695
    %v1902 = vpow.pop %v1901
    %v1903 = vmul.f32 %v1890, 1.442695
    %v1904 = vpow.pop %v1903
    %v1905 = vmul.f32 %v1891, 1.442695
    %v1906 = vpow.pop %v1905
    %v1907 = vmul.f32 %v1892, 1.442695
    %v1908 = vpow.pop %v1907
    %v1909 = vadd.f32 %v1894, 1.0
    %v1910 = vadd.f32 %v1896, 1.0
    %v1911 = vadd.f32 %v1898, 1.0
    %v1912 = vadd.f32 %v1900, 1.0
    %v1913 = vadd.f32 %v1902, 1.0
    %v1914 = vadd.f32 %v1904, 1.0
    %v1915 = vadd.f32 %v1906, 1.0
    %v1916 = vadd.f32 %v1908, 1.0
    %v1917 = vrcp.pop %v1909
    %v1918 = vmul.f32 1.0, %v1917
    %v1919 = vrcp.pop %v1910
    %v1920 = vmul.f32 1.0, %v1919
    %v1921 = vrcp.pop %v1911
    %v1922 = vmul.f32 1.0, %v1921
    %v1923 = vrcp.pop %v1912
    %v1924 = vmul.f32 1.0, %v1923
    %v1925 = vrcp.pop %v1913
    %v1926 = vmul.f32 1.0, %v1925
    %v1927 = vrcp.pop %v1914
    %v1928 = vmul.f32 1.0, %v1927
    %v1929 = vrcp.pop %v1915
    %v1930 = vmul.f32 1.0, %v1929
    %v1931 = vrcp.pop %v1916
    %v1932 = vmul.f32 1.0, %v1931
    %v1933 = vmul.f32 %v1877, %v1918
    %v1934 = vmul.f32 %v1878, %v1920
    %v1935 = vmul.f32 %v1879, %v1922
    %v1936 = vmul.f32 %v1880, %v1924
    %v1937 = vmul.f32 %v1881, %v1926
    %v1938 = vmul.f32 %v1882, %v1928
    %v1939 = vmul.f32 %v1883, %v1930
    %v1940 = vmul.f32 %v1884, %v1932
    %v1941 = vld [vmem:[#allocation16] sm:$0x1]
    %v1943 = vlaneseq
    %v1944 = vshrl.u32 %v1943, 7
    %v1945 = vsub.s32 0, %v1944
    %v1946 = vrot.slane %v1941, %v1945
    %v1956 = vunpack.c.l.b16 %v638
    %v1957 = vunpack.c.l.b16 %v639
    %v1958 = vunpack.c.l.b16 %v640
    %v1959 = vunpack.c.l.b16 %v641
    %v1960 = vunpack.c.l.b16 %v642
    %v1961 = vunpack.c.l.b16 %v643
    %v1962 = vunpack.c.l.b16 %v644
    %v1963 = vunpack.c.l.b16 %v645
    %v1964 = vpack.c.b16 %v1957, %v1956
    %v1965 = vpack.c.b16 %v1959, %v1958
    %v1966 = vpack.c.b16 %v1961, %v1960
    %v1967 = vpack.c.b16 %v1963, %v1962
    %1972 = vmatprep.subr.bf16.mxu0 0
    %1973 = vmatpush1.bf16.msra.mxu0 %v1964
    %1974 = vmatprep.subr.bf16.mxu0 0
    %1975 = vmatpush1.bf16.msra.mxu0 %v1965
    %1976 = vmatprep.subr.bf16.mxu0 0
    %1977 = vmatpush1.bf16.msra.mxu0 %v1966
    %1978 = vmatprep.subr.bf16.mxu0 0
    %1979 = vmatpush1.bf16.msra.mxu0 %v1967
    %1980 = vmatprep.subr.bf16.mxu0 0
    %1981 = vmatpush1.bf16.msra.mxu0 0
    %1982 = vmatprep.subr.bf16.mxu0 0
    %1983 = vmatpush1.bf16.msra.mxu0 0
    %1984 = vmatprep.subr.bf16.mxu0 0
    %1985 = vmatpush1.bf16.msra.mxu0 0
    %1986 = vmatprep.subr.bf16.mxu0 0
    %1987 = vmatpush1.bf16.msra.mxu0 0
    %1988 = vmatprep.subr.bf16.mxu0 0
    %1989 = vmatpush1.bf16.msra.mxu0 0
    %1990 = vmatprep.subr.bf16.mxu0 0
    %1991 = vmatpush1.bf16.msra.mxu0 0
    %1992 = vmatprep.subr.bf16.mxu0 0
    %1993 = vmatpush1.bf16.msra.mxu0 0
    %1994 = vmatprep.subr.bf16.mxu0 0
    %1995 = vmatpush1.bf16.msra.mxu0 0
    %1996 = vmatprep.subr.bf16.mxu0 0
    %1997 = vmatpush1.bf16.msra.mxu0 0
    %1998 = vmatprep.subr.bf16.mxu0 0
    %1999 = vmatpush1.bf16.msra.mxu0 0
    %2000 = vmatprep.subr.bf16.mxu0 0
    %2001 = vmatpush1.bf16.msra.mxu0 0
    %2002 = vmatprep.subr.bf16.mxu0 0
    %2003 = vmatpush1.bf16.msra.mxu0 0
    %2004 = vmatprep.mubr.bf16.mxu0 0
    %2005 = vmatmul.mubr.bf16.gmra.mrb[0].mxu0 %v340
    %v2006 = vpop.f32.mrb[0].mxu0
    %v2007 = vadd.f32 %v1946, %v2006
    %v2008 = vpop.f32.mrb[0].mxu0
    %v2009 = vpop.f32.mrb[0].mxu0
    %v2010 = vadd.f32 %v1946, %v2009
    %v2011 = vpop.f32.mrb[0].mxu0
    %2012 = vdwg.mxu0
    %v2013 = vmax.f32 %v2007, 0.0
    %v2014 = vmax.f32 %v2010, 0.0
    %v2015 = vand.u32 2147483647, %v2007
    %v2016 = vand.u32 2147483647, %v2010
    %v2017 = vsub.f32 0.0, %v2015
    %v2018 = vsub.f32 0.0, %v2016
    %v2019 = vmul.f32 %v2017, 1.442695
    %v2020 = vpow.pop %v2019
    %v2021 = vmul.f32 %v2018, 1.442695
    %v2022 = vpow.pop %v2021
    %v2023 = vadd.f32 %v2020, 1.0
    %v2024 = vadd.f32 %v2022, 1.0
    %v2025 = vlog2.pop %v2023
    %v2026 = vmul.f32 %v2025, 0.6931472
    %v2027 = vlog2.pop %v2024
    %v2028 = vmul.f32 %v2027, 0.6931472
    %v2029 = vadd.f32 %v2013, %v2026
    %v2030 = vadd.f32 %v2014, %v2028
    %v2031 = vld [vmem:[#allocation14] sm:$0x1]
    %v2032 = vmul.f32 %v2031, 1.442695
    %v2033 = vpow.pop %v2032
    %v2034 = vsub.f32 0.0, %v2033
    %v2036 = vlaneseq
    %v2037 = vshrl.u32 %v2036, 7
    %v2038 = vsub.s32 0, %v2037
    %v2039 = vrot.slane %v2034, %v2038
    %v2041 = vmul.f32 %v2029, %v2039
    %v2042 = vmul.f32 %v2030, %v2039
    %v2044 = vsel %vm648, %v243, 0
    %v2047 = vsel %vm648, %v244, 0
    %2049 = vmatprep.subr.mxu0 0.0
    %2050 = vmatpush1.msra.mxu0 %v2041
    %2051 = vmatprep.subr.mxu0 0.0
    %2052 = vmatpush1.msra.mxu0 %v2042
    %2053 = vmatprep.subr.mxu0 0.0
    %2054 = vmatpush1.msra.mxu0 0.0
    %2055 = vmatprep.subr.mxu0 0.0
    %2056 = vmatpush1.msra.mxu0 0.0
    %2057 = vmatprep.subr.mxu0 0.0
    %2058 = vmatpush1.msra.mxu0 0.0
    %2059 = vmatprep.subr.mxu0 0.0
    %2060 = vmatpush1.msra.mxu0 0.0
    %2061 = vmatprep.subr.mxu0 0.0
    %2062 = vmatpush1.msra.mxu0 0.0
    %2063 = vmatprep.subr.mxu0 0.0
    %2064 = vmatpush1.msra.mxu0 0.0
    %2065 = vmatprep.subr.mxu0 0.0
    %2066 = vmatpush1.msra.mxu0 0.0
    %2067 = vmatprep.subr.mxu0 0.0
    %2068 = vmatpush1.msra.mxu0 0.0
    %2069 = vmatprep.subr.mxu0 0.0
    %2070 = vmatpush1.msra.mxu0 0.0
    %2071 = vmatprep.subr.mxu0 0.0
    %2072 = vmatpush1.msra.mxu0 0.0
    %2073 = vmatprep.subr.mxu0 0.0
    %2074 = vmatpush1.msra.mxu0 0.0
    %2075 = vmatprep.subr.mxu0 0.0
    %2076 = vmatpush1.msra.mxu0 0.0
    %2077 = vmatprep.subr.mxu0 0.0
    %2078 = vmatpush1.msra.mxu0 0.0
    %2079 = vmatprep.subr.mxu0 0.0
    %2080 = vmatpush1.msra.mxu0 0.0
    %2081 = vmatprep.subr.mxu0 0.0
    %2082 = vmatpush1.msra.mxu0 0.0
    %2083 = vmatprep.subr.mxu0 0.0
    %2084 = vmatpush1.msra.mxu0 0.0
    %2085 = vmatprep.subr.mxu0 0.0
    %2086 = vmatpush1.msra.mxu0 0.0
    %2087 = vmatprep.subr.mxu0 0.0
    %2088 = vmatpush1.msra.mxu0 0.0
    %2089 = vmatprep.subr.mxu0 0.0
    %2090 = vmatpush1.msra.mxu0 0.0
    %2091 = vmatprep.subr.mxu0 0.0
    %2092 = vmatpush1.msra.mxu0 0.0
    %2093 = vmatprep.subr.mxu0 0.0
    %2094 = vmatpush1.msra.mxu0 0.0
    %2095 = vmatprep.subr.mxu0 0.0
    %2096 = vmatpush1.msra.mxu0 0.0
    %2097 = vmatprep.subr.mxu0 0.0
    %2098 = vmatpush1.msra.mxu0 0.0
    %2099 = vmatprep.subr.mxu0 0.0
    %2100 = vmatpush1.msra.mxu0 0.0
    %2101 = vmatprep.subr.mxu0 0.0
    %2102 = vmatpush1.msra.mxu0 0.0
    %2103 = vmatprep.subr.mxu0 0.0
    %2104 = vmatpush1.msra.mxu0 0.0
    %2105 = vmatprep.subr.mxu0 0.0
    %2106 = vmatpush1.msra.mxu0 0.0
    %2107 = vmatprep.subr.mxu0 0.0
    %2108 = vmatpush1.msra.mxu0 0.0
    %2109 = vmatprep.subr.mxu0 0.0
    %2110 = vmatpush1.msra.mxu0 0.0
    %2111 = vmatprep.subr.mxu0 0.0
    %2112 = vmatpush1.msra.mxu0 0.0
    %2113 = vmatprep.mubr.f32.mxu0 0.0
    %2114 = vmatmul.mubr.f32.gmra.mrb[0].mxu0 %v2044
    %v2115 = vpop.f32.mrb[0].mxu0
    %v2116 = vadd.f32 0.0, %v2115
    %v2117 = vpop.f32.mrb[0].mxu0
    %2118 = vmatprep.mubr.f32.mxu0 0.0
    %2119 = vmatmul.mubr.f32.gmra.mrb[0].mxu0 %v2047
    %v2120 = vpop.f32.mrb[0].mxu0
    %v2121 = vadd.f32 0.0, %v2120
    %v2122 = vpop.f32.mrb[0].mxu0
    %2123 = vdwg.mxu0
    %v2124 = vmul.f32 %v2116, 1.442695
    %v2125 = vpow.pop %v2124
    %v2126 = vmul.f32 %v2121, 1.442695
    %v2127 = vpow.pop %v2126
    %vm2128 = vcmask 31744
    %v2130 = vsel %vm2128, %v2125, 0
    %v2133 = vsel %vm2128, %v2127, 0
    %vm2135 = vcmask 1043456
    %v2137 = vsel %vm2135, %v245, 0
    %2139 = vmatprep.subr.mxu0 0.0
    %2140 = vmatpush1.msra.mxu0 %v2137
    %2141 = vmatprep.subr.mxu0 0.0
    %2142 = vmatpush1.msra.mxu0 0.0
    %2143 = vmatprep.subr.mxu0 0.0
    %2144 = vmatpush1.msra.mxu0 0.0
    %2145 = vmatprep.subr.mxu0 0.0
    %2146 = vmatpush1.msra.mxu0 0.0
    %2147 = vmatprep.subr.mxu0 0.0
    %2148 = vmatpush1.msra.mxu0 0.0
    %2149 = vmatprep.subr.mxu0 0.0
    %2150 = vmatpush1.msra.mxu0 0.0
    %2151 = vmatprep.subr.mxu0 0.0
    %2152 = vmatpush1.msra.mxu0 0.0
    %2153 = vmatprep.subr.mxu0 0.0
    %2154 = vmatpush1.msra.mxu0 0.0
    %2155 = vmatprep.subr.mxu0 0.0
    %2156 = vmatpush1.msra.mxu0 0.0
    %2157 = vmatprep.subr.mxu0 0.0
    %2158 = vmatpush1.msra.mxu0 0.0
    %2159 = vmatprep.subr.mxu0 0.0
    %2160 = vmatpush1.msra.mxu0 0.0
    %2161 = vmatprep.subr.mxu0 0.0
    %2162 = vmatpush1.msra.mxu0 0.0
    %2163 = vmatprep.subr.mxu0 0.0
    %2164 = vmatpush1.msra.mxu0 0.0
    %2165 = vmatprep.subr.mxu0 0.0
    %2166 = vmatpush1.msra.mxu0 0.0
    %2167 = vmatprep.subr.mxu0 0.0
    %2168 = vmatpush1.msra.mxu0 0.0
    %2169 = vmatprep.subr.mxu0 0.0
    %2170 = vmatpush1.msra.mxu0 0.0
    %2171 = vmatprep.subr.mxu0 0.0
    %2172 = vmatpush1.msra.mxu0 0.0
    %2173 = vmatprep.subr.mxu0 0.0
    %2174 = vmatpush1.msra.mxu0 0.0
    %2175 = vmatprep.subr.mxu0 0.0
    %2176 = vmatpush1.msra.mxu0 0.0
    %2177 = vmatprep.subr.mxu0 0.0
    %2178 = vmatpush1.msra.mxu0 0.0
    %2179 = vmatprep.subr.mxu0 0.0
    %2180 = vmatpush1.msra.mxu0 0.0
    %2181 = vmatprep.subr.mxu0 0.0
    %2182 = vmatpush1.msra.mxu0 0.0
    %2183 = vmatprep.subr.mxu0 0.0
    %2184 = vmatpush1.msra.mxu0 0.0
    %2185 = vmatprep.subr.mxu0 0.0
    %2186 = vmatpush1.msra.mxu0 0.0
    %2187 = vmatprep.subr.mxu0 0.0
    %2188 = vmatpush1.msra.mxu0 0.0
    %2189 = vmatprep.subr.mxu0 0.0
    %2190 = vmatpush1.msra.mxu0 0.0
    %2191 = vmatprep.subr.mxu0 0.0
    %2192 = vmatpush1.msra.mxu0 0.0
    %2193 = vmatprep.subr.mxu0 0.0
    %2194 = vmatpush1.msra.mxu0 0.0
    %2195 = vmatprep.subr.mxu0 0.0
    %2196 = vmatpush1.msra.mxu0 0.0
    %2197 = vmatprep.subr.mxu0 0.0
    %2198 = vmatpush1.msra.mxu0 0.0
    %2199 = vmatprep.subr.mxu0 0.0
    %2200 = vmatpush1.msra.mxu0 0.0
    %2201 = vmatprep.subr.mxu0 0.0
    %2202 = vmatpush1.msra.mxu0 0.0
    %2203 = vmatprep.mubr.f32.mxu0 0.0
    %2204 = vmatmul.mubr.f32.gmra.mrb[0].mxu0 %v2130
    %v2205 = vpop.f32.mrb[0].mxu0
    %v2206 = vadd.f32 0.0, %v2205
    %v2207 = vpop.f32.mrb[0].mxu0
    %2208 = vmatprep.mubr.f32.mxu0 0.0
    %2209 = vmatmul.mubr.f32.gmra.mrb[0].mxu0 %v2133
    %v2210 = vpop.f32.mrb[0].mxu0
    %v2211 = vadd.f32 0.0, %v2210
    %v2212 = vpop.f32.mrb[0].mxu0
    %2213 = vdwg.mxu0
    %v2214 = vsub.f32 0.0, %v2116
    %v2215 = vsub.f32 0.0, %v2121
    %v2216 = vmul.f32 %v2214, 1.442695
    %v2217 = vpow.pop %v2216
    %v2218 = vmul.f32 %v2215, 1.442695
    %v2219 = vpow.pop %v2218
    %v2221 = vsel %vm2128, %v2217, 0
    %v2224 = vsel %vm2128, %v2219, 0
    %2226 = vmatprep.subr.mxu0 0.0
    %2227 = vmatpush1.msra.mxu0 %v2137
    %2228 = vmatprep.subr.mxu0 0.0
    %2229 = vmatpush1.msra.mxu0 0.0
    %2230 = vmatprep.subr.mxu0 0.0
    %2231 = vmatpush1.msra.mxu0 0.0
    %2232 = vmatprep.subr.mxu0 0.0
    %2233 = vmatpush1.msra.mxu0 0.0
    %2234 = vmatprep.subr.mxu0 0.0
    %2235 = vmatpush1.msra.mxu0 0.0
    %2236 = vmatprep.subr.mxu0 0.0
    %2237 = vmatpush1.msra.mxu0 0.0
    %2238 = vmatprep.subr.mxu0 0.0
    %2239 = vmatpush1.msra.mxu0 0.0
    %2240 = vmatprep.subr.mxu0 0.0
    %2241 = vmatpush1.msra.mxu0 0.0
    %2242 = vmatprep.subr.mxu0 0.0
    %2243 = vmatpush1.msra.mxu0 0.0
    %2244 = vmatprep.subr.mxu0 0.0
    %2245 = vmatpush1.msra.mxu0 0.0
    %2246 = vmatprep.subr.mxu0 0.0
    %2247 = vmatpush1.msra.mxu0 0.0
    %2248 = vmatprep.subr.mxu0 0.0
    %2249 = vmatpush1.msra.mxu0 0.0
    %2250 = vmatprep.subr.mxu0 0.0
    %2251 = vmatpush1.msra.mxu0 0.0
    %2252 = vmatprep.subr.mxu0 0.0
    %2253 = vmatpush1.msra.mxu0 0.0
    %2254 = vmatprep.subr.mxu0 0.0
    %2255 = vmatpush1.msra.mxu0 0.0
    %2256 = vmatprep.subr.mxu0 0.0
    %2257 = vmatpush1.msra.mxu0 0.0
    %2258 = vmatprep.subr.mxu0 0.0
    %2259 = vmatpush1.msra.mxu0 0.0
    %2260 = vmatprep.subr.mxu0 0.0
    %2261 = vmatpush1.msra.mxu0 0.0
    %2262 = vmatprep.subr.mxu0 0.0
    %2263 = vmatpush1.msra.mxu0 0.0
    %2264 = vmatprep.subr.mxu0 0.0
    %2265 = vmatpush1.msra.mxu0 0.0
    %2266 = vmatprep.subr.mxu0 0.0
    %2267 = vmatpush1.msra.mxu0 0.0
    %2268 = vmatprep.subr.mxu0 0.0
    %2269 = vmatpush1.msra.mxu0 0.0
    %2270 = vmatprep.subr.mxu0 0.0
    %2271 = vmatpush1.msra.mxu0 0.0
    %2272 = vmatprep.subr.mxu0 0.0
    %2273 = vmatpush1.msra.mxu0 0.0
    %2274 = vmatprep.subr.mxu0 0.0
    %2275 = vmatpush1.msra.mxu0 0.0
    %2276 = vmatprep.subr.mxu0 0.0
    %2277 = vmatpush1.msra.mxu0 0.0
    %2278 = vmatprep.subr.mxu0 0.0
    %2279 = vmatpush1.msra.mxu0 0.0
    %2280 = vmatprep.subr.mxu0 0.0
    %2281 = vmatpush1.msra.mxu0 0.0
    %2282 = vmatprep.subr.mxu0 0.0
    %2283 = vmatpush1.msra.mxu0 0.0
    %2284 = vmatprep.subr.mxu0 0.0
    %2285 = vmatpush1.msra.mxu0 0.0
    %2286 = vmatprep.subr.mxu0 0.0
    %2287 = vmatpush1.msra.mxu0 0.0
    %2288 = vmatprep.subr.mxu0 0.0
    %2289 = vmatpush1.msra.mxu0 0.0
    %2290 = vmatprep.mubr.f32.mxu0 0.0
    %2291 = vmatmul.mubr.f32.gmra.mrb[0].mxu0 %v2221
    %v2292 = vpop.f32.mrb[0].mxu0
    %v2293 = vadd.f32 0.0, %v2292
    %v2294 = vpop.f32.mrb[0].mxu0
    %2295 = vmatprep.mubr.f32.mxu0 0.0
    %2296 = vmatmul.mubr.f32.gmra.mrb[0].mxu0 %v2224
    %v2297 = vpop.f32.mrb[0].mxu0
    %v2298 = vadd.f32 0.0, %v2297
    %v2299 = vpop.f32.mrb[0].mxu0
    %2300 = vdwg.mxu0
    %v2302 = vsel %vm2128, %v2029, 0
    %v2305 = vsel %vm2128, %v2030, 0
    %2307 = vmatprep.subr.mxu0 0.0
    %2308 = vmatpush1.msra.mxu0 %v2137
    %2309 = vmatprep.subr.mxu0 0.0
    %2310 = vmatpush1.msra.mxu0 0.0
    %2311 = vmatprep.subr.mxu0 0.0
    %2312 = vmatpush1.msra.mxu0 0.0
    %2313 = vmatprep.subr.mxu0 0.0
    %2314 = vmatpush1.msra.mxu0 0.0
    %2315 = vmatprep.subr.mxu0 0.0
    %2316 = vmatpush1.msra.mxu0 0.0
    %2317 = vmatprep.subr.mxu0 0.0
    %2318 = vmatpush1.msra.mxu0 0.0
    %2319 = vmatprep.subr.mxu0 0.0
    %2320 = vmatpush1.msra.mxu0 0.0
    %2321 = vmatprep.subr.mxu0 0.0
    %2322 = vmatpush1.msra.mxu0 0.0
    %2323 = vmatprep.subr.mxu0 0.0
    %2324 = vmatpush1.msra.mxu0 0.0
    %2325 = vmatprep.subr.mxu0 0.0
    %2326 = vmatpush1.msra.mxu0 0.0
    %2327 = vmatprep.subr.mxu0 0.0
    %2328 = vmatpush1.msra.mxu0 0.0
    %2329 = vmatprep.subr.mxu0 0.0
    %2330 = vmatpush1.msra.mxu0 0.0
    %2331 = vmatprep.subr.mxu0 0.0
    %2332 = vmatpush1.msra.mxu0 0.0
    %2333 = vmatprep.subr.mxu0 0.0
    %2334 = vmatpush1.msra.mxu0 0.0
    %2335 = vmatprep.subr.mxu0 0.0
    %2336 = vmatpush1.msra.mxu0 0.0
    %2337 = vmatprep.subr.mxu0 0.0
    %2338 = vmatpush1.msra.mxu0 0.0
    %2339 = vmatprep.subr.mxu0 0.0
    %2340 = vmatpush1.msra.mxu0 0.0
    %2341 = vmatprep.subr.mxu0 0.0
    %2342 = vmatpush1.msra.mxu0 0.0
    %2343 = vmatprep.subr.mxu0 0.0
    %2344 = vmatpush1.msra.mxu0 0.0
    %2345 = vmatprep.subr.mxu0 0.0
    %2346 = vmatpush1.msra.mxu0 0.0
    %2347 = vmatprep.subr.mxu0 0.0
    %2348 = vmatpush1.msra.mxu0 0.0
    %2349 = vmatprep.subr.mxu0 0.0
    %2350 = vmatpush1.msra.mxu0 0.0
    %2351 = vmatprep.subr.mxu0 0.0
    %2352 = vmatpush1.msra.mxu0 0.0
    %2353 = vmatprep.subr.mxu0 0.0
    %2354 = vmatpush1.msra.mxu0 0.0
    %2355 = vmatprep.subr.mxu0 0.0
    %2356 = vmatpush1.msra.mxu0 0.0
    %2357 = vmatprep.subr.mxu0 0.0
    %2358 = vmatpush1.msra.mxu0 0.0
    %2359 = vmatprep.subr.mxu0 0.0
    %2360 = vmatpush1.msra.mxu0 0.0
    %2361 = vmatprep.subr.mxu0 0.0
    %2362 = vmatpush1.msra.mxu0 0.0
    %2363 = vmatprep.subr.mxu0 0.0
    %2364 = vmatpush1.msra.mxu0 0.0
    %2365 = vmatprep.subr.mxu0 0.0
    %2366 = vmatpush1.msra.mxu0 0.0
    %2367 = vmatprep.subr.mxu0 0.0
    %2368 = vmatpush1.msra.mxu0 0.0
    %2369 = vmatprep.subr.mxu0 0.0
    %2370 = vmatpush1.msra.mxu0 0.0
    %2371 = vmatprep.mubr.f32.mxu0 0.0
    %2372 = vmatmul.mubr.f32.gmra.mrb[0].mxu0 %v2302
    %v2373 = vpop.f32.mrb[0].mxu0
    %v2374 = vadd.f32 0.0, %v2373
    %v2375 = vpop.f32.mrb[0].mxu0
    %2376 = vmatprep.mubr.f32.mxu0 0.0
    %2377 = vmatmul.mubr.f32.gmra.mrb[0].mxu0 %v2305
    %v2378 = vpop.f32.mrb[0].mxu0
    %v2379 = vadd.f32 0.0, %v2378
    %v2380 = vpop.f32.mrb[0].mxu0
    %2381 = vdwg.mxu0
    %2382 = vmatprep.subr.mxu0 %v1934
    %2383 = vmatpush1.xpose.msra.mxu0 %v1933
    %2384 = vmatprep.subr.mxu0 %v1938
    %2385 = vmatpush1.xpose.msra.mxu0 %v1937
    %2386 = vmatprep.subr.mxu0 0.0
    %2387 = vmatpush1.xpose.msra.mxu0 0.0
    %2388 = vmatprep.subr.mxu0 0.0
    %2389 = vmatpush1.xpose.msra.mxu0 0.0
    %2390 = vmatprep.subr.mxu0 0.0
    %2391 = vmatpush1.xpose.msra.mxu0 0.0
    %2392 = vmatprep.subr.mxu0 0.0
    %2393 = vmatpush1.xpose.msra.mxu0 0.0
    %2394 = vmatprep.subr.mxu0 0.0
    %2395 = vmatpush1.xpose.msra.mxu0 0.0
    %2396 = vmatprep.subr.mxu0 0.0
    %2397 = vmatpush1.xpose.msra.mxu0 0.0
    %2398 = vmatprep.subr.mxu0 0.0
    %2399 = vmatpush1.xpose.msra.mxu0 0.0
    %2400 = vmatprep.subr.mxu0 0.0
    %2401 = vmatpush1.xpose.msra.mxu0 0.0
    %2402 = vmatprep.subr.mxu0 0.0
    %2403 = vmatpush1.xpose.msra.mxu0 0.0
    %2404 = vmatprep.subr.mxu0 0.0
    %2405 = vmatpush1.xpose.msra.mxu0 0.0
    %2406 = vmatprep.subr.mxu0 0.0
    %2407 = vmatpush1.xpose.msra.mxu0 0.0
    %2408 = vmatprep.subr.mxu0 0.0
    %2409 = vmatpush1.xpose.msra.mxu0 0.0
    %2410 = vmatprep.subr.mxu0 0.0
    %2411 = vmatpush1.xpose.msra.mxu0 0.0
    %2412 = vmatprep.subr.mxu0 0.0
    %2413 = vmatpush1.xpose.msra.mxu0 0.0
    %2414 = vmatprep.subr.mxu0 0.0
    %2415 = vmatpush1.xpose.msra.mxu0 0.0
    %2416 = vmatprep.subr.mxu0 0.0
    %2417 = vmatpush1.xpose.msra.mxu0 0.0
    %2418 = vmatprep.subr.mxu0 0.0
    %2419 = vmatpush1.xpose.msra.mxu0 0.0
    %2420 = vmatprep.subr.mxu0 0.0
    %2421 = vmatpush1.xpose.msra.mxu0 0.0
    %2422 = vmatprep.subr.mxu0 0.0
    %2423 = vmatpush1.xpose.msra.mxu0 0.0
    %2424 = vmatprep.subr.mxu0 0.0
    %2425 = vmatpush1.xpose.msra.mxu0 0.0
    %2426 = vmatprep.subr.mxu0 0.0
    %2427 = vmatpush1.xpose.msra.mxu0 0.0
    %2428 = vmatprep.subr.mxu0 0.0
    %2429 = vmatpush1.xpose.msra.mxu0 0.0
    %2430 = vmatprep.subr.mxu0 0.0
    %2431 = vmatpush1.xpose.msra.mxu0 0.0
    %2432 = vmatprep.subr.mxu0 0.0
    %2433 = vmatpush1.xpose.msra.mxu0 0.0
    %2434 = vmatprep.subr.mxu0 0.0
    %2435 = vmatpush1.xpose.msra.mxu0 0.0
    %2436 = vmatprep.subr.mxu0 0.0
    %2437 = vmatpush1.xpose.msra.mxu0 0.0
    %2438 = vmatprep.subr.mxu0 0.0
    %2439 = vmatpush1.xpose.msra.mxu0 0.0
    %2440 = vmatprep.subr.mxu0 0.0
    %2441 = vmatpush1.xpose.msra.mxu0 0.0
    %2442 = vmatprep.subr.mxu0 0.0
    %2443 = vmatpush1.xpose.msra.mxu0 0.0
    %2444 = vmatprep.subr.mxu0 0.0
    %2445 = vmatpush1.xpose.msra.mxu0 0.0
    %2446 = vmatprep.mubr.f32.mxu0 %v1936
    %2447 = vmatmul.mubr.f32.gmra.mrb[0].mxu0 %v1935
    %v2448 = vpop.f32.mrb[0].mxu0
    %v2449 = vadd.f32 0.0, %v2448
    %v2450 = vpop.f32.mrb[0].mxu0
    %2451 = vmatprep.mubr.f32.mxu0 %v1940
    %2452 = vmatmul.mubr.f32.gmra.mrb[0].mxu0 %v1939
    %v2453 = vpop.f32.mrb[0].mxu0
    %v2454 = vadd.f32 0.0, %v2453
    %v2455 = vpop.f32.mrb[0].mxu0
    %2456 = vdwg.mxu0
    %v2457 = vmul.f32 %v2449, %v243
    %v2458 = vmul.f32 %v2454, %v244
    %v2459 = vmul.f32 %v1025, %v2374
    %v2460 = vmul.f32 %v1026, %v2379
    %v2461 = vmul.f32 %v2293, %v2459
    %v2462 = vmul.f32 %v2298, %v2460
    %v2464 = vsel %vm648, %v2457, 0
    %v2467 = vsel %vm648, %v2458, 0
    %2469 = vmatprep.subr.mxu0 0.0
    %2470 = vmatpush1.msra.mxu0 %v2461
    %2471 = vmatprep.subr.mxu0 0.0
    %2472 = vmatpush1.msra.mxu0 %v2462
    %2473 = vmatprep.subr.mxu0 0.0
    %2474 = vmatpush1.msra.mxu0 0.0
    %2475 = vmatprep.subr.mxu0 0.0
    %2476 = vmatpush1.msra.mxu0 0.0
    %2477 = vmatprep.subr.mxu0 0.0
    %2478 = vmatpush1.msra.mxu0 0.0
    %2479 = vmatprep.subr.mxu0 0.0
    %2480 = vmatpush1.msra.mxu0 0.0
    %2481 = vmatprep.subr.mxu0 0.0
    %2482 = vmatpush1.msra.mxu0 0.0
    %2483 = vmatprep.subr.mxu0 0.0
    %2484 = vmatpush1.msra.mxu0 0.0
    %2485 = vmatprep.subr.mxu0 0.0
    %2486 = vmatpush1.msra.mxu0 0.0
    %2487 = vmatprep.subr.mxu0 0.0
    %2488 = vmatpush1.msra.mxu0 0.0
    %2489 = vmatprep.subr.mxu0 0.0
    %2490 = vmatpush1.msra.mxu0 0.0
    %2491 = vmatprep.subr.mxu0 0.0
    %2492 = vmatpush1.msra.mxu0 0.0
    %2493 = vmatprep.subr.mxu0 0.0
    %2494 = vmatpush1.msra.mxu0 0.0
    %2495 = vmatprep.subr.mxu0 0.0
    %2496 = vmatpush1.msra.mxu0 0.0
    %2497 = vmatprep.subr.mxu0 0.0
    %2498 = vmatpush1.msra.mxu0 0.0
    %2499 = vmatprep.subr.mxu0 0.0
    %2500 = vmatpush1.msra.mxu0 0.0
    %2501 = vmatprep.subr.mxu0 0.0
    %2502 = vmatpush1.msra.mxu0 0.0
    %2503 = vmatprep.subr.mxu0 0.0
    %2504 = vmatpush1.msra.mxu0 0.0
    %2505 = vmatprep.subr.mxu0 0.0
    %2506 = vmatpush1.msra.mxu0 0.0
    %2507 = vmatprep.subr.mxu0 0.0
    %2508 = vmatpush1.msra.mxu0 0.0
    %2509 = vmatprep.subr.mxu0 0.0
    %2510 = vmatpush1.msra.mxu0 0.0
    %2511 = vmatprep.subr.mxu0 0.0
    %2512 = vmatpush1.msra.mxu0 0.0
    %2513 = vmatprep.subr.mxu0 0.0
    %2514 = vmatpush1.msra.mxu0 0.0
    %2515 = vmatprep.subr.mxu0 0.0
    %2516 = vmatpush1.msra.mxu0 0.0
    %2517 = vmatprep.subr.mxu0 0.0
    %2518 = vmatpush1.msra.mxu0 0.0
    %2519 = vmatprep.subr.mxu0 0.0
    %2520 = vmatpush1.msra.mxu0 0.0
    %2521 = vmatprep.subr.mxu0 0.0
    %2522 = vmatpush1.msra.mxu0 0.0
    %2523 = vmatprep.subr.mxu0 0.0
    %2524 = vmatpush1.msra.mxu0 0.0
    %2525 = vmatprep.subr.mxu0 0.0
    %2526 = vmatpush1.msra.mxu0 0.0
    %2527 = vmatprep.subr.mxu0 0.0
    %2528 = vmatpush1.msra.mxu0 0.0
    %2529 = vmatprep.subr.mxu0 0.0
    %2530 = vmatpush1.msra.mxu0 0.0
    %2531 = vmatprep.subr.mxu0 0.0
    %2532 = vmatpush1.msra.mxu0 0.0
    %2533 = vmatprep.mubr.f32.mxu0 0.0
    %2534 = vmatmul.mubr.f32.gmra.mrb[0].mxu0 %v2464
    %v2535 = vpop.f32.mrb[0].mxu0
    %v2536 = vadd.f32 0.0, %v2535
    %v2537 = vpop.f32.mrb[0].mxu0
    %2538 = vmatprep.mubr.f32.mxu0 0.0
    %2539 = vmatmul.mubr.f32.gmra.mrb[0].mxu0 %v2467
    %v2540 = vpop.f32.mrb[0].mxu0
    %v2541 = vadd.f32 0.0, %v2540
    %v2542 = vpop.f32.mrb[0].mxu0
    %2543 = vdwg.mxu0
    %v2544 = vmul.f32 %v2206, %v2536
    %v2545 = vmul.f32 %v2211, %v2541
    %v2546 = vld [vmem:[#allocation17] sm:$0x1]
    %v2548 = vlaneseq
    %v2549 = vshrl.u32 %v2548, 7
    %v2550 = vsub.s32 0, %v2549
    %v2551 = vrot.slane %v2546, %v2550
    %v2553 = vmul.f32 %v1025, %v2551
    %v2554 = vmul.f32 %v1026, %v2551
    %v2555 = vadd.f32 %v2544, %v2553
    %v2556 = vadd.f32 %v2545, %v2554
    %v2557 = vxor.u32 %v377, 2147483648
    %v2558 = vxor.u32 %v380, 2147483648
    %v2559 = vmul.f32 %v2557, 1.442695
    %v2560 = vpow.pop %v2559
    %v2561 = vmul.f32 %v2558, 1.442695
    %v2562 = vpow.pop %v2561
    %v2563 = vadd.f32 %v2560, 1.0
    %v2564 = vadd.f32 %v2562, 1.0
    %v2565 = vrcp.pop %v2563
    %v2566 = vmul.f32 1.0, %v2565
    %v2567 = vrcp.pop %v2564
    %v2568 = vmul.f32 1.0, %v2567
    %v2569 = vmul.f32 %v377, %v2566
    %v2570 = vmul.f32 %v380, %v2568
    %v2571 = vmul.f32 %v2555, %v2569
    %v2572 = vmul.f32 %v2556, %v2570
    %v2573 = vld [vmem:[%s17] sm:$0x1]
    %v2574 = vmul.f32 %v2571, %v2571
    %v2575 = vmul.f32 %v2572, %v2572
    %v2576 = vsel %vm257, %v2574, 0.0
    %2577 = vadd.xlane.f32.xlu0 %v2576
    %v2578 = vpop.xlane.xlu0 %2577
    %v2579 = vsel %vm257, %v2575, 0.0
    %2580 = vadd.xlane.f32.xlu0 %v2579
    %v2581 = vpop.xlane.xlu0 %2580
    %v2582 = vmul.f32 %v2578, %v264
    %v2583 = vmul.f32 %v2581, %v264
    %v2584 = vadd.f32 %v2582, 1e-05
    %v2585 = vadd.f32 %v2583, 1e-05
    %v2586 = vrsqrt.pop %v2584
    %v2587 = vrsqrt.pop %v2585
    %v2588 = vmul.f32 %v2571, %v2586
    %v2589 = vmul.f32 %v2572, %v2587
    %v2591 = vlaneseq
    %v2592 = vshrl.u32 %v2591, 7
    %v2593 = vsub.s32 0, %v2592
    %v2594 = vrot.slane %v2573, %v2593
    %v2596 = vmul.f32 %v2588, %v2594
    %v2597 = vmul.f32 %v2589, %v2594
    %v2598 = vpack.c.bf16 %v2597, %v2596
    %v2599 = vld [vmem:[%s18] sm:$0xf]
    %v2600 = vld [vmem:[%s18 + $0x4] sm:$0xf]
    %v2601 = vld [vmem:[%s18 + $0x8] sm:$0xf]
    %v2602 = vld [vmem:[%s18 + $0xc] sm:$0xf]
    %v2603 = vld [vmem:[%s18 + $0x10] sm:$0xf]
    %v2604 = vld [vmem:[%s18 + $0x14] sm:$0xf]
    %v2605 = vld [vmem:[%s18 + $0x18] sm:$0xf]
    %v2606 = vld [vmem:[%s18 + $0x1c] sm:$0xf]
    %v2615 = vunpack.c.l.b16 %v2599
    %v2616 = vunpack.c.l.b16 %v2600
    %v2617 = vunpack.c.l.b16 %v2601
    %v2618 = vunpack.c.l.b16 %v2602
    %v2619 = vunpack.c.l.b16 %v2603
    %v2620 = vunpack.c.l.b16 %v2604
    %v2621 = vunpack.c.l.b16 %v2605
    %v2622 = vunpack.c.l.b16 %v2606
    %v2623 = vpack.c.b16 %v2616, %v2615
    %v2624 = vpack.c.b16 %v2618, %v2617
    %v2625 = vpack.c.b16 %v2620, %v2619
    %v2626 = vpack.c.b16 %v2622, %v2621
    %v2632 = vsel %vm257, %v2598, 0
    %2634 = vmatprep.subr.bf16.mxu0 0
    %2635 = vmatpush1.bf16.msra.mxu0 %v2623
    %2636 = vmatprep.subr.bf16.mxu0 0
    %2637 = vmatpush1.bf16.msra.mxu0 %v2624
    %2638 = vmatprep.subr.bf16.mxu0 0
    %2639 = vmatpush1.bf16.msra.mxu0 %v2625
    %2640 = vmatprep.subr.bf16.mxu0 0
    %2641 = vmatpush1.bf16.msra.mxu0 %v2626
    %2642 = vmatprep.subr.bf16.mxu0 0
    %2643 = vmatpush1.bf16.msra.mxu0 0
    %2644 = vmatprep.subr.bf16.mxu0 0
    %2645 = vmatpush1.bf16.msra.mxu0 0
    %2646 = vmatprep.subr.bf16.mxu0 0
    %2647 = vmatpush1.bf16.msra.mxu0 0
    %2648 = vmatprep.subr.bf16.mxu0 0
    %2649 = vmatpush1.bf16.msra.mxu0 0
    %2650 = vmatprep.subr.bf16.mxu0 0
    %2651 = vmatpush1.bf16.msra.mxu0 0
    %2652 = vmatprep.subr.bf16.mxu0 0
    %2653 = vmatpush1.bf16.msra.mxu0 0
    %2654 = vmatprep.subr.bf16.mxu0 0
    %2655 = vmatpush1.bf16.msra.mxu0 0
    %2656 = vmatprep.subr.bf16.mxu0 0
    %2657 = vmatpush1.bf16.msra.mxu0 0
    %2658 = vmatprep.subr.bf16.mxu0 0
    %2659 = vmatpush1.bf16.msra.mxu0 0
    %2660 = vmatprep.subr.bf16.mxu0 0
    %2661 = vmatpush1.bf16.msra.mxu0 0
    %2662 = vmatprep.subr.bf16.mxu0 0
    %2663 = vmatpush1.bf16.msra.mxu0 0
    %2664 = vmatprep.subr.bf16.mxu0 0
    %2665 = vmatpush1.bf16.msra.mxu0 0
    %2666 = vmatprep.mubr.bf16.mxu0 0
    %2667 = vmatmul.mubr.bf16.gmra.mrb[0].mxu0 %v2632
    %v2668 = vpop.f32.mrb[0].mxu0
    %v2669 = vadd.f32 0.0, %v2668
    %v2670 = vpop.f32.mrb[0].mxu0
    %v2671 = vpop.f32.mrb[0].mxu0
    %v2672 = vadd.f32 0.0, %v2671
    %v2673 = vpop.f32.mrb[0].mxu0
    %2674 = vdwg.mxu0
    %v2675 = vpack.c.bf16 %v2672, %v2669
    %v2676 = vld [vmem:[%s19] sm:$0xf]
    %v2677 = vld [vmem:[%s19 + $0x4] sm:$0xf]
    %v2678 = vld [vmem:[%s19 + $0x8] sm:$0xf]
    %v2679 = vld [vmem:[%s19 + $0xc] sm:$0xf]
    %v2680 = vld [vmem:[%s19 + $0x10] sm:$0xf]
    %v2681 = vld [vmem:[%s19 + $0x14] sm:$0xf]
    %v2682 = vld [vmem:[%s19 + $0x18] sm:$0xf]
    %v2683 = vld [vmem:[%s19 + $0x1c] sm:$0xf]
    %v2692 = vunpack.c.l.b16 %v2676
    %v2693 = vunpack.c.l.b16 %v2677
    %v2694 = vunpack.c.l.b16 %v2678
    %v2695 = vunpack.c.l.b16 %v2679
    %v2696 = vunpack.c.l.b16 %v2680
    %v2697 = vunpack.c.l.b16 %v2681
    %v2698 = vunpack.c.l.b16 %v2682
    %v2699 = vunpack.c.l.b16 %v2683
    %v2700 = vpack.c.b16 %v2693, %v2692
    %v2701 = vpack.c.b16 %v2695, %v2694
    %v2702 = vpack.c.b16 %v2697, %v2696
    %v2703 = vpack.c.b16 %v2699, %v2698
    %v2709 = vsel %vm257, %v2675, 0
    %2711 = vmatprep.subr.bf16.mxu0 0
    %2712 = vmatpush1.bf16.msra.mxu0 %v2700
    %2713 = vmatprep.subr.bf16.mxu0 0
    %2714 = vmatpush1.bf16.msra.mxu0 %v2701
    %2715 = vmatprep.subr.bf16.mxu0 0
    %2716 = vmatpush1.bf16.msra.mxu0 %v2702
    %2717 = vmatprep.subr.bf16.mxu0 0
    %2718 = vmatpush1.bf16.msra.mxu0 %v2703
    %2719 = vmatprep.subr.bf16.mxu0 0
    %2720 = vmatpush1.bf16.msra.mxu0 0
    %2721 = vmatprep.subr.bf16.mxu0 0
    %2722 = vmatpush1.bf16.msra.mxu0 0
    %2723 = vmatprep.subr.bf16.mxu0 0
    %2724 = vmatpush1.bf16.msra.mxu0 0
    %2725 = vmatprep.subr.bf16.mxu0 0
    %2726 = vmatpush1.bf16.msra.mxu0 0
    %2727 = vmatprep.subr.bf16.mxu0 0
    %2728 = vmatpush1.bf16.msra.mxu0 0
    %2729 = vmatprep.subr.bf16.mxu0 0
    %2730 = vmatpush1.bf16.msra.mxu0 0
    %2731 = vmatprep.subr.bf16.mxu0 0
    %2732 = vmatpush1.bf16.msra.mxu0 0
    %2733 = vmatprep.subr.bf16.mxu0 0
    %2734 = vmatpush1.bf16.msra.mxu0 0
    %2735 = vmatprep.subr.bf16.mxu0 0
    %2736 = vmatpush1.bf16.msra.mxu0 0
    %2737 = vmatprep.subr.bf16.mxu0 0
    %2738 = vmatpush1.bf16.msra.mxu0 0
    %2739 = vmatprep.subr.bf16.mxu0 0
    %2740 = vmatpush1.bf16.msra.mxu0 0
    %2741 = vmatprep.subr.bf16.mxu0 0
    %2742 = vmatpush1.bf16.msra.mxu0 0
    %2743 = vmatprep.mubr.bf16.mxu0 0
    %2744 = vmatmul.mubr.bf16.gmra.mrb[0].mxu0 %v2709
    %v2745 = vpop.f32.mrb[0].mxu0
    %v2746 = vadd.f32 0.0, %v2745
    %v2747 = vpop.f32.mrb[0].mxu0
    %v2748 = vpop.f32.mrb[0].mxu0
    %v2749 = vadd.f32 0.0, %v2748
    %v2750 = vpop.f32.mrb[0].mxu0
    %2751 = vdwg.mxu0
    %v2752 = vadd.f32 %v241, %v2746
    %v2753 = vadd.f32 %v242, %v2749
    %v2754 = vld [vmem:[#allocation19] sm:$0x1]
    %v2755 = vmul.f32 %v2752, %v2752
    %v2756 = vmul.f32 %v2753, %v2753
    %v2757 = vsel %vm257, %v2755, 0.0
    %2758 = vadd.xlane.f32.xlu0 %v2757
    %v2759 = vpop.xlane.xlu0 %2758
    %v2760 = vsel %vm257, %v2756, 0.0
    %2761 = vadd.xlane.f32.xlu0 %v2760
    %v2762 = vpop.xlane.xlu0 %2761
    %v2763 = vmul.f32 %v2759, %v264
    %v2764 = vmul.f32 %v2762, %v264
    %v2765 = vadd.f32 %v2763, 1e-05
    %v2766 = vadd.f32 %v2764, 1e-05
    %v2767 = vrsqrt.pop %v2765
    %v2768 = vrsqrt.pop %v2766
    %v2769 = vmul.f32 %v2752, %v2767
    %v2770 = vmul.f32 %v2753, %v2768
    %v2772 = vlaneseq
    %v2773 = vshrl.u32 %v2772, 7
    %v2774 = vsub.s32 0, %v2773
    %v2775 = vrot.slane %v2754, %v2774
    %v2777 = vmul.f32 %v2769, %v2775
    %v2778 = vmul.f32 %v2770, %v2775
    %v2779 = vpack.c.bf16 %v2778, %v2777
    %v2780 = vld [vmem:[%s21] sm:$0xff]
    %v2781 = vld [vmem:[%s21 + $0x8] sm:$0xff]
    %v2782 = vld [vmem:[%s21 + $0x10] sm:$0xff]
    %v2783 = vld [vmem:[%s21 + $0x18] sm:$0xff]
    %v2784 = vld [vmem:[%s21 + $0x20] sm:$0xff]
    %v2785 = vld [vmem:[%s21 + $0x28] sm:$0xff]
    %v2786 = vld [vmem:[%s21 + $0x30] sm:$0xff]
    %v2787 = vld [vmem:[%s21 + $0x38] sm:$0xff]
    %v2788 = vld [vmem:[%s21 + $0x40] sm:$0xff]
    %v2789 = vld [vmem:[%s21 + $0x48] sm:$0xff]
    %v2790 = vld [vmem:[%s21 + $0x50] sm:$0xff]
    %v2791 = vld [vmem:[%s21 + $0x58] sm:$0xff]
    %v2792 = vld [vmem:[%s21 + $0x60] sm:$0xff]
    %v2793 = vld [vmem:[%s21 + $0x68] sm:$0xff]
    %v2794 = vld [vmem:[%s21 + $0x70] sm:$0xff]
    %v2795 = vld [vmem:[%s21 + $0x78] sm:$0xff]
    %v2812 = vunpack.c.l.b16 %v2780
    %v2813 = vunpack.c.h.b16 %v2780
    %v2814 = vunpack.c.l.b16 %v2781
    %v2815 = vunpack.c.h.b16 %v2781
    %v2816 = vunpack.c.l.b16 %v2782
    %v2817 = vunpack.c.h.b16 %v2782
    %v2818 = vunpack.c.l.b16 %v2783
    %v2819 = vunpack.c.h.b16 %v2783
    %v2820 = vunpack.c.l.b16 %v2784
    %v2821 = vunpack.c.h.b16 %v2784
    %v2822 = vunpack.c.l.b16 %v2785
    %v2823 = vunpack.c.h.b16 %v2785
    %v2824 = vunpack.c.l.b16 %v2786
    %v2825 = vunpack.c.h.b16 %v2786
    %v2826 = vunpack.c.l.b16 %v2787
    %v2827 = vunpack.c.h.b16 %v2787
    %v2828 = vunpack.c.l.b16 %v2788
    %v2829 = vunpack.c.h.b16 %v2788
    %v2830 = vunpack.c.l.b16 %v2789
    %v2831 = vunpack.c.h.b16 %v2789
    %v2832 = vunpack.c.l.b16 %v2790
    %v2833 = vunpack.c.h.b16 %v2790
    %v2834 = vunpack.c.l.b16 %v2791
    %v2835 = vunpack.c.h.b16 %v2791
    %v2836 = vunpack.c.l.b16 %v2792
    %v2837 = vunpack.c.h.b16 %v2792
    %v2838 = vunpack.c.l.b16 %v2793
    %v2839 = vunpack.c.h.b16 %v2793
    %v2840 = vunpack.c.l.b16 %v2794
    %v2841 = vunpack.c.h.b16 %v2794
    %v2842 = vunpack.c.l.b16 %v2795
    %v2843 = vunpack.c.h.b16 %v2795
    %v2844 = vpack.c.b16 %v2816, %v2812
    %v2845 = vpack.c.b16 %v2817, %v2813
    %v2846 = vpack.c.b16 %v2818, %v2814
    %v2847 = vpack.c.b16 %v2819, %v2815
    %v2848 = vpack.c.b16 %v2824, %v2820
    %v2849 = vpack.c.b16 %v2825, %v2821
    %v2850 = vpack.c.b16 %v2826, %v2822
    %v2851 = vpack.c.b16 %v2827, %v2823
    %v2852 = vpack.c.b16 %v2832, %v2828
    %v2853 = vpack.c.b16 %v2833, %v2829
    %v2854 = vpack.c.b16 %v2834, %v2830
    %v2855 = vpack.c.b16 %v2835, %v2831
    %v2856 = vpack.c.b16 %v2840, %v2836
    %v2857 = vpack.c.b16 %v2841, %v2837
    %v2858 = vpack.c.b16 %v2842, %v2838
    %v2859 = vpack.c.b16 %v2843, %v2839
    %v2877 = vsel %vm257, %v2779, 0
    %2879 = vmatprep.subr.bf16.mxu0 %v2845
    %2880 = vmatpush1.bf16.msra.mxu0 %v2844
    %2881 = vmatprep.subr.bf16.mxu0 %v2849
    %2882 = vmatpush1.bf16.msra.mxu0 %v2848
    %2883 = vmatprep.subr.bf16.mxu0 %v2853
    %2884 = vmatpush1.bf16.msra.mxu0 %v2852
    %2885 = vmatprep.subr.bf16.mxu0 %v2857
    %2886 = vmatpush1.bf16.msra.mxu0 %v2856
    %2887 = vmatprep.subr.bf16.mxu0 0
    %2888 = vmatpush1.bf16.msra.mxu0 0
    %2889 = vmatprep.subr.bf16.mxu0 0
    %2890 = vmatpush1.bf16.msra.mxu0 0
    %2891 = vmatprep.subr.bf16.mxu0 0
    %2892 = vmatpush1.bf16.msra.mxu0 0
    %2893 = vmatprep.subr.bf16.mxu0 0
    %2894 = vmatpush1.bf16.msra.mxu0 0
    %2895 = vmatprep.subr.bf16.mxu0 0
    %2896 = vmatpush1.bf16.msra.mxu0 0
    %2897 = vmatprep.subr.bf16.mxu0 0
    %2898 = vmatpush1.bf16.msra.mxu0 0
    %2899 = vmatprep.subr.bf16.mxu0 0
    %2900 = vmatpush1.bf16.msra.mxu0 0
    %2901 = vmatprep.subr.bf16.mxu0 0
    %2902 = vmatpush1.bf16.msra.mxu0 0
    %2903 = vmatprep.subr.bf16.mxu0 0
    %2904 = vmatpush1.bf16.msra.mxu0 0
    %2905 = vmatprep.subr.bf16.mxu0 0
    %2906 = vmatpush1.bf16.msra.mxu0 0
    %2907 = vmatprep.subr.bf16.mxu0 0
    %2908 = vmatpush1.bf16.msra.mxu0 0
    %2909 = vmatprep.subr.bf16.mxu0 0
    %2910 = vmatpush1.bf16.msra.mxu0 0
    %2911 = vmatprep.mubr.bf16.mxu0 0
    %2912 = vmatmul.mubr.bf16.gmra.mrb[0].mxu0 %v2877
    %v2913 = vpop.f32.mrb[0].mxu0
    %v2914 = vadd.f32 0.0, %v2913
    %v2915 = vpop.f32.mrb[0].mxu0
    %v2916 = vadd.f32 0.0, %v2915
    %v2917 = vpop.f32.mrb[0].mxu0
    %v2918 = vadd.f32 0.0, %v2917
    %v2919 = vpop.f32.mrb[0].mxu0
    %v2920 = vadd.f32 0.0, %v2919
    %2921 = vdwg.mxu0
    %2922 = vmatprep.subr.bf16.mxu0 %v2847
    %2923 = vmatpush1.bf16.msra.mxu0 %v2846
    %2924 = vmatprep.subr.bf16.mxu0 %v2851
    %2925 = vmatpush1.bf16.msra.mxu0 %v2850
    %2926 = vmatprep.subr.bf16.mxu0 %v2855
    %2927 = vmatpush1.bf16.msra.mxu0 %v2854
    %2928 = vmatprep.subr.bf16.mxu0 %v2859
    %2929 = vmatpush1.bf16.msra.mxu0 %v2858
    %2930 = vmatprep.subr.bf16.mxu0 0
    %2931 = vmatpush1.bf16.msra.mxu0 0
    %2932 = vmatprep.subr.bf16.mxu0 0
    %2933 = vmatpush1.bf16.msra.mxu0 0
    %2934 = vmatprep.subr.bf16.mxu0 0
    %2935 = vmatpush1.bf16.msra.mxu0 0
    %2936 = vmatprep.subr.bf16.mxu0 0
    %2937 = vmatpush1.bf16.msra.mxu0 0
    %2938 = vmatprep.subr.bf16.mxu0 0
    %2939 = vmatpush1.bf16.msra.mxu0 0
    %2940 = vmatprep.subr.bf16.mxu0 0
    %2941 = vmatpush1.bf16.msra.mxu0 0
    %2942 = vmatprep.subr.bf16.mxu0 0
    %2943 = vmatpush1.bf16.msra.mxu0 0
    %2944 = vmatprep.subr.bf16.mxu0 0
    %2945 = vmatpush1.bf16.msra.mxu0 0
    %2946 = vmatprep.subr.bf16.mxu0 0
    %2947 = vmatpush1.bf16.msra.mxu0 0
    %2948 = vmatprep.subr.bf16.mxu0 0
    %2949 = vmatpush1.bf16.msra.mxu0 0
    %2950 = vmatprep.subr.bf16.mxu0 0
    %2951 = vmatpush1.bf16.msra.mxu0 0
    %2952 = vmatprep.subr.bf16.mxu0 0
    %2953 = vmatpush1.bf16.msra.mxu0 0
    %2954 = vmatprep.mubr.bf16.mxu0 0
    %2955 = vmatmul.mubr.bf16.gmra.mrb[0].mxu0 %v2877
    %v2956 = vpop.f32.mrb[0].mxu0
    %v2957 = vadd.f32 0.0, %v2956
    %v2958 = vpop.f32.mrb[0].mxu0
    %v2959 = vadd.f32 0.0, %v2958
    %v2960 = vpop.f32.mrb[0].mxu0
    %v2961 = vadd.f32 0.0, %v2960
    %v2962 = vpop.f32.mrb[0].mxu0
    %v2963 = vadd.f32 0.0, %v2962
    %2964 = vdwg.mxu0
    %v2965 = vxor.u32 %v2914, 2147483648
    %v2966 = vxor.u32 %v2916, 2147483648
    %v2967 = vxor.u32 %v2918, 2147483648
    %v2968 = vxor.u32 %v2920, 2147483648
    %v2969 = vmul.f32 %v2965, 1.442695
    %v2970 = vpow.pop %v2969
    %v2971 = vmul.f32 %v2966, 1.442695
    %v2972 = vpow.pop %v2971
    %v2973 = vmul.f32 %v2967, 1.442695
    %v2974 = vpow.pop %v2973
    %v2975 = vmul.f32 %v2968, 1.442695
    %v2976 = vpow.pop %v2975
    %v2977 = vadd.f32 %v2970, 1.0
    %v2978 = vadd.f32 %v2972, 1.0
    %v2979 = vadd.f32 %v2974, 1.0
    %v2980 = vadd.f32 %v2976, 1.0
    %v2981 = vrcp.pop %v2977
    %v2982 = vmul.f32 1.0, %v2981
    %v2983 = vrcp.pop %v2978
    %v2984 = vmul.f32 1.0, %v2983
    %v2985 = vrcp.pop %v2979
    %v2986 = vmul.f32 1.0, %v2985
    %v2987 = vrcp.pop %v2980
    %v2988 = vmul.f32 1.0, %v2987
    %v2989 = vmul.f32 %v2914, %v2982
    %v2990 = vmul.f32 %v2916, %v2984
    %v2991 = vmul.f32 %v2918, %v2986
    %v2992 = vmul.f32 %v2920, %v2988
    %v2993 = vmul.f32 %v2989, %v2957
    %v2994 = vmul.f32 %v2990, %v2959
    %v2995 = vmul.f32 %v2991, %v2961
    %v2996 = vmul.f32 %v2992, %v2963
    %v2997 = vpack.c.bf16 %v2995, %v2993
    %v2998 = vpack.c.bf16 %v2996, %v2994
    %v2999 = vld [vmem:[%s22] sm:$0xf]
    %v3000 = vld [vmem:[%s22 + $0x4] sm:$0xf]
    %v3001 = vld [vmem:[%s22 + $0x8] sm:$0xf]
    %v3002 = vld [vmem:[%s22 + $0xc] sm:$0xf]
    %v3003 = vld [vmem:[%s22 + $0x10] sm:$0xf]
    %v3004 = vld [vmem:[%s22 + $0x14] sm:$0xf]
    %v3005 = vld [vmem:[%s22 + $0x18] sm:$0xf]
    %v3006 = vld [vmem:[%s22 + $0x1c] sm:$0xf]
    %v3007 = vld [vmem:[%s22 + $0x20] sm:$0xf]
    %v3008 = vld [vmem:[%s22 + $0x24] sm:$0xf]
    %v3009 = vld [vmem:[%s22 + $0x28] sm:$0xf]
    %v3010 = vld [vmem:[%s22 + $0x2c] sm:$0xf]
    %v3011 = vld [vmem:[%s22 + $0x30] sm:$0xf]
    %v3012 = vld [vmem:[%s22 + $0x34] sm:$0xf]
    %v3013 = vld [vmem:[%s22 + $0x38] sm:$0xf]
    %v3014 = vld [vmem:[%s22 + $0x3c] sm:$0xf]
    %v3015 = vld [vmem:[%s22 + $0x40] sm:$0xf]
    %v3016 = vld [vmem:[%s22 + $0x44] sm:$0xf]
    %v3017 = vld [vmem:[%s22 + $0x48] sm:$0xf]
    %v3018 = vld [vmem:[%s22 + $0x4c] sm:$0xf]
    %v3019 = vld [vmem:[%s22 + $0x50] sm:$0xf]
    %v3020 = vld [vmem:[%s22 + $0x54] sm:$0xf]
    %v3021 = vld [vmem:[%s22 + $0x58] sm:$0xf]
    %v3022 = vld [vmem:[%s22 + $0x5c] sm:$0xf]
    %v3023 = vld [vmem:[%s22 + $0x60] sm:$0xf]
    %v3024 = vld [vmem:[%s22 + $0x64] sm:$0xf]
    %v3025 = vld [vmem:[%s22 + $0x68] sm:$0xf]
    %v3026 = vld [vmem:[%s22 + $0x6c] sm:$0xf]
    %v3027 = vld [vmem:[%s22 + $0x70] sm:$0xf]
    %v3028 = vld [vmem:[%s22 + $0x74] sm:$0xf]
    %v3029 = vld [vmem:[%s22 + $0x78] sm:$0xf]
    %v3030 = vld [vmem:[%s22 + $0x7c] sm:$0xf]
    %v3063 = vunpack.c.l.b16 %v2999
    %v3064 = vunpack.c.l.b16 %v3000
    %v3065 = vunpack.c.l.b16 %v3001
    %v3066 = vunpack.c.l.b16 %v3002
    %v3067 = vunpack.c.l.b16 %v3003
    %v3068 = vunpack.c.l.b16 %v3004
    %v3069 = vunpack.c.l.b16 %v3005
    %v3070 = vunpack.c.l.b16 %v3006
    %v3071 = vunpack.c.l.b16 %v3007
    %v3072 = vunpack.c.l.b16 %v3008
    %v3073 = vunpack.c.l.b16 %v3009
    %v3074 = vunpack.c.l.b16 %v3010
    %v3075 = vunpack.c.l.b16 %v3011
    %v3076 = vunpack.c.l.b16 %v3012
    %v3077 = vunpack.c.l.b16 %v3013
    %v3078 = vunpack.c.l.b16 %v3014
    %v3079 = vunpack.c.l.b16 %v3015
    %v3080 = vunpack.c.l.b16 %v3016
    %v3081 = vunpack.c.l.b16 %v3017
    %v3082 = vunpack.c.l.b16 %v3018
    %v3083 = vunpack.c.l.b16 %v3019
    %v3084 = vunpack.c.l.b16 %v3020
    %v3085 = vunpack.c.l.b16 %v3021
    %v3086 = vunpack.c.l.b16 %v3022
    %v3087 = vunpack.c.l.b16 %v3023
    %v3088 = vunpack.c.l.b16 %v3024
    %v3089 = vunpack.c.l.b16 %v3025
    %v3090 = vunpack.c.l.b16 %v3026
    %v3091 = vunpack.c.l.b16 %v3027
    %v3092 = vunpack.c.l.b16 %v3028
    %v3093 = vunpack.c.l.b16 %v3029
    %v3094 = vunpack.c.l.b16 %v3030
    %v3095 = vpack.c.b16 %v3064, %v3063
    %v3096 = vpack.c.b16 %v3066, %v3065
    %v3097 = vpack.c.b16 %v3068, %v3067
    %v3098 = vpack.c.b16 %v3070, %v3069
    %v3099 = vpack.c.b16 %v3072, %v3071
    %v3100 = vpack.c.b16 %v3074, %v3073
    %v3101 = vpack.c.b16 %v3076, %v3075
    %v3102 = vpack.c.b16 %v3078, %v3077
    %v3103 = vpack.c.b16 %v3080, %v3079
    %v3104 = vpack.c.b16 %v3082, %v3081
    %v3105 = vpack.c.b16 %v3084, %v3083
    %v3106 = vpack.c.b16 %v3086, %v3085
    %v3107 = vpack.c.b16 %v3088, %v3087
    %v3108 = vpack.c.b16 %v3090, %v3089
    %v3109 = vpack.c.b16 %v3092, %v3091
    %v3110 = vpack.c.b16 %v3094, %v3093
    %3127 = vmatprep.subr.bf16.mxu0 0
    %3128 = vmatpush1.bf16.msra.mxu0 %v3095
    %3129 = vmatprep.subr.bf16.mxu0 0
    %3130 = vmatpush1.bf16.msra.mxu0 %v3096
    %3131 = vmatprep.subr.bf16.mxu0 0
    %3132 = vmatpush1.bf16.msra.mxu0 %v3097
    %3133 = vmatprep.subr.bf16.mxu0 0
    %3134 = vmatpush1.bf16.msra.mxu0 %v3098
    %3135 = vmatprep.subr.bf16.mxu0 0
    %3136 = vmatpush1.bf16.msra.mxu0 %v3099
    %3137 = vmatprep.subr.bf16.mxu0 0
    %3138 = vmatpush1.bf16.msra.mxu0 %v3100
    %3139 = vmatprep.subr.bf16.mxu0 0
    %3140 = vmatpush1.bf16.msra.mxu0 %v3101
    %3141 = vmatprep.subr.bf16.mxu0 0
    %3142 = vmatpush1.bf16.msra.mxu0 %v3102
    %3143 = vmatprep.subr.bf16.mxu0 0
    %3144 = vmatpush1.bf16.msra.mxu0 %v3103
    %3145 = vmatprep.subr.bf16.mxu0 0
    %3146 = vmatpush1.bf16.msra.mxu0 %v3104
    %3147 = vmatprep.subr.bf16.mxu0 0
    %3148 = vmatpush1.bf16.msra.mxu0 %v3105
    %3149 = vmatprep.subr.bf16.mxu0 0
    %3150 = vmatpush1.bf16.msra.mxu0 %v3106
    %3151 = vmatprep.subr.bf16.mxu0 0
    %3152 = vmatpush1.bf16.msra.mxu0 %v3107
    %3153 = vmatprep.subr.bf16.mxu0 0
    %3154 = vmatpush1.bf16.msra.mxu0 %v3108
    %3155 = vmatprep.subr.bf16.mxu0 0
    %3156 = vmatpush1.bf16.msra.mxu0 %v3109
    %3157 = vmatprep.subr.bf16.mxu0 0
    %3158 = vmatpush1.bf16.msra.mxu0 %v3110
    %3159 = vmatprep.mubr.bf16.mxu0 %v2998
    %3160 = vmatmul.mubr.bf16.gmra.mrb[0].mxu0 %v2997
    %v3161 = vpop.f32.mrb[0].mxu0
    %v3162 = vadd.f32 0.0, %v3161
    %v3163 = vpop.f32.mrb[0].mxu0
    %v3164 = vpop.f32.mrb[0].mxu0
    %v3165 = vadd.f32 0.0, %v3164
    %v3166 = vpop.f32.mrb[0].mxu0
    %3167 = vdwg.mxu0
    %v3168 = vadd.f32 %v2752, %v3162
    %v3169 = vadd.f32 %v2753, %v3165
    %s3170 = scalar_lea.vmem [#allocation5], 1
    %v3171 = vld [vmem:[%s3170] sm:$0x1]
    %v3172 = vmul.f32 %v3168, %v3168
    %v3173 = vmul.f32 %v3169, %v3169
    %v3174 = vsel %vm257, %v3172, 0.0
    %3175 = vadd.xlane.f32.xlu0 %v3174
    %v3176 = vpop.xlane.xlu0 %3175
    %v3177 = vsel %vm257, %v3173, 0.0
    %3178 = vadd.xlane.f32.xlu0 %v3177
    %v3179 = vpop.xlane.xlu0 %3178
    %v3180 = vmul.f32 %v3176, %v264
    %v3181 = vmul.f32 %v3179, %v264
    %v3182 = vadd.f32 %v3180, 1e-05
    %v3183 = vadd.f32 %v3181, 1e-05
    %v3184 = vrsqrt.pop %v3182
    %v3185 = vrsqrt.pop %v3183
    %v3186 = vmul.f32 %v3168, %v3184
    %v3187 = vmul.f32 %v3169, %v3185
    %v3189 = vlaneseq
    %v3190 = vshrl.u32 %v3189, 7
    %v3191 = vsub.s32 0, %v3190
    %v3192 = vrot.slane %v3171, %v3191
    %v3194 = vmul.f32 %v3186, %v3192
    %v3195 = vmul.f32 %v3187, %v3192
    %s3196 = scalar_lea.vmem [#allocation7], 1
    %v3197 = vld [vmem:[%s3196] sm:$0x1]
    %v3198 = vmul.f32 %v3194, %v3194
    %v3199 = vmul.f32 %v3195, %v3195
    %v3200 = vsel %vm257, %v3198, 0.0
    %3201 = vadd.xlane.f32.xlu0 %v3200
    %v3202 = vpop.xlane.xlu0 %3201
    %v3203 = vsel %vm257, %v3199, 0.0
    %3204 = vadd.xlane.f32.xlu0 %v3203
    %v3205 = vpop.xlane.xlu0 %3204
    %v3206 = vmul.f32 %v3202, %v264
    %v3207 = vmul.f32 %v3205, %v264
    %v3208 = vadd.f32 %v3206, 1e-05
    %v3209 = vadd.f32 %v3207, 1e-05
    %v3210 = vrsqrt.pop %v3208
    %v3211 = vrsqrt.pop %v3209
    %v3212 = vmul.f32 %v3194, %v3210
    %v3213 = vmul.f32 %v3195, %v3211
    %v3215 = vlaneseq
    %v3216 = vshrl.u32 %v3215, 7
    %v3217 = vsub.s32 0, %v3216
    %v3218 = vrot.slane %v3197, %v3217
    %v3220 = vmul.f32 %v3212, %v3218
    %v3221 = vmul.f32 %v3213, %v3218
    %v3222 = vpack.c.bf16 %v3221, %v3220
    %s3223 = scalar_lea.vmem %s6, 32
    %v3224 = vld [vmem:[%s3223] sm:$0xf]
    %v3225 = vld [vmem:[%s3223 + $0x4] sm:$0xf]
    %v3226 = vld [vmem:[%s3223 + $0x8] sm:$0xf]
    %v3227 = vld [vmem:[%s3223 + $0xc] sm:$0xf]
    %v3228 = vld [vmem:[%s3223 + $0x10] sm:$0xf]
    %v3229 = vld [vmem:[%s3223 + $0x14] sm:$0xf]
    %v3230 = vld [vmem:[%s3223 + $0x18] sm:$0xf]
    %v3231 = vld [vmem:[%s3223 + $0x1c] sm:$0xf]
    %v3240 = vunpack.c.l.b16 %v3224
    %v3241 = vunpack.c.l.b16 %v3225
    %v3242 = vunpack.c.l.b16 %v3226
    %v3243 = vunpack.c.l.b16 %v3227
    %v3244 = vunpack.c.l.b16 %v3228
    %v3245 = vunpack.c.l.b16 %v3229
    %v3246 = vunpack.c.l.b16 %v3230
    %v3247 = vunpack.c.l.b16 %v3231
    %v3248 = vpack.c.b16 %v3241, %v3240
    %v3249 = vpack.c.b16 %v3243, %v3242
    %v3250 = vpack.c.b16 %v3245, %v3244
    %v3251 = vpack.c.b16 %v3247, %v3246
    %v3257 = vsel %vm257, %v3222, 0
    %3259 = vmatprep.subr.bf16.mxu0 0
    %3260 = vmatpush1.bf16.msra.mxu0 %v3248
    %3261 = vmatprep.subr.bf16.mxu0 0
    %3262 = vmatpush1.bf16.msra.mxu0 %v3249
    %3263 = vmatprep.subr.bf16.mxu0 0
    %3264 = vmatpush1.bf16.msra.mxu0 %v3250
    %3265 = vmatprep.subr.bf16.mxu0 0
    %3266 = vmatpush1.bf16.msra.mxu0 %v3251
    %3267 = vmatprep.subr.bf16.mxu0 0
    %3268 = vmatpush1.bf16.msra.mxu0 0
    %3269 = vmatprep.subr.bf16.mxu0 0
    %3270 = vmatpush1.bf16.msra.mxu0 0
    %3271 = vmatprep.subr.bf16.mxu0 0
    %3272 = vmatpush1.bf16.msra.mxu0 0
    %3273 = vmatprep.subr.bf16.mxu0 0
    %3274 = vmatpush1.bf16.msra.mxu0 0
    %3275 = vmatprep.subr.bf16.mxu0 0
    %3276 = vmatpush1.bf16.msra.mxu0 0
    %3277 = vmatprep.subr.bf16.mxu0 0
    %3278 = vmatpush1.bf16.msra.mxu0 0
    %3279 = vmatprep.subr.bf16.mxu0 0
    %3280 = vmatpush1.bf16.msra.mxu0 0
    %3281 = vmatprep.subr.bf16.mxu0 0
    %3282 = vmatpush1.bf16.msra.mxu0 0
    %3283 = vmatprep.subr.bf16.mxu0 0
    %3284 = vmatpush1.bf16.msra.mxu0 0
    %3285 = vmatprep.subr.bf16.mxu0 0
    %3286 = vmatpush1.bf16.msra.mxu0 0
    %3287 = vmatprep.subr.bf16.mxu0 0
    %3288 = vmatpush1.bf16.msra.mxu0 0
    %3289 = vmatprep.subr.bf16.mxu0 0
    %3290 = vmatpush1.bf16.msra.mxu0 0
    %3291 = vmatprep.mubr.bf16.mxu0 0
    %3292 = vmatmul.mubr.bf16.gmra.mrb[0].mxu0 %v3257
    %v3293 = vpop.f32.mrb[0].mxu0
    %v3294 = vadd.f32 0.0, %v3293
    %v3295 = vpop.f32.mrb[0].mxu0
    %v3296 = vpop.f32.mrb[0].mxu0
    %v3297 = vadd.f32 0.0, %v3296
    %v3298 = vpop.f32.mrb[0].mxu0
    %3299 = vdwg.mxu0
    %s3300 = scalar_lea.vmem %s7, 32
    %v3301 = vld [vmem:[%s3300] sm:$0xf]
    %v3302 = vld [vmem:[%s3300 + $0x4] sm:$0xf]
    %v3303 = vld [vmem:[%s3300 + $0x8] sm:$0xf]
    %v3304 = vld [vmem:[%s3300 + $0xc] sm:$0xf]
    %v3305 = vld [vmem:[%s3300 + $0x10] sm:$0xf]
    %v3306 = vld [vmem:[%s3300 + $0x14] sm:$0xf]
    %v3307 = vld [vmem:[%s3300 + $0x18] sm:$0xf]
    %v3308 = vld [vmem:[%s3300 + $0x1c] sm:$0xf]
    %v3317 = vunpack.c.l.b16 %v3301
    %v3318 = vunpack.c.l.b16 %v3302
    %v3319 = vunpack.c.l.b16 %v3303
    %v3320 = vunpack.c.l.b16 %v3304
    %v3321 = vunpack.c.l.b16 %v3305
    %v3322 = vunpack.c.l.b16 %v3306
    %v3323 = vunpack.c.l.b16 %v3307
    %v3324 = vunpack.c.l.b16 %v3308
    %v3325 = vpack.c.b16 %v3318, %v3317
    %v3326 = vpack.c.b16 %v3320, %v3319
    %v3327 = vpack.c.b16 %v3322, %v3321
    %v3328 = vpack.c.b16 %v3324, %v3323
    %3333 = vmatprep.subr.bf16.mxu0 0
    %3334 = vmatpush1.bf16.msra.mxu0 %v3325
    %3335 = vmatprep.subr.bf16.mxu0 0
    %3336 = vmatpush1.bf16.msra.mxu0 %v3326
    %3337 = vmatprep.subr.bf16.mxu0 0
    %3338 = vmatpush1.bf16.msra.mxu0 %v3327
    %3339 = vmatprep.subr.bf16.mxu0 0
    %3340 = vmatpush1.bf16.msra.mxu0 %v3328
    %3341 = vmatprep.subr.bf16.mxu0 0
    %3342 = vmatpush1.bf16.msra.mxu0 0
    %3343 = vmatprep.subr.bf16.mxu0 0
    %3344 = vmatpush1.bf16.msra.mxu0 0
    %3345 = vmatprep.subr.bf16.mxu0 0
    %3346 = vmatpush1.bf16.msra.mxu0 0
    %3347 = vmatprep.subr.bf16.mxu0 0
    %3348 = vmatpush1.bf16.msra.mxu0 0
    %3349 = vmatprep.subr.bf16.mxu0 0
    %3350 = vmatpush1.bf16.msra.mxu0 0
    %3351 = vmatprep.subr.bf16.mxu0 0
    %3352 = vmatpush1.bf16.msra.mxu0 0
    %3353 = vmatprep.subr.bf16.mxu0 0
    %3354 = vmatpush1.bf16.msra.mxu0 0
    %3355 = vmatprep.subr.bf16.mxu0 0
    %3356 = vmatpush1.bf16.msra.mxu0 0
    %3357 = vmatprep.subr.bf16.mxu0 0
    %3358 = vmatpush1.bf16.msra.mxu0 0
    %3359 = vmatprep.subr.bf16.mxu0 0
    %3360 = vmatpush1.bf16.msra.mxu0 0
    %3361 = vmatprep.subr.bf16.mxu0 0
    %3362 = vmatpush1.bf16.msra.mxu0 0
    %3363 = vmatprep.subr.bf16.mxu0 0
    %3364 = vmatpush1.bf16.msra.mxu0 0
    %3365 = vmatprep.mubr.bf16.mxu0 0
    %3366 = vmatmul.mubr.bf16.gmra.mrb[0].mxu0 %v3257
    %v3367 = vpop.f32.mrb[0].mxu0
    %v3368 = vadd.f32 0.0, %v3367
    %v3369 = vpop.f32.mrb[0].mxu0
    %v3370 = vpop.f32.mrb[0].mxu0
    %v3371 = vadd.f32 0.0, %v3370
    %v3372 = vpop.f32.mrb[0].mxu0
    %3373 = vdwg.mxu0
    %s3374 = scalar_lea.vmem %s8, 128
    %v3375 = vld [vmem:[%s3374] sm:$0xff]
    %v3376 = vld [vmem:[%s3374 + $0x8] sm:$0xff]
    %v3377 = vld [vmem:[%s3374 + $0x10] sm:$0xff]
    %v3378 = vld [vmem:[%s3374 + $0x18] sm:$0xff]
    %v3379 = vld [vmem:[%s3374 + $0x20] sm:$0xff]
    %v3380 = vld [vmem:[%s3374 + $0x28] sm:$0xff]
    %v3381 = vld [vmem:[%s3374 + $0x30] sm:$0xff]
    %v3382 = vld [vmem:[%s3374 + $0x38] sm:$0xff]
    %v3383 = vld [vmem:[%s3374 + $0x40] sm:$0xff]
    %v3384 = vld [vmem:[%s3374 + $0x48] sm:$0xff]
    %v3385 = vld [vmem:[%s3374 + $0x50] sm:$0xff]
    %v3386 = vld [vmem:[%s3374 + $0x58] sm:$0xff]
    %v3387 = vld [vmem:[%s3374 + $0x60] sm:$0xff]
    %v3388 = vld [vmem:[%s3374 + $0x68] sm:$0xff]
    %v3389 = vld [vmem:[%s3374 + $0x70] sm:$0xff]
    %v3390 = vld [vmem:[%s3374 + $0x78] sm:$0xff]
    %v3407 = vunpack.c.l.b16 %v3375
    %v3408 = vunpack.c.h.b16 %v3375
    %v3409 = vunpack.c.l.b16 %v3376
    %v3410 = vunpack.c.h.b16 %v3376
    %v3411 = vunpack.c.l.b16 %v3377
    %v3412 = vunpack.c.h.b16 %v3377
    %v3413 = vunpack.c.l.b16 %v3378
    %v3414 = vunpack.c.h.b16 %v3378
    %v3415 = vunpack.c.l.b16 %v3379
    %v3416 = vunpack.c.h.b16 %v3379
    %v3417 = vunpack.c.l.b16 %v3380
    %v3418 = vunpack.c.h.b16 %v3380
    %v3419 = vunpack.c.l.b16 %v3381
    %v3420 = vunpack.c.h.b16 %v3381
    %v3421 = vunpack.c.l.b16 %v3382
    %v3422 = vunpack.c.h.b16 %v3382
    %v3423 = vunpack.c.l.b16 %v3383
    %v3424 = vunpack.c.h.b16 %v3383
    %v3425 = vunpack.c.l.b16 %v3384
    %v3426 = vunpack.c.h.b16 %v3384
    %v3427 = vunpack.c.l.b16 %v3385
    %v3428 = vunpack.c.h.b16 %v3385
    %v3429 = vunpack.c.l.b16 %v3386
    %v3430 = vunpack.c.h.b16 %v3386
    %v3431 = vunpack.c.l.b16 %v3387
    %v3432 = vunpack.c.h.b16 %v3387
    %v3433 = vunpack.c.l.b16 %v3388
    %v3434 = vunpack.c.h.b16 %v3388
    %v3435 = vunpack.c.l.b16 %v3389
    %v3436 = vunpack.c.h.b16 %v3389
    %v3437 = vunpack.c.l.b16 %v3390
    %v3438 = vunpack.c.h.b16 %v3390
    %v3439 = vpack.c.b16 %v3411, %v3407
    %v3440 = vpack.c.b16 %v3412, %v3408
    %v3441 = vpack.c.b16 %v3413, %v3409
    %v3442 = vpack.c.b16 %v3414, %v3410
    %v3443 = vpack.c.b16 %v3419, %v3415
    %v3444 = vpack.c.b16 %v3420, %v3416
    %v3445 = vpack.c.b16 %v3421, %v3417
    %v3446 = vpack.c.b16 %v3422, %v3418
    %v3447 = vpack.c.b16 %v3427, %v3423
    %v3448 = vpack.c.b16 %v3428, %v3424
    %v3449 = vpack.c.b16 %v3429, %v3425
    %v3450 = vpack.c.b16 %v3430, %v3426
    %v3451 = vpack.c.b16 %v3435, %v3431
    %v3452 = vpack.c.b16 %v3436, %v3432
    %v3453 = vpack.c.b16 %v3437, %v3433
    %v3454 = vpack.c.b16 %v3438, %v3434
    %3471 = vmatprep.subr.bf16.mxu0 %v3440
    %3472 = vmatpush1.bf16.msra.mxu0 %v3439
    %3473 = vmatprep.subr.bf16.mxu0 %v3444
    %3474 = vmatpush1.bf16.msra.mxu0 %v3443
    %3475 = vmatprep.subr.bf16.mxu0 %v3448
    %3476 = vmatpush1.bf16.msra.mxu0 %v3447
    %3477 = vmatprep.subr.bf16.mxu0 %v3452
    %3478 = vmatpush1.bf16.msra.mxu0 %v3451
    %3479 = vmatprep.subr.bf16.mxu0 0
    %3480 = vmatpush1.bf16.msra.mxu0 0
    %3481 = vmatprep.subr.bf16.mxu0 0
    %3482 = vmatpush1.bf16.msra.mxu0 0
    %3483 = vmatprep.subr.bf16.mxu0 0
    %3484 = vmatpush1.bf16.msra.mxu0 0
    %3485 = vmatprep.subr.bf16.mxu0 0
    %3486 = vmatpush1.bf16.msra.mxu0 0
    %3487 = vmatprep.subr.bf16.mxu0 0
    %3488 = vmatpush1.bf16.msra.mxu0 0
    %3489 = vmatprep.subr.bf16.mxu0 0
    %3490 = vmatpush1.bf16.msra.mxu0 0
    %3491 = vmatprep.subr.bf16.mxu0 0
    %3492 = vmatpush1.bf16.msra.mxu0 0
    %3493 = vmatprep.subr.bf16.mxu0 0
    %3494 = vmatpush1.bf16.msra.mxu0 0
    %3495 = vmatprep.subr.bf16.mxu0 0
    %3496 = vmatpush1.bf16.msra.mxu0 0
    %3497 = vmatprep.subr.bf16.mxu0 0
    %3498 = vmatpush1.bf16.msra.mxu0 0
    %3499 = vmatprep.subr.bf16.mxu0 0
    %3500 = vmatpush1.bf16.msra.mxu0 0
    %3501 = vmatprep.subr.bf16.mxu0 0
    %3502 = vmatpush1.bf16.msra.mxu0 0
    %3503 = vmatprep.mubr.bf16.mxu0 0
    %3504 = vmatmul.mubr.bf16.gmra.mrb[0].mxu0 %v3257
    %v3505 = vpop.f32.mrb[0].mxu0
    %v3506 = vadd.f32 0.0, %v3505
    %v3507 = vpop.f32.mrb[0].mxu0
    %v3508 = vadd.f32 0.0, %v3507
    %v3509 = vpop.f32.mrb[0].mxu0
    %v3510 = vadd.f32 0.0, %v3509
    %v3511 = vpop.f32.mrb[0].mxu0
    %v3512 = vadd.f32 0.0, %v3511
    %3513 = vdwg.mxu0
    %3514 = vmatprep.subr.bf16.mxu0 %v3442
    %3515 = vmatpush1.bf16.msra.mxu0 %v3441
    %3516 = vmatprep.subr.bf16.mxu0 %v3446
    %3517 = vmatpush1.bf16.msra.mxu0 %v3445
    %3518 = vmatprep.subr.bf16.mxu0 %v3450
    %3519 = vmatpush1.bf16.msra.mxu0 %v3449
    %3520 = vmatprep.subr.bf16.mxu0 %v3454
    %3521 = vmatpush1.bf16.msra.mxu0 %v3453
    %3522 = vmatprep.subr.bf16.mxu0 0
    %3523 = vmatpush1.bf16.msra.mxu0 0
    %3524 = vmatprep.subr.bf16.mxu0 0
    %3525 = vmatpush1.bf16.msra.mxu0 0
    %3526 = vmatprep.subr.bf16.mxu0 0
    %3527 = vmatpush1.bf16.msra.mxu0 0
    %3528 = vmatprep.subr.bf16.mxu0 0
    %3529 = vmatpush1.bf16.msra.mxu0 0
    %3530 = vmatprep.subr.bf16.mxu0 0
    %3531 = vmatpush1.bf16.msra.mxu0 0
    %3532 = vmatprep.subr.bf16.mxu0 0
    %3533 = vmatpush1.bf16.msra.mxu0 0
    %3534 = vmatprep.subr.bf16.mxu0 0
    %3535 = vmatpush1.bf16.msra.mxu0 0
    %3536 = vmatprep.subr.bf16.mxu0 0
    %3537 = vmatpush1.bf16.msra.mxu0 0
    %3538 = vmatprep.subr.bf16.mxu0 0
    %3539 = vmatpush1.bf16.msra.mxu0 0
    %3540 = vmatprep.subr.bf16.mxu0 0
    %3541 = vmatpush1.bf16.msra.mxu0 0
    %3542 = vmatprep.subr.bf16.mxu0 0
    %3543 = vmatpush1.bf16.msra.mxu0 0
    %3544 = vmatprep.subr.bf16.mxu0 0
    %3545 = vmatpush1.bf16.msra.mxu0 0
    %3546 = vmatprep.mubr.bf16.mxu0 0
    %3547 = vmatmul.mubr.bf16.gmra.mrb[0].mxu0 %v3257
    %v3548 = vpop.f32.mrb[0].mxu0
    %v3549 = vadd.f32 0.0, %v3548
    %v3550 = vpop.f32.mrb[0].mxu0
    %v3551 = vadd.f32 0.0, %v3550
    %v3552 = vpop.f32.mrb[0].mxu0
    %v3553 = vadd.f32 0.0, %v3552
    %v3554 = vpop.f32.mrb[0].mxu0
    %v3555 = vadd.f32 0.0, %v3554
    %3556 = vdwg.mxu0
    %s3557 = scalar_lea.vmem %s9, 32
    %v3558 = vld [vmem:[%s3557] sm:$0xf]
    %v3559 = vld [vmem:[%s3557 + $0x4] sm:$0xf]
    %v3560 = vld [vmem:[%s3557 + $0x8] sm:$0xf]
    %v3561 = vld [vmem:[%s3557 + $0xc] sm:$0xf]
    %v3562 = vld [vmem:[%s3557 + $0x10] sm:$0xf]
    %v3563 = vld [vmem:[%s3557 + $0x14] sm:$0xf]
    %v3564 = vld [vmem:[%s3557 + $0x18] sm:$0xf]
    %v3565 = vld [vmem:[%s3557 + $0x1c] sm:$0xf]
    %s3566 = scalar_lea.vmem [#allocation8], 4
    %v3567 = vld [vmem:[%s3566] sm:$0xf]
    %s3568 = scalar_lea.vmem [#allocation10], 1
    %v3569 = vld [vmem:[%s3568] sm:$0x1]
    %3570 = vmatprep.subr.mxu0 0.0
    %3571 = vmatpush1.msra.mxu0 %v3368
    %3572 = vmatprep.subr.mxu0 0.0
    %3573 = vmatpush1.msra.mxu0 %v3371
    %3574 = vmatprep.subr.mxu0 0.0
    %3575 = vmatpush1.msra.mxu0 0.0
    %3576 = vmatprep.subr.mxu0 0.0
    %3577 = vmatpush1.msra.mxu0 0.0
    %3578 = vmatprep.subr.mxu0 0.0
    %3579 = vmatpush1.msra.mxu0 0.0
    %3580 = vmatprep.subr.mxu0 0.0
    %3581 = vmatpush1.msra.mxu0 0.0
    %3582 = vmatprep.subr.mxu0 0.0
    %3583 = vmatpush1.msra.mxu0 0.0
    %3584 = vmatprep.subr.mxu0 0.0
    %3585 = vmatpush1.msra.mxu0 0.0
    %3586 = vmatprep.subr.mxu0 0.0
    %3587 = vmatpush1.msra.mxu0 0.0
    %3588 = vmatprep.subr.mxu0 0.0
    %3589 = vmatpush1.msra.mxu0 0.0
    %3590 = vmatprep.subr.mxu0 0.0
    %3591 = vmatpush1.msra.mxu0 0.0
    %3592 = vmatprep.subr.mxu0 0.0
    %3593 = vmatpush1.msra.mxu0 0.0
    %3594 = vmatprep.subr.mxu0 0.0
    %3595 = vmatpush1.msra.mxu0 0.0
    %3596 = vmatprep.subr.mxu0 0.0
    %3597 = vmatpush1.msra.mxu0 0.0
    %3598 = vmatprep.subr.mxu0 0.0
    %3599 = vmatpush1.msra.mxu0 0.0
    %3600 = vmatprep.subr.mxu0 0.0
    %3601 = vmatpush1.msra.mxu0 0.0
    %3602 = vmatprep.subr.mxu0 0.0
    %3603 = vmatpush1.msra.mxu0 0.0
    %3604 = vmatprep.subr.mxu0 0.0
    %3605 = vmatpush1.msra.mxu0 0.0
    %3606 = vmatprep.subr.mxu0 0.0
    %3607 = vmatpush1.msra.mxu0 0.0
    %3608 = vmatprep.subr.mxu0 0.0
    %3609 = vmatpush1.msra.mxu0 0.0
    %3610 = vmatprep.subr.mxu0 0.0
    %3611 = vmatpush1.msra.mxu0 0.0
    %3612 = vmatprep.subr.mxu0 0.0
    %3613 = vmatpush1.msra.mxu0 0.0
    %3614 = vmatprep.subr.mxu0 0.0
    %3615 = vmatpush1.msra.mxu0 0.0
    %3616 = vmatprep.subr.mxu0 0.0
    %3617 = vmatpush1.msra.mxu0 0.0
    %3618 = vmatprep.subr.mxu0 0.0
    %3619 = vmatpush1.msra.mxu0 0.0
    %3620 = vmatprep.subr.mxu0 0.0
    %3621 = vmatpush1.msra.mxu0 0.0
    %3622 = vmatprep.subr.mxu0 0.0
    %3623 = vmatpush1.msra.mxu0 0.0
    %3624 = vmatprep.subr.mxu0 0.0
    %3625 = vmatpush1.msra.mxu0 0.0
    %3626 = vmatprep.subr.mxu0 0.0
    %3627 = vmatpush1.msra.mxu0 0.0
    %3628 = vmatprep.subr.mxu0 0.0
    %3629 = vmatpush1.msra.mxu0 0.0
    %3630 = vmatprep.subr.mxu0 0.0
    %3631 = vmatpush1.msra.mxu0 0.0
    %3632 = vmatprep.subr.mxu0 0.0
    %3633 = vmatpush1.msra.mxu0 0.0
    %3634 = vmatprep.mubr.f32.mxu0 0.0
    %3635 = vmatmul.mubr.f32.gmra.mrb[0].mxu0 %v650
    %v3636 = vpop.f32.mrb[0].mxu0
    %v3637 = vadd.f32 0.0, %v3636
    %v3638 = vpop.f32.mrb[0].mxu0
    %3639 = vmatprep.mubr.f32.mxu0 0.0
    %3640 = vmatmul.mubr.f32.gmra.mrb[0].mxu0 %v653
    %v3641 = vpop.f32.mrb[0].mxu0
    %v3642 = vadd.f32 0.0, %v3641
    %v3643 = vpop.f32.mrb[0].mxu0
    %3644 = vdwg.mxu0
    %v3645 = vlaneseq
    %v3646 = vshrl.u32 %v3645, 7
    %v3647 = vsub.s32 0, %v3646
    %v3648 = vrot.slane %v3567, %v3647
    %v3649 = vmul.f32 %v3637, %v3648
    %v3650 = vmul.f32 %v3642, %v3648
    %v3651 = vadd.f32 %v3649, 0.0
    %v3652 = vadd.f32 %v3650, 0.0
    %3653 = vmatprep.subr.mxu0 0.0
    %3654 = vmatpush1.msra.mxu0 %v3368
    %3655 = vmatprep.subr.mxu0 0.0
    %3656 = vmatpush1.msra.mxu0 %v3371
    %3657 = vmatprep.subr.mxu0 0.0
    %3658 = vmatpush1.msra.mxu0 0.0
    %3659 = vmatprep.subr.mxu0 0.0
    %3660 = vmatpush1.msra.mxu0 0.0
    %3661 = vmatprep.subr.mxu0 0.0
    %3662 = vmatpush1.msra.mxu0 0.0
    %3663 = vmatprep.subr.mxu0 0.0
    %3664 = vmatpush1.msra.mxu0 0.0
    %3665 = vmatprep.subr.mxu0 0.0
    %3666 = vmatpush1.msra.mxu0 0.0
    %3667 = vmatprep.subr.mxu0 0.0
    %3668 = vmatpush1.msra.mxu0 0.0
    %3669 = vmatprep.subr.mxu0 0.0
    %3670 = vmatpush1.msra.mxu0 0.0
    %3671 = vmatprep.subr.mxu0 0.0
    %3672 = vmatpush1.msra.mxu0 0.0
    %3673 = vmatprep.subr.mxu0 0.0
    %3674 = vmatpush1.msra.mxu0 0.0
    %3675 = vmatprep.subr.mxu0 0.0
    %3676 = vmatpush1.msra.mxu0 0.0
    %3677 = vmatprep.subr.mxu0 0.0
    %3678 = vmatpush1.msra.mxu0 0.0
    %3679 = vmatprep.subr.mxu0 0.0
    %3680 = vmatpush1.msra.mxu0 0.0
    %3681 = vmatprep.subr.mxu0 0.0
    %3682 = vmatpush1.msra.mxu0 0.0
    %3683 = vmatprep.subr.mxu0 0.0
    %3684 = vmatpush1.msra.mxu0 0.0
    %3685 = vmatprep.subr.mxu0 0.0
    %3686 = vmatpush1.msra.mxu0 0.0
    %3687 = vmatprep.subr.mxu0 0.0
    %3688 = vmatpush1.msra.mxu0 0.0
    %3689 = vmatprep.subr.mxu0 0.0
    %3690 = vmatpush1.msra.mxu0 0.0
    %3691 = vmatprep.subr.mxu0 0.0
    %3692 = vmatpush1.msra.mxu0 0.0
    %3693 = vmatprep.subr.mxu0 0.0
    %3694 = vmatpush1.msra.mxu0 0.0
    %3695 = vmatprep.subr.mxu0 0.0
    %3696 = vmatpush1.msra.mxu0 0.0
    %3697 = vmatprep.subr.mxu0 0.0
    %3698 = vmatpush1.msra.mxu0 0.0
    %3699 = vmatprep.subr.mxu0 0.0
    %3700 = vmatpush1.msra.mxu0 0.0
    %3701 = vmatprep.subr.mxu0 0.0
    %3702 = vmatpush1.msra.mxu0 0.0
    %3703 = vmatprep.subr.mxu0 0.0
    %3704 = vmatpush1.msra.mxu0 0.0
    %3705 = vmatprep.subr.mxu0 0.0
    %3706 = vmatpush1.msra.mxu0 0.0
    %3707 = vmatprep.subr.mxu0 0.0
    %3708 = vmatpush1.msra.mxu0 0.0
    %3709 = vmatprep.subr.mxu0 0.0
    %3710 = vmatpush1.msra.mxu0 0.0
    %3711 = vmatprep.subr.mxu0 0.0
    %3712 = vmatpush1.msra.mxu0 0.0
    %3713 = vmatprep.subr.mxu0 0.0
    %3714 = vmatpush1.msra.mxu0 0.0
    %3715 = vmatprep.subr.mxu0 0.0
    %3716 = vmatpush1.msra.mxu0 0.0
    %3717 = vmatprep.mubr.f32.mxu0 0.0
    %3718 = vmatmul.mubr.f32.gmra.mrb[0].mxu0 %v739
    %v3719 = vpop.f32.mrb[0].mxu0
    %v3720 = vadd.f32 0.0, %v3719
    %v3721 = vpop.f32.mrb[0].mxu0
    %3722 = vmatprep.mubr.f32.mxu0 0.0
    %3723 = vmatmul.mubr.f32.gmra.mrb[0].mxu0 %v742
    %v3724 = vpop.f32.mrb[0].mxu0
    %v3725 = vadd.f32 0.0, %v3724
    %v3726 = vpop.f32.mrb[0].mxu0
    %3727 = vdwg.mxu0
    %v3728 = vlaneseq
    %v3729 = vshrl.u32 %v3728, 7
    %v3730 = vsub.s32 1, %v3729
    %v3731 = vrot.slane %v3567, %v3730
    %v3732 = vmul.f32 %v3720, %v3731
    %v3733 = vmul.f32 %v3725, %v3731
    %v3734 = vadd.f32 %v3651, %v3732
    %v3735 = vadd.f32 %v3652, %v3733
    %3736 = vmatprep.subr.mxu0 0.0
    %3737 = vmatpush1.msra.mxu0 %v3368
    %3738 = vmatprep.subr.mxu0 0.0
    %3739 = vmatpush1.msra.mxu0 %v3371
    %3740 = vmatprep.subr.mxu0 0.0
    %3741 = vmatpush1.msra.mxu0 0.0
    %3742 = vmatprep.subr.mxu0 0.0
    %3743 = vmatpush1.msra.mxu0 0.0
    %3744 = vmatprep.subr.mxu0 0.0
    %3745 = vmatpush1.msra.mxu0 0.0
    %3746 = vmatprep.subr.mxu0 0.0
    %3747 = vmatpush1.msra.mxu0 0.0
    %3748 = vmatprep.subr.mxu0 0.0
    %3749 = vmatpush1.msra.mxu0 0.0
    %3750 = vmatprep.subr.mxu0 0.0
    %3751 = vmatpush1.msra.mxu0 0.0
    %3752 = vmatprep.subr.mxu0 0.0
    %3753 = vmatpush1.msra.mxu0 0.0
    %3754 = vmatprep.subr.mxu0 0.0
    %3755 = vmatpush1.msra.mxu0 0.0
    %3756 = vmatprep.subr.mxu0 0.0
    %3757 = vmatpush1.msra.mxu0 0.0
    %3758 = vmatprep.subr.mxu0 0.0
    %3759 = vmatpush1.msra.mxu0 0.0
    %3760 = vmatprep.subr.mxu0 0.0
    %3761 = vmatpush1.msra.mxu0 0.0
    %3762 = vmatprep.subr.mxu0 0.0
    %3763 = vmatpush1.msra.mxu0 0.0
    %3764 = vmatprep.subr.mxu0 0.0
    %3765 = vmatpush1.msra.mxu0 0.0
    %3766 = vmatprep.subr.mxu0 0.0
    %3767 = vmatpush1.msra.mxu0 0.0
    %3768 = vmatprep.subr.mxu0 0.0
    %3769 = vmatpush1.msra.mxu0 0.0
    %3770 = vmatprep.subr.mxu0 0.0
    %3771 = vmatpush1.msra.mxu0 0.0
    %3772 = vmatprep.subr.mxu0 0.0
    %3773 = vmatpush1.msra.mxu0 0.0
    %3774 = vmatprep.subr.mxu0 0.0
    %3775 = vmatpush1.msra.mxu0 0.0
    %3776 = vmatprep.subr.mxu0 0.0
    %3777 = vmatpush1.msra.mxu0 0.0
    %3778 = vmatprep.subr.mxu0 0.0
    %3779 = vmatpush1.msra.mxu0 0.0
    %3780 = vmatprep.subr.mxu0 0.0
    %3781 = vmatpush1.msra.mxu0 0.0
    %3782 = vmatprep.subr.mxu0 0.0
    %3783 = vmatpush1.msra.mxu0 0.0
    %3784 = vmatprep.subr.mxu0 0.0
    %3785 = vmatpush1.msra.mxu0 0.0
    %3786 = vmatprep.subr.mxu0 0.0
    %3787 = vmatpush1.msra.mxu0 0.0
    %3788 = vmatprep.subr.mxu0 0.0
    %3789 = vmatpush1.msra.mxu0 0.0
    %3790 = vmatprep.subr.mxu0 0.0
    %3791 = vmatpush1.msra.mxu0 0.0
    %3792 = vmatprep.subr.mxu0 0.0
    %3793 = vmatpush1.msra.mxu0 0.0
    %3794 = vmatprep.subr.mxu0 0.0
    %3795 = vmatpush1.msra.mxu0 0.0
    %3796 = vmatprep.subr.mxu0 0.0
    %3797 = vmatpush1.msra.mxu0 0.0
    %3798 = vmatprep.subr.mxu0 0.0
    %3799 = vmatpush1.msra.mxu0 0.0
    %3800 = vmatprep.mubr.f32.mxu0 0.0
    %3801 = vmatmul.mubr.f32.gmra.mrb[0].mxu0 %v828
    %v3802 = vpop.f32.mrb[0].mxu0
    %v3803 = vadd.f32 0.0, %v3802
    %v3804 = vpop.f32.mrb[0].mxu0
    %3805 = vmatprep.mubr.f32.mxu0 0.0
    %3806 = vmatmul.mubr.f32.gmra.mrb[0].mxu0 %v831
    %v3807 = vpop.f32.mrb[0].mxu0
    %v3808 = vadd.f32 0.0, %v3807
    %v3809 = vpop.f32.mrb[0].mxu0
    %3810 = vdwg.mxu0
    %v3811 = vlaneseq
    %v3812 = vshrl.u32 %v3811, 7
    %v3813 = vsub.s32 2, %v3812
    %v3814 = vrot.slane %v3567, %v3813
    %v3815 = vmul.f32 %v3803, %v3814
    %v3816 = vmul.f32 %v3808, %v3814
    %v3817 = vadd.f32 %v3734, %v3815
    %v3818 = vadd.f32 %v3735, %v3816
    %3819 = vmatprep.subr.mxu0 0.0
    %3820 = vmatpush1.msra.mxu0 %v3368
    %3821 = vmatprep.subr.mxu0 0.0
    %3822 = vmatpush1.msra.mxu0 %v3371
    %3823 = vmatprep.subr.mxu0 0.0
    %3824 = vmatpush1.msra.mxu0 0.0
    %3825 = vmatprep.subr.mxu0 0.0
    %3826 = vmatpush1.msra.mxu0 0.0
    %3827 = vmatprep.subr.mxu0 0.0
    %3828 = vmatpush1.msra.mxu0 0.0
    %3829 = vmatprep.subr.mxu0 0.0
    %3830 = vmatpush1.msra.mxu0 0.0
    %3831 = vmatprep.subr.mxu0 0.0
    %3832 = vmatpush1.msra.mxu0 0.0
    %3833 = vmatprep.subr.mxu0 0.0
    %3834 = vmatpush1.msra.mxu0 0.0
    %3835 = vmatprep.subr.mxu0 0.0
    %3836 = vmatpush1.msra.mxu0 0.0
    %3837 = vmatprep.subr.mxu0 0.0
    %3838 = vmatpush1.msra.mxu0 0.0
    %3839 = vmatprep.subr.mxu0 0.0
    %3840 = vmatpush1.msra.mxu0 0.0
    %3841 = vmatprep.subr.mxu0 0.0
    %3842 = vmatpush1.msra.mxu0 0.0
    %3843 = vmatprep.subr.mxu0 0.0
    %3844 = vmatpush1.msra.mxu0 0.0
    %3845 = vmatprep.subr.mxu0 0.0
    %3846 = vmatpush1.msra.mxu0 0.0
    %3847 = vmatprep.subr.mxu0 0.0
    %3848 = vmatpush1.msra.mxu0 0.0
    %3849 = vmatprep.subr.mxu0 0.0
    %3850 = vmatpush1.msra.mxu0 0.0
    %3851 = vmatprep.subr.mxu0 0.0
    %3852 = vmatpush1.msra.mxu0 0.0
    %3853 = vmatprep.subr.mxu0 0.0
    %3854 = vmatpush1.msra.mxu0 0.0
    %3855 = vmatprep.subr.mxu0 0.0
    %3856 = vmatpush1.msra.mxu0 0.0
    %3857 = vmatprep.subr.mxu0 0.0
    %3858 = vmatpush1.msra.mxu0 0.0
    %3859 = vmatprep.subr.mxu0 0.0
    %3860 = vmatpush1.msra.mxu0 0.0
    %3861 = vmatprep.subr.mxu0 0.0
    %3862 = vmatpush1.msra.mxu0 0.0
    %3863 = vmatprep.subr.mxu0 0.0
    %3864 = vmatpush1.msra.mxu0 0.0
    %3865 = vmatprep.subr.mxu0 0.0
    %3866 = vmatpush1.msra.mxu0 0.0
    %3867 = vmatprep.subr.mxu0 0.0
    %3868 = vmatpush1.msra.mxu0 0.0
    %3869 = vmatprep.subr.mxu0 0.0
    %3870 = vmatpush1.msra.mxu0 0.0
    %3871 = vmatprep.subr.mxu0 0.0
    %3872 = vmatpush1.msra.mxu0 0.0
    %3873 = vmatprep.subr.mxu0 0.0
    %3874 = vmatpush1.msra.mxu0 0.0
    %3875 = vmatprep.subr.mxu0 0.0
    %3876 = vmatpush1.msra.mxu0 0.0
    %3877 = vmatprep.subr.mxu0 0.0
    %3878 = vmatpush1.msra.mxu0 0.0
    %3879 = vmatprep.subr.mxu0 0.0
    %3880 = vmatpush1.msra.mxu0 0.0
    %3881 = vmatprep.subr.mxu0 0.0
    %3882 = vmatpush1.msra.mxu0 0.0
    %3883 = vmatprep.mubr.f32.mxu0 0.0
    %3884 = vmatmul.mubr.f32.gmra.mrb[0].mxu0 %v917
    %v3885 = vpop.f32.mrb[0].mxu0
    %v3886 = vadd.f32 0.0, %v3885
    %v3887 = vpop.f32.mrb[0].mxu0
    %3888 = vmatprep.mubr.f32.mxu0 0.0
    %3889 = vmatmul.mubr.f32.gmra.mrb[0].mxu0 %v920
    %v3890 = vpop.f32.mrb[0].mxu0
    %v3891 = vadd.f32 0.0, %v3890
    %v3892 = vpop.f32.mrb[0].mxu0
    %3893 = vdwg.mxu0
    %v3894 = vlaneseq
    %v3895 = vshrl.u32 %v3894, 7
    %v3896 = vsub.s32 3, %v3895
    %v3897 = vrot.slane %v3567, %v3896
    %v3898 = vmul.f32 %v3886, %v3897
    %v3899 = vmul.f32 %v3891, %v3897
    %v3900 = vadd.f32 %v3817, %v3898
    %v3901 = vadd.f32 %v3818, %v3899
    %v3903 = vlaneseq
    %v3904 = vshrl.u32 %v3903, 7
    %v3905 = vsub.s32 0, %v3904
    %v3906 = vrot.slane %v3569, %v3905
    %v3908 = vadd.f32 %v3900, %v3906
    %v3909 = vadd.f32 %v3901, %v3906
    %v3910 = vxor.u32 %v3908, 2147483648
    %v3911 = vxor.u32 %v3909, 2147483648
    %v3912 = vmul.f32 %v3910, 1.442695
    %v3913 = vpow.pop %v3912
    %v3914 = vmul.f32 %v3911, 1.442695
    %v3915 = vpow.pop %v3914
    %v3916 = vadd.f32 %v3913, 1.0
    %v3917 = vadd.f32 %v3915, 1.0
    %v3918 = vrcp.pop %v3916
    %v3919 = vmul.f32 1.0, %v3918
    %v3920 = vrcp.pop %v3917
    %v3921 = vmul.f32 1.0, %v3920
    %v3922 = vmul.f32 %v3908, %v3919
    %v3923 = vmul.f32 %v3909, %v3921
    %s3924 = scalar_lea.vmem [#allocation11], 16
    %v3925 = vld [vmem:[%s3924] sm:$0xff]
    %v3926 = vld [vmem:[%s3924 + $0x8] sm:$0xff]
    %s3927 = scalar_lea.vmem [#allocation13], 4
    %v3928 = vld [vmem:[%s3927] sm:$0xf]
    %3929 = vmatprep.subr.mxu0 %v3508
    %3930 = vmatpush1.msra.mxu0 %v3506
    %3931 = vmatprep.subr.mxu0 %v3512
    %3932 = vmatpush1.msra.mxu0 %v3510
    %3933 = vmatprep.subr.mxu0 0.0
    %3934 = vmatpush1.msra.mxu0 0.0
    %3935 = vmatprep.subr.mxu0 0.0
    %3936 = vmatpush1.msra.mxu0 0.0
    %3937 = vmatprep.subr.mxu0 0.0
    %3938 = vmatpush1.msra.mxu0 0.0
    %3939 = vmatprep.subr.mxu0 0.0
    %3940 = vmatpush1.msra.mxu0 0.0
    %3941 = vmatprep.subr.mxu0 0.0
    %3942 = vmatpush1.msra.mxu0 0.0
    %3943 = vmatprep.subr.mxu0 0.0
    %3944 = vmatpush1.msra.mxu0 0.0
    %3945 = vmatprep.subr.mxu0 0.0
    %3946 = vmatpush1.msra.mxu0 0.0
    %3947 = vmatprep.subr.mxu0 0.0
    %3948 = vmatpush1.msra.mxu0 0.0
    %3949 = vmatprep.subr.mxu0 0.0
    %3950 = vmatpush1.msra.mxu0 0.0
    %3951 = vmatprep.subr.mxu0 0.0
    %3952 = vmatpush1.msra.mxu0 0.0
    %3953 = vmatprep.subr.mxu0 0.0
    %3954 = vmatpush1.msra.mxu0 0.0
    %3955 = vmatprep.subr.mxu0 0.0
    %3956 = vmatpush1.msra.mxu0 0.0
    %3957 = vmatprep.subr.mxu0 0.0
    %3958 = vmatpush1.msra.mxu0 0.0
    %3959 = vmatprep.subr.mxu0 0.0
    %3960 = vmatpush1.msra.mxu0 0.0
    %3961 = vmatprep.subr.mxu0 0.0
    %3962 = vmatpush1.msra.mxu0 0.0
    %3963 = vmatprep.subr.mxu0 0.0
    %3964 = vmatpush1.msra.mxu0 0.0
    %3965 = vmatprep.subr.mxu0 0.0
    %3966 = vmatpush1.msra.mxu0 0.0
    %3967 = vmatprep.subr.mxu0 0.0
    %3968 = vmatpush1.msra.mxu0 0.0
    %3969 = vmatprep.subr.mxu0 0.0
    %3970 = vmatpush1.msra.mxu0 0.0
    %3971 = vmatprep.subr.mxu0 0.0
    %3972 = vmatpush1.msra.mxu0 0.0
    %3973 = vmatprep.subr.mxu0 0.0
    %3974 = vmatpush1.msra.mxu0 0.0
    %3975 = vmatprep.subr.mxu0 0.0
    %3976 = vmatpush1.msra.mxu0 0.0
    %3977 = vmatprep.subr.mxu0 0.0
    %3978 = vmatpush1.msra.mxu0 0.0
    %3979 = vmatprep.subr.mxu0 0.0
    %3980 = vmatpush1.msra.mxu0 0.0
    %3981 = vmatprep.subr.mxu0 0.0
    %3982 = vmatpush1.msra.mxu0 0.0
    %3983 = vmatprep.subr.mxu0 0.0
    %3984 = vmatpush1.msra.mxu0 0.0
    %3985 = vmatprep.subr.mxu0 0.0
    %3986 = vmatpush1.msra.mxu0 0.0
    %3987 = vmatprep.subr.mxu0 0.0
    %3988 = vmatpush1.msra.mxu0 0.0
    %3989 = vmatprep.subr.mxu0 0.0
    %3990 = vmatpush1.msra.mxu0 0.0
    %3991 = vmatprep.subr.mxu0 0.0
    %3992 = vmatpush1.msra.mxu0 0.0
    %3993 = vmatprep.mubr.f32.mxu0 0.0
    %3994 = vmatmul.mubr.f32.gmra.mrb[0].mxu0 %v650
    %v3995 = vpop.f32.mrb[0].mxu0
    %v3996 = vadd.f32 0.0, %v3995
    %v3997 = vpop.f32.mrb[0].mxu0
    %v3998 = vadd.f32 0.0, %v3997
    %3999 = vmatprep.mubr.f32.mxu0 0.0
    %4000 = vmatmul.mubr.f32.gmra.mrb[0].mxu0 %v653
    %v4001 = vpop.f32.mrb[0].mxu0
    %v4002 = vadd.f32 0.0, %v4001
    %v4003 = vpop.f32.mrb[0].mxu0
    %v4004 = vadd.f32 0.0, %v4003
    %4005 = vdwg.mxu0
    %4006 = vmatprep.subr.mxu0 %v3551
    %4007 = vmatpush1.msra.mxu0 %v3549
    %4008 = vmatprep.subr.mxu0 %v3555
    %4009 = vmatpush1.msra.mxu0 %v3553
    %4010 = vmatprep.subr.mxu0 0.0
    %4011 = vmatpush1.msra.mxu0 0.0
    %4012 = vmatprep.subr.mxu0 0.0
    %4013 = vmatpush1.msra.mxu0 0.0
    %4014 = vmatprep.subr.mxu0 0.0
    %4015 = vmatpush1.msra.mxu0 0.0
    %4016 = vmatprep.subr.mxu0 0.0
    %4017 = vmatpush1.msra.mxu0 0.0
    %4018 = vmatprep.subr.mxu0 0.0
    %4019 = vmatpush1.msra.mxu0 0.0
    %4020 = vmatprep.subr.mxu0 0.0
    %4021 = vmatpush1.msra.mxu0 0.0
    %4022 = vmatprep.subr.mxu0 0.0
    %4023 = vmatpush1.msra.mxu0 0.0
    %4024 = vmatprep.subr.mxu0 0.0
    %4025 = vmatpush1.msra.mxu0 0.0
    %4026 = vmatprep.subr.mxu0 0.0
    %4027 = vmatpush1.msra.mxu0 0.0
    %4028 = vmatprep.subr.mxu0 0.0
    %4029 = vmatpush1.msra.mxu0 0.0
    %4030 = vmatprep.subr.mxu0 0.0
    %4031 = vmatpush1.msra.mxu0 0.0
    %4032 = vmatprep.subr.mxu0 0.0
    %4033 = vmatpush1.msra.mxu0 0.0
    %4034 = vmatprep.subr.mxu0 0.0
    %4035 = vmatpush1.msra.mxu0 0.0
    %4036 = vmatprep.subr.mxu0 0.0
    %4037 = vmatpush1.msra.mxu0 0.0
    %4038 = vmatprep.subr.mxu0 0.0
    %4039 = vmatpush1.msra.mxu0 0.0
    %4040 = vmatprep.subr.mxu0 0.0
    %4041 = vmatpush1.msra.mxu0 0.0
    %4042 = vmatprep.subr.mxu0 0.0
    %4043 = vmatpush1.msra.mxu0 0.0
    %4044 = vmatprep.subr.mxu0 0.0
    %4045 = vmatpush1.msra.mxu0 0.0
    %4046 = vmatprep.subr.mxu0 0.0
    %4047 = vmatpush1.msra.mxu0 0.0
    %4048 = vmatprep.subr.mxu0 0.0
    %4049 = vmatpush1.msra.mxu0 0.0
    %4050 = vmatprep.subr.mxu0 0.0
    %4051 = vmatpush1.msra.mxu0 0.0
    %4052 = vmatprep.subr.mxu0 0.0
    %4053 = vmatpush1.msra.mxu0 0.0
    %4054 = vmatprep.subr.mxu0 0.0
    %4055 = vmatpush1.msra.mxu0 0.0
    %4056 = vmatprep.subr.mxu0 0.0
    %4057 = vmatpush1.msra.mxu0 0.0
    %4058 = vmatprep.subr.mxu0 0.0
    %4059 = vmatpush1.msra.mxu0 0.0
    %4060 = vmatprep.subr.mxu0 0.0
    %4061 = vmatpush1.msra.mxu0 0.0
    %4062 = vmatprep.subr.mxu0 0.0
    %4063 = vmatpush1.msra.mxu0 0.0
    %4064 = vmatprep.subr.mxu0 0.0
    %4065 = vmatpush1.msra.mxu0 0.0
    %4066 = vmatprep.subr.mxu0 0.0
    %4067 = vmatpush1.msra.mxu0 0.0
    %4068 = vmatprep.subr.mxu0 0.0
    %4069 = vmatpush1.msra.mxu0 0.0
    %4070 = vmatprep.mubr.f32.mxu0 0.0
    %4071 = vmatmul.mubr.f32.gmra.mrb[0].mxu0 %v650
    %v4072 = vpop.f32.mrb[0].mxu0
    %v4073 = vadd.f32 0.0, %v4072
    %v4074 = vpop.f32.mrb[0].mxu0
    %v4075 = vadd.f32 0.0, %v4074
    %4076 = vmatprep.mubr.f32.mxu0 0.0
    %4077 = vmatmul.mubr.f32.gmra.mrb[0].mxu0 %v653
    %v4078 = vpop.f32.mrb[0].mxu0
    %v4079 = vadd.f32 0.0, %v4078
    %v4080 = vpop.f32.mrb[0].mxu0
    %v4081 = vadd.f32 0.0, %v4080
    %4082 = vdwg.mxu0
    %v4085 = vlaneseq
    %v4086 = vshrl.u32 %v4085, 7
    %v4087 = vsub.s32 0, %v4086
    %v4088 = vrot.slane %v3925, %v4087
    %v4089 = vlaneseq
    %v4090 = vshrl.u32 %v4089, 7
    %v4091 = vsub.s32 4, %v4090
    %v4092 = vrot.slane %v3925, %v4091
    %v4093 = vlaneseq
    %v4094 = vshrl.u32 %v4093, 7
    %v4095 = vsub.s32 0, %v4094
    %v4096 = vrot.slane %v3926, %v4095
    %v4097 = vlaneseq
    %v4098 = vshrl.u32 %v4097, 7
    %v4099 = vsub.s32 4, %v4098
    %v4100 = vrot.slane %v3926, %v4099
    %v4105 = vlaneseq
    %v4106 = vshrl.u32 %v4105, 7
    %v4107 = vsub.s32 0, %v4106
    %v4108 = vrot.slane %v4088, %v4107
    %v4109 = vlaneseq
    %v4110 = vshrl.u32 %v4109, 7
    %v4111 = vsub.s32 0, %v4110
    %v4112 = vrot.slane %v4092, %v4111
    %v4113 = vlaneseq
    %v4114 = vshrl.u32 %v4113, 7
    %v4115 = vsub.s32 0, %v4114
    %v4116 = vrot.slane %v4096, %v4115
    %v4117 = vlaneseq
    %v4118 = vshrl.u32 %v4117, 7
    %v4119 = vsub.s32 0, %v4118
    %v4120 = vrot.slane %v4100, %v4119
    %v4121 = vmul.f32 %v3996, %v4108
    %v4122 = vmul.f32 %v3998, %v4112
    %v4123 = vmul.f32 %v4073, %v4116
    %v4124 = vmul.f32 %v4075, %v4120
    %v4125 = vmul.f32 %v4002, %v4108
    %v4126 = vmul.f32 %v4004, %v4112
    %v4127 = vmul.f32 %v4079, %v4116
    %v4128 = vmul.f32 %v4081, %v4120
    %v4129 = vadd.f32 %v4121, 0.0
    %v4130 = vadd.f32 %v4122, 0.0
    %v4131 = vadd.f32 %v4123, 0.0
    %v4132 = vadd.f32 %v4124, 0.0
    %v4133 = vadd.f32 %v4125, 0.0
    %v4134 = vadd.f32 %v4126, 0.0
    %v4135 = vadd.f32 %v4127, 0.0
    %v4136 = vadd.f32 %v4128, 0.0
    %4137 = vmatprep.subr.mxu0 %v3508
    %4138 = vmatpush1.msra.mxu0 %v3506
    %4139 = vmatprep.subr.mxu0 %v3512
    %4140 = vmatpush1.msra.mxu0 %v3510
    %4141 = vmatprep.subr.mxu0 0.0
    %4142 = vmatpush1.msra.mxu0 0.0
    %4143 = vmatprep.subr.mxu0 0.0
    %4144 = vmatpush1.msra.mxu0 0.0
    %4145 = vmatprep.subr.mxu0 0.0
    %4146 = vmatpush1.msra.mxu0 0.0
    %4147 = vmatprep.subr.mxu0 0.0
    %4148 = vmatpush1.msra.mxu0 0.0
    %4149 = vmatprep.subr.mxu0 0.0
    %4150 = vmatpush1.msra.mxu0 0.0
    %4151 = vmatprep.subr.mxu0 0.0
    %4152 = vmatpush1.msra.mxu0 0.0
    %4153 = vmatprep.subr.mxu0 0.0
    %4154 = vmatpush1.msra.mxu0 0.0
    %4155 = vmatprep.subr.mxu0 0.0
    %4156 = vmatpush1.msra.mxu0 0.0
    %4157 = vmatprep.subr.mxu0 0.0
    %4158 = vmatpush1.msra.mxu0 0.0
    %4159 = vmatprep.subr.mxu0 0.0
    %4160 = vmatpush1.msra.mxu0 0.0
    %4161 = vmatprep.subr.mxu0 0.0
    %4162 = vmatpush1.msra.mxu0 0.0
    %4163 = vmatprep.subr.mxu0 0.0
    %4164 = vmatpush1.msra.mxu0 0.0
    %4165 = vmatprep.subr.mxu0 0.0
    %4166 = vmatpush1.msra.mxu0 0.0
    %4167 = vmatprep.subr.mxu0 0.0
    %4168 = vmatpush1.msra.mxu0 0.0
    %4169 = vmatprep.subr.mxu0 0.0
    %4170 = vmatpush1.msra.mxu0 0.0
    %4171 = vmatprep.subr.mxu0 0.0
    %4172 = vmatpush1.msra.mxu0 0.0
    %4173 = vmatprep.subr.mxu0 0.0
    %4174 = vmatpush1.msra.mxu0 0.0
    %4175 = vmatprep.subr.mxu0 0.0
    %4176 = vmatpush1.msra.mxu0 0.0
    %4177 = vmatprep.subr.mxu0 0.0
    %4178 = vmatpush1.msra.mxu0 0.0
    %4179 = vmatprep.subr.mxu0 0.0
    %4180 = vmatpush1.msra.mxu0 0.0
    %4181 = vmatprep.subr.mxu0 0.0
    %4182 = vmatpush1.msra.mxu0 0.0
    %4183 = vmatprep.subr.mxu0 0.0
    %4184 = vmatpush1.msra.mxu0 0.0
    %4185 = vmatprep.subr.mxu0 0.0
    %4186 = vmatpush1.msra.mxu0 0.0
    %4187 = vmatprep.subr.mxu0 0.0
    %4188 = vmatpush1.msra.mxu0 0.0
    %4189 = vmatprep.subr.mxu0 0.0
    %4190 = vmatpush1.msra.mxu0 0.0
    %4191 = vmatprep.subr.mxu0 0.0
    %4192 = vmatpush1.msra.mxu0 0.0
    %4193 = vmatprep.subr.mxu0 0.0
    %4194 = vmatpush1.msra.mxu0 0.0
    %4195 = vmatprep.subr.mxu0 0.0
    %4196 = vmatpush1.msra.mxu0 0.0
    %4197 = vmatprep.subr.mxu0 0.0
    %4198 = vmatpush1.msra.mxu0 0.0
    %4199 = vmatprep.subr.mxu0 0.0
    %4200 = vmatpush1.msra.mxu0 0.0
    %4201 = vmatprep.mubr.f32.mxu0 0.0
    %4202 = vmatmul.mubr.f32.gmra.mrb[0].mxu0 %v739
    %v4203 = vpop.f32.mrb[0].mxu0
    %v4204 = vadd.f32 0.0, %v4203
    %v4205 = vpop.f32.mrb[0].mxu0
    %v4206 = vadd.f32 0.0, %v4205
    %4207 = vmatprep.mubr.f32.mxu0 0.0
    %4208 = vmatmul.mubr.f32.gmra.mrb[0].mxu0 %v742
    %v4209 = vpop.f32.mrb[0].mxu0
    %v4210 = vadd.f32 0.0, %v4209
    %v4211 = vpop.f32.mrb[0].mxu0
    %v4212 = vadd.f32 0.0, %v4211
    %4213 = vdwg.mxu0
    %4214 = vmatprep.subr.mxu0 %v3551
    %4215 = vmatpush1.msra.mxu0 %v3549
    %4216 = vmatprep.subr.mxu0 %v3555
    %4217 = vmatpush1.msra.mxu0 %v3553
    %4218 = vmatprep.subr.mxu0 0.0
    %4219 = vmatpush1.msra.mxu0 0.0
    %4220 = vmatprep.subr.mxu0 0.0
    %4221 = vmatpush1.msra.mxu0 0.0
    %4222 = vmatprep.subr.mxu0 0.0
    %4223 = vmatpush1.msra.mxu0 0.0
    %4224 = vmatprep.subr.mxu0 0.0
    %4225 = vmatpush1.msra.mxu0 0.0
    %4226 = vmatprep.subr.mxu0 0.0
    %4227 = vmatpush1.msra.mxu0 0.0
    %4228 = vmatprep.subr.mxu0 0.0
    %4229 = vmatpush1.msra.mxu0 0.0
    %4230 = vmatprep.subr.mxu0 0.0
    %4231 = vmatpush1.msra.mxu0 0.0
    %4232 = vmatprep.subr.mxu0 0.0
    %4233 = vmatpush1.msra.mxu0 0.0
    %4234 = vmatprep.subr.mxu0 0.0
    %4235 = vmatpush1.msra.mxu0 0.0
    %4236 = vmatprep.subr.mxu0 0.0
    %4237 = vmatpush1.msra.mxu0 0.0
    %4238 = vmatprep.subr.mxu0 0.0
    %4239 = vmatpush1.msra.mxu0 0.0
    %4240 = vmatprep.subr.mxu0 0.0
    %4241 = vmatpush1.msra.mxu0 0.0
    %4242 = vmatprep.subr.mxu0 0.0
    %4243 = vmatpush1.msra.mxu0 0.0
    %4244 = vmatprep.subr.mxu0 0.0
    %4245 = vmatpush1.msra.mxu0 0.0
    %4246 = vmatprep.subr.mxu0 0.0
    %4247 = vmatpush1.msra.mxu0 0.0
    %4248 = vmatprep.subr.mxu0 0.0
    %4249 = vmatpush1.msra.mxu0 0.0
    %4250 = vmatprep.subr.mxu0 0.0
    %4251 = vmatpush1.msra.mxu0 0.0
    %4252 = vmatprep.subr.mxu0 0.0
    %4253 = vmatpush1.msra.mxu0 0.0
    %4254 = vmatprep.subr.mxu0 0.0
    %4255 = vmatpush1.msra.mxu0 0.0
    %4256 = vmatprep.subr.mxu0 0.0
    %4257 = vmatpush1.msra.mxu0 0.0
    %4258 = vmatprep.subr.mxu0 0.0
    %4259 = vmatpush1.msra.mxu0 0.0
    %4260 = vmatprep.subr.mxu0 0.0
    %4261 = vmatpush1.msra.mxu0 0.0
    %4262 = vmatprep.subr.mxu0 0.0
    %4263 = vmatpush1.msra.mxu0 0.0
    %4264 = vmatprep.subr.mxu0 0.0
    %4265 = vmatpush1.msra.mxu0 0.0
    %4266 = vmatprep.subr.mxu0 0.0
    %4267 = vmatpush1.msra.mxu0 0.0
    %4268 = vmatprep.subr.mxu0 0.0
    %4269 = vmatpush1.msra.mxu0 0.0
    %4270 = vmatprep.subr.mxu0 0.0
    %4271 = vmatpush1.msra.mxu0 0.0
    %4272 = vmatprep.subr.mxu0 0.0
    %4273 = vmatpush1.msra.mxu0 0.0
    %4274 = vmatprep.subr.mxu0 0.0
    %4275 = vmatpush1.msra.mxu0 0.0
    %4276 = vmatprep.subr.mxu0 0.0
    %4277 = vmatpush1.msra.mxu0 0.0
    %4278 = vmatprep.mubr.f32.mxu0 0.0
    %4279 = vmatmul.mubr.f32.gmra.mrb[0].mxu0 %v739
    %v4280 = vpop.f32.mrb[0].mxu0
    %v4281 = vadd.f32 0.0, %v4280
    %v4282 = vpop.f32.mrb[0].mxu0
    %v4283 = vadd.f32 0.0, %v4282
    %4284 = vmatprep.mubr.f32.mxu0 0.0
    %4285 = vmatmul.mubr.f32.gmra.mrb[0].mxu0 %v742
    %v4286 = vpop.f32.mrb[0].mxu0
    %v4287 = vadd.f32 0.0, %v4286
    %v4288 = vpop.f32.mrb[0].mxu0
    %v4289 = vadd.f32 0.0, %v4288
    %4290 = vdwg.mxu0
    %v4291 = vlaneseq
    %v4292 = vshrl.u32 %v4291, 7
    %v4293 = vsub.s32 1, %v4292
    %v4294 = vrot.slane %v3925, %v4293
    %v4295 = vlaneseq
    %v4296 = vshrl.u32 %v4295, 7
    %v4297 = vsub.s32 5, %v4296
    %v4298 = vrot.slane %v3925, %v4297
    %v4299 = vlaneseq
    %v4300 = vshrl.u32 %v4299, 7
    %v4301 = vsub.s32 1, %v4300
    %v4302 = vrot.slane %v3926, %v4301
    %v4303 = vlaneseq
    %v4304 = vshrl.u32 %v4303, 7
    %v4305 = vsub.s32 5, %v4304
    %v4306 = vrot.slane %v3926, %v4305
    %v4311 = vlaneseq
    %v4312 = vshrl.u32 %v4311, 7
    %v4313 = vsub.s32 1, %v4312
    %v4314 = vrot.slane %v4294, %v4313
    %v4315 = vlaneseq
    %v4316 = vshrl.u32 %v4315, 7
    %v4317 = vsub.s32 1, %v4316
    %v4318 = vrot.slane %v4298, %v4317
    %v4319 = vlaneseq
    %v4320 = vshrl.u32 %v4319, 7
    %v4321 = vsub.s32 1, %v4320
    %v4322 = vrot.slane %v4302, %v4321
    %v4323 = vlaneseq
    %v4324 = vshrl.u32 %v4323, 7
    %v4325 = vsub.s32 1, %v4324
    %v4326 = vrot.slane %v4306, %v4325
    %v4327 = vmul.f32 %v4204, %v4314
    %v4328 = vmul.f32 %v4206, %v4318
    %v4329 = vmul.f32 %v4281, %v4322
    %v4330 = vmul.f32 %v4283, %v4326
    %v4331 = vmul.f32 %v4210, %v4314
    %v4332 = vmul.f32 %v4212, %v4318
    %v4333 = vmul.f32 %v4287, %v4322
    %v4334 = vmul.f32 %v4289, %v4326
    %v4335 = vadd.f32 %v4129, %v4327
    %v4336 = vadd.f32 %v4130, %v4328
    %v4337 = vadd.f32 %v4131, %v4329
    %v4338 = vadd.f32 %v4132, %v4330
    %v4339 = vadd.f32 %v4133, %v4331
    %v4340 = vadd.f32 %v4134, %v4332
    %v4341 = vadd.f32 %v4135, %v4333
    %v4342 = vadd.f32 %v4136, %v4334
    %4343 = vmatprep.subr.mxu0 %v3508
    %4344 = vmatpush1.msra.mxu0 %v3506
    %4345 = vmatprep.subr.mxu0 %v3512
    %4346 = vmatpush1.msra.mxu0 %v3510
    %4347 = vmatprep.subr.mxu0 0.0
    %4348 = vmatpush1.msra.mxu0 0.0
    %4349 = vmatprep.subr.mxu0 0.0
    %4350 = vmatpush1.msra.mxu0 0.0
    %4351 = vmatprep.subr.mxu0 0.0
    %4352 = vmatpush1.msra.mxu0 0.0
    %4353 = vmatprep.subr.mxu0 0.0
    %4354 = vmatpush1.msra.mxu0 0.0
    %4355 = vmatprep.subr.mxu0 0.0
    %4356 = vmatpush1.msra.mxu0 0.0
    %4357 = vmatprep.subr.mxu0 0.0
    %4358 = vmatpush1.msra.mxu0 0.0
    %4359 = vmatprep.subr.mxu0 0.0
    %4360 = vmatpush1.msra.mxu0 0.0
    %4361 = vmatprep.subr.mxu0 0.0
    %4362 = vmatpush1.msra.mxu0 0.0
    %4363 = vmatprep.subr.mxu0 0.0
    %4364 = vmatpush1.msra.mxu0 0.0
    %4365 = vmatprep.subr.mxu0 0.0
    %4366 = vmatpush1.msra.mxu0 0.0
    %4367 = vmatprep.subr.mxu0 0.0
    %4368 = vmatpush1.msra.mxu0 0.0
    %4369 = vmatprep.subr.mxu0 0.0
    %4370 = vmatpush1.msra.mxu0 0.0
    %4371 = vmatprep.subr.mxu0 0.0
    %4372 = vmatpush1.msra.mxu0 0.0
    %4373 = vmatprep.subr.mxu0 0.0
    %4374 = vmatpush1.msra.mxu0 0.0
    %4375 = vmatprep.subr.mxu0 0.0
    %4376 = vmatpush1.msra.mxu0 0.0
    %4377 = vmatprep.subr.mxu0 0.0
    %4378 = vmatpush1.msra.mxu0 0.0
    %4379 = vmatprep.subr.mxu0 0.0
    %4380 = vmatpush1.msra.mxu0 0.0
    %4381 = vmatprep.subr.mxu0 0.0
    %4382 = vmatpush1.msra.mxu0 0.0
    %4383 = vmatprep.subr.mxu0 0.0
    %4384 = vmatpush1.msra.mxu0 0.0
    %4385 = vmatprep.subr.mxu0 0.0
    %4386 = vmatpush1.msra.mxu0 0.0
    %4387 = vmatprep.subr.mxu0 0.0
    %4388 = vmatpush1.msra.mxu0 0.0
    %4389 = vmatprep.subr.mxu0 0.0
    %4390 = vmatpush1.msra.mxu0 0.0
    %4391 = vmatprep.subr.mxu0 0.0
    %4392 = vmatpush1.msra.mxu0 0.0
    %4393 = vmatprep.subr.mxu0 0.0
    %4394 = vmatpush1.msra.mxu0 0.0
    %4395 = vmatprep.subr.mxu0 0.0
    %4396 = vmatpush1.msra.mxu0 0.0
    %4397 = vmatprep.subr.mxu0 0.0
    %4398 = vmatpush1.msra.mxu0 0.0
    %4399 = vmatprep.subr.mxu0 0.0
    %4400 = vmatpush1.msra.mxu0 0.0
    %4401 = vmatprep.subr.mxu0 0.0
    %4402 = vmatpush1.msra.mxu0 0.0
    %4403 = vmatprep.subr.mxu0 0.0
    %4404 = vmatpush1.msra.mxu0 0.0
    %4405 = vmatprep.subr.mxu0 0.0
    %4406 = vmatpush1.msra.mxu0 0.0
    %4407 = vmatprep.mubr.f32.mxu0 0.0
    %4408 = vmatmul.mubr.f32.gmra.mrb[0].mxu0 %v828
    %v4409 = vpop.f32.mrb[0].mxu0
    %v4410 = vadd.f32 0.0, %v4409
    %v4411 = vpop.f32.mrb[0].mxu0
    %v4412 = vadd.f32 0.0, %v4411
    %4413 = vmatprep.mubr.f32.mxu0 0.0
    %4414 = vmatmul.mubr.f32.gmra.mrb[0].mxu0 %v831
    %v4415 = vpop.f32.mrb[0].mxu0
    %v4416 = vadd.f32 0.0, %v4415
    %v4417 = vpop.f32.mrb[0].mxu0
    %v4418 = vadd.f32 0.0, %v4417
    %4419 = vdwg.mxu0
    %4420 = vmatprep.subr.mxu0 %v3551
    %4421 = vmatpush1.msra.mxu0 %v3549
    %4422 = vmatprep.subr.mxu0 %v3555
    %4423 = vmatpush1.msra.mxu0 %v3553
    %4424 = vmatprep.subr.mxu0 0.0
    %4425 = vmatpush1.msra.mxu0 0.0
    %4426 = vmatprep.subr.mxu0 0.0
    %4427 = vmatpush1.msra.mxu0 0.0
    %4428 = vmatprep.subr.mxu0 0.0
    %4429 = vmatpush1.msra.mxu0 0.0
    %4430 = vmatprep.subr.mxu0 0.0
    %4431 = vmatpush1.msra.mxu0 0.0
    %4432 = vmatprep.subr.mxu0 0.0
    %4433 = vmatpush1.msra.mxu0 0.0
    %4434 = vmatprep.subr.mxu0 0.0
    %4435 = vmatpush1.msra.mxu0 0.0
    %4436 = vmatprep.subr.mxu0 0.0
    %4437 = vmatpush1.msra.mxu0 0.0
    %4438 = vmatprep.subr.mxu0 0.0
    %4439 = vmatpush1.msra.mxu0 0.0
    %4440 = vmatprep.subr.mxu0 0.0
    %4441 = vmatpush1.msra.mxu0 0.0
    %4442 = vmatprep.subr.mxu0 0.0
    %4443 = vmatpush1.msra.mxu0 0.0
    %4444 = vmatprep.subr.mxu0 0.0
    %4445 = vmatpush1.msra.mxu0 0.0
    %4446 = vmatprep.subr.mxu0 0.0
    %4447 = vmatpush1.msra.mxu0 0.0
    %4448 = vmatprep.subr.mxu0 0.0
    %4449 = vmatpush1.msra.mxu0 0.0
    %4450 = vmatprep.subr.mxu0 0.0
    %4451 = vmatpush1.msra.mxu0 0.0
    %4452 = vmatprep.subr.mxu0 0.0
    %4453 = vmatpush1.msra.mxu0 0.0
    %4454 = vmatprep.subr.mxu0 0.0
    %4455 = vmatpush1.msra.mxu0 0.0
    %4456 = vmatprep.subr.mxu0 0.0
    %4457 = vmatpush1.msra.mxu0 0.0
    %4458 = vmatprep.subr.mxu0 0.0
    %4459 = vmatpush1.msra.mxu0 0.0
    %4460 = vmatprep.subr.mxu0 0.0
    %4461 = vmatpush1.msra.mxu0 0.0
    %4462 = vmatprep.subr.mxu0 0.0
    %4463 = vmatpush1.msra.mxu0 0.0
    %4464 = vmatprep.subr.mxu0 0.0
    %4465 = vmatpush1.msra.mxu0 0.0
    %4466 = vmatprep.subr.mxu0 0.0
    %4467 = vmatpush1.msra.mxu0 0.0
    %4468 = vmatprep.subr.mxu0 0.0
    %4469 = vmatpush1.msra.mxu0 0.0
    %4470 = vmatprep.subr.mxu0 0.0
    %4471 = vmatpush1.msra.mxu0 0.0
    %4472 = vmatprep.subr.mxu0 0.0
    %4473 = vmatpush1.msra.mxu0 0.0
    %4474 = vmatprep.subr.mxu0 0.0
    %4475 = vmatpush1.msra.mxu0 0.0
    %4476 = vmatprep.subr.mxu0 0.0
    %4477 = vmatpush1.msra.mxu0 0.0
    %4478 = vmatprep.subr.mxu0 0.0
    %4479 = vmatpush1.msra.mxu0 0.0
    %4480 = vmatprep.subr.mxu0 0.0
    %4481 = vmatpush1.msra.mxu0 0.0
    %4482 = vmatprep.subr.mxu0 0.0
    %4483 = vmatpush1.msra.mxu0 0.0
    %4484 = vmatprep.mubr.f32.mxu0 0.0
    %4485 = vmatmul.mubr.f32.gmra.mrb[0].mxu0 %v828
    %v4486 = vpop.f32.mrb[0].mxu0
    %v4487 = vadd.f32 0.0, %v4486
    %v4488 = vpop.f32.mrb[0].mxu0
    %v4489 = vadd.f32 0.0, %v4488
    %4490 = vmatprep.mubr.f32.mxu0 0.0
    %4491 = vmatmul.mubr.f32.gmra.mrb[0].mxu0 %v831
    %v4492 = vpop.f32.mrb[0].mxu0
    %v4493 = vadd.f32 0.0, %v4492
    %v4494 = vpop.f32.mrb[0].mxu0
    %v4495 = vadd.f32 0.0, %v4494
    %4496 = vdwg.mxu0
    %v4497 = vlaneseq
    %v4498 = vshrl.u32 %v4497, 7
    %v4499 = vsub.s32 2, %v4498
    %v4500 = vrot.slane %v3925, %v4499
    %v4501 = vlaneseq
    %v4502 = vshrl.u32 %v4501, 7
    %v4503 = vsub.s32 6, %v4502
    %v4504 = vrot.slane %v3925, %v4503
    %v4505 = vlaneseq
    %v4506 = vshrl.u32 %v4505, 7
    %v4507 = vsub.s32 2, %v4506
    %v4508 = vrot.slane %v3926, %v4507
    %v4509 = vlaneseq
    %v4510 = vshrl.u32 %v4509, 7
    %v4511 = vsub.s32 6, %v4510
    %v4512 = vrot.slane %v3926, %v4511
    %v4517 = vlaneseq
    %v4518 = vshrl.u32 %v4517, 7
    %v4519 = vsub.s32 2, %v4518
    %v4520 = vrot.slane %v4500, %v4519
    %v4521 = vlaneseq
    %v4522 = vshrl.u32 %v4521, 7
    %v4523 = vsub.s32 2, %v4522
    %v4524 = vrot.slane %v4504, %v4523
    %v4525 = vlaneseq
    %v4526 = vshrl.u32 %v4525, 7
    %v4527 = vsub.s32 2, %v4526
    %v4528 = vrot.slane %v4508, %v4527
    %v4529 = vlaneseq
    %v4530 = vshrl.u32 %v4529, 7
    %v4531 = vsub.s32 2, %v4530
    %v4532 = vrot.slane %v4512, %v4531
    %v4533 = vmul.f32 %v4410, %v4520
    %v4534 = vmul.f32 %v4412, %v4524
    %v4535 = vmul.f32 %v4487, %v4528
    %v4536 = vmul.f32 %v4489, %v4532
    %v4537 = vmul.f32 %v4416, %v4520
    %v4538 = vmul.f32 %v4418, %v4524
    %v4539 = vmul.f32 %v4493, %v4528
    %v4540 = vmul.f32 %v4495, %v4532
    %v4541 = vadd.f32 %v4335, %v4533
    %v4542 = vadd.f32 %v4336, %v4534
    %v4543 = vadd.f32 %v4337, %v4535
    %v4544 = vadd.f32 %v4338, %v4536
    %v4545 = vadd.f32 %v4339, %v4537
    %v4546 = vadd.f32 %v4340, %v4538
    %v4547 = vadd.f32 %v4341, %v4539
    %v4548 = vadd.f32 %v4342, %v4540
    %4549 = vmatprep.subr.mxu0 %v3508
    %4550 = vmatpush1.msra.mxu0 %v3506
    %4551 = vmatprep.subr.mxu0 %v3512
    %4552 = vmatpush1.msra.mxu0 %v3510
    %4553 = vmatprep.subr.mxu0 0.0
    %4554 = vmatpush1.msra.mxu0 0.0
    %4555 = vmatprep.subr.mxu0 0.0
    %4556 = vmatpush1.msra.mxu0 0.0
    %4557 = vmatprep.subr.mxu0 0.0
    %4558 = vmatpush1.msra.mxu0 0.0
    %4559 = vmatprep.subr.mxu0 0.0
    %4560 = vmatpush1.msra.mxu0 0.0
    %4561 = vmatprep.subr.mxu0 0.0
    %4562 = vmatpush1.msra.mxu0 0.0
    %4563 = vmatprep.subr.mxu0 0.0
    %4564 = vmatpush1.msra.mxu0 0.0
    %4565 = vmatprep.subr.mxu0 0.0
    %4566 = vmatpush1.msra.mxu0 0.0
    %4567 = vmatprep.subr.mxu0 0.0
    %4568 = vmatpush1.msra.mxu0 0.0
    %4569 = vmatprep.subr.mxu0 0.0
    %4570 = vmatpush1.msra.mxu0 0.0
    %4571 = vmatprep.subr.mxu0 0.0
    %4572 = vmatpush1.msra.mxu0 0.0
    %4573 = vmatprep.subr.mxu0 0.0
    %4574 = vmatpush1.msra.mxu0 0.0
    %4575 = vmatprep.subr.mxu0 0.0
    %4576 = vmatpush1.msra.mxu0 0.0
    %4577 = vmatprep.subr.mxu0 0.0
    %4578 = vmatpush1.msra.mxu0 0.0
    %4579 = vmatprep.subr.mxu0 0.0
    %4580 = vmatpush1.msra.mxu0 0.0
    %4581 = vmatprep.subr.mxu0 0.0
    %4582 = vmatpush1.msra.mxu0 0.0
    %4583 = vmatprep.subr.mxu0 0.0
    %4584 = vmatpush1.msra.mxu0 0.0
    %4585 = vmatprep.subr.mxu0 0.0
    %4586 = vmatpush1.msra.mxu0 0.0
    %4587 = vmatprep.subr.mxu0 0.0
    %4588 = vmatpush1.msra.mxu0 0.0
    %4589 = vmatprep.subr.mxu0 0.0
    %4590 = vmatpush1.msra.mxu0 0.0
    %4591 = vmatprep.subr.mxu0 0.0
    %4592 = vmatpush1.msra.mxu0 0.0
    %4593 = vmatprep.subr.mxu0 0.0
    %4594 = vmatpush1.msra.mxu0 0.0
    %4595 = vmatprep.subr.mxu0 0.0
    %4596 = vmatpush1.msra.mxu0 0.0
    %4597 = vmatprep.subr.mxu0 0.0
    %4598 = vmatpush1.msra.mxu0 0.0
    %4599 = vmatprep.subr.mxu0 0.0
    %4600 = vmatpush1.msra.mxu0 0.0
    %4601 = vmatprep.subr.mxu0 0.0
    %4602 = vmatpush1.msra.mxu0 0.0
    %4603 = vmatprep.subr.mxu0 0.0
    %4604 = vmatpush1.msra.mxu0 0.0
    %4605 = vmatprep.subr.mxu0 0.0
    %4606 = vmatpush1.msra.mxu0 0.0
    %4607 = vmatprep.subr.mxu0 0.0
    %4608 = vmatpush1.msra.mxu0 0.0
    %4609 = vmatprep.subr.mxu0 0.0
    %4610 = vmatpush1.msra.mxu0 0.0
    %4611 = vmatprep.subr.mxu0 0.0
    %4612 = vmatpush1.msra.mxu0 0.0
    %4613 = vmatprep.mubr.f32.mxu0 0.0
    %4614 = vmatmul.mubr.f32.gmra.mrb[0].mxu0 %v917
    %v4615 = vpop.f32.mrb[0].mxu0
    %v4616 = vadd.f32 0.0, %v4615
    %v4617 = vpop.f32.mrb[0].mxu0
    %v4618 = vadd.f32 0.0, %v4617
    %4619 = vmatprep.mubr.f32.mxu0 0.0
    %4620 = vmatmul.mubr.f32.gmra.mrb[0].mxu0 %v920
    %v4621 = vpop.f32.mrb[0].mxu0
    %v4622 = vadd.f32 0.0, %v4621
    %v4623 = vpop.f32.mrb[0].mxu0
    %v4624 = vadd.f32 0.0, %v4623
    %4625 = vdwg.mxu0
    %4626 = vmatprep.subr.mxu0 %v3551
    %4627 = vmatpush1.msra.mxu0 %v3549
    %4628 = vmatprep.subr.mxu0 %v3555
    %4629 = vmatpush1.msra.mxu0 %v3553
    %4630 = vmatprep.subr.mxu0 0.0
    %4631 = vmatpush1.msra.mxu0 0.0
    %4632 = vmatprep.subr.mxu0 0.0
    %4633 = vmatpush1.msra.mxu0 0.0
    %4634 = vmatprep.subr.mxu0 0.0
    %4635 = vmatpush1.msra.mxu0 0.0
    %4636 = vmatprep.subr.mxu0 0.0
    %4637 = vmatpush1.msra.mxu0 0.0
    %4638 = vmatprep.subr.mxu0 0.0
    %4639 = vmatpush1.msra.mxu0 0.0
    %4640 = vmatprep.subr.mxu0 0.0
    %4641 = vmatpush1.msra.mxu0 0.0
    %4642 = vmatprep.subr.mxu0 0.0
    %4643 = vmatpush1.msra.mxu0 0.0
    %4644 = vmatprep.subr.mxu0 0.0
    %4645 = vmatpush1.msra.mxu0 0.0
    %4646 = vmatprep.subr.mxu0 0.0
    %4647 = vmatpush1.msra.mxu0 0.0
    %4648 = vmatprep.subr.mxu0 0.0
    %4649 = vmatpush1.msra.mxu0 0.0
    %4650 = vmatprep.subr.mxu0 0.0
    %4651 = vmatpush1.msra.mxu0 0.0
    %4652 = vmatprep.subr.mxu0 0.0
    %4653 = vmatpush1.msra.mxu0 0.0
    %4654 = vmatprep.subr.mxu0 0.0
    %4655 = vmatpush1.msra.mxu0 0.0
    %4656 = vmatprep.subr.mxu0 0.0
    %4657 = vmatpush1.msra.mxu0 0.0
    %4658 = vmatprep.subr.mxu0 0.0
    %4659 = vmatpush1.msra.mxu0 0.0
    %4660 = vmatprep.subr.mxu0 0.0
    %4661 = vmatpush1.msra.mxu0 0.0
    %4662 = vmatprep.subr.mxu0 0.0
    %4663 = vmatpush1.msra.mxu0 0.0
    %4664 = vmatprep.subr.mxu0 0.0
    %4665 = vmatpush1.msra.mxu0 0.0
    %4666 = vmatprep.subr.mxu0 0.0
    %4667 = vmatpush1.msra.mxu0 0.0
    %4668 = vmatprep.subr.mxu0 0.0
    %4669 = vmatpush1.msra.mxu0 0.0
    %4670 = vmatprep.subr.mxu0 0.0
    %4671 = vmatpush1.msra.mxu0 0.0
    %4672 = vmatprep.subr.mxu0 0.0
    %4673 = vmatpush1.msra.mxu0 0.0
    %4674 = vmatprep.subr.mxu0 0.0
    %4675 = vmatpush1.msra.mxu0 0.0
    %4676 = vmatprep.subr.mxu0 0.0
    %4677 = vmatpush1.msra.mxu0 0.0
    %4678 = vmatprep.subr.mxu0 0.0
    %4679 = vmatpush1.msra.mxu0 0.0
    %4680 = vmatprep.subr.mxu0 0.0
    %4681 = vmatpush1.msra.mxu0 0.0
    %4682 = vmatprep.subr.mxu0 0.0
    %4683 = vmatpush1.msra.mxu0 0.0
    %4684 = vmatprep.subr.mxu0 0.0
    %4685 = vmatpush1.msra.mxu0 0.0
    %4686 = vmatprep.subr.mxu0 0.0
    %4687 = vmatpush1.msra.mxu0 0.0
    %4688 = vmatprep.subr.mxu0 0.0
    %4689 = vmatpush1.msra.mxu0 0.0
    %4690 = vmatprep.mubr.f32.mxu0 0.0
    %4691 = vmatmul.mubr.f32.gmra.mrb[0].mxu0 %v917
    %v4692 = vpop.f32.mrb[0].mxu0
    %v4693 = vadd.f32 0.0, %v4692
    %v4694 = vpop.f32.mrb[0].mxu0
    %v4695 = vadd.f32 0.0, %v4694
    %4696 = vmatprep.mubr.f32.mxu0 0.0
    %4697 = vmatmul.mubr.f32.gmra.mrb[0].mxu0 %v920
    %v4698 = vpop.f32.mrb[0].mxu0
    %v4699 = vadd.f32 0.0, %v4698
    %v4700 = vpop.f32.mrb[0].mxu0
    %v4701 = vadd.f32 0.0, %v4700
    %4702 = vdwg.mxu0
    %v4703 = vlaneseq
    %v4704 = vshrl.u32 %v4703, 7
    %v4705 = vsub.s32 3, %v4704
    %v4706 = vrot.slane %v3925, %v4705
    %v4707 = vlaneseq
    %v4708 = vshrl.u32 %v4707, 7
    %v4709 = vsub.s32 7, %v4708
    %v4710 = vrot.slane %v3925, %v4709
    %v4711 = vlaneseq
    %v4712 = vshrl.u32 %v4711, 7
    %v4713 = vsub.s32 3, %v4712
    %v4714 = vrot.slane %v3926, %v4713
    %v4715 = vlaneseq
    %v4716 = vshrl.u32 %v4715, 7
    %v4717 = vsub.s32 7, %v4716
    %v4718 = vrot.slane %v3926, %v4717
    %v4723 = vlaneseq
    %v4724 = vshrl.u32 %v4723, 7
    %v4725 = vsub.s32 3, %v4724
    %v4726 = vrot.slane %v4706, %v4725
    %v4727 = vlaneseq
    %v4728 = vshrl.u32 %v4727, 7
    %v4729 = vsub.s32 3, %v4728
    %v4730 = vrot.slane %v4710, %v4729
    %v4731 = vlaneseq
    %v4732 = vshrl.u32 %v4731, 7
    %v4733 = vsub.s32 3, %v4732
    %v4734 = vrot.slane %v4714, %v4733
    %v4735 = vlaneseq
    %v4736 = vshrl.u32 %v4735, 7
    %v4737 = vsub.s32 3, %v4736
    %v4738 = vrot.slane %v4718, %v4737
    %v4739 = vmul.f32 %v4616, %v4726
    %v4740 = vmul.f32 %v4618, %v4730
    %v4741 = vmul.f32 %v4693, %v4734
    %v4742 = vmul.f32 %v4695, %v4738
    %v4743 = vmul.f32 %v4622, %v4726
    %v4744 = vmul.f32 %v4624, %v4730
    %v4745 = vmul.f32 %v4699, %v4734
    %v4746 = vmul.f32 %v4701, %v4738
    %v4747 = vadd.f32 %v4541, %v4739
    %v4748 = vadd.f32 %v4542, %v4740
    %v4749 = vadd.f32 %v4543, %v4741
    %v4750 = vadd.f32 %v4544, %v4742
    %v4751 = vadd.f32 %v4545, %v4743
    %v4752 = vadd.f32 %v4546, %v4744
    %v4753 = vadd.f32 %v4547, %v4745
    %v4754 = vadd.f32 %v4548, %v4746
    %v4756 = vlaneseq
    %v4757 = vshrl.u32 %v4756, 7
    %v4758 = vsub.s32 0, %v4757
    %v4759 = vrot.slane %v3928, %v4758
    %v4760 = vlaneseq
    %v4761 = vshrl.u32 %v4760, 7
    %v4762 = vsub.s32 1, %v4761
    %v4763 = vrot.slane %v3928, %v4762
    %v4764 = vlaneseq
    %v4765 = vshrl.u32 %v4764, 7
    %v4766 = vsub.s32 2, %v4765
    %v4767 = vrot.slane %v3928, %v4766
    %v4768 = vlaneseq
    %v4769 = vshrl.u32 %v4768, 7
    %v4770 = vsub.s32 3, %v4769
    %v4771 = vrot.slane %v3928, %v4770
    %v4776 = vadd.f32 %v4747, %v4759
    %v4777 = vadd.f32 %v4748, %v4763
    %v4778 = vadd.f32 %v4749, %v4767
    %v4779 = vadd.f32 %v4750, %v4771
    %v4780 = vadd.f32 %v4751, %v4759
    %v4781 = vadd.f32 %v4752, %v4763
    %v4782 = vadd.f32 %v4753, %v4767
    %v4783 = vadd.f32 %v4754, %v4771
    %v4784 = vxor.u32 %v4776, 2147483648
    %v4785 = vxor.u32 %v4777, 2147483648
    %v4786 = vxor.u32 %v4778, 2147483648
    %v4787 = vxor.u32 %v4779, 2147483648
    %v4788 = vxor.u32 %v4780, 2147483648
    %v4789 = vxor.u32 %v4781, 2147483648
    %v4790 = vxor.u32 %v4782, 2147483648
    %v4791 = vxor.u32 %v4783, 2147483648
    %v4792 = vmul.f32 %v4784, 1.442695
    %v4793 = vpow.pop %v4792
    %v4794 = vmul.f32 %v4785, 1.442695
    %v4795 = vpow.pop %v4794
    %v4796 = vmul.f32 %v4786, 1.442695
    %v4797 = vpow.pop %v4796
    %v4798 = vmul.f32 %v4787, 1.442695
    %v4799 = vpow.pop %v4798
    %v4800 = vmul.f32 %v4788, 1.442695
    %v4801 = vpow.pop %v4800
    %v4802 = vmul.f32 %v4789, 1.442695
    %v4803 = vpow.pop %v4802
    %v4804 = vmul.f32 %v4790, 1.442695
    %v4805 = vpow.pop %v4804
    %v4806 = vmul.f32 %v4791, 1.442695
    %v4807 = vpow.pop %v4806
    %v4808 = vadd.f32 %v4793, 1.0
    %v4809 = vadd.f32 %v4795, 1.0
    %v4810 = vadd.f32 %v4797, 1.0
    %v4811 = vadd.f32 %v4799, 1.0
    %v4812 = vadd.f32 %v4801, 1.0
    %v4813 = vadd.f32 %v4803, 1.0
    %v4814 = vadd.f32 %v4805, 1.0
    %v4815 = vadd.f32 %v4807, 1.0
    %v4816 = vrcp.pop %v4808
    %v4817 = vmul.f32 1.0, %v4816
    %v4818 = vrcp.pop %v4809
    %v4819 = vmul.f32 1.0, %v4818
    %v4820 = vrcp.pop %v4810
    %v4821 = vmul.f32 1.0, %v4820
    %v4822 = vrcp.pop %v4811
    %v4823 = vmul.f32 1.0, %v4822
    %v4824 = vrcp.pop %v4812
    %v4825 = vmul.f32 1.0, %v4824
    %v4826 = vrcp.pop %v4813
    %v4827 = vmul.f32 1.0, %v4826
    %v4828 = vrcp.pop %v4814
    %v4829 = vmul.f32 1.0, %v4828
    %v4830 = vrcp.pop %v4815
    %v4831 = vmul.f32 1.0, %v4830
    %v4832 = vmul.f32 %v4776, %v4817
    %v4833 = vmul.f32 %v4777, %v4819
    %v4834 = vmul.f32 %v4778, %v4821
    %v4835 = vmul.f32 %v4779, %v4823
    %v4836 = vmul.f32 %v4780, %v4825
    %v4837 = vmul.f32 %v4781, %v4827
    %v4838 = vmul.f32 %v4782, %v4829
    %v4839 = vmul.f32 %v4783, %v4831
    %s4840 = scalar_lea.vmem [#allocation16], 1
    %v4841 = vld [vmem:[%s4840] sm:$0x1]
    %v4843 = vlaneseq
    %v4844 = vshrl.u32 %v4843, 7
    %v4845 = vsub.s32 0, %v4844
    %v4846 = vrot.slane %v4841, %v4845
    %v4856 = vunpack.c.l.b16 %v3558
    %v4857 = vunpack.c.l.b16 %v3559
    %v4858 = vunpack.c.l.b16 %v3560
    %v4859 = vunpack.c.l.b16 %v3561
    %v4860 = vunpack.c.l.b16 %v3562
    %v4861 = vunpack.c.l.b16 %v3563
    %v4862 = vunpack.c.l.b16 %v3564
    %v4863 = vunpack.c.l.b16 %v3565
    %v4864 = vpack.c.b16 %v4857, %v4856
    %v4865 = vpack.c.b16 %v4859, %v4858
    %v4866 = vpack.c.b16 %v4861, %v4860
    %v4867 = vpack.c.b16 %v4863, %v4862
    %4872 = vmatprep.subr.bf16.mxu0 0
    %4873 = vmatpush1.bf16.msra.mxu0 %v4864
    %4874 = vmatprep.subr.bf16.mxu0 0
    %4875 = vmatpush1.bf16.msra.mxu0 %v4865
    %4876 = vmatprep.subr.bf16.mxu0 0
    %4877 = vmatpush1.bf16.msra.mxu0 %v4866
    %4878 = vmatprep.subr.bf16.mxu0 0
    %4879 = vmatpush1.bf16.msra.mxu0 %v4867
    %4880 = vmatprep.subr.bf16.mxu0 0
    %4881 = vmatpush1.bf16.msra.mxu0 0
    %4882 = vmatprep.subr.bf16.mxu0 0
    %4883 = vmatpush1.bf16.msra.mxu0 0
    %4884 = vmatprep.subr.bf16.mxu0 0
    %4885 = vmatpush1.bf16.msra.mxu0 0
    %4886 = vmatprep.subr.bf16.mxu0 0
    %4887 = vmatpush1.bf16.msra.mxu0 0
    %4888 = vmatprep.subr.bf16.mxu0 0
    %4889 = vmatpush1.bf16.msra.mxu0 0
    %4890 = vmatprep.subr.bf16.mxu0 0
    %4891 = vmatpush1.bf16.msra.mxu0 0
    %4892 = vmatprep.subr.bf16.mxu0 0
    %4893 = vmatpush1.bf16.msra.mxu0 0
    %4894 = vmatprep.subr.bf16.mxu0 0
    %4895 = vmatpush1.bf16.msra.mxu0 0
    %4896 = vmatprep.subr.bf16.mxu0 0
    %4897 = vmatpush1.bf16.msra.mxu0 0
    %4898 = vmatprep.subr.bf16.mxu0 0
    %4899 = vmatpush1.bf16.msra.mxu0 0
    %4900 = vmatprep.subr.bf16.mxu0 0
    %4901 = vmatpush1.bf16.msra.mxu0 0
    %4902 = vmatprep.subr.bf16.mxu0 0
    %4903 = vmatpush1.bf16.msra.mxu0 0
    %4904 = vmatprep.mubr.bf16.mxu0 0
    %4905 = vmatmul.mubr.bf16.gmra.mrb[0].mxu0 %v3257
    %v4906 = vpop.f32.mrb[0].mxu0
    %v4907 = vadd.f32 %v4846, %v4906
    %v4908 = vpop.f32.mrb[0].mxu0
    %v4909 = vpop.f32.mrb[0].mxu0
    %v4910 = vadd.f32 %v4846, %v4909
    %v4911 = vpop.f32.mrb[0].mxu0
    %4912 = vdwg.mxu0
    %v4913 = vmax.f32 %v4907, 0.0
    %v4914 = vmax.f32 %v4910, 0.0
    %v4915 = vand.u32 2147483647, %v4907
    %v4916 = vand.u32 2147483647, %v4910
    %v4917 = vsub.f32 0.0, %v4915
    %v4918 = vsub.f32 0.0, %v4916
    %v4919 = vmul.f32 %v4917, 1.442695
    %v4920 = vpow.pop %v4919
    %v4921 = vmul.f32 %v4918, 1.442695
    %v4922 = vpow.pop %v4921
    %v4923 = vadd.f32 %v4920, 1.0
    %v4924 = vadd.f32 %v4922, 1.0
    %v4925 = vlog2.pop %v4923
    %v4926 = vmul.f32 %v4925, 0.6931472
    %v4927 = vlog2.pop %v4924
    %v4928 = vmul.f32 %v4927, 0.6931472
    %v4929 = vadd.f32 %v4913, %v4926
    %v4930 = vadd.f32 %v4914, %v4928
    %s4931 = scalar_lea.vmem [#allocation14], 1
    %v4932 = vld [vmem:[%s4931] sm:$0x1]
    %v4933 = vmul.f32 %v4932, 1.442695
    %v4934 = vpow.pop %v4933
    %v4935 = vsub.f32 0.0, %v4934
    %v4937 = vlaneseq
    %v4938 = vshrl.u32 %v4937, 7
    %v4939 = vsub.s32 0, %v4938
    %v4940 = vrot.slane %v4935, %v4939
    %v4942 = vmul.f32 %v4929, %v4940
    %v4943 = vmul.f32 %v4930, %v4940
    %4944 = vmatprep.subr.mxu0 0.0
    %4945 = vmatpush1.msra.mxu0 %v4942
    %4946 = vmatprep.subr.mxu0 0.0
    %4947 = vmatpush1.msra.mxu0 %v4943
    %4948 = vmatprep.subr.mxu0 0.0
    %4949 = vmatpush1.msra.mxu0 0.0
    %4950 = vmatprep.subr.mxu0 0.0
    %4951 = vmatpush1.msra.mxu0 0.0
    %4952 = vmatprep.subr.mxu0 0.0
    %4953 = vmatpush1.msra.mxu0 0.0
    %4954 = vmatprep.subr.mxu0 0.0
    %4955 = vmatpush1.msra.mxu0 0.0
    %4956 = vmatprep.subr.mxu0 0.0
    %4957 = vmatpush1.msra.mxu0 0.0
    %4958 = vmatprep.subr.mxu0 0.0
    %4959 = vmatpush1.msra.mxu0 0.0
    %4960 = vmatprep.subr.mxu0 0.0
    %4961 = vmatpush1.msra.mxu0 0.0
    %4962 = vmatprep.subr.mxu0 0.0
    %4963 = vmatpush1.msra.mxu0 0.0
    %4964 = vmatprep.subr.mxu0 0.0
    %4965 = vmatpush1.msra.mxu0 0.0
    %4966 = vmatprep.subr.mxu0 0.0
    %4967 = vmatpush1.msra.mxu0 0.0
    %4968 = vmatprep.subr.mxu0 0.0
    %4969 = vmatpush1.msra.mxu0 0.0
    %4970 = vmatprep.subr.mxu0 0.0
    %4971 = vmatpush1.msra.mxu0 0.0
    %4972 = vmatprep.subr.mxu0 0.0
    %4973 = vmatpush1.msra.mxu0 0.0
    %4974 = vmatprep.subr.mxu0 0.0
    %4975 = vmatpush1.msra.mxu0 0.0
    %4976 = vmatprep.subr.mxu0 0.0
    %4977 = vmatpush1.msra.mxu0 0.0
    %4978 = vmatprep.subr.mxu0 0.0
    %4979 = vmatpush1.msra.mxu0 0.0
    %4980 = vmatprep.subr.mxu0 0.0
    %4981 = vmatpush1.msra.mxu0 0.0
    %4982 = vmatprep.subr.mxu0 0.0
    %4983 = vmatpush1.msra.mxu0 0.0
    %4984 = vmatprep.subr.mxu0 0.0
    %4985 = vmatpush1.msra.mxu0 0.0
    %4986 = vmatprep.subr.mxu0 0.0
    %4987 = vmatpush1.msra.mxu0 0.0
    %4988 = vmatprep.subr.mxu0 0.0
    %4989 = vmatpush1.msra.mxu0 0.0
    %4990 = vmatprep.subr.mxu0 0.0
    %4991 = vmatpush1.msra.mxu0 0.0
    %4992 = vmatprep.subr.mxu0 0.0
    %4993 = vmatpush1.msra.mxu0 0.0
    %4994 = vmatprep.subr.mxu0 0.0
    %4995 = vmatpush1.msra.mxu0 0.0
    %4996 = vmatprep.subr.mxu0 0.0
    %4997 = vmatpush1.msra.mxu0 0.0
    %4998 = vmatprep.subr.mxu0 0.0
    %4999 = vmatpush1.msra.mxu0 0.0
    %5000 = vmatprep.subr.mxu0 0.0
    %5001 = vmatpush1.msra.mxu0 0.0
    %5002 = vmatprep.subr.mxu0 0.0
    %5003 = vmatpush1.msra.mxu0 0.0
    %5004 = vmatprep.subr.mxu0 0.0
    %5005 = vmatpush1.msra.mxu0 0.0
    %5006 = vmatprep.subr.mxu0 0.0
    %5007 = vmatpush1.msra.mxu0 0.0
    %5008 = vmatprep.mubr.f32.mxu0 0.0
    %5009 = vmatmul.mubr.f32.gmra.mrb[0].mxu0 %v2044
    %v5010 = vpop.f32.mrb[0].mxu0
    %v5011 = vadd.f32 0.0, %v5010
    %v5012 = vpop.f32.mrb[0].mxu0
    %5013 = vmatprep.mubr.f32.mxu0 0.0
    %5014 = vmatmul.mubr.f32.gmra.mrb[0].mxu0 %v2047
    %v5015 = vpop.f32.mrb[0].mxu0
    %v5016 = vadd.f32 0.0, %v5015
    %v5017 = vpop.f32.mrb[0].mxu0
    %5018 = vdwg.mxu0
    %v5019 = vmul.f32 %v5011, 1.442695
    %v5020 = vpow.pop %v5019
    %v5021 = vmul.f32 %v5016, 1.442695
    %v5022 = vpow.pop %v5021
    %v5024 = vsel %vm2128, %v5020, 0
    %v5027 = vsel %vm2128, %v5022, 0
    %5029 = vmatprep.subr.mxu0 0.0
    %5030 = vmatpush1.msra.mxu0 %v2137
    %5031 = vmatprep.subr.mxu0 0.0
    %5032 = vmatpush1.msra.mxu0 0.0
    %5033 = vmatprep.subr.mxu0 0.0
    %5034 = vmatpush1.msra.mxu0 0.0
    %5035 = vmatprep.subr.mxu0 0.0
    %5036 = vmatpush1.msra.mxu0 0.0
    %5037 = vmatprep.subr.mxu0 0.0
    %5038 = vmatpush1.msra.mxu0 0.0
    %5039 = vmatprep.subr.mxu0 0.0
    %5040 = vmatpush1.msra.mxu0 0.0
    %5041 = vmatprep.subr.mxu0 0.0
    %5042 = vmatpush1.msra.mxu0 0.0
    %5043 = vmatprep.subr.mxu0 0.0
    %5044 = vmatpush1.msra.mxu0 0.0
    %5045 = vmatprep.subr.mxu0 0.0
    %5046 = vmatpush1.msra.mxu0 0.0
    %5047 = vmatprep.subr.mxu0 0.0
    %5048 = vmatpush1.msra.mxu0 0.0
    %5049 = vmatprep.subr.mxu0 0.0
    %5050 = vmatpush1.msra.mxu0 0.0
    %5051 = vmatprep.subr.mxu0 0.0
    %5052 = vmatpush1.msra.mxu0 0.0
    %5053 = vmatprep.subr.mxu0 0.0
    %5054 = vmatpush1.msra.mxu0 0.0
    %5055 = vmatprep.subr.mxu0 0.0
    %5056 = vmatpush1.msra.mxu0 0.0
    %5057 = vmatprep.subr.mxu0 0.0
    %5058 = vmatpush1.msra.mxu0 0.0
    %5059 = vmatprep.subr.mxu0 0.0
    %5060 = vmatpush1.msra.mxu0 0.0
    %5061 = vmatprep.subr.mxu0 0.0
    %5062 = vmatpush1.msra.mxu0 0.0
    %5063 = vmatprep.subr.mxu0 0.0
    %5064 = vmatpush1.msra.mxu0 0.0
    %5065 = vmatprep.subr.mxu0 0.0
    %5066 = vmatpush1.msra.mxu0 0.0
    %5067 = vmatprep.subr.mxu0 0.0
    %5068 = vmatpush1.msra.mxu0 0.0
    %5069 = vmatprep.subr.mxu0 0.0
    %5070 = vmatpush1.msra.mxu0 0.0
    %5071 = vmatprep.subr.mxu0 0.0
    %5072 = vmatpush1.msra.mxu0 0.0
    %5073 = vmatprep.subr.mxu0 0.0
    %5074 = vmatpush1.msra.mxu0 0.0
    %5075 = vmatprep.subr.mxu0 0.0
    %5076 = vmatpush1.msra.mxu0 0.0
    %5077 = vmatprep.subr.mxu0 0.0
    %5078 = vmatpush1.msra.mxu0 0.0
    %5079 = vmatprep.subr.mxu0 0.0
    %5080 = vmatpush1.msra.mxu0 0.0
    %5081 = vmatprep.subr.mxu0 0.0
    %5082 = vmatpush1.msra.mxu0 0.0
    %5083 = vmatprep.subr.mxu0 0.0
    %5084 = vmatpush1.msra.mxu0 0.0
    %5085 = vmatprep.subr.mxu0 0.0
    %5086 = vmatpush1.msra.mxu0 0.0
    %5087 = vmatprep.subr.mxu0 0.0
    %5088 = vmatpush1.msra.mxu0 0.0
    %5089 = vmatprep.subr.mxu0 0.0
    %5090 = vmatpush1.msra.mxu0 0.0
    %5091 = vmatprep.subr.mxu0 0.0
    %5092 = vmatpush1.msra.mxu0 0.0
    %5093 = vmatprep.mubr.f32.mxu0 0.0
    %5094 = vmatmul.mubr.f32.gmra.mrb[0].mxu0 %v5024
    %v5095 = vpop.f32.mrb[0].mxu0
    %v5096 = vadd.f32 0.0, %v5095
    %v5097 = vpop.f32.mrb[0].mxu0
    %5098 = vmatprep.mubr.f32.mxu0 0.0
    %5099 = vmatmul.mubr.f32.gmra.mrb[0].mxu0 %v5027
    %v5100 = vpop.f32.mrb[0].mxu0
    %v5101 = vadd.f32 0.0, %v5100
    %v5102 = vpop.f32.mrb[0].mxu0
    %5103 = vdwg.mxu0
    %v5104 = vsub.f32 0.0, %v5011
    %v5105 = vsub.f32 0.0, %v5016
    %v5106 = vmul.f32 %v5104, 1.442695
    %v5107 = vpow.pop %v5106
    %v5108 = vmul.f32 %v5105, 1.442695
    %v5109 = vpow.pop %v5108
    %v5111 = vsel %vm2128, %v5107, 0
    %v5114 = vsel %vm2128, %v5109, 0
    %5116 = vmatprep.subr.mxu0 0.0
    %5117 = vmatpush1.msra.mxu0 %v2137
    %5118 = vmatprep.subr.mxu0 0.0
    %5119 = vmatpush1.msra.mxu0 0.0
    %5120 = vmatprep.subr.mxu0 0.0
    %5121 = vmatpush1.msra.mxu0 0.0
    %5122 = vmatprep.subr.mxu0 0.0
    %5123 = vmatpush1.msra.mxu0 0.0
    %5124 = vmatprep.subr.mxu0 0.0
    %5125 = vmatpush1.msra.mxu0 0.0
    %5126 = vmatprep.subr.mxu0 0.0
    %5127 = vmatpush1.msra.mxu0 0.0
    %5128 = vmatprep.subr.mxu0 0.0
    %5129 = vmatpush1.msra.mxu0 0.0
    %5130 = vmatprep.subr.mxu0 0.0
    %5131 = vmatpush1.msra.mxu0 0.0
    %5132 = vmatprep.subr.mxu0 0.0
    %5133 = vmatpush1.msra.mxu0 0.0
    %5134 = vmatprep.subr.mxu0 0.0
    %5135 = vmatpush1.msra.mxu0 0.0
    %5136 = vmatprep.subr.mxu0 0.0
    %5137 = vmatpush1.msra.mxu0 0.0
    %5138 = vmatprep.subr.mxu0 0.0
    %5139 = vmatpush1.msra.mxu0 0.0
    %5140 = vmatprep.subr.mxu0 0.0
    %5141 = vmatpush1.msra.mxu0 0.0
    %5142 = vmatprep.subr.mxu0 0.0
    %5143 = vmatpush1.msra.mxu0 0.0
    %5144 = vmatprep.subr.mxu0 0.0
    %5145 = vmatpush1.msra.mxu0 0.0
    %5146 = vmatprep.subr.mxu0 0.0
    %5147 = vmatpush1.msra.mxu0 0.0
    %5148 = vmatprep.subr.mxu0 0.0
    %5149 = vmatpush1.msra.mxu0 0.0
    %5150 = vmatprep.subr.mxu0 0.0
    %5151 = vmatpush1.msra.mxu0 0.0
    %5152 = vmatprep.subr.mxu0 0.0
    %5153 = vmatpush1.msra.mxu0 0.0
    %5154 = vmatprep.subr.mxu0 0.0
    %5155 = vmatpush1.msra.mxu0 0.0
    %5156 = vmatprep.subr.mxu0 0.0
    %5157 = vmatpush1.msra.mxu0 0.0
    %5158 = vmatprep.subr.mxu0 0.0
    %5159 = vmatpush1.msra.mxu0 0.0
    %5160 = vmatprep.subr.mxu0 0.0
    %5161 = vmatpush1.msra.mxu0 0.0
    %5162 = vmatprep.subr.mxu0 0.0
    %5163 = vmatpush1.msra.mxu0 0.0
    %5164 = vmatprep.subr.mxu0 0.0
    %5165 = vmatpush1.msra.mxu0 0.0
    %5166 = vmatprep.subr.mxu0 0.0
    %5167 = vmatpush1.msra.mxu0 0.0
    %5168 = vmatprep.subr.mxu0 0.0
    %5169 = vmatpush1.msra.mxu0 0.0
    %5170 = vmatprep.subr.mxu0 0.0
    %5171 = vmatpush1.msra.mxu0 0.0
    %5172 = vmatprep.subr.mxu0 0.0
    %5173 = vmatpush1.msra.mxu0 0.0
    %5174 = vmatprep.subr.mxu0 0.0
    %5175 = vmatpush1.msra.mxu0 0.0
    %5176 = vmatprep.subr.mxu0 0.0
    %5177 = vmatpush1.msra.mxu0 0.0
    %5178 = vmatprep.subr.mxu0 0.0
    %5179 = vmatpush1.msra.mxu0 0.0
    %5180 = vmatprep.mubr.f32.mxu0 0.0
    %5181 = vmatmul.mubr.f32.gmra.mrb[0].mxu0 %v5111
    %v5182 = vpop.f32.mrb[0].mxu0
    %v5183 = vadd.f32 0.0, %v5182
    %v5184 = vpop.f32.mrb[0].mxu0
    %5185 = vmatprep.mubr.f32.mxu0 0.0
    %5186 = vmatmul.mubr.f32.gmra.mrb[0].mxu0 %v5114
    %v5187 = vpop.f32.mrb[0].mxu0
    %v5188 = vadd.f32 0.0, %v5187
    %v5189 = vpop.f32.mrb[0].mxu0
    %5190 = vdwg.mxu0
    %v5192 = vsel %vm2128, %v4929, 0
    %v5195 = vsel %vm2128, %v4930, 0
    %5197 = vmatprep.subr.mxu0 0.0
    %5198 = vmatpush1.msra.mxu0 %v2137
    %5199 = vmatprep.subr.mxu0 0.0
    %5200 = vmatpush1.msra.mxu0 0.0
    %5201 = vmatprep.subr.mxu0 0.0
    %5202 = vmatpush1.msra.mxu0 0.0
    %5203 = vmatprep.subr.mxu0 0.0
    %5204 = vmatpush1.msra.mxu0 0.0
    %5205 = vmatprep.subr.mxu0 0.0
    %5206 = vmatpush1.msra.mxu0 0.0
    %5207 = vmatprep.subr.mxu0 0.0
    %5208 = vmatpush1.msra.mxu0 0.0
    %5209 = vmatprep.subr.mxu0 0.0
    %5210 = vmatpush1.msra.mxu0 0.0
    %5211 = vmatprep.subr.mxu0 0.0
    %5212 = vmatpush1.msra.mxu0 0.0
    %5213 = vmatprep.subr.mxu0 0.0
    %5214 = vmatpush1.msra.mxu0 0.0
    %5215 = vmatprep.subr.mxu0 0.0
    %5216 = vmatpush1.msra.mxu0 0.0
    %5217 = vmatprep.subr.mxu0 0.0
    %5218 = vmatpush1.msra.mxu0 0.0
    %5219 = vmatprep.subr.mxu0 0.0
    %5220 = vmatpush1.msra.mxu0 0.0
    %5221 = vmatprep.subr.mxu0 0.0
    %5222 = vmatpush1.msra.mxu0 0.0
    %5223 = vmatprep.subr.mxu0 0.0
    %5224 = vmatpush1.msra.mxu0 0.0
    %5225 = vmatprep.subr.mxu0 0.0
    %5226 = vmatpush1.msra.mxu0 0.0
    %5227 = vmatprep.subr.mxu0 0.0
    %5228 = vmatpush1.msra.mxu0 0.0
    %5229 = vmatprep.subr.mxu0 0.0
    %5230 = vmatpush1.msra.mxu0 0.0
    %5231 = vmatprep.subr.mxu0 0.0
    %5232 = vmatpush1.msra.mxu0 0.0
    %5233 = vmatprep.subr.mxu0 0.0
    %5234 = vmatpush1.msra.mxu0 0.0
    %5235 = vmatprep.subr.mxu0 0.0
    %5236 = vmatpush1.msra.mxu0 0.0
    %5237 = vmatprep.subr.mxu0 0.0
    %5238 = vmatpush1.msra.mxu0 0.0
    %5239 = vmatprep.subr.mxu0 0.0
    %5240 = vmatpush1.msra.mxu0 0.0
    %5241 = vmatprep.subr.mxu0 0.0
    %5242 = vmatpush1.msra.mxu0 0.0
    %5243 = vmatprep.subr.mxu0 0.0
    %5244 = vmatpush1.msra.mxu0 0.0
    %5245 = vmatprep.subr.mxu0 0.0
    %5246 = vmatpush1.msra.mxu0 0.0
    %5247 = vmatprep.subr.mxu0 0.0
    %5248 = vmatpush1.msra.mxu0 0.0
    %5249 = vmatprep.subr.mxu0 0.0
    %5250 = vmatpush1.msra.mxu0 0.0
    %5251 = vmatprep.subr.mxu0 0.0
    %5252 = vmatpush1.msra.mxu0 0.0
    %5253 = vmatprep.subr.mxu0 0.0
    %5254 = vmatpush1.msra.mxu0 0.0
    %5255 = vmatprep.subr.mxu0 0.0
    %5256 = vmatpush1.msra.mxu0 0.0
    %5257 = vmatprep.subr.mxu0 0.0
    %5258 = vmatpush1.msra.mxu0 0.0
    %5259 = vmatprep.subr.mxu0 0.0
    %5260 = vmatpush1.msra.mxu0 0.0
    %5261 = vmatprep.mubr.f32.mxu0 0.0
    %5262 = vmatmul.mubr.f32.gmra.mrb[0].mxu0 %v5192
    %v5263 = vpop.f32.mrb[0].mxu0
    %v5264 = vadd.f32 0.0, %v5263
    %v5265 = vpop.f32.mrb[0].mxu0
    %5266 = vmatprep.mubr.f32.mxu0 0.0
    %5267 = vmatmul.mubr.f32.gmra.mrb[0].mxu0 %v5195
    %v5268 = vpop.f32.mrb[0].mxu0
    %v5269 = vadd.f32 0.0, %v5268
    %v5270 = vpop.f32.mrb[0].mxu0
    %5271 = vdwg.mxu0
    %5272 = vmatprep.subr.mxu0 %v4833
    %5273 = vmatpush1.xpose.msra.mxu0 %v4832
    %5274 = vmatprep.subr.mxu0 %v4837
    %5275 = vmatpush1.xpose.msra.mxu0 %v4836
    %5276 = vmatprep.subr.mxu0 0.0
    %5277 = vmatpush1.xpose.msra.mxu0 0.0
    %5278 = vmatprep.subr.mxu0 0.0
    %5279 = vmatpush1.xpose.msra.mxu0 0.0
    %5280 = vmatprep.subr.mxu0 0.0
    %5281 = vmatpush1.xpose.msra.mxu0 0.0
    %5282 = vmatprep.subr.mxu0 0.0
    %5283 = vmatpush1.xpose.msra.mxu0 0.0
    %5284 = vmatprep.subr.mxu0 0.0
    %5285 = vmatpush1.xpose.msra.mxu0 0.0
    %5286 = vmatprep.subr.mxu0 0.0
    %5287 = vmatpush1.xpose.msra.mxu0 0.0
    %5288 = vmatprep.subr.mxu0 0.0
    %5289 = vmatpush1.xpose.msra.mxu0 0.0
    %5290 = vmatprep.subr.mxu0 0.0
    %5291 = vmatpush1.xpose.msra.mxu0 0.0
    %5292 = vmatprep.subr.mxu0 0.0
    %5293 = vmatpush1.xpose.msra.mxu0 0.0
    %5294 = vmatprep.subr.mxu0 0.0
    %5295 = vmatpush1.xpose.msra.mxu0 0.0
    %5296 = vmatprep.subr.mxu0 0.0
    %5297 = vmatpush1.xpose.msra.mxu0 0.0
    %5298 = vmatprep.subr.mxu0 0.0
    %5299 = vmatpush1.xpose.msra.mxu0 0.0
    %5300 = vmatprep.subr.mxu0 0.0
    %5301 = vmatpush1.xpose.msra.mxu0 0.0
    %5302 = vmatprep.subr.mxu0 0.0
    %5303 = vmatpush1.xpose.msra.mxu0 0.0
    %5304 = vmatprep.subr.mxu0 0.0
    %5305 = vmatpush1.xpose.msra.mxu0 0.0
    %5306 = vmatprep.subr.mxu0 0.0
    %5307 = vmatpush1.xpose.msra.mxu0 0.0
    %5308 = vmatprep.subr.mxu0 0.0
    %5309 = vmatpush1.xpose.msra.mxu0 0.0
    %5310 = vmatprep.subr.mxu0 0.0
    %5311 = vmatpush1.xpose.msra.mxu0 0.0
    %5312 = vmatprep.subr.mxu0 0.0
    %5313 = vmatpush1.xpose.msra.mxu0 0.0
    %5314 = vmatprep.subr.mxu0 0.0
    %5315 = vmatpush1.xpose.msra.mxu0 0.0
    %5316 = vmatprep.subr.mxu0 0.0
    %5317 = vmatpush1.xpose.msra.mxu0 0.0
    %5318 = vmatprep.subr.mxu0 0.0
    %5319 = vmatpush1.xpose.msra.mxu0 0.0
    %5320 = vmatprep.subr.mxu0 0.0
    %5321 = vmatpush1.xpose.msra.mxu0 0.0
    %5322 = vmatprep.subr.mxu0 0.0
    %5323 = vmatpush1.xpose.msra.mxu0 0.0
    %5324 = vmatprep.subr.mxu0 0.0
    %5325 = vmatpush1.xpose.msra.mxu0 0.0
    %5326 = vmatprep.subr.mxu0 0.0
    %5327 = vmatpush1.xpose.msra.mxu0 0.0
    %5328 = vmatprep.subr.mxu0 0.0
    %5329 = vmatpush1.xpose.msra.mxu0 0.0
    %5330 = vmatprep.subr.mxu0 0.0
    %5331 = vmatpush1.xpose.msra.mxu0 0.0
    %5332 = vmatprep.subr.mxu0 0.0
    %5333 = vmatpush1.xpose.msra.mxu0 0.0
    %5334 = vmatprep.subr.mxu0 0.0
    %5335 = vmatpush1.xpose.msra.mxu0 0.0
    %5336 = vmatprep.mubr.f32.mxu0 %v4835
    %5337 = vmatmul.mubr.f32.gmra.mrb[0].mxu0 %v4834
    %v5338 = vpop.f32.mrb[0].mxu0
    %v5339 = vadd.f32 0.0, %v5338
    %v5340 = vpop.f32.mrb[0].mxu0
    %5341 = vmatprep.mubr.f32.mxu0 %v4839
    %5342 = vmatmul.mubr.f32.gmra.mrb[0].mxu0 %v4838
    %v5343 = vpop.f32.mrb[0].mxu0
    %v5344 = vadd.f32 0.0, %v5343
    %v5345 = vpop.f32.mrb[0].mxu0
    %5346 = vdwg.mxu0
    %v5347 = vmul.f32 %v5339, %v243
    %v5348 = vmul.f32 %v5344, %v244
    %v5349 = vmul.f32 %v3922, %v5264
    %v5350 = vmul.f32 %v3923, %v5269
    %v5351 = vmul.f32 %v5183, %v5349
    %v5352 = vmul.f32 %v5188, %v5350
    %v5354 = vsel %vm648, %v5347, 0
    %v5357 = vsel %vm648, %v5348, 0
    %5359 = vmatprep.subr.mxu0 0.0
    %5360 = vmatpush1.msra.mxu0 %v5351
    %5361 = vmatprep.subr.mxu0 0.0
    %5362 = vmatpush1.msra.mxu0 %v5352
    %5363 = vmatprep.subr.mxu0 0.0
    %5364 = vmatpush1.msra.mxu0 0.0
    %5365 = vmatprep.subr.mxu0 0.0
    %5366 = vmatpush1.msra.mxu0 0.0
    %5367 = vmatprep.subr.mxu0 0.0
    %5368 = vmatpush1.msra.mxu0 0.0
    %5369 = vmatprep.subr.mxu0 0.0
    %5370 = vmatpush1.msra.mxu0 0.0
    %5371 = vmatprep.subr.mxu0 0.0
    %5372 = vmatpush1.msra.mxu0 0.0
    %5373 = vmatprep.subr.mxu0 0.0
    %5374 = vmatpush1.msra.mxu0 0.0
    %5375 = vmatprep.subr.mxu0 0.0
    %5376 = vmatpush1.msra.mxu0 0.0
    %5377 = vmatprep.subr.mxu0 0.0
    %5378 = vmatpush1.msra.mxu0 0.0
    %5379 = vmatprep.subr.mxu0 0.0
    %5380 = vmatpush1.msra.mxu0 0.0
    %5381 = vmatprep.subr.mxu0 0.0
    %5382 = vmatpush1.msra.mxu0 0.0
    %5383 = vmatprep.subr.mxu0 0.0
    %5384 = vmatpush1.msra.mxu0 0.0
    %5385 = vmatprep.subr.mxu0 0.0
    %5386 = vmatpush1.msra.mxu0 0.0
    %5387 = vmatprep.subr.mxu0 0.0
    %5388 = vmatpush1.msra.mxu0 0.0
    %5389 = vmatprep.subr.mxu0 0.0
    %5390 = vmatpush1.msra.mxu0 0.0
    %5391 = vmatprep.subr.mxu0 0.0
    %5392 = vmatpush1.msra.mxu0 0.0
    %5393 = vmatprep.subr.mxu0 0.0
    %5394 = vmatpush1.msra.mxu0 0.0
    %5395 = vmatprep.subr.mxu0 0.0
    %5396 = vmatpush1.msra.mxu0 0.0
    %5397 = vmatprep.subr.mxu0 0.0
    %5398 = vmatpush1.msra.mxu0 0.0
    %5399 = vmatprep.subr.mxu0 0.0
    %5400 = vmatpush1.msra.mxu0 0.0
    %5401 = vmatprep.subr.mxu0 0.0
    %5402 = vmatpush1.msra.mxu0 0.0
    %5403 = vmatprep.subr.mxu0 0.0
    %5404 = vmatpush1.msra.mxu0 0.0
    %5405 = vmatprep.subr.mxu0 0.0
    %5406 = vmatpush1.msra.mxu0 0.0
    %5407 = vmatprep.subr.mxu0 0.0
    %5408 = vmatpush1.msra.mxu0 0.0
    %5409 = vmatprep.subr.mxu0 0.0
    %5410 = vmatpush1.msra.mxu0 0.0
    %5411 = vmatprep.subr.mxu0 0.0
    %5412 = vmatpush1.msra.mxu0 0.0
    %5413 = vmatprep.subr.mxu0 0.0
    %5414 = vmatpush1.msra.mxu0 0.0
    %5415 = vmatprep.subr.mxu0 0.0
    %5416 = vmatpush1.msra.mxu0 0.0
    %5417 = vmatprep.subr.mxu0 0.0
    %5418 = vmatpush1.msra.mxu0 0.0
    %5419 = vmatprep.subr.mxu0 0.0
    %5420 = vmatpush1.msra.mxu0 0.0
    %5421 = vmatprep.subr.mxu0 0.0
    %5422 = vmatpush1.msra.mxu0 0.0
    %5423 = vmatprep.mubr.f32.mxu0 0.0
    %5424 = vmatmul.mubr.f32.gmra.mrb[0].mxu0 %v5354
    %v5425 = vpop.f32.mrb[0].mxu0
    %v5426 = vadd.f32 0.0, %v5425
    %v5427 = vpop.f32.mrb[0].mxu0
    %5428 = vmatprep.mubr.f32.mxu0 0.0
    %5429 = vmatmul.mubr.f32.gmra.mrb[0].mxu0 %v5357
    %v5430 = vpop.f32.mrb[0].mxu0
    %v5431 = vadd.f32 0.0, %v5430
    %v5432 = vpop.f32.mrb[0].mxu0
    %5433 = vdwg.mxu0
    %v5434 = vmul.f32 %v5096, %v5426
    %v5435 = vmul.f32 %v5101, %v5431
    %s5436 = scalar_lea.vmem [#allocation17], 1
    %v5437 = vld [vmem:[%s5436] sm:$0x1]
    %v5439 = vlaneseq
    %v5440 = vshrl.u32 %v5439, 7
    %v5441 = vsub.s32 0, %v5440
    %v5442 = vrot.slane %v5437, %v5441
    %v5444 = vmul.f32 %v3922, %v5442
    %v5445 = vmul.f32 %v3923, %v5442
    %v5446 = vadd.f32 %v5434, %v5444
    %v5447 = vadd.f32 %v5435, %v5445
    %v5448 = vxor.u32 %v3294, 2147483648
    %v5449 = vxor.u32 %v3297, 2147483648
    %v5450 = vmul.f32 %v5448, 1.442695
    %v5451 = vpow.pop %v5450
    %v5452 = vmul.f32 %v5449, 1.442695
    %v5453 = vpow.pop %v5452
    %v5454 = vadd.f32 %v5451, 1.0
    %v5455 = vadd.f32 %v5453, 1.0
    %v5456 = vrcp.pop %v5454
    %v5457 = vmul.f32 1.0, %v5456
    %v5458 = vrcp.pop %v5455
    %v5459 = vmul.f32 1.0, %v5458
    %v5460 = vmul.f32 %v3294, %v5457
    %v5461 = vmul.f32 %v3297, %v5459
    %v5462 = vmul.f32 %v5446, %v5460
    %v5463 = vmul.f32 %v5447, %v5461
    %s5464 = scalar_lea.vmem %s17, 1
    %v5465 = vld [vmem:[%s5464] sm:$0x1]
    %v5466 = vmul.f32 %v5462, %v5462
    %v5467 = vmul.f32 %v5463, %v5463
    %v5468 = vsel %vm257, %v5466, 0.0
    %5469 = vadd.xlane.f32.xlu0 %v5468
    %v5470 = vpop.xlane.xlu0 %5469
    %v5471 = vsel %vm257, %v5467, 0.0
    %5472 = vadd.xlane.f32.xlu0 %v5471
    %v5473 = vpop.xlane.xlu0 %5472
    %v5474 = vmul.f32 %v5470, %v264
    %v5475 = vmul.f32 %v5473, %v264
    %v5476 = vadd.f32 %v5474, 1e-05
    %v5477 = vadd.f32 %v5475, 1e-05
    %v5478 = vrsqrt.pop %v5476
    %v5479 = vrsqrt.pop %v5477
    %v5480 = vmul.f32 %v5462, %v5478
    %v5481 = vmul.f32 %v5463, %v5479
    %v5483 = vlaneseq
    %v5484 = vshrl.u32 %v5483, 7
    %v5485 = vsub.s32 0, %v5484
    %v5486 = vrot.slane %v5465, %v5485
    %v5488 = vmul.f32 %v5480, %v5486
    %v5489 = vmul.f32 %v5481, %v5486
    %v5490 = vpack.c.bf16 %v5489, %v5488
    %s5491 = scalar_lea.vmem %s18, 32
    %v5492 = vld [vmem:[%s5491] sm:$0xf]
    %v5493 = vld [vmem:[%s5491 + $0x4] sm:$0xf]
    %v5494 = vld [vmem:[%s5491 + $0x8] sm:$0xf]
    %v5495 = vld [vmem:[%s5491 + $0xc] sm:$0xf]
    %v5496 = vld [vmem:[%s5491 + $0x10] sm:$0xf]
    %v5497 = vld [vmem:[%s5491 + $0x14] sm:$0xf]
    %v5498 = vld [vmem:[%s5491 + $0x18] sm:$0xf]
    %v5499 = vld [vmem:[%s5491 + $0x1c] sm:$0xf]
    %v5508 = vunpack.c.l.b16 %v5492
    %v5509 = vunpack.c.l.b16 %v5493
    %v5510 = vunpack.c.l.b16 %v5494
    %v5511 = vunpack.c.l.b16 %v5495
    %v5512 = vunpack.c.l.b16 %v5496
    %v5513 = vunpack.c.l.b16 %v5497
    %v5514 = vunpack.c.l.b16 %v5498
    %v5515 = vunpack.c.l.b16 %v5499
    %v5516 = vpack.c.b16 %v5509, %v5508
    %v5517 = vpack.c.b16 %v5511, %v5510
    %v5518 = vpack.c.b16 %v5513, %v5512
    %v5519 = vpack.c.b16 %v5515, %v5514
    %v5525 = vsel %vm257, %v5490, 0
    %5527 = vmatprep.subr.bf16.mxu0 0
    %5528 = vmatpush1.bf16.msra.mxu0 %v5516
    %5529 = vmatprep.subr.bf16.mxu0 0
    %5530 = vmatpush1.bf16.msra.mxu0 %v5517
    %5531 = vmatprep.subr.bf16.mxu0 0
    %5532 = vmatpush1.bf16.msra.mxu0 %v5518
    %5533 = vmatprep.subr.bf16.mxu0 0
    %5534 = vmatpush1.bf16.msra.mxu0 %v5519
    %5535 = vmatprep.subr.bf16.mxu0 0
    %5536 = vmatpush1.bf16.msra.mxu0 0
    %5537 = vmatprep.subr.bf16.mxu0 0
    %5538 = vmatpush1.bf16.msra.mxu0 0
    %5539 = vmatprep.subr.bf16.mxu0 0
    %5540 = vmatpush1.bf16.msra.mxu0 0
    %5541 = vmatprep.subr.bf16.mxu0 0
    %5542 = vmatpush1.bf16.msra.mxu0 0
    %5543 = vmatprep.subr.bf16.mxu0 0
    %5544 = vmatpush1.bf16.msra.mxu0 0
    %5545 = vmatprep.subr.bf16.mxu0 0
    %5546 = vmatpush1.bf16.msra.mxu0 0
    %5547 = vmatprep.subr.bf16.mxu0 0
    %5548 = vmatpush1.bf16.msra.mxu0 0
    %5549 = vmatprep.subr.bf16.mxu0 0
    %5550 = vmatpush1.bf16.msra.mxu0 0
    %5551 = vmatprep.subr.bf16.mxu0 0
    %5552 = vmatpush1.bf16.msra.mxu0 0
    %5553 = vmatprep.subr.bf16.mxu0 0
    %5554 = vmatpush1.bf16.msra.mxu0 0
    %5555 = vmatprep.subr.bf16.mxu0 0
    %5556 = vmatpush1.bf16.msra.mxu0 0
    %5557 = vmatprep.subr.bf16.mxu0 0
    %5558 = vmatpush1.bf16.msra.mxu0 0
    %5559 = vmatprep.mubr.bf16.mxu0 0
    %5560 = vmatmul.mubr.bf16.gmra.mrb[0].mxu0 %v5525
    %v5561 = vpop.f32.mrb[0].mxu0
    %v5562 = vadd.f32 0.0, %v5561
    %v5563 = vpop.f32.mrb[0].mxu0
    %v5564 = vpop.f32.mrb[0].mxu0
    %v5565 = vadd.f32 0.0, %v5564
    %v5566 = vpop.f32.mrb[0].mxu0
    %5567 = vdwg.mxu0
    %v5568 = vpack.c.bf16 %v5565, %v5562
    %s5569 = scalar_lea.vmem %s19, 32
    %v5570 = vld [vmem:[%s5569] sm:$0xf]
    %v5571 = vld [vmem:[%s5569 + $0x4] sm:$0xf]
    %v5572 = vld [vmem:[%s5569 + $0x8] sm:$0xf]
    %v5573 = vld [vmem:[%s5569 + $0xc] sm:$0xf]
    %v5574 = vld [vmem:[%s5569 + $0x10] sm:$0xf]
    %v5575 = vld [vmem:[%s5569 + $0x14] sm:$0xf]
    %v5576 = vld [vmem:[%s5569 + $0x18] sm:$0xf]
    %v5577 = vld [vmem:[%s5569 + $0x1c] sm:$0xf]
    %v5586 = vunpack.c.l.b16 %v5570
    %v5587 = vunpack.c.l.b16 %v5571
    %v5588 = vunpack.c.l.b16 %v5572
    %v5589 = vunpack.c.l.b16 %v5573
    %v5590 = vunpack.c.l.b16 %v5574
    %v5591 = vunpack.c.l.b16 %v5575
    %v5592 = vunpack.c.l.b16 %v5576
    %v5593 = vunpack.c.l.b16 %v5577
    %v5594 = vpack.c.b16 %v5587, %v5586
    %v5595 = vpack.c.b16 %v5589, %v5588
    %v5596 = vpack.c.b16 %v5591, %v5590
    %v5597 = vpack.c.b16 %v5593, %v5592
    %v5603 = vsel %vm257, %v5568, 0
    %5605 = vmatprep.subr.bf16.mxu0 0
    %5606 = vmatpush1.bf16.msra.mxu0 %v5594
    %5607 = vmatprep.subr.bf16.mxu0 0
    %5608 = vmatpush1.bf16.msra.mxu0 %v5595
    %5609 = vmatprep.subr.bf16.mxu0 0
    %5610 = vmatpush1.bf16.msra.mxu0 %v5596
    %5611 = vmatprep.subr.bf16.mxu0 0
    %5612 = vmatpush1.bf16.msra.mxu0 %v5597
    %5613 = vmatprep.subr.bf16.mxu0 0
    %5614 = vmatpush1.bf16.msra.mxu0 0
    %5615 = vmatprep.subr.bf16.mxu0 0
    %5616 = vmatpush1.bf16.msra.mxu0 0
    %5617 = vmatprep.subr.bf16.mxu0 0
    %5618 = vmatpush1.bf16.msra.mxu0 0
    %5619 = vmatprep.subr.bf16.mxu0 0
    %5620 = vmatpush1.bf16.msra.mxu0 0
    %5621 = vmatprep.subr.bf16.mxu0 0
    %5622 = vmatpush1.bf16.msra.mxu0 0
    %5623 = vmatprep.subr.bf16.mxu0 0
    %5624 = vmatpush1.bf16.msra.mxu0 0
    %5625 = vmatprep.subr.bf16.mxu0 0
    %5626 = vmatpush1.bf16.msra.mxu0 0
    %5627 = vmatprep.subr.bf16.mxu0 0
    %5628 = vmatpush1.bf16.msra.mxu0 0
    %5629 = vmatprep.subr.bf16.mxu0 0
    %5630 = vmatpush1.bf16.msra.mxu0 0
    %5631 = vmatprep.subr.bf16.mxu0 0
    %5632 = vmatpush1.bf16.msra.mxu0 0
    %5633 = vmatprep.subr.bf16.mxu0 0
    %5634 = vmatpush1.bf16.msra.mxu0 0
    %5635 = vmatprep.subr.bf16.mxu0 0
    %5636 = vmatpush1.bf16.msra.mxu0 0
    %5637 = vmatprep.mubr.bf16.mxu0 0
    %5638 = vmatmul.mubr.bf16.gmra.mrb[0].mxu0 %v5603
    %v5639 = vpop.f32.mrb[0].mxu0
    %v5640 = vadd.f32 0.0, %v5639
    %v5641 = vpop.f32.mrb[0].mxu0
    %v5642 = vpop.f32.mrb[0].mxu0
    %v5643 = vadd.f32 0.0, %v5642
    %v5644 = vpop.f32.mrb[0].mxu0
    %5645 = vdwg.mxu0
    %v5646 = vadd.f32 %v3168, %v5640
    %v5647 = vadd.f32 %v3169, %v5643
    %s5648 = scalar_lea.vmem [#allocation19], 1
    %v5649 = vld [vmem:[%s5648] sm:$0x1]
    %v5650 = vmul.f32 %v5646, %v5646
    %v5651 = vmul.f32 %v5647, %v5647
    %v5652 = vsel %vm257, %v5650, 0.0
    %5653 = vadd.xlane.f32.xlu0 %v5652
    %v5654 = vpop.xlane.xlu0 %5653
    %v5655 = vsel %vm257, %v5651, 0.0
    %5656 = vadd.xlane.f32.xlu0 %v5655
    %v5657 = vpop.xlane.xlu0 %5656
    %v5658 = vmul.f32 %v5654, %v264
    %v5659 = vmul.f32 %v5657, %v264
    %v5660 = vadd.f32 %v5658, 1e-05
    %v5661 = vadd.f32 %v5659, 1e-05
    %v5662 = vrsqrt.pop %v5660
    %v5663 = vrsqrt.pop %v5661
    %v5664 = vmul.f32 %v5646, %v5662
    %v5665 = vmul.f32 %v5647, %v5663
    %v5667 = vlaneseq
    %v5668 = vshrl.u32 %v5667, 7
    %v5669 = vsub.s32 0, %v5668
    %v5670 = vrot.slane %v5649, %v5669
    %v5672 = vmul.f32 %v5664, %v5670
    %v5673 = vmul.f32 %v5665, %v5670
    %v5674 = vpack.c.bf16 %v5673, %v5672
    %s5675 = scalar_lea.vmem %s21, 128
    %v5676 = vld [vmem:[%s5675] sm:$0xff]
    %v5677 = vld [vmem:[%s5675 + $0x8] sm:$0xff]
    %v5678 = vld [vmem:[%s5675 + $0x10] sm:$0xff]
    %v5679 = vld [vmem:[%s5675 + $0x18] sm:$0xff]
    %v5680 = vld [vmem:[%s5675 + $0x20] sm:$0xff]
    %v5681 = vld [vmem:[%s5675 + $0x28] sm:$0xff]
    %v5682 = vld [vmem:[%s5675 + $0x30] sm:$0xff]
    %v5683 = vld [vmem:[%s5675 + $0x38] sm:$0xff]
    %v5684 = vld [vmem:[%s5675 + $0x40] sm:$0xff]
    %v5685 = vld [vmem:[%s5675 + $0x48] sm:$0xff]
    %v5686 = vld [vmem:[%s5675 + $0x50] sm:$0xff]
    %v5687 = vld [vmem:[%s5675 + $0x58] sm:$0xff]
    %v5688 = vld [vmem:[%s5675 + $0x60] sm:$0xff]
    %v5689 = vld [vmem:[%s5675 + $0x68] sm:$0xff]
    %v5690 = vld [vmem:[%s5675 + $0x70] sm:$0xff]
    %v5691 = vld [vmem:[%s5675 + $0x78] sm:$0xff]
    %v5708 = vunpack.c.l.b16 %v5676
    %v5709 = vunpack.c.h.b16 %v5676
    %v5710 = vunpack.c.l.b16 %v5677
    %v5711 = vunpack.c.h.b16 %v5677
    %v5712 = vunpack.c.l.b16 %v5678
    %v5713 = vunpack.c.h.b16 %v5678
    %v5714 = vunpack.c.l.b16 %v5679
    %v5715 = vunpack.c.h.b16 %v5679
    %v5716 = vunpack.c.l.b16 %v5680
    %v5717 = vunpack.c.h.b16 %v5680
    %v5718 = vunpack.c.l.b16 %v5681
    %v5719 = vunpack.c.h.b16 %v5681
    %v5720 = vunpack.c.l.b16 %v5682
    %v5721 = vunpack.c.h.b16 %v5682
    %v5722 = vunpack.c.l.b16 %v5683
    %v5723 = vunpack.c.h.b16 %v5683
    %v5724 = vunpack.c.l.b16 %v5684
    %v5725 = vunpack.c.h.b16 %v5684
    %v5726 = vunpack.c.l.b16 %v5685
    %v5727 = vunpack.c.h.b16 %v5685
    %v5728 = vunpack.c.l.b16 %v5686
    %v5729 = vunpack.c.h.b16 %v5686
    %v5730 = vunpack.c.l.b16 %v5687
    %v5731 = vunpack.c.h.b16 %v5687
    %v5732 = vunpack.c.l.b16 %v5688
    %v5733 = vunpack.c.h.b16 %v5688
    %v5734 = vunpack.c.l.b16 %v5689
    %v5735 = vunpack.c.h.b16 %v5689
    %v5736 = vunpack.c.l.b16 %v5690
    %v5737 = vunpack.c.h.b16 %v5690
    %v5738 = vunpack.c.l.b16 %v5691
    %v5739 = vunpack.c.h.b16 %v5691
    %v5740 = vpack.c.b16 %v5712, %v5708
    %v5741 = vpack.c.b16 %v5713, %v5709
    %v5742 = vpack.c.b16 %v5714, %v5710
    %v5743 = vpack.c.b16 %v5715, %v5711
    %v5744 = vpack.c.b16 %v5720, %v5716
    %v5745 = vpack.c.b16 %v5721, %v5717
    %v5746 = vpack.c.b16 %v5722, %v5718
    %v5747 = vpack.c.b16 %v5723, %v5719
    %v5748 = vpack.c.b16 %v5728, %v5724
    %v5749 = vpack.c.b16 %v5729, %v5725
    %v5750 = vpack.c.b16 %v5730, %v5726
    %v5751 = vpack.c.b16 %v5731, %v5727
    %v5752 = vpack.c.b16 %v5736, %v5732
    %v5753 = vpack.c.b16 %v5737, %v5733
    %v5754 = vpack.c.b16 %v5738, %v5734
    %v5755 = vpack.c.b16 %v5739, %v5735
    %v5773 = vsel %vm257, %v5674, 0
    %5775 = vmatprep.subr.bf16.mxu0 %v5741
    %5776 = vmatpush1.bf16.msra.mxu0 %v5740
    %5777 = vmatprep.subr.bf16.mxu0 %v5745
    %5778 = vmatpush1.bf16.msra.mxu0 %v5744
    %5779 = vmatprep.subr.bf16.mxu0 %v5749
    %5780 = vmatpush1.bf16.msra.mxu0 %v5748
    %5781 = vmatprep.subr.bf16.mxu0 %v5753
    %5782 = vmatpush1.bf16.msra.mxu0 %v5752
    %5783 = vmatprep.subr.bf16.mxu0 0
    %5784 = vmatpush1.bf16.msra.mxu0 0
    %5785 = vmatprep.subr.bf16.mxu0 0
    %5786 = vmatpush1.bf16.msra.mxu0 0
    %5787 = vmatprep.subr.bf16.mxu0 0
    %5788 = vmatpush1.bf16.msra.mxu0 0
    %5789 = vmatprep.subr.bf16.mxu0 0
    %5790 = vmatpush1.bf16.msra.mxu0 0
    %5791 = vmatprep.subr.bf16.mxu0 0
    %5792 = vmatpush1.bf16.msra.mxu0 0
    %5793 = vmatprep.subr.bf16.mxu0 0
    %5794 = vmatpush1.bf16.msra.mxu0 0
    %5795 = vmatprep.subr.bf16.mxu0 0
    %5796 = vmatpush1.bf16.msra.mxu0 0
    %5797 = vmatprep.subr.bf16.mxu0 0
    %5798 = vmatpush1.bf16.msra.mxu0 0
    %5799 = vmatprep.subr.bf16.mxu0 0
    %5800 = vmatpush1.bf16.msra.mxu0 0
    %5801 = vmatprep.subr.bf16.mxu0 0
    %5802 = vmatpush1.bf16.msra.mxu0 0
    %5803 = vmatprep.subr.bf16.mxu0 0
    %5804 = vmatpush1.bf16.msra.mxu0 0
    %5805 = vmatprep.subr.bf16.mxu0 0
    %5806 = vmatpush1.bf16.msra.mxu0 0
    %5807 = vmatprep.mubr.bf16.mxu0 0
    %5808 = vmatmul.mubr.bf16.gmra.mrb[0].mxu0 %v5773
    %v5809 = vpop.f32.mrb[0].mxu0
    %v5810 = vadd.f32 0.0, %v5809
    %v5811 = vpop.f32.mrb[0].mxu0
    %v5812 = vadd.f32 0.0, %v5811
    %v5813 = vpop.f32.mrb[0].mxu0
    %v5814 = vadd.f32 0.0, %v5813
    %v5815 = vpop.f32.mrb[0].mxu0
    %v5816 = vadd.f32 0.0, %v5815
    %5817 = vdwg.mxu0
    %5818 = vmatprep.subr.bf16.mxu0 %v5743
    %5819 = vmatpush1.bf16.msra.mxu0 %v5742
    %5820 = vmatprep.subr.bf16.mxu0 %v5747
    %5821 = vmatpush1.bf16.msra.mxu0 %v5746
    %5822 = vmatprep.subr.bf16.mxu0 %v5751
    %5823 = vmatpush1.bf16.msra.mxu0 %v5750
    %5824 = vmatprep.subr.bf16.mxu0 %v5755
    %5825 = vmatpush1.bf16.msra.mxu0 %v5754
    %5826 = vmatprep.subr.bf16.mxu0 0
    %5827 = vmatpush1.bf16.msra.mxu0 0
    %5828 = vmatprep.subr.bf16.mxu0 0
    %5829 = vmatpush1.bf16.msra.mxu0 0
    %5830 = vmatprep.subr.bf16.mxu0 0
    %5831 = vmatpush1.bf16.msra.mxu0 0
    %5832 = vmatprep.subr.bf16.mxu0 0
    %5833 = vmatpush1.bf16.msra.mxu0 0
    %5834 = vmatprep.subr.bf16.mxu0 0
    %5835 = vmatpush1.bf16.msra.mxu0 0
    %5836 = vmatprep.subr.bf16.mxu0 0
    %5837 = vmatpush1.bf16.msra.mxu0 0
    %5838 = vmatprep.subr.bf16.mxu0 0
    %5839 = vmatpush1.bf16.msra.mxu0 0
    %5840 = vmatprep.subr.bf16.mxu0 0
    %5841 = vmatpush1.bf16.msra.mxu0 0
    %5842 = vmatprep.subr.bf16.mxu0 0
    %5843 = vmatpush1.bf16.msra.mxu0 0
    %5844 = vmatprep.subr.bf16.mxu0 0
    %5845 = vmatpush1.bf16.msra.mxu0 0
    %5846 = vmatprep.subr.bf16.mxu0 0
    %5847 = vmatpush1.bf16.msra.mxu0 0
    %5848 = vmatprep.subr.bf16.mxu0 0
    %5849 = vmatpush1.bf16.msra.mxu0 0
    %5850 = vmatprep.mubr.bf16.mxu0 0
    %5851 = vmatmul.mubr.bf16.gmra.mrb[0].mxu0 %v5773
    %v5852 = vpop.f32.mrb[0].mxu0
    %v5853 = vadd.f32 0.0, %v5852
    %v5854 = vpop.f32.mrb[0].mxu0
    %v5855 = vadd.f32 0.0, %v5854
    %v5856 = vpop.f32.mrb[0].mxu0
    %v5857 = vadd.f32 0.0, %v5856
    %v5858 = vpop.f32.mrb[0].mxu0
    %v5859 = vadd.f32 0.0, %v5858
    %5860 = vdwg.mxu0
    %v5861 = vxor.u32 %v5810, 2147483648
    %v5862 = vxor.u32 %v5812, 2147483648
    %v5863 = vxor.u32 %v5814, 2147483648
    %v5864 = vxor.u32 %v5816, 2147483648
    %v5865 = vmul.f32 %v5861, 1.442695
    %v5866 = vpow.pop %v5865
    %v5867 = vmul.f32 %v5862, 1.442695
    %v5868 = vpow.pop %v5867
    %v5869 = vmul.f32 %v5863, 1.442695
    %v5870 = vpow.pop %v5869
    %v5871 = vmul.f32 %v5864, 1.442695
    %v5872 = vpow.pop %v5871
    %v5873 = vadd.f32 %v5866, 1.0
    %v5874 = vadd.f32 %v5868, 1.0
    %v5875 = vadd.f32 %v5870, 1.0
    %v5876 = vadd.f32 %v5872, 1.0
    %v5877 = vrcp.pop %v5873
    %v5878 = vmul.f32 1.0, %v5877
    %v5879 = vrcp.pop %v5874
    %v5880 = vmul.f32 1.0, %v5879
    %v5881 = vrcp.pop %v5875
    %v5882 = vmul.f32 1.0, %v5881
    %v5883 = vrcp.pop %v5876
    %v5884 = vmul.f32 1.0, %v5883
    %v5885 = vmul.f32 %v5810, %v5878
    %v5886 = vmul.f32 %v5812, %v5880
    %v5887 = vmul.f32 %v5814, %v5882
    %v5888 = vmul.f32 %v5816, %v5884
    %v5889 = vmul.f32 %v5885, %v5853
    %v5890 = vmul.f32 %v5886, %v5855
    %v5891 = vmul.f32 %v5887, %v5857
    %v5892 = vmul.f32 %v5888, %v5859
    %v5893 = vpack.c.bf16 %v5891, %v5889
    %v5894 = vpack.c.bf16 %v5892, %v5890
    %s5895 = scalar_lea.vmem %s22, 128
    %v5896 = vld [vmem:[%s5895] sm:$0xf]
    %v5897 = vld [vmem:[%s5895 + $0x4] sm:$0xf]
    %v5898 = vld [vmem:[%s5895 + $0x8] sm:$0xf]
    %v5899 = vld [vmem:[%s5895 + $0xc] sm:$0xf]
    %v5900 = vld [vmem:[%s5895 + $0x10] sm:$0xf]
    %v5901 = vld [vmem:[%s5895 + $0x14] sm:$0xf]
    %v5902 = vld [vmem:[%s5895 + $0x18] sm:$0xf]
    %v5903 = vld [vmem:[%s5895 + $0x1c] sm:$0xf]
    %v5904 = vld [vmem:[%s5895 + $0x20] sm:$0xf]
    %v5905 = vld [vmem:[%s5895 + $0x24] sm:$0xf]
    %v5906 = vld [vmem:[%s5895 + $0x28] sm:$0xf]
    %v5907 = vld [vmem:[%s5895 + $0x2c] sm:$0xf]
    %v5908 = vld [vmem:[%s5895 + $0x30] sm:$0xf]
    %v5909 = vld [vmem:[%s5895 + $0x34] sm:$0xf]
    %v5910 = vld [vmem:[%s5895 + $0x38] sm:$0xf]
    %v5911 = vld [vmem:[%s5895 + $0x3c] sm:$0xf]
    %v5912 = vld [vmem:[%s5895 + $0x40] sm:$0xf]
    %v5913 = vld [vmem:[%s5895 + $0x44] sm:$0xf]
    %v5914 = vld [vmem:[%s5895 + $0x48] sm:$0xf]
    %v5915 = vld [vmem:[%s5895 + $0x4c] sm:$0xf]
    %v5916 = vld [vmem:[%s5895 + $0x50] sm:$0xf]
    %v5917 = vld [vmem:[%s5895 + $0x54] sm:$0xf]
    %v5918 = vld [vmem:[%s5895 + $0x58] sm:$0xf]
    %v5919 = vld [vmem:[%s5895 + $0x5c] sm:$0xf]
    %v5920 = vld [vmem:[%s5895 + $0x60] sm:$0xf]
    %v5921 = vld [vmem:[%s5895 + $0x64] sm:$0xf]
    %v5922 = vld [vmem:[%s5895 + $0x68] sm:$0xf]
    %v5923 = vld [vmem:[%s5895 + $0x6c] sm:$0xf]
    %v5924 = vld [vmem:[%s5895 + $0x70] sm:$0xf]
    %v5925 = vld [vmem:[%s5895 + $0x74] sm:$0xf]
    %v5926 = vld [vmem:[%s5895 + $0x78] sm:$0xf]
    %v5927 = vld [vmem:[%s5895 + $0x7c] sm:$0xf]
    %v5960 = vunpack.c.l.b16 %v5896
    %v5961 = vunpack.c.l.b16 %v5897
    %v5962 = vunpack.c.l.b16 %v5898
    %v5963 = vunpack.c.l.b16 %v5899
    %v5964 = vunpack.c.l.b16 %v5900
    %v5965 = vunpack.c.l.b16 %v5901
    %v5966 = vunpack.c.l.b16 %v5902
    %v5967 = vunpack.c.l.b16 %v5903
    %v5968 = vunpack.c.l.b16 %v5904
    %v5969 = vunpack.c.l.b16 %v5905
    %v5970 = vunpack.c.l.b16 %v5906
    %v5971 = vunpack.c.l.b16 %v5907
    %v5972 = vunpack.c.l.b16 %v5908
    %v5973 = vunpack.c.l.b16 %v5909
    %v5974 = vunpack.c.l.b16 %v5910
    %v5975 = vunpack.c.l.b16 %v5911
    %v5976 = vunpack.c.l.b16 %v5912
    %v5977 = vunpack.c.l.b16 %v5913
    %v5978 = vunpack.c.l.b16 %v5914
    %v5979 = vunpack.c.l.b16 %v5915
    %v5980 = vunpack.c.l.b16 %v5916
    %v5981 = vunpack.c.l.b16 %v5917
    %v5982 = vunpack.c.l.b16 %v5918
    %v5983 = vunpack.c.l.b16 %v5919
    %v5984 = vunpack.c.l.b16 %v5920
    %v5985 = vunpack.c.l.b16 %v5921
    %v5986 = vunpack.c.l.b16 %v5922
    %v5987 = vunpack.c.l.b16 %v5923
    %v5988 = vunpack.c.l.b16 %v5924
    %v5989 = vunpack.c.l.b16 %v5925
    %v5990 = vunpack.c.l.b16 %v5926
    %v5991 = vunpack.c.l.b16 %v5927
    %v5992 = vpack.c.b16 %v5961, %v5960
    %v5993 = vpack.c.b16 %v5963, %v5962
    %v5994 = vpack.c.b16 %v5965, %v5964
    %v5995 = vpack.c.b16 %v5967, %v5966
    %v5996 = vpack.c.b16 %v5969, %v5968
    %v5997 = vpack.c.b16 %v5971, %v5970
    %v5998 = vpack.c.b16 %v5973, %v5972
    %v5999 = vpack.c.b16 %v5975, %v5974
    %v6000 = vpack.c.b16 %v5977, %v5976
    %v6001 = vpack.c.b16 %v5979, %v5978
    %v6002 = vpack.c.b16 %v5981, %v5980
    %v6003 = vpack.c.b16 %v5983, %v5982
    %v6004 = vpack.c.b16 %v5985, %v5984
    %v6005 = vpack.c.b16 %v5987, %v5986
    %v6006 = vpack.c.b16 %v5989, %v5988
    %v6007 = vpack.c.b16 %v5991, %v5990
    %6024 = vmatprep.subr.bf16.mxu0 0
    %6025 = vmatpush1.bf16.msra.mxu0 %v5992
    %6026 = vmatprep.subr.bf16.mxu0 0
    %6027 = vmatpush1.bf16.msra.mxu0 %v5993
    %6028 = vmatprep.subr.bf16.mxu0 0
    %6029 = vmatpush1.bf16.msra.mxu0 %v5994
    %6030 = vmatprep.subr.bf16.mxu0 0
    %6031 = vmatpush1.bf16.msra.mxu0 %v5995
    %6032 = vmatprep.subr.bf16.mxu0 0
    %6033 = vmatpush1.bf16.msra.mxu0 %v5996
    %6034 = vmatprep.subr.bf16.mxu0 0
    %6035 = vmatpush1.bf16.msra.mxu0 %v5997
    %6036 = vmatprep.subr.bf16.mxu0 0
    %6037 = vmatpush1.bf16.msra.mxu0 %v5998
    %6038 = vmatprep.subr.bf16.mxu0 0
    %6039 = vmatpush1.bf16.msra.mxu0 %v5999
    %6040 = vmatprep.subr.bf16.mxu0 0
    %6041 = vmatpush1.bf16.msra.mxu0 %v6000
    %6042 = vmatprep.subr.bf16.mxu0 0
    %6043 = vmatpush1.bf16.msra.mxu0 %v6001
    %6044 = vmatprep.subr.bf16.mxu0 0
    %6045 = vmatpush1.bf16.msra.mxu0 %v6002
    %6046 = vmatprep.subr.bf16.mxu0 0
    %6047 = vmatpush1.bf16.msra.mxu0 %v6003
    %6048 = vmatprep.subr.bf16.mxu0 0
    %6049 = vmatpush1.bf16.msra.mxu0 %v6004
    %6050 = vmatprep.subr.bf16.mxu0 0
    %6051 = vmatpush1.bf16.msra.mxu0 %v6005
    %6052 = vmatprep.subr.bf16.mxu0 0
    %6053 = vmatpush1.bf16.msra.mxu0 %v6006
    %6054 = vmatprep.subr.bf16.mxu0 0
    %6055 = vmatpush1.bf16.msra.mxu0 %v6007
    %6056 = vmatprep.mubr.bf16.mxu0 %v5894
    %6057 = vmatmul.mubr.bf16.gmra.mrb[0].mxu0 %v5893
    %v6058 = vpop.f32.mrb[0].mxu0
    %v6059 = vadd.f32 0.0, %v6058
    %v6060 = vpop.f32.mrb[0].mxu0
    %v6061 = vpop.f32.mrb[0].mxu0
    %v6062 = vadd.f32 0.0, %v6061
    %v6063 = vpop.f32.mrb[0].mxu0
    %6064 = vdwg.mxu0
    %v6065 = vadd.f32 %v5646, %v6059
    %v6066 = vadd.f32 %v5647, %v6062
    %v6067 = vld [vmem:[#allocation20] sm:$0x1]
    %v6068 = vmul.f32 %v6065, %v6065
    %v6069 = vmul.f32 %v6066, %v6066
    %v6070 = vsel %vm257, %v6068, 0.0
    %6071 = vadd.xlane.f32.xlu0 %v6070
    %v6072 = vpop.xlane.xlu0 %6071
    %v6073 = vsel %vm257, %v6069, 0.0
    %6074 = vadd.xlane.f32.xlu0 %v6073
    %v6075 = vpop.xlane.xlu0 %6074
    %v6076 = vmul.f32 %v6072, %v264
    %v6077 = vmul.f32 %v6075, %v264
    %v6078 = vadd.f32 %v6076, 1e-05
    %v6079 = vadd.f32 %v6077, 1e-05
    %v6080 = vrsqrt.pop %v6078
    %v6081 = vrsqrt.pop %v6079
    %v6082 = vmul.f32 %v6065, %v6080
    %v6083 = vmul.f32 %v6066, %v6081
    %v6085 = vlaneseq
    %v6086 = vshrl.u32 %v6085, 7
    %v6087 = vsub.s32 0, %v6086
    %v6088 = vrot.slane %v6067, %v6087
    %v6090 = vmul.f32 %v6082, %v6088
    %v6091 = vmul.f32 %v6083, %v6088
    %v6092 = vpack.c.bf16 %v6091, %v6090
    %v6093 = vld [vmem:[%s24] sm:$0xff]
    %v6094 = vld [vmem:[%s24 + $0x8] sm:$0xff]
    %v6095 = vld [vmem:[%s24 + $0x10] sm:$0xff]
    %v6096 = vld [vmem:[%s24 + $0x18] sm:$0xff]
    %v6097 = vld [vmem:[%s24 + $0x20] sm:$0xff]
    %v6098 = vld [vmem:[%s24 + $0x28] sm:$0xff]
    %v6099 = vld [vmem:[%s24 + $0x30] sm:$0xff]
    %v6100 = vld [vmem:[%s24 + $0x38] sm:$0xff]
    %v6109 = vunpack.c.l.b16 %v6093
    %v6110 = vunpack.c.h.b16 %v6093
    %v6111 = vunpack.c.l.b16 %v6094
    %v6112 = vunpack.c.h.b16 %v6094
    %v6113 = vunpack.c.l.b16 %v6095
    %v6114 = vunpack.c.h.b16 %v6095
    %v6115 = vunpack.c.l.b16 %v6096
    %v6116 = vunpack.c.h.b16 %v6096
    %v6117 = vunpack.c.l.b16 %v6097
    %v6118 = vunpack.c.h.b16 %v6097
    %v6119 = vunpack.c.l.b16 %v6098
    %v6120 = vunpack.c.h.b16 %v6098
    %v6121 = vunpack.c.l.b16 %v6099
    %v6122 = vunpack.c.h.b16 %v6099
    %v6123 = vunpack.c.l.b16 %v6100
    %v6124 = vunpack.c.h.b16 %v6100
    %v6125 = vpack.c.b16 %v6111, %v6109
    %v6126 = vpack.c.b16 %v6112, %v6110
    %v6127 = vpack.c.b16 %v6115, %v6113
    %v6128 = vpack.c.b16 %v6116, %v6114
    %v6129 = vpack.c.b16 %v6119, %v6117
    %v6130 = vpack.c.b16 %v6120, %v6118
    %v6131 = vpack.c.b16 %v6123, %v6121
    %v6132 = vpack.c.b16 %v6124, %v6122
    %v6142 = vsel %vm257, %v6092, 0
    %6144 = vmatprep.subr.bf16.mxu0 %v6126
    %6145 = vmatpush1.bf16.msra.mxu0 %v6125
    %6146 = vmatprep.subr.bf16.mxu0 %v6128
    %6147 = vmatpush1.bf16.msra.mxu0 %v6127
    %6148 = vmatprep.subr.bf16.mxu0 %v6130
    %6149 = vmatpush1.bf16.msra.mxu0 %v6129
    %6150 = vmatprep.subr.bf16.mxu0 %v6132
    %6151 = vmatpush1.bf16.msra.mxu0 %v6131
    %6152 = vmatprep.subr.bf16.mxu0 0
    %6153 = vmatpush1.bf16.msra.mxu0 0
    %6154 = vmatprep.subr.bf16.mxu0 0
    %6155 = vmatpush1.bf16.msra.mxu0 0
    %6156 = vmatprep.subr.bf16.mxu0 0
    %6157 = vmatpush1.bf16.msra.mxu0 0
    %6158 = vmatprep.subr.bf16.mxu0 0
    %6159 = vmatpush1.bf16.msra.mxu0 0
    %6160 = vmatprep.subr.bf16.mxu0 0
    %6161 = vmatpush1.bf16.msra.mxu0 0
    %6162 = vmatprep.subr.bf16.mxu0 0
    %6163 = vmatpush1.bf16.msra.mxu0 0
    %6164 = vmatprep.subr.bf16.mxu0 0
    %6165 = vmatpush1.bf16.msra.mxu0 0
    %6166 = vmatprep.subr.bf16.mxu0 0
    %6167 = vmatpush1.bf16.msra.mxu0 0
    %6168 = vmatprep.subr.bf16.mxu0 0
    %6169 = vmatpush1.bf16.msra.mxu0 0
    %6170 = vmatprep.subr.bf16.mxu0 0
    %6171 = vmatpush1.bf16.msra.mxu0 0
    %6172 = vmatprep.subr.bf16.mxu0 0
    %6173 = vmatpush1.bf16.msra.mxu0 0
    %6174 = vmatprep.subr.bf16.mxu0 0
    %6175 = vmatpush1.bf16.msra.mxu0 0
    %6176 = vmatprep.mubr.bf16.mxu0 0
    %6177 = vmatmul.mubr.bf16.gmra.mrb[0].mxu0 %v6142
    %v6178 = vpop.f32.mrb[0].mxu0
    %v6179 = vadd.f32 0.0, %v6178
    %v6180 = vpop.f32.mrb[0].mxu0
    %v6181 = vadd.f32 0.0, %v6180
    %v6182 = vpop.f32.mrb[0].mxu0
    %v6183 = vadd.f32 0.0, %v6182
    %v6184 = vpop.f32.mrb[0].mxu0
    %v6185 = vadd.f32 0.0, %v6184
    %6186 = vdwg.mxu0
    %6187 = vst [vmem:[#allocation22] sm:$0xff] %v6179
    %6188 = vst [vmem:[#allocation22 + $0x8] sm:$0xff] %v6181
    %6189 = vst [vmem:[#allocation22 + $0x10] sm:$0xff] %v6183
    %6190 = vst [vmem:[#allocation22 + $0x18] sm:$0xff] %v6185
    // Predicated region
    $region150: #{transformer_forward.1} parent=1 // pred_check
      _
    $region151: #{transformer_forward.1} parent=1 // pred_check_branch
      %6192 = sbr.rel (0) target = $region153
    $region152: #{transformer_forward.1} parent=1 // pred_region
      %s6194 = ssub.s32 512, 512
      %6195 = vsyncadd [#allocation4], %s6194
      %s6196 = sshll.u32 [#allocation22], 4
      %s6197 = int_to_ptr.vmem [resolvable:$true] %s6196
      %6202 = dma.vmem_to_hbm [thread:$0]  %s6197, 512, %s25, [#allocation4], 256, 256, 16
    $region153: #{transformer_forward.1} parent=1 // pred_fallthru
      _
    // Predicated region
    $region154: #{transformer_forward.1} parent=1 // pred_check
      _
    $region155: #{transformer_forward.1} parent=1 // pred_check_branch
      %6204 = sbr.rel (0) target = $region157
    $region156: #{transformer_forward.1} parent=1 // pred_region
      %6205 = dma.done [#allocation4], 512
    $region157: #{transformer_forward.1} parent=1 // pred_fallthru
      _
    %6206 = vsyncpa [#allocation3], 1
    %6207 = vsyncpa [#allocation6], 1
    %6208 = vsyncpa [#allocation9], 1
    %6209 = vsyncpa [#allocation12], 1
    %6210 = vsyncpa [#allocation15], 1
    %6211 = vsyncpa [#allocation18], 1
    %6212 = vsyncpa [#allocation21], 1
    %6213 = vsyncpa [#allocation4], 1

</llo_original>
